<compile_context>
chip_gen: v7x
topology: tpu7x:2x2x1
jax: 0.10.0
libtpu: 0.0.40
codegen_flags: <defaults>
</compile_context>

<pallas_src>
import functools

import numpy as np
import jax
import jax.numpy as jnp
from jax.experimental import pallas as pl
from jax.experimental.pallas import tpu as pltpu

CFG = dict(
    num_channels=2,                     # audio channels (stereo)
    n_fft=256, hop_length=64, dim_f=128,
    num_subbands=4,
    num_scales=1, scale=(2, 2), num_blocks_per_scale=1,
    num_channels_model=8, growth=4, bottleneck_factor=4,
)
EPS = 1e-5                              # nn.InstanceNorm2d default eps
MXU_DTYPE = jnp.bfloat16                # MXU operand dtype (f32 accumulation)
N_BLK = 13                              # prepared tensors per TFC_TDF block (l == 1)


# ----------------------------------------------------------------------------
# In-kernel helpers (operate on (C, T*F) values, spatial axis on lanes)
# ----------------------------------------------------------------------------
def _inorm_relu(x, g, b):
    """InstanceNorm2d(affine, eps=1e-5, biased var) + ReLU; reduce over lanes."""
    mean = jnp.mean(x, axis=1, keepdims=True)
    d = x - mean
    var = jnp.mean(d * d, axis=1, keepdims=True)
    y = d * jax.lax.rsqrt(var + EPS) * g + b
    return jnp.maximum(y, 0.0)


def _mm(w, x):
    """(Co, K) @ (K, N) on the MXU, f32 accumulation, lane-dense (N) output."""
    return jnp.dot(w, x.astype(w.dtype), preferred_element_type=jnp.float32)


def _mm_r(x, m):
    """(C, K) @ (K, N) with the (block-diagonal) weight on the right."""
    return jnp.dot(x.astype(m.dtype), m, preferred_element_type=jnp.float32)


def _conv3x3(x, w_mat, mask_ref, f):
    """3x3 conv (stride 1, pad 1) as ONE im2col GEMM.

    x: (Cin, N) with N = T*F laid out t-major; w_mat: (Cout, 9*Cin);
    mask_ref: (9, N) zero/one validity mask for the 9 taps (zero padding).
    """
    c, n = x.shape
    pad = f + 1
    z = jnp.zeros((c, pad), x.dtype)
    xe = jnp.concatenate([z, x, z], axis=1)              # (C, N + 2*(F+1))
    taps = []
    k = 0
    for dy in (-1, 0, 1):
        for dx in (-1, 0, 1):
            d = dy * f + dx
            shifted = xe[:, pad + d: pad + d + n]        # y[:, j] = x[:, j + d]
            if dy == 0 and dx == 0:                      # center tap: always valid
                taps.append(shifted)
            else:
                taps.append(shifted * mask_ref[k:k + 1, :])
            k += 1
    patches = jnp.concatenate(taps, axis=0)              # (9*Cin, N)
    return _mm(w_mat, patches)


def _tfc_tdf_block(x, blk, mask_ref, f):
    """One TFC_TDF residual block (l == 1), fully VMEM-resident."""
    (sc_w, g1, b1, w1, tg1, tb1, m1, tg2, tb2, m2, g2, b2, w2) = blk
    s = _mm(sc_w[...], x)                                 # 1x1 shortcut conv
    h = _inorm_relu(x, g1[...], b1[...])
    h = _conv3x3(h, w1[...], mask_ref, f)                 # tfc1
    t = _inorm_relu(h, tg1[...], tb1[...])
    t = _mm_r(t, m1[...])                                 # tdf Linear F -> F//bn
    t = _inorm_relu(t, tg2[...], tb2[...])
    t = _mm_r(t, m2[...])                                 # tdf Linear F//bn -> F
    h = h + t
    h = _inorm_relu(h, g2[...], b2[...])
    h = _conv3x3(h, w2[...], mask_ref, f)                 # tfc2
    return h + s


# ----------------------------------------------------------------------------
# Fused stage kernels
# ----------------------------------------------------------------------------
def _stage1_kernel(x_ref, wfc_ref, *refs, f):
    """first_conv + encoder TFC_TDF block + downscale norm/ReLU."""
    blk = refs[:N_BLK]
    mask_ref, dg_ref, db_ref = refs[N_BLK:N_BLK + 3]
    skip_ref, down_ref = refs[N_BLK + 3:]
    fc = _mm(wfc_ref[...], x_ref[...])                    # (c, T*F)
    h = _tfc_tdf_block(fc, blk, mask_ref, f)
    skip_ref[...] = h
    down_ref[...] = _inorm_relu(h, dg_ref[...], db_ref[...])


def _stage2_kernel(x_ref, dwn_ref, *refs, f):
    """downscale strided-conv GEMM + bottleneck TFC_TDF + upscale norm/ReLU/GEMM."""
    blk = refs[:N_BLK]
    mask_ref, ug_ref, ub_ref, upw_ref = refs[N_BLK:N_BLK + 4]
    out_ref = refs[N_BLK + 4]
    x = _mm(dwn_ref[...], x_ref[...])                     # (c+g, T'*F')
    h = _tfc_tdf_block(x, blk, mask_ref, f)
    h = _inorm_relu(h, ug_ref[...], ub_ref[...])
    out_ref[...] = _mm(upw_ref[...], h)                   # (c*s1*s2, T'*F')


def _stage3_kernel(up_ref, skip_ref, mix_ref, *refs, f):
    """skip concat + decoder TFC_TDF + mask multiply + fused output head.

    first_conv output is recomputed here from `mix` (one tiny GEMM) instead of
    being round-tripped through HBM from stage 1.
    """
    wfc_ref = refs[0]
    blk = refs[1:1 + N_BLK]
    mask_ref, w1_ref, w2_ref = refs[1 + N_BLK:4 + N_BLK]
    out_ref = refs[4 + N_BLK]
    mix = mix_ref[...]
    x = jnp.concatenate([up_ref[...], skip_ref[...]], axis=0)   # (2c, T*F)
    h = _tfc_tdf_block(x, blk, mask_ref, f)                     # (c, T*F)
    fco = _mm(wfc_ref[...], mix)                                # first_conv out
    h = h * fco                                                 # mask multiply
    z = jnp.concatenate([mix, h], axis=0)                       # (dim_c+c, T*F)
    z = jnp.maximum(_mm(w1_ref[...], z), 0.0)                   # final conv1+ReLU
    out_ref[...] = _mm(w2_ref[...], z)                          # final conv2


# ----------------------------------------------------------------------------
# pallas_call wrappers
# ----------------------------------------------------------------------------
_PARALLEL = pltpu.CompilerParams(dimension_semantics=("parallel",))


def _const_index_map(ndim):
    def index_map(b):
        return (0,) * ndim
    return index_map


def _w_spec(arr):
    return pl.BlockSpec(arr.shape, _const_index_map(arr.ndim))


def _act_spec(c, n):
    # (B, C, N) arrays; one batch element per grid step, leading dim squeezed.
    return pl.BlockSpec((None, c, n), lambda b: (b, 0, 0))


def _run_stage1(x, prep, f):
    b, dim_c, n = x.shape
    c = prep['first_conv'].shape[0]
    weights = (prep['first_conv'],) + prep['enc_block'] + \
              (prep['mask0'], prep['down_g'], prep['down_b'])
    return pl.pallas_call(
        functools.partial(_stage1_kernel, f=f),
        out_shape=(jax.ShapeDtypeStruct((b, c, n), jnp.float32),) * 2,
        grid=(b,),
        in_specs=[_act_spec(dim_c, n)] + [_w_spec(w) for w in weights],
        out_specs=(_act_spec(c, n),) * 2,
        compiler_params=_PARALLEL,
    )(x, *weights)


def _run_stage2(x, prep, f):
    b, cin4, n = x.shape
    cout = prep['up_w'].shape[0]
    weights = (prep['down_w'],) + prep['bot_block'] + \
              (prep['mask1'], prep['up_g'], prep['up_b'], prep['up_w'])
    return pl.pallas_call(
        functools.partial(_stage2_kernel, f=f),
        out_shape=jax.ShapeDtypeStruct((b, cout, n), jnp.float32),
        grid=(b,),
        in_specs=[_act_spec(cin4, n)] + [_w_spec(w) for w in weights],
        out_specs=_act_spec(cout, n),
        compiler_params=_PARALLEL,
    )(x, *weights)


def _run_stage3(up, skip, mix, prep, f):
    b, c, n = up.shape
    dim_c = mix.shape[1]
    weights = (prep['first_conv'],) + prep['dec_block'] + \
              (prep['mask0'], prep['final_w1'], prep['final_w2'])
    return pl.pallas_call(
        functools.partial(_stage3_kernel, f=f),
        out_shape=jax.ShapeDtypeStruct((b, dim_c, n), jnp.float32),
        grid=(b,),
        in_specs=[_act_spec(c, n), _act_spec(c, n), _act_spec(dim_c, n)]
                 + [_w_spec(w) for w in weights],
        out_specs=_act_spec(dim_c, n),
        compiler_params=_PARALLEL,
    )(up, skip, mix, *weights)


# ----------------------------------------------------------------------------
# STFT / iSTFT (plain JAX / XLA FFT)
# ----------------------------------------------------------------------------
# TODO(synk): torch.stft / torch.istft are reproduced with jnp.fft (XLA FFT);
# there is no Pallas FFT primitive.
def _hann_periodic(n):
    return (0.5 - 0.5 * jnp.cos(2.0 * jnp.pi * jnp.arange(n) / n)).astype(jnp.float32)


def stft_forward(x):
    n_fft, hop, dim_f = CFG['n_fft'], CFG['hop_length'], CFG['dim_f']
    B, C, T = x.shape
    win = _hann_periodic(n_fft)
    xf = x.reshape(B * C, T)
    pad = n_fft // 2
    xp = jnp.pad(xf, ((0, 0), (pad, pad)), mode='reflect')
    n_frames = 1 + (xp.shape[-1] - n_fft) // hop
    idx = jnp.arange(n_frames)[:, None] * hop + jnp.arange(n_fft)[None, :]
    frames = xp[:, idx] * win[None, None, :]
    spec = jnp.fft.rfft(frames, axis=-1)                 # (BC, frames, bins)
    spec = jnp.transpose(spec, (0, 2, 1))                # (BC, bins, frames)
    xr = jnp.stack([jnp.real(spec), jnp.imag(spec)], axis=1)
    xr = xr.reshape(B, C, 2, xr.shape[2], xr.shape[3])
    xr = xr.reshape(B, C * 2, xr.shape[3], xr.shape[4])
    return xr[:, :, :dim_f, :].astype(jnp.float32)


def stft_inverse(x):
    n_fft, hop = CFG['n_fft'], CFG['hop_length']
    B, c, f, t = x.shape
    n = n_fft // 2 + 1
    x = jnp.concatenate([x, jnp.zeros((B, c, n - f, t), x.dtype)], axis=2)
    x = x.reshape(B, c // 2, 2, n, t).reshape(B * (c // 2), 2, n, t)
    x = jnp.transpose(x, (0, 2, 3, 1))
    spec = x[..., 0] + 1j * x[..., 1]                    # (BC, n, t)
    win = _hann_periodic(n_fft)
    frames = jnp.fft.irfft(jnp.transpose(spec, (0, 2, 1)), n=n_fft, axis=-1)
    frames = frames * win[None, None, :]
    F = t
    L = n_fft + hop * (F - 1)
    idx = jnp.arange(F)[:, None] * hop + jnp.arange(n_fft)[None, :]
    y = jnp.zeros((frames.shape[0], L), jnp.float32).at[:, idx].add(frames)
    env = jnp.zeros((L,), jnp.float32).at[idx.reshape(-1)].add(jnp.tile(win * win, F))
    pad = n_fft // 2
    length = hop * (F - 1)
    y = y[:, pad:pad + length] / jnp.maximum(env[None, pad:pad + length], 1e-8)
    return y.reshape(B, 2, -1)


def cac2cws(x, k):
    b, c, f, t = x.shape
    return x.reshape(b, c, k, f // k, t).reshape(b, c * k, f // k, t)


def cws2cac(x, k):
    b, c, f, t = x.shape
    return x.reshape(b, c // k, k, f, t).reshape(b, c // k, f * k, t)


# ----------------------------------------------------------------------------
# Parameter init (PyTorch-shaped) and one-time packing into kernel layouts
# ----------------------------------------------------------------------------
class KeyGen:
    def __init__(self, key):
        self.key = key

    def __call__(self):
        self.key, sub = jax.random.split(self.key)
        return sub


def _w(kg, shape):
    return (0.1 * jax.random.normal(kg(), shape)).astype(jnp.float32)


def _gamma(kg, c):
    return (1.0 + 0.1 * jax.random.normal(kg(), (c,))).astype(jnp.float32)


def init_tfc_tdf(kg, in_c, c, l, f, bn):
    blocks = []
    for _ in range(l):
        blk = dict(
            tfc1_g=_gamma(kg, in_c), tfc1_b=_w(kg, (in_c,)),
            tfc1_w=_w(kg, (c, in_c, 3, 3)),
            tdf_g1=_gamma(kg, c), tdf_b1=_w(kg, (c,)),
            tdf_w1=_w(kg, (f // bn, f)),
            tdf_g2=_gamma(kg, c), tdf_b2=_w(kg, (c,)),
            tdf_w2=_w(kg, (f, f // bn)),
            tfc2_g=_gamma(kg, c), tfc2_b=_w(kg, (c,)),
            tfc2_w=_w(kg, (c, c, 3, 3)),
            sc_w=_w(kg, (c, in_c)),
        )
        blocks.append(blk)
        in_c = c
    return blocks


def init_params(key):
    kg = KeyGen(key)
    k = CFG['num_subbands']
    dim_c = k * CFG['num_channels'] * 2
    n, scale, l = CFG['num_scales'], CFG['scale'], CFG['num_blocks_per_scale']
    c, g, bn = CFG['num_channels_model'], CFG['growth'], CFG['bottleneck_factor']
    f = CFG['dim_f'] // k
    params = {'first_conv': _w(kg, (c, dim_c))}
    enc = []
    for _ in range(n):
        enc.append(dict(tfc_tdf=init_tfc_tdf(kg, c, c, l, f, bn),
                        down_g=_gamma(kg, c), down_b=_w(kg, (c,)),
                        down_w=_w(kg, (c + g, c, scale[0], scale[1]))))
        f = f // scale[1]
        c += g
    params['encoder'] = enc
    params['bottleneck'] = init_tfc_tdf(kg, c, c, l, f, bn)
    dec = []
    for _ in range(n):
        blk = dict(up_g=_gamma(kg, c), up_b=_w(kg, (c,)),
                   up_w=_w(kg, (c, c - g, scale[0], scale[1])))
        f = f * scale[1]
        c -= g
        blk['tfc_tdf'] = init_tfc_tdf(kg, 2 * c, c, l, f, bn)
        dec.append(blk)
    params['decoder'] = dec
    params['final_w1'] = _w(kg, (c, c + dim_c))
    params['final_w2'] = _w(kg, (1 * dim_c, c))      # num_target_instruments = 1
    return params


def _bf16(x):
    return jnp.asarray(x, MXU_DTYPE)


def _col(x):
    return jnp.asarray(x, jnp.float32).reshape(-1, 1)


def _prep_conv3x3_w(w):
    """(Cout, Cin, 3, 3) -> (Cout, 9*Cin), columns ordered (tap, Cin)."""
    co, ci = w.shape[:2]
    return _bf16(jnp.transpose(w, (0, 2, 3, 1)).reshape(co, 9 * ci))


def _prep_tdf_w(w, t):
    """nn.Linear weight (out_f, in_f) -> block-diag (t*in_f, t*out_f) right matrix."""
    return _bf16(jnp.kron(jnp.eye(t, dtype=jnp.float32),
                          jnp.transpose(w).astype(jnp.float32)))


def _prep_block(blk, t):
    return (
        _bf16(blk['sc_w']),
        _col(blk['tfc1_g']), _col(blk['tfc1_b']), _prep_conv3x3_w(blk['tfc1_w']),
        _col(blk['tdf_g1']), _col(blk['tdf_b1']), _prep_tdf_w(blk['tdf_w1'], t),
        _col(blk['tdf_g2']), _col(blk['tdf_b2']), _prep_tdf_w(blk['tdf_w2'], t),
        _col(blk['tfc2_g']), _col(blk['tfc2_b']), _prep_conv3x3_w(blk['tfc2_w']),
    )


def _conv_mask(t, f):
    """(9, t*f) zero/one validity mask for the 3x3 conv taps (zero padding)."""
    tt = np.arange(t * f) // f
    ff = np.arange(t * f) % f
    rows = []
    for dy in (-1, 0, 1):
        for dx in (-1, 0, 1):
            ok = (tt + dy >= 0) & (tt + dy < t) & (ff + dx >= 0) & (ff + dx < f)
            rows.append(ok.astype(np.float32))
    return jnp.asarray(np.stack(rows, axis=0))


def prepare_params(params, n_frames):
    """One-time packing of weights into MXU-friendly layouts (bf16 operands)."""
    k = CFG['num_subbands']
    s1, s2 = CFG['scale']
    t0, f0 = n_frames, CFG['dim_f'] // k
    t1, f1 = t0 // s1, f0 // s2
    enc = params['encoder'][0]
    dec = params['decoder'][0]
    return dict(
        first_conv=_bf16(params['first_conv']),
        enc_block=_prep_block(enc['tfc_tdf'][0], t0),
        down_g=_col(enc['down_g']), down_b=_col(enc['down_b']),
        down_w=_bf16(jnp.reshape(enc['down_w'], (enc['down_w'].shape[0], -1))),
        bot_block=_prep_block(params['bottleneck'][0], t1),
        up_g=_col(dec['up_g']), up_b=_col(dec['up_b']),
        up_w=_bf16(jnp.transpose(dec['up_w'], (1, 2, 3, 0)).reshape(-1, dec['up_w'].shape[0])),
        dec_block=_prep_block(dec['tfc_tdf'][0], t0),
        final_w1=_bf16(params['final_w1']),
        final_w2=_bf16(params['final_w2']),
        mask0=_conv_mask(t0, f0),
        mask1=_conv_mask(t1, f1),
    )


# ----------------------------------------------------------------------------
# Forward pass (mirrors TFC_TDF_net.forward for n=1 scale, l=1 block)
# ----------------------------------------------------------------------------
def tfc_tdf_net_forward(prep, audio):
    k = CFG['num_subbands']
    c = CFG['num_channels_model']
    s1, s2 = CFG['scale']
    spec = stft_forward(audio)                       # (B, 2*ch, dim_f, T)
    x = cac2cws(spec, k)                             # (B, dim_c, F0, T0)
    b, dim_c, f0, t0 = x.shape
    n0 = t0 * f0
    # canonical layout: (B, C, T*F) with the time-major spatial axis on lanes
    mix = jnp.swapaxes(x, -1, -2).reshape(b, dim_c, n0)

    skip, down_in = _run_stage1(mix, prep, f0)

    # space-to-depth (kernel=stride=(2,2)) -> downscale conv is a GEMM in stage 2
    d = down_in.reshape(b, c, t0 // s1, s1, f0 // s2, s2)
    s2d = jnp.transpose(d, (0, 1, 3, 5, 2, 4)).reshape(
        b, c * s1 * s2, (t0 // s1) * (f0 // s2))

    up_raw = _run_stage2(s2d, prep, f0 // s2)

    # depth-to-space for the transposed conv computed in stage 2
    u = up_raw.reshape(b, c, s1, s2, t0 // s1, f0 // s2)
    up = jnp.transpose(u, (0, 1, 4, 2, 5, 3)).reshape(b, c, n0)

    y = _run_stage3(up, skip, mix, prep, f0)         # (B, dim_c, T*F)

    y = jnp.swapaxes(y.reshape(b, dim_c, t0, f0), -1, -2)   # (B, dim_c, F0, T0)
    y = cws2cac(y, k)                                       # (B, 2*ch, dim_f, T0)
    return stft_inverse(y)


if __name__ == "__main__":
    key = jax.random.PRNGKey(0)
    pkey, xkey = jax.random.split(key)
    params = init_params(pkey)
    # raw waveform input: (batch=2, channels=2, samples=960) -> 16 STFT frames
    audio = jax.random.normal(xkey, (2, 2, 960), dtype=jnp.float32)
    n_frames = 1 + audio.shape[-1] // CFG['hop_length']      # center-padded STFT
    prep = prepare_params(params, n_frames)
    fwd = jax.jit(tfc_tdf_net_forward)
    out = jax.block_until_ready(fwd(prep, audio))
    assert out.shape == (2, 2, 960), out.shape
    assert bool(jnp.all(jnp.isfinite(out)))
    print("KERNEL_OK")
</pallas_src>

<mosaic_0001>
module attributes {stable_mosaic.version = 11 : i64} {
  func.func private @main(%arg0: i32) attributes {dimension_semantics = [#tpu.dimension_semantics<core_parallel>], iteration_bounds = array<i64: 2>, tpu.core_type = #tpu.core_type<sc_scalar_subcore>, window_params = []} {
    return
  }
}

module attributes {stable_mosaic.version = 11 : i64} {
  func.func private @main(%arg0: i32) attributes {dimension_semantics = [#tpu.dimension_semantics<core_parallel>], iteration_bounds = array<i64: 2>, tpu.core_type = #tpu.core_type<sc_scalar_subcore>, window_params = []} {
    return
  }
}

module attributes {stable_mosaic.version = 11 : i64} {
  func.func @_stage1_kernel(%arg0: i32, %arg1: memref<1x16x512xf32, #tpu.memory_space<vmem>>, %arg2: memref<8x16xbf16, #tpu.memory_space<vmem>>, %arg3: memref<8x8xbf16, #tpu.memory_space<vmem>>, %arg4: memref<8x1xf32, #tpu.memory_space<vmem>>, %arg5: memref<8x1xf32, #tpu.memory_space<vmem>>, %arg6: memref<8x72xbf16, #tpu.memory_space<vmem>>, %arg7: memref<8x1xf32, #tpu.memory_space<vmem>>, %arg8: memref<8x1xf32, #tpu.memory_space<vmem>>, %arg9: memref<512x128xbf16, #tpu.memory_space<vmem>>, %arg10: memref<8x1xf32, #tpu.memory_space<vmem>>, %arg11: memref<8x1xf32, #tpu.memory_space<vmem>>, %arg12: memref<128x512xbf16, #tpu.memory_space<vmem>>, %arg13: memref<8x1xf32, #tpu.memory_space<vmem>>, %arg14: memref<8x1xf32, #tpu.memory_space<vmem>>, %arg15: memref<8x72xbf16, #tpu.memory_space<vmem>>, %arg16: memref<9x512xf32, #tpu.memory_space<vmem>>, %arg17: memref<8x1xf32, #tpu.memory_space<vmem>>, %arg18: memref<8x1xf32, #tpu.memory_space<vmem>>, %arg19: memref<1x8x512xf32, #tpu.memory_space<vmem>>, %arg20: memref<1x8x512xf32, #tpu.memory_space<vmem>>) attributes {dimension_semantics = [#tpu.dimension_semantics<parallel>], iteration_bounds = array<i64: 2>, scalar_prefetch = 0 : i64, scratch_operands = 0 : i64, tpu.core_type = #tpu.core_type<tc>, window_params = [{transform_indices = @transform_0, window_bounds = array<i64: 1, 16, 512>}, {pipeline_mode = #tpu.pipeline_mode<synchronous>, transform_indices = @transform_1, window_bounds = array<i64: 8, 16>}, {pipeline_mode = #tpu.pipeline_mode<synchronous>, transform_indices = @transform_2, window_bounds = array<i64: 8, 8>}, {pipeline_mode = #tpu.pipeline_mode<synchronous>, transform_indices = @transform_3, window_bounds = array<i64: 8, 1>}, {pipeline_mode = #tpu.pipeline_mode<synchronous>, transform_indices = @transform_4, window_bounds = array<i64: 8, 1>}, {pipeline_mode = #tpu.pipeline_mode<synchronous>, transform_indices = @transform_5, window_bounds = array<i64: 8, 72>}, {pipeline_mode = #tpu.pipeline_mode<synchronous>, transform_indices = @transform_6, window_bounds = array<i64: 8, 1>}, {pipeline_mode = #tpu.pipeline_mode<synchronous>, transform_indices = @transform_7, window_bounds = array<i64: 8, 1>}, {pipeline_mode = #tpu.pipeline_mode<synchronous>, transform_indices = @transform_8, window_bounds = array<i64: 512, 128>}, {pipeline_mode = #tpu.pipeline_mode<synchronous>, transform_indices = @transform_9, window_bounds = array<i64: 8, 1>}, {pipeline_mode = #tpu.pipeline_mode<synchronous>, transform_indices = @transform_10, window_bounds = array<i64: 8, 1>}, {pipeline_mode = #tpu.pipeline_mode<synchronous>, transform_indices = @transform_11, window_bounds = array<i64: 128, 512>}, {pipeline_mode = #tpu.pipeline_mode<synchronous>, transform_indices = @transform_12, window_bounds = array<i64: 8, 1>}, {pipeline_mode = #tpu.pipeline_mode<synchronous>, transform_indices = @transform_13, window_bounds = array<i64: 8, 1>}, {pipeline_mode = #tpu.pipeline_mode<synchronous>, transform_indices = @transform_14, window_bounds = array<i64: 8, 72>}, {pipeline_mode = #tpu.pipeline_mode<synchronous>, transform_indices = @transform_15, window_bounds = array<i64: 9, 512>}, {pipeline_mode = #tpu.pipeline_mode<synchronous>, transform_indices = @transform_16, window_bounds = array<i64: 8, 1>}, {pipeline_mode = #tpu.pipeline_mode<synchronous>, transform_indices = @transform_17, window_bounds = array<i64: 8, 1>}, {transform_indices = @transform_18, window_bounds = array<i64: 1, 8, 512>}, {transform_indices = @transform_19, window_bounds = array<i64: 1, 8, 512>}]} {
    %c0 = arith.constant 0 : index
    %c0_0 = arith.constant 0 : index
    %0 = vector.load %arg2[%c0, %c0_0] : memref<8x16xbf16, #tpu.memory_space<vmem>>, vector<8x16xbf16>
    %c0_1 = arith.constant 0 : index
    %c0_2 = arith.constant 0 : index
    %c0_3 = arith.constant 0 : index
    %1 = vector.load %arg1[%c0_1, %c0_2, %c0_3] : memref<1x16x512xf32, #tpu.memory_space<vmem>>, vector<1x16x512xf32>
    %2 = vector.shape_cast %1 : vector<1x16x512xf32> to vector<16x512xf32>
    %3 = arith.truncf %2 : vector<16x512xf32> to vector<16x512xbf16>
    %cst = arith.constant dense<0.000000e+00> : vector<8x512xf32>
    %4 = tpu.matmul %0, %3, %cst {dimension_numbers = #tpu.dot_dimension_numbers<[1], [0], [0], [1], [0, 0, 1, 1], [], []>} : vector<8x16xbf16>, vector<16x512xbf16>, vector<8x512xf32> -> vector<8x512xf32>
    %c0_4 = arith.constant 0 : index
    %c0_5 = arith.constant 0 : index
    %5 = vector.load %arg3[%c0_4, %c0_5] : memref<8x8xbf16, #tpu.memory_space<vmem>>, vector<8x8xbf16>
    %6 = arith.truncf %4 : vector<8x512xf32> to vector<8x512xbf16>
    %cst_6 = arith.constant dense<0.000000e+00> : vector<8x512xf32>
    %7 = tpu.matmul %5, %6, %cst_6 {dimension_numbers = #tpu.dot_dimension_numbers<[1], [0], [0], [1], [0, 0, 1, 1], [], []>} : vector<8x8xbf16>, vector<8x512xbf16>, vector<8x512xf32> -> vector<8x512xf32>
    %c0_7 = arith.constant 0 : index
    %c0_8 = arith.constant 0 : index
    %8 = vector.load %arg4[%c0_7, %c0_8] : memref<8x1xf32, #tpu.memory_space<vmem>>, vector<8x1xf32>
    %c0_9 = arith.constant 0 : index
    %c0_10 = arith.constant 0 : index
    %9 = vector.load %arg5[%c0_9, %c0_10] : memref<8x1xf32, #tpu.memory_space<vmem>>, vector<8x1xf32>
    %cst_11 = arith.constant dense<0.000000e+00> : vector<8xf32>
    %10 = vector.multi_reduction <add>, %4, %cst_11 [1] : vector<8x512xf32> to vector<8xf32>
    %11 = vector.shape_cast %10 : vector<8xf32> to vector<8x1xf32>
    %cst_12 = arith.constant 5.120000e+02 : f32
    %12 = vector.broadcast %cst_12 : f32 to vector<8x1xf32>
    %13 = arith.divf %11, %12 : vector<8x1xf32>
    %14 = vector.broadcast %13 : vector<8x1xf32> to vector<8x512xf32>
    %15 = arith.subf %4, %14 : vector<8x512xf32>
    %16 = arith.mulf %15, %15 : vector<8x512xf32>
    %cst_13 = arith.constant dense<0.000000e+00> : vector<8xf32>
    %17 = vector.multi_reduction <add>, %16, %cst_13 [1] : vector<8x512xf32> to vector<8xf32>
    %18 = vector.shape_cast %17 : vector<8xf32> to vector<8x1xf32>
    %cst_14 = arith.constant 5.120000e+02 : f32
    %19 = vector.broadcast %cst_14 : f32 to vector<8x1xf32>
    %20 = arith.divf %18, %19 : vector<8x1xf32>
    %cst_15 = arith.constant 9.99999974E-6 : f32
    %21 = vector.broadcast %cst_15 : f32 to vector<8x1xf32>
    %22 = arith.addf %20, %21 : vector<8x1xf32>
    %23 = math.rsqrt %22 : vector<8x1xf32>
    %24 = vector.broadcast %23 : vector<8x1xf32> to vector<8x512xf32>
    %25 = arith.mulf %15, %24 : vector<8x512xf32>
    %26 = vector.broadcast %8 : vector<8x1xf32> to vector<8x512xf32>
    %27 = arith.mulf %25, %26 : vector<8x512xf32>
    %28 = vector.broadcast %9 : vector<8x1xf32> to vector<8x512xf32>
    %29 = arith.addf %27, %28 : vector<8x512xf32>
    %cst_16 = arith.constant 0.000000e+00 : f32
    %30 = vector.broadcast %cst_16 : f32 to vector<8x512xf32>
    %31 = arith.maximumf %29, %30 : vector<8x512xf32>
    %c0_17 = arith.constant 0 : index
    %c0_18 = arith.constant 0 : index
    %32 = vector.load %arg6[%c0_17, %c0_18] : memref<8x72xbf16, #tpu.memory_space<vmem>>, vector<8x72xbf16>
    %cst_19 = arith.constant 0.000000e+00 : f32
    %33 = vector.broadcast %cst_19 : f32 to vector<8x33xf32>
    %34 = tpu.concatenate %33, %31, %33 in 1 : vector<8x33xf32>, vector<8x512xf32>, vector<8x33xf32> -> vector<8x578xf32>
    %35 = vector.extract_strided_slice %34 {offsets = [0, 0], sizes = [8, 512], strides = [1, 1]} : vector<8x578xf32> to vector<8x512xf32>
    %c0_20 = arith.constant 0 : index
    %c0_21 = arith.constant 0 : index
    %36 = vector.load %arg16[%c0_20, %c0_21] : memref<9x512xf32, #tpu.memory_space<vmem>>, vector<1x512xf32>
    %37 = vector.broadcast %36 : vector<1x512xf32> to vector<8x512xf32>
    %38 = arith.mulf %35, %37 : vector<8x512xf32>
    %39 = vector.extract_strided_slice %34 {offsets = [0, 1], sizes = [8, 512], strides = [1, 1]} : vector<8x578xf32> to vector<8x512xf32>
    %c1 = arith.constant 1 : index
    %c0_22 = arith.constant 0 : index
    %40 = vector.load %arg16[%c1, %c0_22] : memref<9x512xf32, #tpu.memory_space<vmem>>, vector<1x512xf32>
    %41 = vector.broadcast %40 : vector<1x512xf32> to vector<8x512xf32>
    %42 = arith.mulf %39, %41 : vector<8x512xf32>
    %43 = vector.extract_strided_slice %34 {offsets = [0, 2], sizes = [8, 512], strides = [1, 1]} : vector<8x578xf32> to vector<8x512xf32>
    %c2 = arith.constant 2 : index
    %c0_23 = arith.constant 0 : index
    %44 = vector.load %arg16[%c2, %c0_23] : memref<9x512xf32, #tpu.memory_space<vmem>>, vector<1x512xf32>
    %45 = vector.broadcast %44 : vector<1x512xf32> to vector<8x512xf32>
    %46 = arith.mulf %43, %45 : vector<8x512xf32>
    %47 = vector.extract_strided_slice %34 {offsets = [0, 32], sizes = [8, 512], strides = [1, 1]} : vector<8x578xf32> to vector<8x512xf32>
    %c3 = arith.constant 3 : index
    %c0_24 = arith.constant 0 : index
    %48 = vector.load %arg16[%c3, %c0_24] : memref<9x512xf32, #tpu.memory_space<vmem>>, vector<1x512xf32>
    %49 = vector.broadcast %48 : vector<1x512xf32> to vector<8x512xf32>
    %50 = arith.mulf %47, %49 : vector<8x512xf32>
    %51 = vector.extract_strided_slice %34 {offsets = [0, 33], sizes = [8, 512], strides = [1, 1]} : vector<8x578xf32> to vector<8x512xf32>
    %52 = vector.extract_strided_slice %34 {offsets = [0, 34], sizes = [8, 512], strides = [1, 1]} : vector<8x578xf32> to vector<8x512xf32>
    %c5 = arith.constant 5 : index
    %c0_25 = arith.constant 0 : index
    %53 = vector.load %arg16[%c5, %c0_25] : memref<9x512xf32, #tpu.memory_space<vmem>>, vector<1x512xf32>
    %54 = vector.broadcast %53 : vector<1x512xf32> to vector<8x512xf32>
    %55 = arith.mulf %52, %54 : vector<8x512xf32>
    %56 = vector.extract_strided_slice %34 {offsets = [0, 64], sizes = [8, 512], strides = [1, 1]} : vector<8x578xf32> to vector<8x512xf32>
    %c6 = arith.constant 6 : index
    %c0_26 = arith.constant 0 : index
    %57 = vector.load %arg16[%c6, %c0_26] : memref<9x512xf32, #tpu.memory_space<vmem>>, vector<1x512xf32>
    %58 = vector.broadcast %57 : vector<1x512xf32> to vector<8x512xf32>
    %59 = arith.mulf %56, %58 : vector<8x512xf32>
    %60 = vector.extract_strided_slice %34 {offsets = [0, 65], sizes = [8, 512], strides = [1, 1]} : vector<8x578xf32> to vector<8x512xf32>
    %c7 = arith.constant 7 : index
    %c0_27 = arith.constant 0 : index
    %61 = vector.load %arg16[%c7, %c0_27] : memref<9x512xf32, #tpu.memory_space<vmem>>, vector<1x512xf32>
    %62 = vector.broadcast %61 : vector<1x512xf32> to vector<8x512xf32>
    %63 = arith.mulf %60, %62 : vector<8x512xf32>
    %64 = vector.extract_strided_slice %34 {offsets = [0, 66], sizes = [8, 512], strides = [1, 1]} : vector<8x578xf32> to vector<8x512xf32>
    %c8 = arith.constant 8 : index
    %c0_28 = arith.constant 0 : index
    %65 = vector.load %arg16[%c8, %c0_28] : memref<9x512xf32, #tpu.memory_space<vmem>>, vector<1x512xf32>
    %66 = vector.broadcast %65 : vector<1x512xf32> to vector<8x512xf32>
    %67 = arith.mulf %64, %66 : vector<8x512xf32>
    %68 = tpu.concatenate %38, %42, %46, %50, %51, %55, %59, %63, %67 in 0 : vector<8x512xf32>, vector<8x512xf32>, vector<8x512xf32>, vector<8x512xf32>, vector<8x512xf32>, vector<8x512xf32>, vector<8x512xf32>, vector<8x512xf32>, vector<8x512xf32> -> vector<72x512xf32>
    %69 = arith.truncf %68 : vector<72x512xf32> to vector<72x512xbf16>
    %cst_29 = arith.constant dense<0.000000e+00> : vector<8x512xf32>
    %70 = tpu.matmul %32, %69, %cst_29 {dimension_numbers = #tpu.dot_dimension_numbers<[1], [0], [0], [1], [0, 0, 1, 1], [], []>} : vector<8x72xbf16>, vector<72x512xbf16>, vector<8x512xf32> -> vector<8x512xf32>
    %c0_30 = arith.constant 0 : index
    %c0_31 = arith.constant 0 : index
    %71 = vector.load %arg7[%c0_30, %c0_31] : memref<8x1xf32, #tpu.memory_space<vmem>>, vector<8x1xf32>
    %c0_32 = arith.constant 0 : index
    %c0_33 = arith.constant 0 : index
    %72 = vector.load %arg8[%c0_32, %c0_33] : memref<8x1xf32, #tpu.memory_space<vmem>>, vector<8x1xf32>
    %cst_34 = arith.constant dense<0.000000e+00> : vector<8xf32>
    %73 = vector.multi_reduction <add>, %70, %cst_34 [1] : vector<8x512xf32> to vector<8xf32>
    %74 = vector.shape_cast %73 : vector<8xf32> to vector<8x1xf32>
    %cst_35 = arith.constant 5.120000e+02 : f32
    %75 = vector.broadcast %cst_35 : f32 to vector<8x1xf32>
    %76 = arith.divf %74, %75 : vector<8x1xf32>
    %77 = vector.broadcast %76 : vector<8x1xf32> to vector<8x512xf32>
    %78 = arith.subf %70, %77 : vector<8x512xf32>
    %79 = arith.mulf %78, %78 : vector<8x512xf32>
    %cst_36 = arith.constant dense<0.000000e+00> : vector<8xf32>
    %80 = vector.multi_reduction <add>, %79, %cst_36 [1] : vector<8x512xf32> to vector<8xf32>
    %81 = vector.shape_cast %80 : vector<8xf32> to vector<8x1xf32>
    %cst_37 = arith.constant 5.120000e+02 : f32
    %82 = vector.broadcast %cst_37 : f32 to vector<8x1xf32>
    %83 = arith.divf %81, %82 : vector<8x1xf32>
    %cst_38 = arith.constant 9.99999974E-6 : f32
    %84 = vector.broadcast %cst_38 : f32 to vector<8x1xf32>
    %85 = arith.addf %83, %84 : vector<8x1xf32>
    %86 = math.rsqrt %85 : vector<8x1xf32>
    %87 = vector.broadcast %86 : vector<8x1xf32> to vector<8x512xf32>
    %88 = arith.mulf %78, %87 : vector<8x512xf32>
    %89 = vector.broadcast %71 : vector<8x1xf32> to vector<8x512xf32>
    %90 = arith.mulf %88, %89 : vector<8x512xf32>
    %91 = vector.broadcast %72 : vector<8x1xf32> to vector<8x512xf32>
    %92 = arith.addf %90, %91 : vector<8x512xf32>
    %cst_39 = arith.constant 0.000000e+00 : f32
    %93 = vector.broadcast %cst_39 : f32 to vector<8x512xf32>
    %94 = arith.maximumf %92, %93 : vector<8x512xf32>
    %c0_40 = arith.constant 0 : index
    %c0_41 = arith.constant 0 : index
    %95 = vector.load %arg9[%c0_40, %c0_41] : memref<512x128xbf16, #tpu.memory_space<vmem>>, vector<512x128xbf16>
    %96 = arith.truncf %94 : vector<8x512xf32> to vector<8x512xbf16>
    %cst_42 = arith.constant dense<0.000000e+00> : vector<8x128xf32>
    %97 = tpu.matmul %96, %95, %cst_42 {dimension_numbers = #tpu.dot_dimension_numbers<[1], [0], [0], [1], [0, 0, 1, 1], [], []>} : vector<8x512xbf16>, vector<512x128xbf16>, vector<8x128xf32> -> vector<8x128xf32>
    %c0_43 = arith.constant 0 : index
    %c0_44 = arith.constant 0 : index
    %98 = vector.load %arg10[%c0_43, %c0_44] : memref<8x1xf32, #tpu.memory_space<vmem>>, vector<8x1xf32>
    %c0_45 = arith.constant 0 : index
    %c0_46 = arith.constant 0 : index
    %99 = vector.load %arg11[%c0_45, %c0_46] : memref<8x1xf32, #tpu.memory_space<vmem>>, vector<8x1xf32>
    %cst_47 = arith.constant dense<0.000000e+00> : vector<8xf32>
    %100 = vector.multi_reduction <add>, %97, %cst_47 [1] : vector<8x128xf32> to vector<8xf32>
    %101 = vector.shape_cast %100 : vector<8xf32> to vector<8x1xf32>
    %cst_48 = arith.constant 1.280000e+02 : f32
    %102 = vector.broadcast %cst_48 : f32 to vector<8x1xf32>
    %103 = arith.divf %101, %102 : vector<8x1xf32>
    %104 = vector.broadcast %103 : vector<8x1xf32> to vector<8x128xf32>
    %105 = arith.subf %97, %104 : vector<8x128xf32>
    %106 = arith.mulf %105, %105 : vector<8x128xf32>
    %cst_49 = arith.constant dense<0.000000e+00> : vector<8xf32>
    %107 = vector.multi_reduction <add>, %106, %cst_49 [1] : vector<8x128xf32> to vector<8xf32>
    %108 = vector.shape_cast %107 : vector<8xf32> to vector<8x1xf32>
    %cst_50 = arith.constant 1.280000e+02 : f32
    %109 = vector.broadcast %cst_50 : f32 to vector<8x1xf32>
    %110 = arith.divf %108, %109 : vector<8x1xf32>
    %cst_51 = arith.constant 9.99999974E-6 : f32
    %111 = vector.broadcast %cst_51 : f32 to vector<8x1xf32>
    %112 = arith.addf %110, %111 : vector<8x1xf32>
    %113 = math.rsqrt %112 : vector<8x1xf32>
    %114 = vector.broadcast %113 : vector<8x1xf32> to vector<8x128xf32>
    %115 = arith.mulf %105, %114 : vector<8x128xf32>
    %116 = vector.broadcast %98 : vector<8x1xf32> to vector<8x128xf32>
    %117 = arith.mulf %115, %116 : vector<8x128xf32>
    %118 = vector.broadcast %99 : vector<8x1xf32> to vector<8x128xf32>
    %119 = arith.addf %117, %118 : vector<8x128xf32>
    %cst_52 = arith.constant 0.000000e+00 : f32
    %120 = vector.broadcast %cst_52 : f32 to vector<8x128xf32>
    %121 = arith.maximumf %119, %120 : vector<8x128xf32>
    %c0_53 = arith.constant 0 : index
    %c0_54 = arith.constant 0 : index
    %122 = vector.load %arg12[%c0_53, %c0_54] : memref<128x512xbf16, #tpu.memory_space<vmem>>, vector<128x512xbf16>
    %123 = arith.truncf %121 : vector<8x128xf32> to vector<8x128xbf16>
    %cst_55 = arith.constant dense<0.000000e+00> : vector<8x512xf32>
    %124 = tpu.matmul %123, %122, %cst_55 {dimension_numbers = #tpu.dot_dimension_numbers<[1], [0], [0], [1], [0, 0, 1, 1], [], []>} : vector<8x128xbf16>, vector<128x512xbf16>, vector<8x512xf32> -> vector<8x512xf32>
    %125 = arith.addf %70, %124 : vector<8x512xf32>
    %c0_56 = arith.constant 0 : index
    %c0_57 = arith.constant 0 : index
    %126 = vector.load %arg13[%c0_56, %c0_57] : memref<8x1xf32, #tpu.memory_space<vmem>>, vector<8x1xf32>
    %c0_58 = arith.constant 0 : index
    %c0_59 = arith.constant 0 : index
    %127 = vector.load %arg14[%c0_58, %c0_59] : memref<8x1xf32, #tpu.memory_space<vmem>>, vector<8x1xf32>
    %cst_60 = arith.constant dense<0.000000e+00> : vector<8xf32>
    %128 = vector.multi_reduction <add>, %125, %cst_60 [1] : vector<8x512xf32> to vector<8xf32>
    %129 = vector.shape_cast %128 : vector<8xf32> to vector<8x1xf32>
    %cst_61 = arith.constant 5.120000e+02 : f32
    %130 = vector.broadcast %cst_61 : f32 to vector<8x1xf32>
    %131 = arith.divf %129, %130 : vector<8x1xf32>
    %132 = vector.broadcast %131 : vector<8x1xf32> to vector<8x512xf32>
    %133 = arith.subf %125, %132 : vector<8x512xf32>
    %134 = arith.mulf %133, %133 : vector<8x512xf32>
    %cst_62 = arith.constant dense<0.000000e+00> : vector<8xf32>
    %135 = vector.multi_reduction <add>, %134, %cst_62 [1] : vector<8x512xf32> to vector<8xf32>
    %136 = vector.shape_cast %135 : vector<8xf32> to vector<8x1xf32>
    %cst_63 = arith.constant 5.120000e+02 : f32
    %137 = vector.broadcast %cst_63 : f32 to vector<8x1xf32>
    %138 = arith.divf %136, %137 : vector<8x1xf32>
    %cst_64 = arith.constant 9.99999974E-6 : f32
    %139 = vector.broadcast %cst_64 : f32 to vector<8x1xf32>
    %140 = arith.addf %138, %139 : vector<8x1xf32>
    %141 = math.rsqrt %140 : vector<8x1xf32>
    %142 = vector.broadcast %141 : vector<8x1xf32> to vector<8x512xf32>
    %143 = arith.mulf %133, %142 : vector<8x512xf32>
    %144 = vector.broadcast %126 : vector<8x1xf32> to vector<8x512xf32>
    %145 = arith.mulf %143, %144 : vector<8x512xf32>
    %146 = vector.broadcast %127 : vector<8x1xf32> to vector<8x512xf32>
    %147 = arith.addf %145, %146 : vector<8x512xf32>
    %cst_65 = arith.constant 0.000000e+00 : f32
    %148 = vector.broadcast %cst_65 : f32 to vector<8x512xf32>
    %149 = arith.maximumf %147, %148 : vector<8x512xf32>
    %c0_66 = arith.constant 0 : index
    %c0_67 = arith.constant 0 : index
    %150 = vector.load %arg15[%c0_66, %c0_67] : memref<8x72xbf16, #tpu.memory_space<vmem>>, vector<8x72xbf16>
    %cst_68 = arith.constant 0.000000e+00 : f32
    %151 = vector.broadcast %cst_68 : f32 to vector<8x33xf32>
    %152 = tpu.concatenate %151, %149, %151 in 1 : vector<8x33xf32>, vector<8x512xf32>, vector<8x33xf32> -> vector<8x578xf32>
    %153 = vector.extract_strided_slice %152 {offsets = [0, 0], sizes = [8, 512], strides = [1, 1]} : vector<8x578xf32> to vector<8x512xf32>
    %c0_69 = arith.constant 0 : index
    %c0_70 = arith.constant 0 : index
    %154 = vector.load %arg16[%c0_69, %c0_70] : memref<9x512xf32, #tpu.memory_space<vmem>>, vector<1x512xf32>
    %155 = vector.broadcast %154 : vector<1x512xf32> to vector<8x512xf32>
    %156 = arith.mulf %153, %155 : vector<8x512xf32>
    %157 = vector.extract_strided_slice %152 {offsets = [0, 1], sizes = [8, 512], strides = [1, 1]} : vector<8x578xf32> to vector<8x512xf32>
    %c1_71 = arith.constant 1 : index
    %c0_72 = arith.constant 0 : index
    %158 = vector.load %arg16[%c1_71, %c0_72] : memref<9x512xf32, #tpu.memory_space<vmem>>, vector<1x512xf32>
    %159 = vector.broadcast %158 : vector<1x512xf32> to vector<8x512xf32>
    %160 = arith.mulf %157, %159 : vector<8x512xf32>
    %161 = vector.extract_strided_slice %152 {offsets = [0, 2], sizes = [8, 512], strides = [1, 1]} : vector<8x578xf32> to vector<8x512xf32>
    %c2_73 = arith.constant 2 : index
    %c0_74 = arith.constant 0 : index
    %162 = vector.load %arg16[%c2_73, %c0_74] : memref<9x512xf32, #tpu.memory_space<vmem>>, vector<1x512xf32>
    %163 = vector.broadcast %162 : vector<1x512xf32> to vector<8x512xf32>
    %164 = arith.mulf %161, %163 : vector<8x512xf32>
    %165 = vector.extract_strided_slice %152 {offsets = [0, 32], sizes = [8, 512], strides = [1, 1]} : vector<8x578xf32> to vector<8x512xf32>
    %c3_75 = arith.constant 3 : index
    %c0_76 = arith.constant 0 : index
    %166 = vector.load %arg16[%c3_75, %c0_76] : memref<9x512xf32, #tpu.memory_space<vmem>>, vector<1x512xf32>
    %167 = vector.broadcast %166 : vector<1x512xf32> to vector<8x512xf32>
    %168 = arith.mulf %165, %167 : vector<8x512xf32>
    %169 = vector.extract_strided_slice %152 {offsets = [0, 33], sizes = [8, 512], strides = [1, 1]} : vector<8x578xf32> to vector<8x512xf32>
    %170 = vector.extract_strided_slice %152 {offsets = [0, 34], sizes = [8, 512], strides = [1, 1]} : vector<8x578xf32> to vector<8x512xf32>
    %c5_77 = arith.constant 5 : index
    %c0_78 = arith.constant 0 : index
    %171 = vector.load %arg16[%c5_77, %c0_78] : memref<9x512xf32, #tpu.memory_space<vmem>>, vector<1x512xf32>
    %172 = vector.broadcast %171 : vector<1x512xf32> to vector<8x512xf32>
    %173 = arith.mulf %170, %172 : vector<8x512xf32>
    %174 = vector.extract_strided_slice %152 {offsets = [0, 64], sizes = [8, 512], strides = [1, 1]} : vector<8x578xf32> to vector<8x512xf32>
    %c6_79 = arith.constant 6 : index
    %c0_80 = arith.constant 0 : index
    %175 = vector.load %arg16[%c6_79, %c0_80] : memref<9x512xf32, #tpu.memory_space<vmem>>, vector<1x512xf32>
    %176 = vector.broadcast %175 : vector<1x512xf32> to vector<8x512xf32>
    %177 = arith.mulf %174, %176 : vector<8x512xf32>
    %178 = vector.extract_strided_slice %152 {offsets = [0, 65], sizes = [8, 512], strides = [1, 1]} : vector<8x578xf32> to vector<8x512xf32>
    %c7_81 = arith.constant 7 : index
    %c0_82 = arith.constant 0 : index
    %179 = vector.load %arg16[%c7_81, %c0_82] : memref<9x512xf32, #tpu.memory_space<vmem>>, vector<1x512xf32>
    %180 = vector.broadcast %179 : vector<1x512xf32> to vector<8x512xf32>
    %181 = arith.mulf %178, %180 : vector<8x512xf32>
    %182 = vector.extract_strided_slice %152 {offsets = [0, 66], sizes = [8, 512], strides = [1, 1]} : vector<8x578xf32> to vector<8x512xf32>
    %c8_83 = arith.constant 8 : index
    %c0_84 = arith.constant 0 : index
    %183 = vector.load %arg16[%c8_83, %c0_84] : memref<9x512xf32, #tpu.memory_space<vmem>>, vector<1x512xf32>
    %184 = vector.broadcast %183 : vector<1x512xf32> to vector<8x512xf32>
    %185 = arith.mulf %182, %184 : vector<8x512xf32>
    %186 = tpu.concatenate %156, %160, %164, %168, %169, %173, %177, %181, %185 in 0 : vector<8x512xf32>, vector<8x512xf32>, vector<8x512xf32>, vector<8x512xf32>, vector<8x512xf32>, vector<8x512xf32>, vector<8x512xf32>, vector<8x512xf32>, vector<8x512xf32> -> vector<72x512xf32>
    %187 = arith.truncf %186 : vector<72x512xf32> to vector<72x512xbf16>
    %cst_85 = arith.constant dense<0.000000e+00> : vector<8x512xf32>
    %188 = tpu.matmul %150, %187, %cst_85 {dimension_numbers = #tpu.dot_dimension_numbers<[1], [0], [0], [1], [0, 0, 1, 1], [], []>} : vector<8x72xbf16>, vector<72x512xbf16>, vector<8x512xf32> -> vector<8x512xf32>
    %189 = arith.addf %188, %7 : vector<8x512xf32>
    %c0_86 = arith.constant 0 : index
    %c0_87 = arith.constant 0 : index
    %c0_88 = arith.constant 0 : index
    %190 = vector.load %arg19[%c0_86, %c0_87, %c0_88] : memref<1x8x512xf32, #tpu.memory_space<vmem>>, vector<1x8x512xf32>
    %191 = vector.shape_cast %190 : vector<1x8x512xf32> to vector<8x512xf32>
    %192 = vector.shape_cast %189 : vector<8x512xf32> to vector<1x8x512xf32>
    tpu.vector_store %arg19[%c0_86, %c0_87, %c0_88], %192 {strides = array<i32>} : memref<1x8x512xf32, #tpu.memory_space<vmem>>, vector<1x8x512xf32>,
    %c0_89 = arith.constant 0 : index
    %c0_90 = arith.constant 0 : index
    %193 = vector.load %arg17[%c0_89, %c0_90] : memref<8x1xf32, #tpu.memory_space<vmem>>, vector<8x1xf32>
    %c0_91 = arith.constant 0 : index
    %c0_92 = arith.constant 0 : index
    %194 = vector.load %arg18[%c0_91, %c0_92] : memref<8x1xf32, #tpu.memory_space<vmem>>, vector<8x1xf32>
    %cst_93 = arith.constant dense<0.000000e+00> : vector<8xf32>
    %195 = vector.multi_reduction <add>, %189, %cst_93 [1] : vector<8x512xf32> to vector<8xf32>
    %196 = vector.shape_cast %195 : vector<8xf32> to vector<8x1xf32>
    %cst_94 = arith.constant 5.120000e+02 : f32
    %197 = vector.broadcast %cst_94 : f32 to vector<8x1xf32>
    %198 = arith.divf %196, %197 : vector<8x1xf32>
    %199 = vector.broadcast %198 : vector<8x1xf32> to vector<8x512xf32>
    %200 = arith.subf %189, %199 : vector<8x512xf32>
    %201 = arith.mulf %200, %200 : vector<8x512xf32>
    %cst_95 = arith.constant dense<0.000000e+00> : vector<8xf32>
    %202 = vector.multi_reduction <add>, %201, %cst_95 [1] : vector<8x512xf32> to vector<8xf32>
    %203 = vector.shape_cast %202 : vector<8xf32> to vector<8x1xf32>
    %cst_96 = arith.constant 5.120000e+02 : f32
    %204 = vector.broadcast %cst_96 : f32 to vector<8x1xf32>
    %205 = arith.divf %203, %204 : vector<8x1xf32>
    %cst_97 = arith.constant 9.99999974E-6 : f32
    %206 = vector.broadcast %cst_97 : f32 to vector<8x1xf32>
    %207 = arith.addf %205, %206 : vector<8x1xf32>
    %208 = math.rsqrt %207 : vector<8x1xf32>
    %209 = vector.broadcast %208 : vector<8x1xf32> to vector<8x512xf32>
    %210 = arith.mulf %200, %209 : vector<8x512xf32>
    %211 = vector.broadcast %193 : vector<8x1xf32> to vector<8x512xf32>
    %212 = arith.mulf %210, %211 : vector<8x512xf32>
    %213 = vector.broadcast %194 : vector<8x1xf32> to vector<8x512xf32>
    %214 = arith.addf %212, %213 : vector<8x512xf32>
    %cst_98 = arith.constant 0.000000e+00 : f32
    %215 = vector.broadcast %cst_98 : f32 to vector<8x512xf32>
    %216 = arith.maximumf %214, %215 : vector<8x512xf32>
    %c0_99 = arith.constant 0 : index
    %c0_100 = arith.constant 0 : index
    %c0_101 = arith.constant 0 : index
    %217 = vector.load %arg20[%c0_99, %c0_100, %c0_101] : memref<1x8x512xf32, #tpu.memory_space<vmem>>, vector<1x8x512xf32>
    %218 = vector.shape_cast %217 : vector<1x8x512xf32> to vector<8x512xf32>
    %219 = vector.shape_cast %216 : vector<8x512xf32> to vector<1x8x512xf32>
    tpu.vector_store %arg20[%c0_99, %c0_100, %c0_101], %219 {strides = array<i32>} : memref<1x8x512xf32, #tpu.memory_space<vmem>>, vector<1x8x512xf32>,
    return
  }
  func.func @transform_0(%arg0: i32) -> (i32, i32, i32) {
    %c0_i32 = arith.constant 0 : i32
    %c0_i32_0 = arith.constant 0 : i32
    %c0_i32_1 = arith.constant 0 : i32
    return %arg0, %c0_i32, %c0_i32_0 : i32, i32, i32
  }
  func.func @transform_1(%arg0: i32) -> (i32, i32) {
    %c0_i32 = arith.constant 0 : i32
    %c0_i32_0 = arith.constant 0 : i32
    %c0_i32_1 = arith.constant 0 : i32
    return %c0_i32, %c0_i32_0 : i32, i32
  }
  func.func @transform_2(%arg0: i32) -> (i32, i32) {
    %c0_i32 = arith.constant 0 : i32
    %c0_i32_0 = arith.constant 0 : i32
    %c0_i32_1 = arith.constant 0 : i32
    return %c0_i32, %c0_i32_0 : i32, i32
  }
  func.func @transform_3(%arg0: i32) -> (i32, i32) {
    %c0_i32 = arith.constant 0 : i32
    %c0_i32_0 = arith.constant 0 : i32
    %c0_i32_1 = arith.constant 0 : i32
    return %c0_i32, %c0_i32_0 : i32, i32
  }
  func.func @transform_4(%arg0: i32) -> (i32, i32) {
    %c0_i32 = arith.constant 0 : i32
    %c0_i32_0 = arith.constant 0 : i32
    %c0_i32_1 = arith.constant 0 : i32
    return %c0_i32, %c0_i32_0 : i32, i32
  }
  func.func @transform_5(%arg0: i32) -> (i32, i32) {
    %c0_i32 = arith.constant 0 : i32
    %c0_i32_0 = arith.constant 0 : i32
    %c0_i32_1 = arith.constant 0 : i32
    return %c0_i32, %c0_i32_0 : i32, i32
  }
  func.func @transform_6(%arg0: i32) -> (i32, i32) {
    %c0_i32 = arith.constant 0 : i32
    %c0_i32_0 = arith.constant 0 : i32
    %c0_i32_1 = arith.constant 0 : i32
    return %c0_i32, %c0_i32_0 : i32, i32
  }
  func.func @transform_7(%arg0: i32) -> (i32, i32) {
    %c0_i32 = arith.constant 0 : i32
    %c0_i32_0 = arith.constant 0 : i32
    %c0_i32_1 = arith.constant 0 : i32
    return %c0_i32, %c0_i32_0 : i32, i32
  }
  func.func @transform_8(%arg0: i32) -> (i32, i32) {
    %c0_i32 = arith.constant 0 : i32
    %c0_i32_0 = arith.constant 0 : i32
    %c0_i32_1 = arith.constant 0 : i32
    return %c0_i32, %c0_i32_0 : i32, i32
  }
  func.func @transform_9(%arg0: i32) -> (i32, i32) {
    %c0_i32 = arith.constant 0 : i32
    %c0_i32_0 = arith.constant 0 : i32
    %c0_i32_1 = arith.constant 0 : i32
    return %c0_i32, %c0_i32_0 : i32, i32
  }
  func.func @transform_10(%arg0: i32) -> (i32, i32) {
    %c0_i32 = arith.constant 0 : i32
    %c0_i32_0 = arith.constant 0 : i32
    %c0_i32_1 = arith.constant 0 : i32
    return %c0_i32, %c0_i32_0 : i32, i32
  }
  func.func @transform_11(%arg0: i32) -> (i32, i32) {
    %c0_i32 = arith.constant 0 : i32
    %c0_i32_0 = arith.constant 0 : i32
    %c0_i32_1 = arith.constant 0 : i32
    return %c0_i32, %c0_i32_0 : i32, i32
  }
  func.func @transform_12(%arg0: i32) -> (i32, i32) {
    %c0_i32 = arith.constant 0 : i32
    %c0_i32_0 = arith.constant 0 : i32
    %c0_i32_1 = arith.constant 0 : i32
    return %c0_i32, %c0_i32_0 : i32, i32
  }
  func.func @transform_13(%arg0: i32) -> (i32, i32) {
    %c0_i32 = arith.constant 0 : i32
    %c0_i32_0 = arith.constant 0 : i32
    %c0_i32_1 = arith.constant 0 : i32
    return %c0_i32, %c0_i32_0 : i32, i32
  }
  func.func @transform_14(%arg0: i32) -> (i32, i32) {
    %c0_i32 = arith.constant 0 : i32
    %c0_i32_0 = arith.constant 0 : i32
    %c0_i32_1 = arith.constant 0 : i32
    return %c0_i32, %c0_i32_0 : i32, i32
  }
  func.func @transform_15(%arg0: i32) -> (i32, i32) {
    %c0_i32 = arith.constant 0 : i32
    %c0_i32_0 = arith.constant 0 : i32
    %c0_i32_1 = arith.constant 0 : i32
    return %c0_i32, %c0_i32_0 : i32, i32
  }
  func.func @transform_16(%arg0: i32) -> (i32, i32) {
    %c0_i32 = arith.constant 0 : i32
    %c0_i32_0 = arith.constant 0 : i32
    %c0_i32_1 = arith.constant 0 : i32
    return %c0_i32, %c0_i32_0 : i32, i32
  }
  func.func @transform_17(%arg0: i32) -> (i32, i32) {
    %c0_i32 = arith.constant 0 : i32
    %c0_i32_0 = arith.constant 0 : i32
    %c0_i32_1 = arith.constant 0 : i32
    return %c0_i32, %c0_i32_0 : i32, i32
  }
  func.func @transform_18(%arg0: i32) -> (i32, i32, i32) {
    %c0_i32 = arith.constant 0 : i32
    %c0_i32_0 = arith.constant 0 : i32
    %c0_i32_1 = arith.constant 0 : i32
    return %arg0, %c0_i32, %c0_i32_0 : i32, i32, i32
  }
  func.func @transform_19(%arg0: i32) -> (i32, i32, i32) {
    %c0_i32 = arith.constant 0 : i32
    %c0_i32_0 = arith.constant 0 : i32
    %c0_i32_1 = arith.constant 0 : i32
    return %arg0, %c0_i32, %c0_i32_0 : i32, i32, i32
  }
}

module attributes {stable_mosaic.version = 11 : i64} {
  func.func @_stage2_kernel(%arg0: i32, %arg1: memref<1x32x128xf32, #tpu.memory_space<vmem>>, %arg2: memref<12x32xbf16, #tpu.memory_space<vmem>>, %arg3: memref<12x12xbf16, #tpu.memory_space<vmem>>, %arg4: memref<12x1xf32, #tpu.memory_space<vmem>>, %arg5: memref<12x1xf32, #tpu.memory_space<vmem>>, %arg6: memref<12x108xbf16, #tpu.memory_space<vmem>>, %arg7: memref<12x1xf32, #tpu.memory_space<vmem>>, %arg8: memref<12x1xf32, #tpu.memory_space<vmem>>, %arg9: memref<128x32xbf16, #tpu.memory_space<vmem>>, %arg10: memref<12x1xf32, #tpu.memory_space<vmem>>, %arg11: memref<12x1xf32, #tpu.memory_space<vmem>>, %arg12: memref<32x128xbf16, #tpu.memory_space<vmem>>, %arg13: memref<12x1xf32, #tpu.memory_space<vmem>>, %arg14: memref<12x1xf32, #tpu.memory_space<vmem>>, %arg15: memref<12x108xbf16, #tpu.memory_space<vmem>>, %arg16: memref<9x128xf32, #tpu.memory_space<vmem>>, %arg17: memref<12x1xf32, #tpu.memory_space<vmem>>, %arg18: memref<12x1xf32, #tpu.memory_space<vmem>>, %arg19: memref<32x12xbf16, #tpu.memory_space<vmem>>, %arg20: memref<1x32x128xf32, #tpu.memory_space<vmem>>) attributes {dimension_semantics = [#tpu.dimension_semantics<parallel>], iteration_bounds = array<i64: 2>, scalar_prefetch = 0 : i64, scratch_operands = 0 : i64, tpu.core_type = #tpu.core_type<tc>, window_params = [{transform_indices = @transform_0, window_bounds = array<i64: 1, 32, 128>}, {pipeline_mode = #tpu.pipeline_mode<synchronous>, transform_indices = @transform_1, window_bounds = array<i64: 12, 32>}, {pipeline_mode = #tpu.pipeline_mode<synchronous>, transform_indices = @transform_2, window_bounds = array<i64: 12, 12>}, {pipeline_mode = #tpu.pipeline_mode<synchronous>, transform_indices = @transform_3, window_bounds = array<i64: 12, 1>}, {pipeline_mode = #tpu.pipeline_mode<synchronous>, transform_indices = @transform_4, window_bounds = array<i64: 12, 1>}, {pipeline_mode = #tpu.pipeline_mode<synchronous>, transform_indices = @transform_5, window_bounds = array<i64: 12, 108>}, {pipeline_mode = #tpu.pipeline_mode<synchronous>, transform_indices = @transform_6, window_bounds = array<i64: 12, 1>}, {pipeline_mode = #tpu.pipeline_mode<synchronous>, transform_indices = @transform_7, window_bounds = array<i64: 12, 1>}, {pipeline_mode = #tpu.pipeline_mode<synchronous>, transform_indices = @transform_8, window_bounds = array<i64: 128, 32>}, {pipeline_mode = #tpu.pipeline_mode<synchronous>, transform_indices = @transform_9, window_bounds = array<i64: 12, 1>}, {pipeline_mode = #tpu.pipeline_mode<synchronous>, transform_indices = @transform_10, window_bounds = array<i64: 12, 1>}, {pipeline_mode = #tpu.pipeline_mode<synchronous>, transform_indices = @transform_11, window_bounds = array<i64: 32, 128>}, {pipeline_mode = #tpu.pipeline_mode<synchronous>, transform_indices = @transform_12, window_bounds = array<i64: 12, 1>}, {pipeline_mode = #tpu.pipeline_mode<synchronous>, transform_indices = @transform_13, window_bounds = array<i64: 12, 1>}, {pipeline_mode = #tpu.pipeline_mode<synchronous>, transform_indices = @transform_14, window_bounds = array<i64: 12, 108>}, {pipeline_mode = #tpu.pipeline_mode<synchronous>, transform_indices = @transform_15, window_bounds = array<i64: 9, 128>}, {pipeline_mode = #tpu.pipeline_mode<synchronous>, transform_indices = @transform_16, window_bounds = array<i64: 12, 1>}, {pipeline_mode = #tpu.pipeline_mode<synchronous>, transform_indices = @transform_17, window_bounds = array<i64: 12, 1>}, {pipeline_mode = #tpu.pipeline_mode<synchronous>, transform_indices = @transform_18, window_bounds = array<i64: 32, 12>}, {transform_indices = @transform_19, window_bounds = array<i64: 1, 32, 128>}]} {
    %c0 = arith.constant 0 : index
    %c0_0 = arith.constant 0 : index
    %0 = vector.load %arg2[%c0, %c0_0] : memref<12x32xbf16, #tpu.memory_space<vmem>>, vector<12x32xbf16>
    %c0_1 = arith.constant 0 : index
    %c0_2 = arith.constant 0 : index
    %c0_3 = arith.constant 0 : index
    %1 = vector.load %arg1[%c0_1, %c0_2, %c0_3] : memref<1x32x128xf32, #tpu.memory_space<vmem>>, vector<1x32x128xf32>
    %2 = vector.shape_cast %1 : vector<1x32x128xf32> to vector<32x128xf32>
    %3 = arith.truncf %2 : vector<32x128xf32> to vector<32x128xbf16>
    %cst = arith.constant dense<0.000000e+00> : vector<12x128xf32>
    %4 = tpu.matmul %0, %3, %cst {dimension_numbers = #tpu.dot_dimension_numbers<[1], [0], [0], [1], [0, 0, 1, 1], [], []>} : vector<12x32xbf16>, vector<32x128xbf16>, vector<12x128xf32> -> vector<12x128xf32>
    %c0_4 = arith.constant 0 : index
    %c0_5 = arith.constant 0 : index
    %5 = vector.load %arg3[%c0_4, %c0_5] : memref<12x12xbf16, #tpu.memory_space<vmem>>, vector<12x12xbf16>
    %6 = arith.truncf %4 : vector<12x128xf32> to vector<12x128xbf16>
    %cst_6 = arith.constant dense<0.000000e+00> : vector<12x128xf32>
    %7 = tpu.matmul %5, %6, %cst_6 {dimension_numbers = #tpu.dot_dimension_numbers<[1], [0], [0], [1], [0, 0, 1, 1], [], []>} : vector<12x12xbf16>, vector<12x128xbf16>, vector<12x128xf32> -> vector<12x128xf32>
    %c0_7 = arith.constant 0 : index
    %c0_8 = arith.constant 0 : index
    %8 = vector.load %arg4[%c0_7, %c0_8] : memref<12x1xf32, #tpu.memory_space<vmem>>, vector<12x1xf32>
    %c0_9 = arith.constant 0 : index
    %c0_10 = arith.constant 0 : index
    %9 = vector.load %arg5[%c0_9, %c0_10] : memref<12x1xf32, #tpu.memory_space<vmem>>, vector<12x1xf32>
    %cst_11 = arith.constant dense<0.000000e+00> : vector<12xf32>
    %10 = vector.multi_reduction <add>, %4, %cst_11 [1] : vector<12x128xf32> to vector<12xf32>
    %11 = vector.shape_cast %10 : vector<12xf32> to vector<12x1xf32>
    %cst_12 = arith.constant 1.280000e+02 : f32
    %12 = vector.broadcast %cst_12 : f32 to vector<12x1xf32>
    %13 = arith.divf %11, %12 : vector<12x1xf32>
    %14 = vector.broadcast %13 : vector<12x1xf32> to vector<12x128xf32>
    %15 = arith.subf %4, %14 : vector<12x128xf32>
    %16 = arith.mulf %15, %15 : vector<12x128xf32>
    %cst_13 = arith.constant dense<0.000000e+00> : vector<12xf32>
    %17 = vector.multi_reduction <add>, %16, %cst_13 [1] : vector<12x128xf32> to vector<12xf32>
    %18 = vector.shape_cast %17 : vector<12xf32> to vector<12x1xf32>
    %cst_14 = arith.constant 1.280000e+02 : f32
    %19 = vector.broadcast %cst_14 : f32 to vector<12x1xf32>
    %20 = arith.divf %18, %19 : vector<12x1xf32>
    %cst_15 = arith.constant 9.99999974E-6 : f32
    %21 = vector.broadcast %cst_15 : f32 to vector<12x1xf32>
    %22 = arith.addf %20, %21 : vector<12x1xf32>
    %23 = math.rsqrt %22 : vector<12x1xf32>
    %24 = vector.broadcast %23 : vector<12x1xf32> to vector<12x128xf32>
    %25 = arith.mulf %15, %24 : vector<12x128xf32>
    %26 = vector.broadcast %8 : vector<12x1xf32> to vector<12x128xf32>
    %27 = arith.mulf %25, %26 : vector<12x128xf32>
    %28 = vector.broadcast %9 : vector<12x1xf32> to vector<12x128xf32>
    %29 = arith.addf %27, %28 : vector<12x128xf32>
    %cst_16 = arith.constant 0.000000e+00 : f32
    %30 = vector.broadcast %cst_16 : f32 to vector<12x128xf32>
    %31 = arith.maximumf %29, %30 : vector<12x128xf32>
    %c0_17 = arith.constant 0 : index
    %c0_18 = arith.constant 0 : index
    %32 = vector.load %arg6[%c0_17, %c0_18] : memref<12x108xbf16, #tpu.memory_space<vmem>>, vector<12x108xbf16>
    %cst_19 = arith.constant 0.000000e+00 : f32
    %33 = vector.broadcast %cst_19 : f32 to vector<12x17xf32>
    %34 = tpu.concatenate %33, %31, %33 in 1 : vector<12x17xf32>, vector<12x128xf32>, vector<12x17xf32> -> vector<12x162xf32>
    %35 = vector.extract_strided_slice %34 {offsets = [0, 0], sizes = [12, 128], strides = [1, 1]} : vector<12x162xf32> to vector<12x128xf32>
    %c0_20 = arith.constant 0 : index
    %c0_21 = arith.constant 0 : index
    %36 = vector.load %arg16[%c0_20, %c0_21] : memref<9x128xf32, #tpu.memory_space<vmem>>, vector<1x128xf32>
    %37 = vector.broadcast %36 : vector<1x128xf32> to vector<12x128xf32>
    %38 = arith.mulf %35, %37 : vector<12x128xf32>
    %39 = vector.extract_strided_slice %34 {offsets = [0, 1], sizes = [12, 128], strides = [1, 1]} : vector<12x162xf32> to vector<12x128xf32>
    %c1 = arith.constant 1 : index
    %c0_22 = arith.constant 0 : index
    %40 = vector.load %arg16[%c1, %c0_22] : memref<9x128xf32, #tpu.memory_space<vmem>>, vector<1x128xf32>
    %41 = vector.broadcast %40 : vector<1x128xf32> to vector<12x128xf32>
    %42 = arith.mulf %39, %41 : vector<12x128xf32>
    %43 = vector.extract_strided_slice %34 {offsets = [0, 2], sizes = [12, 128], strides = [1, 1]} : vector<12x162xf32> to vector<12x128xf32>
    %c2 = arith.constant 2 : index
    %c0_23 = arith.constant 0 : index
    %44 = vector.load %arg16[%c2, %c0_23] : memref<9x128xf32, #tpu.memory_space<vmem>>, vector<1x128xf32>
    %45 = vector.broadcast %44 : vector<1x128xf32> to vector<12x128xf32>
    %46 = arith.mulf %43, %45 : vector<12x128xf32>
    %47 = vector.extract_strided_slice %34 {offsets = [0, 16], sizes = [12, 128], strides = [1, 1]} : vector<12x162xf32> to vector<12x128xf32>
    %c3 = arith.constant 3 : index
    %c0_24 = arith.constant 0 : index
    %48 = vector.load %arg16[%c3, %c0_24] : memref<9x128xf32, #tpu.memory_space<vmem>>, vector<1x128xf32>
    %49 = vector.broadcast %48 : vector<1x128xf32> to vector<12x128xf32>
    %50 = arith.mulf %47, %49 : vector<12x128xf32>
    %51 = vector.extract_strided_slice %34 {offsets = [0, 17], sizes = [12, 128], strides = [1, 1]} : vector<12x162xf32> to vector<12x128xf32>
    %52 = vector.extract_strided_slice %34 {offsets = [0, 18], sizes = [12, 128], strides = [1, 1]} : vector<12x162xf32> to vector<12x128xf32>
    %c5 = arith.constant 5 : index
    %c0_25 = arith.constant 0 : index
    %53 = vector.load %arg16[%c5, %c0_25] : memref<9x128xf32, #tpu.memory_space<vmem>>, vector<1x128xf32>
    %54 = vector.broadcast %53 : vector<1x128xf32> to vector<12x128xf32>
    %55 = arith.mulf %52, %54 : vector<12x128xf32>
    %56 = vector.extract_strided_slice %34 {offsets = [0, 32], sizes = [12, 128], strides = [1, 1]} : vector<12x162xf32> to vector<12x128xf32>
    %c6 = arith.constant 6 : index
    %c0_26 = arith.constant 0 : index
    %57 = vector.load %arg16[%c6, %c0_26] : memref<9x128xf32, #tpu.memory_space<vmem>>, vector<1x128xf32>
    %58 = vector.broadcast %57 : vector<1x128xf32> to vector<12x128xf32>
    %59 = arith.mulf %56, %58 : vector<12x128xf32>
    %60 = vector.extract_strided_slice %34 {offsets = [0, 33], sizes = [12, 128], strides = [1, 1]} : vector<12x162xf32> to vector<12x128xf32>
    %c7 = arith.constant 7 : index
    %c0_27 = arith.constant 0 : index
    %61 = vector.load %arg16[%c7, %c0_27] : memref<9x128xf32, #tpu.memory_space<vmem>>, vector<1x128xf32>
    %62 = vector.broadcast %61 : vector<1x128xf32> to vector<12x128xf32>
    %63 = arith.mulf %60, %62 : vector<12x128xf32>
    %64 = vector.extract_strided_slice %34 {offsets = [0, 34], sizes = [12, 128], strides = [1, 1]} : vector<12x162xf32> to vector<12x128xf32>
    %c8 = arith.constant 8 : index
    %c0_28 = arith.constant 0 : index
    %65 = vector.load %arg16[%c8, %c0_28] : memref<9x128xf32, #tpu.memory_space<vmem>>, vector<1x128xf32>
    %66 = vector.broadcast %65 : vector<1x128xf32> to vector<12x128xf32>
    %67 = arith.mulf %64, %66 : vector<12x128xf32>
    %68 = tpu.concatenate %38, %42, %46, %50, %51, %55, %59, %63, %67 in 0 : vector<12x128xf32>, vector<12x128xf32>, vector<12x128xf32>, vector<12x128xf32>, vector<12x128xf32>, vector<12x128xf32>, vector<12x128xf32>, vector<12x128xf32>, vector<12x128xf32> -> vector<108x128xf32>
    %69 = arith.truncf %68 : vector<108x128xf32> to vector<108x128xbf16>
    %cst_29 = arith.constant dense<0.000000e+00> : vector<12x128xf32>
    %70 = tpu.matmul %32, %69, %cst_29 {dimension_numbers = #tpu.dot_dimension_numbers<[1], [0], [0], [1], [0, 0, 1, 1], [], []>} : vector<12x108xbf16>, vector<108x128xbf16>, vector<12x128xf32> -> vector<12x128xf32>
    %c0_30 = arith.constant 0 : index
    %c0_31 = arith.constant 0 : index
    %71 = vector.load %arg7[%c0_30, %c0_31] : memref<12x1xf32, #tpu.memory_space<vmem>>, vector<12x1xf32>
    %c0_32 = arith.constant 0 : index
    %c0_33 = arith.constant 0 : index
    %72 = vector.load %arg8[%c0_32, %c0_33] : memref<12x1xf32, #tpu.memory_space<vmem>>, vector<12x1xf32>
    %cst_34 = arith.constant dense<0.000000e+00> : vector<12xf32>
    %73 = vector.multi_reduction <add>, %70, %cst_34 [1] : vector<12x128xf32> to vector<12xf32>
    %74 = vector.shape_cast %73 : vector<12xf32> to vector<12x1xf32>
    %cst_35 = arith.constant 1.280000e+02 : f32
    %75 = vector.broadcast %cst_35 : f32 to vector<12x1xf32>
    %76 = arith.divf %74, %75 : vector<12x1xf32>
    %77 = vector.broadcast %76 : vector<12x1xf32> to vector<12x128xf32>
    %78 = arith.subf %70, %77 : vector<12x128xf32>
    %79 = arith.mulf %78, %78 : vector<12x128xf32>
    %cst_36 = arith.constant dense<0.000000e+00> : vector<12xf32>
    %80 = vector.multi_reduction <add>, %79, %cst_36 [1] : vector<12x128xf32> to vector<12xf32>
    %81 = vector.shape_cast %80 : vector<12xf32> to vector<12x1xf32>
    %cst_37 = arith.constant 1.280000e+02 : f32
    %82 = vector.broadcast %cst_37 : f32 to vector<12x1xf32>
    %83 = arith.divf %81, %82 : vector<12x1xf32>
    %cst_38 = arith.constant 9.99999974E-6 : f32
    %84 = vector.broadcast %cst_38 : f32 to vector<12x1xf32>
    %85 = arith.addf %83, %84 : vector<12x1xf32>
    %86 = math.rsqrt %85 : vector<12x1xf32>
    %87 = vector.broadcast %86 : vector<12x1xf32> to vector<12x128xf32>
    %88 = arith.mulf %78, %87 : vector<12x128xf32>
    %89 = vector.broadcast %71 : vector<12x1xf32> to vector<12x128xf32>
    %90 = arith.mulf %88, %89 : vector<12x128xf32>
    %91 = vector.broadcast %72 : vector<12x1xf32> to vector<12x128xf32>
    %92 = arith.addf %90, %91 : vector<12x128xf32>
    %cst_39 = arith.constant 0.000000e+00 : f32
    %93 = vector.broadcast %cst_39 : f32 to vector<12x128xf32>
    %94 = arith.maximumf %92, %93 : vector<12x128xf32>
    %c0_40 = arith.constant 0 : index
    %c0_41 = arith.constant 0 : index
    %95 = vector.load %arg9[%c0_40, %c0_41] : memref<128x32xbf16, #tpu.memory_space<vmem>>, vector<128x32xbf16>
    %96 = arith.truncf %94 : vector<12x128xf32> to vector<12x128xbf16>
    %cst_42 = arith.constant dense<0.000000e+00> : vector<12x32xf32>
    %97 = tpu.matmul %96, %95, %cst_42 {dimension_numbers = #tpu.dot_dimension_numbers<[1], [0], [0], [1], [0, 0, 1, 1], [], []>} : vector<12x128xbf16>, vector<128x32xbf16>, vector<12x32xf32> -> vector<12x32xf32>
    %c0_43 = arith.constant 0 : index
    %c0_44 = arith.constant 0 : index
    %98 = vector.load %arg10[%c0_43, %c0_44] : memref<12x1xf32, #tpu.memory_space<vmem>>, vector<12x1xf32>
    %c0_45 = arith.constant 0 : index
    %c0_46 = arith.constant 0 : index
    %99 = vector.load %arg11[%c0_45, %c0_46] : memref<12x1xf32, #tpu.memory_space<vmem>>, vector<12x1xf32>
    %cst_47 = arith.constant dense<0.000000e+00> : vector<12xf32>
    %100 = vector.multi_reduction <add>, %97, %cst_47 [1] : vector<12x32xf32> to vector<12xf32>
    %101 = vector.shape_cast %100 : vector<12xf32> to vector<12x1xf32>
    %cst_48 = arith.constant 3.200000e+01 : f32
    %102 = vector.broadcast %cst_48 : f32 to vector<12x1xf32>
    %103 = arith.divf %101, %102 : vector<12x1xf32>
    %104 = vector.broadcast %103 : vector<12x1xf32> to vector<12x32xf32>
    %105 = arith.subf %97, %104 : vector<12x32xf32>
    %106 = arith.mulf %105, %105 : vector<12x32xf32>
    %cst_49 = arith.constant dense<0.000000e+00> : vector<12xf32>
    %107 = vector.multi_reduction <add>, %106, %cst_49 [1] : vector<12x32xf32> to vector<12xf32>
    %108 = vector.shape_cast %107 : vector<12xf32> to vector<12x1xf32>
    %cst_50 = arith.constant 3.200000e+01 : f32
    %109 = vector.broadcast %cst_50 : f32 to vector<12x1xf32>
    %110 = arith.divf %108, %109 : vector<12x1xf32>
    %cst_51 = arith.constant 9.99999974E-6 : f32
    %111 = vector.broadcast %cst_51 : f32 to vector<12x1xf32>
    %112 = arith.addf %110, %111 : vector<12x1xf32>
    %113 = math.rsqrt %112 : vector<12x1xf32>
    %114 = vector.broadcast %113 : vector<12x1xf32> to vector<12x32xf32>
    %115 = arith.mulf %105, %114 : vector<12x32xf32>
    %116 = vector.broadcast %98 : vector<12x1xf32> to vector<12x32xf32>
    %117 = arith.mulf %115, %116 : vector<12x32xf32>
    %118 = vector.broadcast %99 : vector<12x1xf32> to vector<12x32xf32>
    %119 = arith.addf %117, %118 : vector<12x32xf32>
    %cst_52 = arith.constant 0.000000e+00 : f32
    %120 = vector.broadcast %cst_52 : f32 to vector<12x32xf32>
    %121 = arith.maximumf %119, %120 : vector<12x32xf32>
    %c0_53 = arith.constant 0 : index
    %c0_54 = arith.constant 0 : index
    %122 = vector.load %arg12[%c0_53, %c0_54] : memref<32x128xbf16, #tpu.memory_space<vmem>>, vector<32x128xbf16>
    %123 = arith.truncf %121 : vector<12x32xf32> to vector<12x32xbf16>
    %cst_55 = arith.constant dense<0.000000e+00> : vector<12x128xf32>
    %124 = tpu.matmul %123, %122, %cst_55 {dimension_numbers = #tpu.dot_dimension_numbers<[1], [0], [0], [1], [0, 0, 1, 1], [], []>} : vector<12x32xbf16>, vector<32x128xbf16>, vector<12x128xf32> -> vector<12x128xf32>
    %125 = arith.addf %70, %124 : vector<12x128xf32>
    %c0_56 = arith.constant 0 : index
    %c0_57 = arith.constant 0 : index
    %126 = vector.load %arg13[%c0_56, %c0_57] : memref<12x1xf32, #tpu.memory_space<vmem>>, vector<12x1xf32>
    %c0_58 = arith.constant 0 : index
    %c0_59 = arith.constant 0 : index
    %127 = vector.load %arg14[%c0_58, %c0_59] : memref<12x1xf32, #tpu.memory_space<vmem>>, vector<12x1xf32>
    %cst_60 = arith.constant dense<0.000000e+00> : vector<12xf32>
    %128 = vector.multi_reduction <add>, %125, %cst_60 [1] : vector<12x128xf32> to vector<12xf32>
    %129 = vector.shape_cast %128 : vector<12xf32> to vector<12x1xf32>
    %cst_61 = arith.constant 1.280000e+02 : f32
    %130 = vector.broadcast %cst_61 : f32 to vector<12x1xf32>
    %131 = arith.divf %129, %130 : vector<12x1xf32>
    %132 = vector.broadcast %131 : vector<12x1xf32> to vector<12x128xf32>
    %133 = arith.subf %125, %132 : vector<12x128xf32>
    %134 = arith.mulf %133, %133 : vector<12x128xf32>
    %cst_62 = arith.constant dense<0.000000e+00> : vector<12xf32>
    %135 = vector.multi_reduction <add>, %134, %cst_62 [1] : vector<12x128xf32> to vector<12xf32>
    %136 = vector.shape_cast %135 : vector<12xf32> to vector<12x1xf32>
    %cst_63 = arith.constant 1.280000e+02 : f32
    %137 = vector.broadcast %cst_63 : f32 to vector<12x1xf32>
    %138 = arith.divf %136, %137 : vector<12x1xf32>
    %cst_64 = arith.constant 9.99999974E-6 : f32
    %139 = vector.broadcast %cst_64 : f32 to vector<12x1xf32>
    %140 = arith.addf %138, %139 : vector<12x1xf32>
    %141 = math.rsqrt %140 : vector<12x1xf32>
    %142 = vector.broadcast %141 : vector<12x1xf32> to vector<12x128xf32>
    %143 = arith.mulf %133, %142 : vector<12x128xf32>
    %144 = vector.broadcast %126 : vector<12x1xf32> to vector<12x128xf32>
    %145 = arith.mulf %143, %144 : vector<12x128xf32>
    %146 = vector.broadcast %127 : vector<12x1xf32> to vector<12x128xf32>
    %147 = arith.addf %145, %146 : vector<12x128xf32>
    %cst_65 = arith.constant 0.000000e+00 : f32
    %148 = vector.broadcast %cst_65 : f32 to vector<12x128xf32>
    %149 = arith.maximumf %147, %148 : vector<12x128xf32>
    %c0_66 = arith.constant 0 : index
    %c0_67 = arith.constant 0 : index
    %150 = vector.load %arg15[%c0_66, %c0_67] : memref<12x108xbf16, #tpu.memory_space<vmem>>, vector<12x108xbf16>
    %cst_68 = arith.constant 0.000000e+00 : f32
    %151 = vector.broadcast %cst_68 : f32 to vector<12x17xf32>
    %152 = tpu.concatenate %151, %149, %151 in 1 : vector<12x17xf32>, vector<12x128xf32>, vector<12x17xf32> -> vector<12x162xf32>
    %153 = vector.extract_strided_slice %152 {offsets = [0, 0], sizes = [12, 128], strides = [1, 1]} : vector<12x162xf32> to vector<12x128xf32>
    %c0_69 = arith.constant 0 : index
    %c0_70 = arith.constant 0 : index
    %154 = vector.load %arg16[%c0_69, %c0_70] : memref<9x128xf32, #tpu.memory_space<vmem>>, vector<1x128xf32>
    %155 = vector.broadcast %154 : vector<1x128xf32> to vector<12x128xf32>
    %156 = arith.mulf %153, %155 : vector<12x128xf32>
    %157 = vector.extract_strided_slice %152 {offsets = [0, 1], sizes = [12, 128], strides = [1, 1]} : vector<12x162xf32> to vector<12x128xf32>
    %c1_71 = arith.constant 1 : index
    %c0_72 = arith.constant 0 : index
    %158 = vector.load %arg16[%c1_71, %c0_72] : memref<9x128xf32, #tpu.memory_space<vmem>>, vector<1x128xf32>
    %159 = vector.broadcast %158 : vector<1x128xf32> to vector<12x128xf32>
    %160 = arith.mulf %157, %159 : vector<12x128xf32>
    %161 = vector.extract_strided_slice %152 {offsets = [0, 2], sizes = [12, 128], strides = [1, 1]} : vector<12x162xf32> to vector<12x128xf32>
    %c2_73 = arith.constant 2 : index
    %c0_74 = arith.constant 0 : index
    %162 = vector.load %arg16[%c2_73, %c0_74] : memref<9x128xf32, #tpu.memory_space<vmem>>, vector<1x128xf32>
    %163 = vector.broadcast %162 : vector<1x128xf32> to vector<12x128xf32>
    %164 = arith.mulf %161, %163 : vector<12x128xf32>
    %165 = vector.extract_strided_slice %152 {offsets = [0, 16], sizes = [12, 128], strides = [1, 1]} : vector<12x162xf32> to vector<12x128xf32>
    %c3_75 = arith.constant 3 : index
    %c0_76 = arith.constant 0 : index
    %166 = vector.load %arg16[%c3_75, %c0_76] : memref<9x128xf32, #tpu.memory_space<vmem>>, vector<1x128xf32>
    %167 = vector.broadcast %166 : vector<1x128xf32> to vector<12x128xf32>
    %168 = arith.mulf %165, %167 : vector<12x128xf32>
    %169 = vector.extract_strided_slice %152 {offsets = [0, 17], sizes = [12, 128], strides = [1, 1]} : vector<12x162xf32> to vector<12x128xf32>
    %170 = vector.extract_strided_slice %152 {offsets = [0, 18], sizes = [12, 128], strides = [1, 1]} : vector<12x162xf32> to vector<12x128xf32>
    %c5_77 = arith.constant 5 : index
    %c0_78 = arith.constant 0 : index
    %171 = vector.load %arg16[%c5_77, %c0_78] : memref<9x128xf32, #tpu.memory_space<vmem>>, vector<1x128xf32>
    %172 = vector.broadcast %171 : vector<1x128xf32> to vector<12x128xf32>
    %173 = arith.mulf %170, %172 : vector<12x128xf32>
    %174 = vector.extract_strided_slice %152 {offsets = [0, 32], sizes = [12, 128], strides = [1, 1]} : vector<12x162xf32> to vector<12x128xf32>
    %c6_79 = arith.constant 6 : index
    %c0_80 = arith.constant 0 : index
    %175 = vector.load %arg16[%c6_79, %c0_80] : memref<9x128xf32, #tpu.memory_space<vmem>>, vector<1x128xf32>
    %176 = vector.broadcast %175 : vector<1x128xf32> to vector<12x128xf32>
    %177 = arith.mulf %174, %176 : vector<12x128xf32>
    %178 = vector.extract_strided_slice %152 {offsets = [0, 33], sizes = [12, 128], strides = [1, 1]} : vector<12x162xf32> to vector<12x128xf32>
    %c7_81 = arith.constant 7 : index
    %c0_82 = arith.constant 0 : index
    %179 = vector.load %arg16[%c7_81, %c0_82] : memref<9x128xf32, #tpu.memory_space<vmem>>, vector<1x128xf32>
    %180 = vector.broadcast %179 : vector<1x128xf32> to vector<12x128xf32>
    %181 = arith.mulf %178, %180 : vector<12x128xf32>
    %182 = vector.extract_strided_slice %152 {offsets = [0, 34], sizes = [12, 128], strides = [1, 1]} : vector<12x162xf32> to vector<12x128xf32>
    %c8_83 = arith.constant 8 : index
    %c0_84 = arith.constant 0 : index
    %183 = vector.load %arg16[%c8_83, %c0_84] : memref<9x128xf32, #tpu.memory_space<vmem>>, vector<1x128xf32>
    %184 = vector.broadcast %183 : vector<1x128xf32> to vector<12x128xf32>
    %185 = arith.mulf %182, %184 : vector<12x128xf32>
    %186 = tpu.concatenate %156, %160, %164, %168, %169, %173, %177, %181, %185 in 0 : vector<12x128xf32>, vector<12x128xf32>, vector<12x128xf32>, vector<12x128xf32>, vector<12x128xf32>, vector<12x128xf32>, vector<12x128xf32>, vector<12x128xf32>, vector<12x128xf32> -> vector<108x128xf32>
    %187 = arith.truncf %186 : vector<108x128xf32> to vector<108x128xbf16>
    %cst_85 = arith.constant dense<0.000000e+00> : vector<12x128xf32>
    %188 = tpu.matmul %150, %187, %cst_85 {dimension_numbers = #tpu.dot_dimension_numbers<[1], [0], [0], [1], [0, 0, 1, 1], [], []>} : vector<12x108xbf16>, vector<108x128xbf16>, vector<12x128xf32> -> vector<12x128xf32>
    %189 = arith.addf %188, %7 : vector<12x128xf32>
    %c0_86 = arith.constant 0 : index
    %c0_87 = arith.constant 0 : index
    %190 = vector.load %arg17[%c0_86, %c0_87] : memref<12x1xf32, #tpu.memory_space<vmem>>, vector<12x1xf32>
    %c0_88 = arith.constant 0 : index
    %c0_89 = arith.constant 0 : index
    %191 = vector.load %arg18[%c0_88, %c0_89] : memref<12x1xf32, #tpu.memory_space<vmem>>, vector<12x1xf32>
    %cst_90 = arith.constant dense<0.000000e+00> : vector<12xf32>
    %192 = vector.multi_reduction <add>, %189, %cst_90 [1] : vector<12x128xf32> to vector<12xf32>
    %193 = vector.shape_cast %192 : vector<12xf32> to vector<12x1xf32>
    %cst_91 = arith.constant 1.280000e+02 : f32
    %194 = vector.broadcast %cst_91 : f32 to vector<12x1xf32>
    %195 = arith.divf %193, %194 : vector<12x1xf32>
    %196 = vector.broadcast %195 : vector<12x1xf32> to vector<12x128xf32>
    %197 = arith.subf %189, %196 : vector<12x128xf32>
    %198 = arith.mulf %197, %197 : vector<12x128xf32>
    %cst_92 = arith.constant dense<0.000000e+00> : vector<12xf32>
    %199 = vector.multi_reduction <add>, %198, %cst_92 [1] : vector<12x128xf32> to vector<12xf32>
    %200 = vector.shape_cast %199 : vector<12xf32> to vector<12x1xf32>
    %cst_93 = arith.constant 1.280000e+02 : f32
    %201 = vector.broadcast %cst_93 : f32 to vector<12x1xf32>
    %202 = arith.divf %200, %201 : vector<12x1xf32>
    %cst_94 = arith.constant 9.99999974E-6 : f32
    %203 = vector.broadcast %cst_94 : f32 to vector<12x1xf32>
    %204 = arith.addf %202, %203 : vector<12x1xf32>
    %205 = math.rsqrt %204 : vector<12x1xf32>
    %206 = vector.broadcast %205 : vector<12x1xf32> to vector<12x128xf32>
    %207 = arith.mulf %197, %206 : vector<12x128xf32>
    %208 = vector.broadcast %190 : vector<12x1xf32> to vector<12x128xf32>
    %209 = arith.mulf %207, %208 : vector<12x128xf32>
    %210 = vector.broadcast %191 : vector<12x1xf32> to vector<12x128xf32>
    %211 = arith.addf %209, %210 : vector<12x128xf32>
    %cst_95 = arith.constant 0.000000e+00 : f32
    %212 = vector.broadcast %cst_95 : f32 to vector<12x128xf32>
    %213 = arith.maximumf %211, %212 : vector<12x128xf32>
    %c0_96 = arith.constant 0 : index
    %c0_97 = arith.constant 0 : index
    %214 = vector.load %arg19[%c0_96, %c0_97] : memref<32x12xbf16, #tpu.memory_space<vmem>>, vector<32x12xbf16>
    %215 = arith.truncf %213 : vector<12x128xf32> to vector<12x128xbf16>
    %cst_98 = arith.constant dense<0.000000e+00> : vector<32x128xf32>
    %216 = tpu.matmul %214, %215, %cst_98 {dimension_numbers = #tpu.dot_dimension_numbers<[1], [0], [0], [1], [0, 0, 1, 1], [], []>} : vector<32x12xbf16>, vector<12x128xbf16>, vector<32x128xf32> -> vector<32x128xf32>
    %c0_99 = arith.constant 0 : index
    %c0_100 = arith.constant 0 : index
    %c0_101 = arith.constant 0 : index
    %217 = vector.load %arg20[%c0_99, %c0_100, %c0_101] : memref<1x32x128xf32, #tpu.memory_space<vmem>>, vector<1x32x128xf32>
    %218 = vector.shape_cast %217 : vector<1x32x128xf32> to vector<32x128xf32>
    %219 = vector.shape_cast %216 : vector<32x128xf32> to vector<1x32x128xf32>
    tpu.vector_store %arg20[%c0_99, %c0_100, %c0_101], %219 {strides = array<i32>} : memref<1x32x128xf32, #tpu.memory_space<vmem>>, vector<1x32x128xf32>,
    return
  }
  func.func @transform_0(%arg0: i32) -> (i32, i32, i32) {
    %c0_i32 = arith.constant 0 : i32
    %c0_i32_0 = arith.constant 0 : i32
    %c0_i32_1 = arith.constant 0 : i32
    return %arg0, %c0_i32, %c0_i32_0 : i32, i32, i32
  }
  func.func @transform_1(%arg0: i32) -> (i32, i32) {
    %c0_i32 = arith.constant 0 : i32
    %c0_i32_0 = arith.constant 0 : i32
    %c0_i32_1 = arith.constant 0 : i32
    return %c0_i32, %c0_i32_0 : i32, i32
  }
  func.func @transform_2(%arg0: i32) -> (i32, i32) {
    %c0_i32 = arith.constant 0 : i32
    %c0_i32_0 = arith.constant 0 : i32
    %c0_i32_1 = arith.constant 0 : i32
    return %c0_i32, %c0_i32_0 : i32, i32
  }
  func.func @transform_3(%arg0: i32) -> (i32, i32) {
    %c0_i32 = arith.constant 0 : i32
    %c0_i32_0 = arith.constant 0 : i32
    %c0_i32_1 = arith.constant 0 : i32
    return %c0_i32, %c0_i32_0 : i32, i32
  }
  func.func @transform_4(%arg0: i32) -> (i32, i32) {
    %c0_i32 = arith.constant 0 : i32
    %c0_i32_0 = arith.constant 0 : i32
    %c0_i32_1 = arith.constant 0 : i32
    return %c0_i32, %c0_i32_0 : i32, i32
  }
  func.func @transform_5(%arg0: i32) -> (i32, i32) {
    %c0_i32 = arith.constant 0 : i32
    %c0_i32_0 = arith.constant 0 : i32
    %c0_i32_1 = arith.constant 0 : i32
    return %c0_i32, %c0_i32_0 : i32, i32
  }
  func.func @transform_6(%arg0: i32) -> (i32, i32) {
    %c0_i32 = arith.constant 0 : i32
    %c0_i32_0 = arith.constant 0 : i32
    %c0_i32_1 = arith.constant 0 : i32
    return %c0_i32, %c0_i32_0 : i32, i32
  }
  func.func @transform_7(%arg0: i32) -> (i32, i32) {
    %c0_i32 = arith.constant 0 : i32
    %c0_i32_0 = arith.constant 0 : i32
    %c0_i32_1 = arith.constant 0 : i32
    return %c0_i32, %c0_i32_0 : i32, i32
  }
  func.func @transform_8(%arg0: i32) -> (i32, i32) {
    %c0_i32 = arith.constant 0 : i32
    %c0_i32_0 = arith.constant 0 : i32
    %c0_i32_1 = arith.constant 0 : i32
    return %c0_i32, %c0_i32_0 : i32, i32
  }
  func.func @transform_9(%arg0: i32) -> (i32, i32) {
    %c0_i32 = arith.constant 0 : i32
    %c0_i32_0 = arith.constant 0 : i32
    %c0_i32_1 = arith.constant 0 : i32
    return %c0_i32, %c0_i32_0 : i32, i32
  }
  func.func @transform_10(%arg0: i32) -> (i32, i32) {
    %c0_i32 = arith.constant 0 : i32
    %c0_i32_0 = arith.constant 0 : i32
    %c0_i32_1 = arith.constant 0 : i32
    return %c0_i32, %c0_i32_0 : i32, i32
  }
  func.func @transform_11(%arg0: i32) -> (i32, i32) {
    %c0_i32 = arith.constant 0 : i32
    %c0_i32_0 = arith.constant 0 : i32
    %c0_i32_1 = arith.constant 0 : i32
    return %c0_i32, %c0_i32_0 : i32, i32
  }
  func.func @transform_12(%arg0: i32) -> (i32, i32) {
    %c0_i32 = arith.constant 0 : i32
    %c0_i32_0 = arith.constant 0 : i32
    %c0_i32_1 = arith.constant 0 : i32
    return %c0_i32, %c0_i32_0 : i32, i32
  }
  func.func @transform_13(%arg0: i32) -> (i32, i32) {
    %c0_i32 = arith.constant 0 : i32
    %c0_i32_0 = arith.constant 0 : i32
    %c0_i32_1 = arith.constant 0 : i32
    return %c0_i32, %c0_i32_0 : i32, i32
  }
  func.func @transform_14(%arg0: i32) -> (i32, i32) {
    %c0_i32 = arith.constant 0 : i32
    %c0_i32_0 = arith.constant 0 : i32
    %c0_i32_1 = arith.constant 0 : i32
    return %c0_i32, %c0_i32_0 : i32, i32
  }
  func.func @transform_15(%arg0: i32) -> (i32, i32) {
    %c0_i32 = arith.constant 0 : i32
    %c0_i32_0 = arith.constant 0 : i32
    %c0_i32_1 = arith.constant 0 : i32
    return %c0_i32, %c0_i32_0 : i32, i32
  }
  func.func @transform_16(%arg0: i32) -> (i32, i32) {
    %c0_i32 = arith.constant 0 : i32
    %c0_i32_0 = arith.constant 0 : i32
    %c0_i32_1 = arith.constant 0 : i32
    return %c0_i32, %c0_i32_0 : i32, i32
  }
  func.func @transform_17(%arg0: i32) -> (i32, i32) {
    %c0_i32 = arith.constant 0 : i32
    %c0_i32_0 = arith.constant 0 : i32
    %c0_i32_1 = arith.constant 0 : i32
    return %c0_i32, %c0_i32_0 : i32, i32
  }
  func.func @transform_18(%arg0: i32) -> (i32, i32) {
    %c0_i32 = arith.constant 0 : i32
    %c0_i32_0 = arith.constant 0 : i32
    %c0_i32_1 = arith.constant 0 : i32
    return %c0_i32, %c0_i32_0 : i32, i32
  }
  func.func @transform_19(%arg0: i32) -> (i32, i32, i32) {
    %c0_i32 = arith.constant 0 : i32
    %c0_i32_0 = arith.constant 0 : i32
    %c0_i32_1 = arith.constant 0 : i32
    return %arg0, %c0_i32, %c0_i32_0 : i32, i32, i32
  }
}

module attributes {stable_mosaic.version = 11 : i64} {
  func.func @_stage3_kernel(%arg0: i32, %arg1: memref<1x8x512xf32, #tpu.memory_space<vmem>>, %arg2: memref<1x8x512xf32, #tpu.memory_space<vmem>>, %arg3: memref<1x16x512xf32, #tpu.memory_space<vmem>>, %arg4: memref<8x16xbf16, #tpu.memory_space<vmem>>, %arg5: memref<8x16xbf16, #tpu.memory_space<vmem>>, %arg6: memref<16x1xf32, #tpu.memory_space<vmem>>, %arg7: memref<16x1xf32, #tpu.memory_space<vmem>>, %arg8: memref<8x144xbf16, #tpu.memory_space<vmem>>, %arg9: memref<8x1xf32, #tpu.memory_space<vmem>>, %arg10: memref<8x1xf32, #tpu.memory_space<vmem>>, %arg11: memref<512x128xbf16, #tpu.memory_space<vmem>>, %arg12: memref<8x1xf32, #tpu.memory_space<vmem>>, %arg13: memref<8x1xf32, #tpu.memory_space<vmem>>, %arg14: memref<128x512xbf16, #tpu.memory_space<vmem>>, %arg15: memref<8x1xf32, #tpu.memory_space<vmem>>, %arg16: memref<8x1xf32, #tpu.memory_space<vmem>>, %arg17: memref<8x72xbf16, #tpu.memory_space<vmem>>, %arg18: memref<9x512xf32, #tpu.memory_space<vmem>>, %arg19: memref<8x24xbf16, #tpu.memory_space<vmem>>, %arg20: memref<16x8xbf16, #tpu.memory_space<vmem>>, %arg21: memref<1x16x512xf32, #tpu.memory_space<vmem>>) attributes {dimension_semantics = [#tpu.dimension_semantics<parallel>], iteration_bounds = array<i64: 2>, scalar_prefetch = 0 : i64, scratch_operands = 0 : i64, tpu.core_type = #tpu.core_type<tc>, window_params = [{transform_indices = @transform_0, window_bounds = array<i64: 1, 8, 512>}, {transform_indices = @transform_1, window_bounds = array<i64: 1, 8, 512>}, {transform_indices = @transform_2, window_bounds = array<i64: 1, 16, 512>}, {pipeline_mode = #tpu.pipeline_mode<synchronous>, transform_indices = @transform_3, window_bounds = array<i64: 8, 16>}, {pipeline_mode = #tpu.pipeline_mode<synchronous>, transform_indices = @transform_4, window_bounds = array<i64: 8, 16>}, {pipeline_mode = #tpu.pipeline_mode<synchronous>, transform_indices = @transform_5, window_bounds = array<i64: 16, 1>}, {pipeline_mode = #tpu.pipeline_mode<synchronous>, transform_indices = @transform_6, window_bounds = array<i64: 16, 1>}, {pipeline_mode = #tpu.pipeline_mode<synchronous>, transform_indices = @transform_7, window_bounds = array<i64: 8, 144>}, {pipeline_mode = #tpu.pipeline_mode<synchronous>, transform_indices = @transform_8, window_bounds = array<i64: 8, 1>}, {pipeline_mode = #tpu.pipeline_mode<synchronous>, transform_indices = @transform_9, window_bounds = array<i64: 8, 1>}, {pipeline_mode = #tpu.pipeline_mode<synchronous>, transform_indices = @transform_10, window_bounds = array<i64: 512, 128>}, {pipeline_mode = #tpu.pipeline_mode<synchronous>, transform_indices = @transform_11, window_bounds = array<i64: 8, 1>}, {pipeline_mode = #tpu.pipeline_mode<synchronous>, transform_indices = @transform_12, window_bounds = array<i64: 8, 1>}, {pipeline_mode = #tpu.pipeline_mode<synchronous>, transform_indices = @transform_13, window_bounds = array<i64: 128, 512>}, {pipeline_mode = #tpu.pipeline_mode<synchronous>, transform_indices = @transform_14, window_bounds = array<i64: 8, 1>}, {pipeline_mode = #tpu.pipeline_mode<synchronous>, transform_indices = @transform_15, window_bounds = array<i64: 8, 1>}, {pipeline_mode = #tpu.pipeline_mode<synchronous>, transform_indices = @transform_16, window_bounds = array<i64: 8, 72>}, {pipeline_mode = #tpu.pipeline_mode<synchronous>, transform_indices = @transform_17, window_bounds = array<i64: 9, 512>}, {pipeline_mode = #tpu.pipeline_mode<synchronous>, transform_indices = @transform_18, window_bounds = array<i64: 8, 24>}, {pipeline_mode = #tpu.pipeline_mode<synchronous>, transform_indices = @transform_19, window_bounds = array<i64: 16, 8>}, {transform_indices = @transform_20, window_bounds = array<i64: 1, 16, 512>}]} {
    %c0 = arith.constant 0 : index
    %c0_0 = arith.constant 0 : index
    %c0_1 = arith.constant 0 : index
    %0 = vector.load %arg3[%c0, %c0_0, %c0_1] : memref<1x16x512xf32, #tpu.memory_space<vmem>>, vector<1x16x512xf32>
    %1 = vector.shape_cast %0 : vector<1x16x512xf32> to vector<16x512xf32>
    %c0_2 = arith.constant 0 : index
    %c0_3 = arith.constant 0 : index
    %c0_4 = arith.constant 0 : index
    %2 = vector.load %arg1[%c0_2, %c0_3, %c0_4] : memref<1x8x512xf32, #tpu.memory_space<vmem>>, vector<1x8x512xf32>
    %3 = vector.shape_cast %2 : vector<1x8x512xf32> to vector<8x512xf32>
    %c0_5 = arith.constant 0 : index
    %c0_6 = arith.constant 0 : index
    %c0_7 = arith.constant 0 : index
    %4 = vector.load %arg2[%c0_5, %c0_6, %c0_7] : memref<1x8x512xf32, #tpu.memory_space<vmem>>, vector<1x8x512xf32>
    %5 = vector.shape_cast %4 : vector<1x8x512xf32> to vector<8x512xf32>
    %6 = tpu.concatenate %3, %5 in 0 : vector<8x512xf32>, vector<8x512xf32> -> vector<16x512xf32>
    %c0_8 = arith.constant 0 : index
    %c0_9 = arith.constant 0 : index
    %7 = vector.load %arg5[%c0_8, %c0_9] : memref<8x16xbf16, #tpu.memory_space<vmem>>, vector<8x16xbf16>
    %8 = arith.truncf %6 : vector<16x512xf32> to vector<16x512xbf16>
    %cst = arith.constant dense<0.000000e+00> : vector<8x512xf32>
    %9 = tpu.matmul %7, %8, %cst {dimension_numbers = #tpu.dot_dimension_numbers<[1], [0], [0], [1], [0, 0, 1, 1], [], []>} : vector<8x16xbf16>, vector<16x512xbf16>, vector<8x512xf32> -> vector<8x512xf32>
    %c0_10 = arith.constant 0 : index
    %c0_11 = arith.constant 0 : index
    %10 = vector.load %arg6[%c0_10, %c0_11] : memref<16x1xf32, #tpu.memory_space<vmem>>, vector<16x1xf32>
    %c0_12 = arith.constant 0 : index
    %c0_13 = arith.constant 0 : index
    %11 = vector.load %arg7[%c0_12, %c0_13] : memref<16x1xf32, #tpu.memory_space<vmem>>, vector<16x1xf32>
    %cst_14 = arith.constant dense<0.000000e+00> : vector<16xf32>
    %12 = vector.multi_reduction <add>, %6, %cst_14 [1] : vector<16x512xf32> to vector<16xf32>
    %13 = vector.shape_cast %12 : vector<16xf32> to vector<16x1xf32>
    %cst_15 = arith.constant 5.120000e+02 : f32
    %14 = vector.broadcast %cst_15 : f32 to vector<16x1xf32>
    %15 = arith.divf %13, %14 : vector<16x1xf32>
    %16 = vector.broadcast %15 : vector<16x1xf32> to vector<16x512xf32>
    %17 = arith.subf %6, %16 : vector<16x512xf32>
    %18 = arith.mulf %17, %17 : vector<16x512xf32>
    %cst_16 = arith.constant dense<0.000000e+00> : vector<16xf32>
    %19 = vector.multi_reduction <add>, %18, %cst_16 [1] : vector<16x512xf32> to vector<16xf32>
    %20 = vector.shape_cast %19 : vector<16xf32> to vector<16x1xf32>
    %cst_17 = arith.constant 5.120000e+02 : f32
    %21 = vector.broadcast %cst_17 : f32 to vector<16x1xf32>
    %22 = arith.divf %20, %21 : vector<16x1xf32>
    %cst_18 = arith.constant 9.99999974E-6 : f32
    %23 = vector.broadcast %cst_18 : f32 to vector<16x1xf32>
    %24 = arith.addf %22, %23 : vector<16x1xf32>
    %25 = math.rsqrt %24 : vector<16x1xf32>
    %26 = vector.broadcast %25 : vector<16x1xf32> to vector<16x512xf32>
    %27 = arith.mulf %17, %26 : vector<16x512xf32>
    %28 = vector.broadcast %10 : vector<16x1xf32> to vector<16x512xf32>
    %29 = arith.mulf %27, %28 : vector<16x512xf32>
    %30 = vector.broadcast %11 : vector<16x1xf32> to vector<16x512xf32>
    %31 = arith.addf %29, %30 : vector<16x512xf32>
    %cst_19 = arith.constant 0.000000e+00 : f32
    %32 = vector.broadcast %cst_19 : f32 to vector<16x512xf32>
    %33 = arith.maximumf %31, %32 : vector<16x512xf32>
    %c0_20 = arith.constant 0 : index
    %c0_21 = arith.constant 0 : index
    %34 = vector.load %arg8[%c0_20, %c0_21] : memref<8x144xbf16, #tpu.memory_space<vmem>>, vector<8x144xbf16>
    %cst_22 = arith.constant 0.000000e+00 : f32
    %35 = vector.broadcast %cst_22 : f32 to vector<16x33xf32>
    %36 = tpu.concatenate %35, %33, %35 in 1 : vector<16x33xf32>, vector<16x512xf32>, vector<16x33xf32> -> vector<16x578xf32>
    %37 = vector.extract_strided_slice %36 {offsets = [0, 0], sizes = [16, 512], strides = [1, 1]} : vector<16x578xf32> to vector<16x512xf32>
    %c0_23 = arith.constant 0 : index
    %c0_24 = arith.constant 0 : index
    %38 = vector.load %arg18[%c0_23, %c0_24] : memref<9x512xf32, #tpu.memory_space<vmem>>, vector<1x512xf32>
    %39 = vector.broadcast %38 : vector<1x512xf32> to vector<16x512xf32>
    %40 = arith.mulf %37, %39 : vector<16x512xf32>
    %41 = vector.extract_strided_slice %36 {offsets = [0, 1], sizes = [16, 512], strides = [1, 1]} : vector<16x578xf32> to vector<16x512xf32>
    %c1 = arith.constant 1 : index
    %c0_25 = arith.constant 0 : index
    %42 = vector.load %arg18[%c1, %c0_25] : memref<9x512xf32, #tpu.memory_space<vmem>>, vector<1x512xf32>
    %43 = vector.broadcast %42 : vector<1x512xf32> to vector<16x512xf32>
    %44 = arith.mulf %41, %43 : vector<16x512xf32>
    %45 = vector.extract_strided_slice %36 {offsets = [0, 2], sizes = [16, 512], strides = [1, 1]} : vector<16x578xf32> to vector<16x512xf32>
    %c2 = arith.constant 2 : index
    %c0_26 = arith.constant 0 : index
    %46 = vector.load %arg18[%c2, %c0_26] : memref<9x512xf32, #tpu.memory_space<vmem>>, vector<1x512xf32>
    %47 = vector.broadcast %46 : vector<1x512xf32> to vector<16x512xf32>
    %48 = arith.mulf %45, %47 : vector<16x512xf32>
    %49 = vector.extract_strided_slice %36 {offsets = [0, 32], sizes = [16, 512], strides = [1, 1]} : vector<16x578xf32> to vector<16x512xf32>
    %c3 = arith.constant 3 : index
    %c0_27 = arith.constant 0 : index
    %50 = vector.load %arg18[%c3, %c0_27] : memref<9x512xf32, #tpu.memory_space<vmem>>, vector<1x512xf32>
    %51 = vector.broadcast %50 : vector<1x512xf32> to vector<16x512xf32>
    %52 = arith.mulf %49, %51 : vector<16x512xf32>
    %53 = vector.extract_strided_slice %36 {offsets = [0, 33], sizes = [16, 512], strides = [1, 1]} : vector<16x578xf32> to vector<16x512xf32>
    %54 = vector.extract_strided_slice %36 {offsets = [0, 34], sizes = [16, 512], strides = [1, 1]} : vector<16x578xf32> to vector<16x512xf32>
    %c5 = arith.constant 5 : index
    %c0_28 = arith.constant 0 : index
    %55 = vector.load %arg18[%c5, %c0_28] : memref<9x512xf32, #tpu.memory_space<vmem>>, vector<1x512xf32>
    %56 = vector.broadcast %55 : vector<1x512xf32> to vector<16x512xf32>
    %57 = arith.mulf %54, %56 : vector<16x512xf32>
    %58 = vector.extract_strided_slice %36 {offsets = [0, 64], sizes = [16, 512], strides = [1, 1]} : vector<16x578xf32> to vector<16x512xf32>
    %c6 = arith.constant 6 : index
    %c0_29 = arith.constant 0 : index
    %59 = vector.load %arg18[%c6, %c0_29] : memref<9x512xf32, #tpu.memory_space<vmem>>, vector<1x512xf32>
    %60 = vector.broadcast %59 : vector<1x512xf32> to vector<16x512xf32>
    %61 = arith.mulf %58, %60 : vector<16x512xf32>
    %62 = vector.extract_strided_slice %36 {offsets = [0, 65], sizes = [16, 512], strides = [1, 1]} : vector<16x578xf32> to vector<16x512xf32>
    %c7 = arith.constant 7 : index
    %c0_30 = arith.constant 0 : index
    %63 = vector.load %arg18[%c7, %c0_30] : memref<9x512xf32, #tpu.memory_space<vmem>>, vector<1x512xf32>
    %64 = vector.broadcast %63 : vector<1x512xf32> to vector<16x512xf32>
    %65 = arith.mulf %62, %64 : vector<16x512xf32>
    %66 = vector.extract_strided_slice %36 {offsets = [0, 66], sizes = [16, 512], strides = [1, 1]} : vector<16x578xf32> to vector<16x512xf32>
    %c8 = arith.constant 8 : index
    %c0_31 = arith.constant 0 : index
    %67 = vector.load %arg18[%c8, %c0_31] : memref<9x512xf32, #tpu.memory_space<vmem>>, vector<1x512xf32>
    %68 = vector.broadcast %67 : vector<1x512xf32> to vector<16x512xf32>
    %69 = arith.mulf %66, %68 : vector<16x512xf32>
    %70 = tpu.concatenate %40, %44, %48, %52, %53, %57, %61, %65, %69 in 0 : vector<16x512xf32>, vector<16x512xf32>, vector<16x512xf32>, vector<16x512xf32>, vector<16x512xf32>, vector<16x512xf32>, vector<16x512xf32>, vector<16x512xf32>, vector<16x512xf32> -> vector<144x512xf32>
    %71 = arith.truncf %70 : vector<144x512xf32> to vector<144x512xbf16>
    %cst_32 = arith.constant dense<0.000000e+00> : vector<8x512xf32>
    %72 = tpu.matmul %34, %71, %cst_32 {dimension_numbers = #tpu.dot_dimension_numbers<[1], [0], [0], [1], [0, 0, 1, 1], [], []>} : vector<8x144xbf16>, vector<144x512xbf16>, vector<8x512xf32> -> vector<8x512xf32>
    %c0_33 = arith.constant 0 : index
    %c0_34 = arith.constant 0 : index
    %73 = vector.load %arg9[%c0_33, %c0_34] : memref<8x1xf32, #tpu.memory_space<vmem>>, vector<8x1xf32>
    %c0_35 = arith.constant 0 : index
    %c0_36 = arith.constant 0 : index
    %74 = vector.load %arg10[%c0_35, %c0_36] : memref<8x1xf32, #tpu.memory_space<vmem>>, vector<8x1xf32>
    %cst_37 = arith.constant dense<0.000000e+00> : vector<8xf32>
    %75 = vector.multi_reduction <add>, %72, %cst_37 [1] : vector<8x512xf32> to vector<8xf32>
    %76 = vector.shape_cast %75 : vector<8xf32> to vector<8x1xf32>
    %cst_38 = arith.constant 5.120000e+02 : f32
    %77 = vector.broadcast %cst_38 : f32 to vector<8x1xf32>
    %78 = arith.divf %76, %77 : vector<8x1xf32>
    %79 = vector.broadcast %78 : vector<8x1xf32> to vector<8x512xf32>
    %80 = arith.subf %72, %79 : vector<8x512xf32>
    %81 = arith.mulf %80, %80 : vector<8x512xf32>
    %cst_39 = arith.constant dense<0.000000e+00> : vector<8xf32>
    %82 = vector.multi_reduction <add>, %81, %cst_39 [1] : vector<8x512xf32> to vector<8xf32>
    %83 = vector.shape_cast %82 : vector<8xf32> to vector<8x1xf32>
    %cst_40 = arith.constant 5.120000e+02 : f32
    %84 = vector.broadcast %cst_40 : f32 to vector<8x1xf32>
    %85 = arith.divf %83, %84 : vector<8x1xf32>
    %cst_41 = arith.constant 9.99999974E-6 : f32
    %86 = vector.broadcast %cst_41 : f32 to vector<8x1xf32>
    %87 = arith.addf %85, %86 : vector<8x1xf32>
    %88 = math.rsqrt %87 : vector<8x1xf32>
    %89 = vector.broadcast %88 : vector<8x1xf32> to vector<8x512xf32>
    %90 = arith.mulf %80, %89 : vector<8x512xf32>
    %91 = vector.broadcast %73 : vector<8x1xf32> to vector<8x512xf32>
    %92 = arith.mulf %90, %91 : vector<8x512xf32>
    %93 = vector.broadcast %74 : vector<8x1xf32> to vector<8x512xf32>
    %94 = arith.addf %92, %93 : vector<8x512xf32>
    %cst_42 = arith.constant 0.000000e+00 : f32
    %95 = vector.broadcast %cst_42 : f32 to vector<8x512xf32>
    %96 = arith.maximumf %94, %95 : vector<8x512xf32>
    %c0_43 = arith.constant 0 : index
    %c0_44 = arith.constant 0 : index
    %97 = vector.load %arg11[%c0_43, %c0_44] : memref<512x128xbf16, #tpu.memory_space<vmem>>, vector<512x128xbf16>
    %98 = arith.truncf %96 : vector<8x512xf32> to vector<8x512xbf16>
    %cst_45 = arith.constant dense<0.000000e+00> : vector<8x128xf32>
    %99 = tpu.matmul %98, %97, %cst_45 {dimension_numbers = #tpu.dot_dimension_numbers<[1], [0], [0], [1], [0, 0, 1, 1], [], []>} : vector<8x512xbf16>, vector<512x128xbf16>, vector<8x128xf32> -> vector<8x128xf32>
    %c0_46 = arith.constant 0 : index
    %c0_47 = arith.constant 0 : index
    %100 = vector.load %arg12[%c0_46, %c0_47] : memref<8x1xf32, #tpu.memory_space<vmem>>, vector<8x1xf32>
    %c0_48 = arith.constant 0 : index
    %c0_49 = arith.constant 0 : index
    %101 = vector.load %arg13[%c0_48, %c0_49] : memref<8x1xf32, #tpu.memory_space<vmem>>, vector<8x1xf32>
    %cst_50 = arith.constant dense<0.000000e+00> : vector<8xf32>
    %102 = vector.multi_reduction <add>, %99, %cst_50 [1] : vector<8x128xf32> to vector<8xf32>
    %103 = vector.shape_cast %102 : vector<8xf32> to vector<8x1xf32>
    %cst_51 = arith.constant 1.280000e+02 : f32
    %104 = vector.broadcast %cst_51 : f32 to vector<8x1xf32>
    %105 = arith.divf %103, %104 : vector<8x1xf32>
    %106 = vector.broadcast %105 : vector<8x1xf32> to vector<8x128xf32>
    %107 = arith.subf %99, %106 : vector<8x128xf32>
    %108 = arith.mulf %107, %107 : vector<8x128xf32>
    %cst_52 = arith.constant dense<0.000000e+00> : vector<8xf32>
    %109 = vector.multi_reduction <add>, %108, %cst_52 [1] : vector<8x128xf32> to vector<8xf32>
    %110 = vector.shape_cast %109 : vector<8xf32> to vector<8x1xf32>
    %cst_53 = arith.constant 1.280000e+02 : f32
    %111 = vector.broadcast %cst_53 : f32 to vector<8x1xf32>
    %112 = arith.divf %110, %111 : vector<8x1xf32>
    %cst_54 = arith.constant 9.99999974E-6 : f32
    %113 = vector.broadcast %cst_54 : f32 to vector<8x1xf32>
    %114 = arith.addf %112, %113 : vector<8x1xf32>
    %115 = math.rsqrt %114 : vector<8x1xf32>
    %116 = vector.broadcast %115 : vector<8x1xf32> to vector<8x128xf32>
    %117 = arith.mulf %107, %116 : vector<8x128xf32>
    %118 = vector.broadcast %100 : vector<8x1xf32> to vector<8x128xf32>
    %119 = arith.mulf %117, %118 : vector<8x128xf32>
    %120 = vector.broadcast %101 : vector<8x1xf32> to vector<8x128xf32>
    %121 = arith.addf %119, %120 : vector<8x128xf32>
    %cst_55 = arith.constant 0.000000e+00 : f32
    %122 = vector.broadcast %cst_55 : f32 to vector<8x128xf32>
    %123 = arith.maximumf %121, %122 : vector<8x128xf32>
    %c0_56 = arith.constant 0 : index
    %c0_57 = arith.constant 0 : index
    %124 = vector.load %arg14[%c0_56, %c0_57] : memref<128x512xbf16, #tpu.memory_space<vmem>>, vector<128x512xbf16>
    %125 = arith.truncf %123 : vector<8x128xf32> to vector<8x128xbf16>
    %cst_58 = arith.constant dense<0.000000e+00> : vector<8x512xf32>
    %126 = tpu.matmul %125, %124, %cst_58 {dimension_numbers = #tpu.dot_dimension_numbers<[1], [0], [0], [1], [0, 0, 1, 1], [], []>} : vector<8x128xbf16>, vector<128x512xbf16>, vector<8x512xf32> -> vector<8x512xf32>
    %127 = arith.addf %72, %126 : vector<8x512xf32>
    %c0_59 = arith.constant 0 : index
    %c0_60 = arith.constant 0 : index
    %128 = vector.load %arg15[%c0_59, %c0_60] : memref<8x1xf32, #tpu.memory_space<vmem>>, vector<8x1xf32>
    %c0_61 = arith.constant 0 : index
    %c0_62 = arith.constant 0 : index
    %129 = vector.load %arg16[%c0_61, %c0_62] : memref<8x1xf32, #tpu.memory_space<vmem>>, vector<8x1xf32>
    %cst_63 = arith.constant dense<0.000000e+00> : vector<8xf32>
    %130 = vector.multi_reduction <add>, %127, %cst_63 [1] : vector<8x512xf32> to vector<8xf32>
    %131 = vector.shape_cast %130 : vector<8xf32> to vector<8x1xf32>
    %cst_64 = arith.constant 5.120000e+02 : f32
    %132 = vector.broadcast %cst_64 : f32 to vector<8x1xf32>
    %133 = arith.divf %131, %132 : vector<8x1xf32>
    %134 = vector.broadcast %133 : vector<8x1xf32> to vector<8x512xf32>
    %135 = arith.subf %127, %134 : vector<8x512xf32>
    %136 = arith.mulf %135, %135 : vector<8x512xf32>
    %cst_65 = arith.constant dense<0.000000e+00> : vector<8xf32>
    %137 = vector.multi_reduction <add>, %136, %cst_65 [1] : vector<8x512xf32> to vector<8xf32>
    %138 = vector.shape_cast %137 : vector<8xf32> to vector<8x1xf32>
    %cst_66 = arith.constant 5.120000e+02 : f32
    %139 = vector.broadcast %cst_66 : f32 to vector<8x1xf32>
    %140 = arith.divf %138, %139 : vector<8x1xf32>
    %cst_67 = arith.constant 9.99999974E-6 : f32
    %141 = vector.broadcast %cst_67 : f32 to vector<8x1xf32>
    %142 = arith.addf %140, %141 : vector<8x1xf32>
    %143 = math.rsqrt %142 : vector<8x1xf32>
    %144 = vector.broadcast %143 : vector<8x1xf32> to vector<8x512xf32>
    %145 = arith.mulf %135, %144 : vector<8x512xf32>
    %146 = vector.broadcast %128 : vector<8x1xf32> to vector<8x512xf32>
    %147 = arith.mulf %145, %146 : vector<8x512xf32>
    %148 = vector.broadcast %129 : vector<8x1xf32> to vector<8x512xf32>
    %149 = arith.addf %147, %148 : vector<8x512xf32>
    %cst_68 = arith.constant 0.000000e+00 : f32
    %150 = vector.broadcast %cst_68 : f32 to vector<8x512xf32>
    %151 = arith.maximumf %149, %150 : vector<8x512xf32>
    %c0_69 = arith.constant 0 : index
    %c0_70 = arith.constant 0 : index
    %152 = vector.load %arg17[%c0_69, %c0_70] : memref<8x72xbf16, #tpu.memory_space<vmem>>, vector<8x72xbf16>
    %cst_71 = arith.constant 0.000000e+00 : f32
    %153 = vector.broadcast %cst_71 : f32 to vector<8x33xf32>
    %154 = tpu.concatenate %153, %151, %153 in 1 : vector<8x33xf32>, vector<8x512xf32>, vector<8x33xf32> -> vector<8x578xf32>
    %155 = vector.extract_strided_slice %154 {offsets = [0, 0], sizes = [8, 512], strides = [1, 1]} : vector<8x578xf32> to vector<8x512xf32>
    %c0_72 = arith.constant 0 : index
    %c0_73 = arith.constant 0 : index
    %156 = vector.load %arg18[%c0_72, %c0_73] : memref<9x512xf32, #tpu.memory_space<vmem>>, vector<1x512xf32>
    %157 = vector.broadcast %156 : vector<1x512xf32> to vector<8x512xf32>
    %158 = arith.mulf %155, %157 : vector<8x512xf32>
    %159 = vector.extract_strided_slice %154 {offsets = [0, 1], sizes = [8, 512], strides = [1, 1]} : vector<8x578xf32> to vector<8x512xf32>
    %c1_74 = arith.constant 1 : index
    %c0_75 = arith.constant 0 : index
    %160 = vector.load %arg18[%c1_74, %c0_75] : memref<9x512xf32, #tpu.memory_space<vmem>>, vector<1x512xf32>
    %161 = vector.broadcast %160 : vector<1x512xf32> to vector<8x512xf32>
    %162 = arith.mulf %159, %161 : vector<8x512xf32>
    %163 = vector.extract_strided_slice %154 {offsets = [0, 2], sizes = [8, 512], strides = [1, 1]} : vector<8x578xf32> to vector<8x512xf32>
    %c2_76 = arith.constant 2 : index
    %c0_77 = arith.constant 0 : index
    %164 = vector.load %arg18[%c2_76, %c0_77] : memref<9x512xf32, #tpu.memory_space<vmem>>, vector<1x512xf32>
    %165 = vector.broadcast %164 : vector<1x512xf32> to vector<8x512xf32>
    %166 = arith.mulf %163, %165 : vector<8x512xf32>
    %167 = vector.extract_strided_slice %154 {offsets = [0, 32], sizes = [8, 512], strides = [1, 1]} : vector<8x578xf32> to vector<8x512xf32>
    %c3_78 = arith.constant 3 : index
    %c0_79 = arith.constant 0 : index
    %168 = vector.load %arg18[%c3_78, %c0_79] : memref<9x512xf32, #tpu.memory_space<vmem>>, vector<1x512xf32>
    %169 = vector.broadcast %168 : vector<1x512xf32> to vector<8x512xf32>
    %170 = arith.mulf %167, %169 : vector<8x512xf32>
    %171 = vector.extract_strided_slice %154 {offsets = [0, 33], sizes = [8, 512], strides = [1, 1]} : vector<8x578xf32> to vector<8x512xf32>
    %172 = vector.extract_strided_slice %154 {offsets = [0, 34], sizes = [8, 512], strides = [1, 1]} : vector<8x578xf32> to vector<8x512xf32>
    %c5_80 = arith.constant 5 : index
    %c0_81 = arith.constant 0 : index
    %173 = vector.load %arg18[%c5_80, %c0_81] : memref<9x512xf32, #tpu.memory_space<vmem>>, vector<1x512xf32>
    %174 = vector.broadcast %173 : vector<1x512xf32> to vector<8x512xf32>
    %175 = arith.mulf %172, %174 : vector<8x512xf32>
    %176 = vector.extract_strided_slice %154 {offsets = [0, 64], sizes = [8, 512], strides = [1, 1]} : vector<8x578xf32> to vector<8x512xf32>
    %c6_82 = arith.constant 6 : index
    %c0_83 = arith.constant 0 : index
    %177 = vector.load %arg18[%c6_82, %c0_83] : memref<9x512xf32, #tpu.memory_space<vmem>>, vector<1x512xf32>
    %178 = vector.broadcast %177 : vector<1x512xf32> to vector<8x512xf32>
    %179 = arith.mulf %176, %178 : vector<8x512xf32>
    %180 = vector.extract_strided_slice %154 {offsets = [0, 65], sizes = [8, 512], strides = [1, 1]} : vector<8x578xf32> to vector<8x512xf32>
    %c7_84 = arith.constant 7 : index
    %c0_85 = arith.constant 0 : index
    %181 = vector.load %arg18[%c7_84, %c0_85] : memref<9x512xf32, #tpu.memory_space<vmem>>, vector<1x512xf32>
    %182 = vector.broadcast %181 : vector<1x512xf32> to vector<8x512xf32>
    %183 = arith.mulf %180, %182 : vector<8x512xf32>
    %184 = vector.extract_strided_slice %154 {offsets = [0, 66], sizes = [8, 512], strides = [1, 1]} : vector<8x578xf32> to vector<8x512xf32>
    %c8_86 = arith.constant 8 : index
    %c0_87 = arith.constant 0 : index
    %185 = vector.load %arg18[%c8_86, %c0_87] : memref<9x512xf32, #tpu.memory_space<vmem>>, vector<1x512xf32>
    %186 = vector.broadcast %185 : vector<1x512xf32> to vector<8x512xf32>
    %187 = arith.mulf %184, %186 : vector<8x512xf32>
    %188 = tpu.concatenate %158, %162, %166, %170, %171, %175, %179, %183, %187 in 0 : vector<8x512xf32>, vector<8x512xf32>, vector<8x512xf32>, vector<8x512xf32>, vector<8x512xf32>, vector<8x512xf32>, vector<8x512xf32>, vector<8x512xf32>, vector<8x512xf32> -> vector<72x512xf32>
    %189 = arith.truncf %188 : vector<72x512xf32> to vector<72x512xbf16>
    %cst_88 = arith.constant dense<0.000000e+00> : vector<8x512xf32>
    %190 = tpu.matmul %152, %189, %cst_88 {dimension_numbers = #tpu.dot_dimension_numbers<[1], [0], [0], [1], [0, 0, 1, 1], [], []>} : vector<8x72xbf16>, vector<72x512xbf16>, vector<8x512xf32> -> vector<8x512xf32>
    %191 = arith.addf %190, %9 : vector<8x512xf32>
    %c0_89 = arith.constant 0 : index
    %c0_90 = arith.constant 0 : index
    %192 = vector.load %arg4[%c0_89, %c0_90] : memref<8x16xbf16, #tpu.memory_space<vmem>>, vector<8x16xbf16>
    %193 = arith.truncf %1 : vector<16x512xf32> to vector<16x512xbf16>
    %cst_91 = arith.constant dense<0.000000e+00> : vector<8x512xf32>
    %194 = tpu.matmul %192, %193, %cst_91 {dimension_numbers = #tpu.dot_dimension_numbers<[1], [0], [0], [1], [0, 0, 1, 1], [], []>} : vector<8x16xbf16>, vector<16x512xbf16>, vector<8x512xf32> -> vector<8x512xf32>
    %195 = arith.mulf %191, %194 : vector<8x512xf32>
    %196 = tpu.concatenate %1, %195 in 0 : vector<16x512xf32>, vector<8x512xf32> -> vector<24x512xf32>
    %c0_92 = arith.constant 0 : index
    %c0_93 = arith.constant 0 : index
    %197 = vector.load %arg19[%c0_92, %c0_93] : memref<8x24xbf16, #tpu.memory_space<vmem>>, vector<8x24xbf16>
    %198 = arith.truncf %196 : vector<24x512xf32> to vector<24x512xbf16>
    %cst_94 = arith.constant dense<0.000000e+00> : vector<8x512xf32>
    %199 = tpu.matmul %197, %198, %cst_94 {dimension_numbers = #tpu.dot_dimension_numbers<[1], [0], [0], [1], [0, 0, 1, 1], [], []>} : vector<8x24xbf16>, vector<24x512xbf16>, vector<8x512xf32> -> vector<8x512xf32>
    %cst_95 = arith.constant 0.000000e+00 : f32
    %200 = vector.broadcast %cst_95 : f32 to vector<8x512xf32>
    %201 = arith.maximumf %199, %200 : vector<8x512xf32>
    %c0_96 = arith.constant 0 : index
    %c0_97 = arith.constant 0 : index
    %202 = vector.load %arg20[%c0_96, %c0_97] : memref<16x8xbf16, #tpu.memory_space<vmem>>, vector<16x8xbf16>
    %203 = arith.truncf %201 : vector<8x512xf32> to vector<8x512xbf16>
    %cst_98 = arith.constant dense<0.000000e+00> : vector<16x512xf32>
    %204 = tpu.matmul %202, %203, %cst_98 {dimension_numbers = #tpu.dot_dimension_numbers<[1], [0], [0], [1], [0, 0, 1, 1], [], []>} : vector<16x8xbf16>, vector<8x512xbf16>, vector<16x512xf32> -> vector<16x512xf32>
    %c0_99 = arith.constant 0 : index
    %c0_100 = arith.constant 0 : index
    %c0_101 = arith.constant 0 : index
    %205 = vector.load %arg21[%c0_99, %c0_100, %c0_101] : memref<1x16x512xf32, #tpu.memory_space<vmem>>, vector<1x16x512xf32>
    %206 = vector.shape_cast %205 : vector<1x16x512xf32> to vector<16x512xf32>
    %207 = vector.shape_cast %204 : vector<16x512xf32> to vector<1x16x512xf32>
    tpu.vector_store %arg21[%c0_99, %c0_100, %c0_101], %207 {strides = array<i32>} : memref<1x16x512xf32, #tpu.memory_space<vmem>>, vector<1x16x512xf32>,
    return
  }
  func.func @transform_0(%arg0: i32) -> (i32, i32, i32) {
    %c0_i32 = arith.constant 0 : i32
    %c0_i32_0 = arith.constant 0 : i32
    %c0_i32_1 = arith.constant 0 : i32
    return %arg0, %c0_i32, %c0_i32_0 : i32, i32, i32
  }
  func.func @transform_1(%arg0: i32) -> (i32, i32, i32) {
    %c0_i32 = arith.constant 0 : i32
    %c0_i32_0 = arith.constant 0 : i32
    %c0_i32_1 = arith.constant 0 : i32
    return %arg0, %c0_i32, %c0_i32_0 : i32, i32, i32
  }
  func.func @transform_2(%arg0: i32) -> (i32, i32, i32) {
    %c0_i32 = arith.constant 0 : i32
    %c0_i32_0 = arith.constant 0 : i32
    %c0_i32_1 = arith.constant 0 : i32
    return %arg0, %c0_i32, %c0_i32_0 : i32, i32, i32
  }
  func.func @transform_3(%arg0: i32) -> (i32, i32) {
    %c0_i32 = arith.constant 0 : i32
    %c0_i32_0 = arith.constant 0 : i32
    %c0_i32_1 = arith.constant 0 : i32
    return %c0_i32, %c0_i32_0 : i32, i32
  }
  func.func @transform_4(%arg0: i32) -> (i32, i32) {
    %c0_i32 = arith.constant 0 : i32
    %c0_i32_0 = arith.constant 0 : i32
    %c0_i32_1 = arith.constant 0 : i32
    return %c0_i32, %c0_i32_0 : i32, i32
  }
  func.func @transform_5(%arg0: i32) -> (i32, i32) {
    %c0_i32 = arith.constant 0 : i32
    %c0_i32_0 = arith.constant 0 : i32
    %c0_i32_1 = arith.constant 0 : i32
    return %c0_i32, %c0_i32_0 : i32, i32
  }
  func.func @transform_6(%arg0: i32) -> (i32, i32) {
    %c0_i32 = arith.constant 0 : i32
    %c0_i32_0 = arith.constant 0 : i32
    %c0_i32_1 = arith.constant 0 : i32
    return %c0_i32, %c0_i32_0 : i32, i32
  }
  func.func @transform_7(%arg0: i32) -> (i32, i32) {
    %c0_i32 = arith.constant 0 : i32
    %c0_i32_0 = arith.constant 0 : i32
    %c0_i32_1 = arith.constant 0 : i32
    return %c0_i32, %c0_i32_0 : i32, i32
  }
  func.func @transform_8(%arg0: i32) -> (i32, i32) {
    %c0_i32 = arith.constant 0 : i32
    %c0_i32_0 = arith.constant 0 : i32
    %c0_i32_1 = arith.constant 0 : i32
    return %c0_i32, %c0_i32_0 : i32, i32
  }
  func.func @transform_9(%arg0: i32) -> (i32, i32) {
    %c0_i32 = arith.constant 0 : i32
    %c0_i32_0 = arith.constant 0 : i32
    %c0_i32_1 = arith.constant 0 : i32
    return %c0_i32, %c0_i32_0 : i32, i32
  }
  func.func @transform_10(%arg0: i32) -> (i32, i32) {
    %c0_i32 = arith.constant 0 : i32
    %c0_i32_0 = arith.constant 0 : i32
    %c0_i32_1 = arith.constant 0 : i32
    return %c0_i32, %c0_i32_0 : i32, i32
  }
  func.func @transform_11(%arg0: i32) -> (i32, i32) {
    %c0_i32 = arith.constant 0 : i32
    %c0_i32_0 = arith.constant 0 : i32
    %c0_i32_1 = arith.constant 0 : i32
    return %c0_i32, %c0_i32_0 : i32, i32
  }
  func.func @transform_12(%arg0: i32) -> (i32, i32) {
    %c0_i32 = arith.constant 0 : i32
    %c0_i32_0 = arith.constant 0 : i32
    %c0_i32_1 = arith.constant 0 : i32
    return %c0_i32, %c0_i32_0 : i32, i32
  }
  func.func @transform_13(%arg0: i32) -> (i32, i32) {
    %c0_i32 = arith.constant 0 : i32
    %c0_i32_0 = arith.constant 0 : i32
    %c0_i32_1 = arith.constant 0 : i32
    return %c0_i32, %c0_i32_0 : i32, i32
  }
  func.func @transform_14(%arg0: i32) -> (i32, i32) {
    %c0_i32 = arith.constant 0 : i32
    %c0_i32_0 = arith.constant 0 : i32
    %c0_i32_1 = arith.constant 0 : i32
    return %c0_i32, %c0_i32_0 : i32, i32
  }
  func.func @transform_15(%arg0: i32) -> (i32, i32) {
    %c0_i32 = arith.constant 0 : i32
    %c0_i32_0 = arith.constant 0 : i32
    %c0_i32_1 = arith.constant 0 : i32
    return %c0_i32, %c0_i32_0 : i32, i32
  }
  func.func @transform_16(%arg0: i32) -> (i32, i32) {
    %c0_i32 = arith.constant 0 : i32
    %c0_i32_0 = arith.constant 0 : i32
    %c0_i32_1 = arith.constant 0 : i32
    return %c0_i32, %c0_i32_0 : i32, i32
  }
  func.func @transform_17(%arg0: i32) -> (i32, i32) {
    %c0_i32 = arith.constant 0 : i32
    %c0_i32_0 = arith.constant 0 : i32
    %c0_i32_1 = arith.constant 0 : i32
    return %c0_i32, %c0_i32_0 : i32, i32
  }
  func.func @transform_18(%arg0: i32) -> (i32, i32) {
    %c0_i32 = arith.constant 0 : i32
    %c0_i32_0 = arith.constant 0 : i32
    %c0_i32_1 = arith.constant 0 : i32
    return %c0_i32, %c0_i32_0 : i32, i32
  }
  func.func @transform_19(%arg0: i32) -> (i32, i32) {
    %c0_i32 = arith.constant 0 : i32
    %c0_i32_0 = arith.constant 0 : i32
    %c0_i32_1 = arith.constant 0 : i32
    return %c0_i32, %c0_i32_0 : i32, i32
  }
  func.func @transform_20(%arg0: i32) -> (i32, i32, i32) {
    %c0_i32 = arith.constant 0 : i32
    %c0_i32_0 = arith.constant 0 : i32
    %c0_i32_1 = arith.constant 0 : i32
    return %arg0, %c0_i32, %c0_i32_0 : i32, i32, i32
  }
}

</mosaic_0001>

<llo_original>
// kernel: tfc_tdf_net_forward.3
$region0: #{tfc_tdf_net_forward.3}
  #allocation0 [shape = 'u32[]', space=smem, size = 0x4, offset = 0x4, fixed_abs, tag = 'smem constant byte address 0x4 - core index']
  #allocation1 [shape = 'u32[144,128]{1,0:T(1,128)}', space=vmem, size = 0x12000, scoped, tag = 'internal scratch']
  %s0 = inlined_call_operand.vmem [shape: f32[2,16,512], index: 0, kind: input, shape index: {}]
  %s1 = inlined_call_operand.vmem [shape: bf16[8,16], index: 1, kind: input, shape index: {}]
  %s2 = inlined_call_operand.vmem [shape: bf16[8,8], index: 2, kind: input, shape index: {}]
  %s3 = inlined_call_operand.vmem [shape: f32[8,1], index: 3, kind: input, shape index: {}]
  %s4 = inlined_call_operand.vmem [shape: f32[8,1], index: 4, kind: input, shape index: {}]
  %s5 = inlined_call_operand.vmem [shape: bf16[8,72], index: 5, kind: input, shape index: {}]
  %s6 = inlined_call_operand.vmem [shape: f32[8,1], index: 6, kind: input, shape index: {}]
  %s7 = inlined_call_operand.vmem [shape: f32[8,1], index: 7, kind: input, shape index: {}]
  %s8 = inlined_call_operand.vmem [shape: bf16[512,128], index: 8, kind: input, shape index: {}]
  %s9 = inlined_call_operand.vmem [shape: f32[8,1], index: 9, kind: input, shape index: {}]
  %s10 = inlined_call_operand.vmem [shape: f32[8,1], index: 10, kind: input, shape index: {}]
  %s11 = inlined_call_operand.vmem [shape: bf16[128,512], index: 11, kind: input, shape index: {}]
  %s12 = inlined_call_operand.vmem [shape: f32[8,1], index: 12, kind: input, shape index: {}]
  %s13 = inlined_call_operand.vmem [shape: f32[8,1], index: 13, kind: input, shape index: {}]
  %s14 = inlined_call_operand.vmem [shape: bf16[8,72], index: 14, kind: input, shape index: {}]
  %s15 = inlined_call_operand.vmem [shape: f32[9,512], index: 15, kind: input, shape index: {}]
  %s16 = inlined_call_operand.vmem [shape: f32[8,1], index: 16, kind: input, shape index: {}]
  %s17 = inlined_call_operand.vmem [shape: f32[8,1], index: 17, kind: input, shape index: {}]
  %s18 = inlined_call_operand.vmem [shape: f32[2,8,512], index: 18, kind: output, shape index: {0}]
  %s19 = inlined_call_operand.vmem [shape: f32[2,8,512], index: 19, kind: output, shape index: {1}]
  %20 = xla_tuple %s18, %s19
  %s21 = sld [smem:[#allocation0]]
  $region113: #{tfc_tdf_net_forward.3} parent=0
    _
  %s23 = ssub.s32 1, %s21
  %s24 = scalar_select 0, %s23, %s21
  loop: start=0, step=1, limit=4
  $region2: #{tfc_tdf_net_forward.3} parent=0 // loop_pre_header
    _
  $region3: #{tfc_tdf_net_forward.3} parent=0 // loop_header
    %s26 = sphi 0, %s30
    %p27 = scmp.ge.s32.totalorder %s26, 4
    %s36 = sphi 0, %s38
    %s39 = sphi 0, %s36
    %s40 = sphi 0, %s39
    %s56 = sphi 0, %s40
    %s60 = sphi 0, %s60
    %s62 = sphi 0, %s60
    %s63 = sphi 0, %s62
    %s77 = sphi 0, %s63
    %s81 = sphi 0, %s81
    %s83 = sphi 0, %s81
    %s84 = sphi 0, %s83
    %s98 = sphi 0, %s84
    %s102 = sphi 0, %s102
    %s104 = sphi 0, %s102
    %s105 = sphi 0, %s104
    %s119 = sphi 0, %s105
    %s123 = sphi 0, %s123
    %s125 = sphi 0, %s123
    %s126 = sphi 0, %s125
    %s140 = sphi 0, %s126
    %s144 = sphi 0, %s144
    %s146 = sphi 0, %s144
    %s147 = sphi 0, %s146
    %s161 = sphi 0, %s147
    %s165 = sphi 0, %s165
    %s167 = sphi 0, %s165
    %s168 = sphi 0, %s167
    %s182 = sphi 0, %s168
    %s186 = sphi 0, %s186
    %s188 = sphi 0, %s186
    %s189 = sphi 0, %s188
    %s203 = sphi 0, %s189
    %s207 = sphi 0, %s207
    %s209 = sphi 0, %s207
    %s210 = sphi 0, %s209
    %s224 = sphi 0, %s210
    %s228 = sphi 0, %s228
    %s230 = sphi 0, %s228
    %s231 = sphi 0, %s230
    %s245 = sphi 0, %s231
    %s249 = sphi 0, %s249
    %s251 = sphi 0, %s249
    %s252 = sphi 0, %s251
    %s266 = sphi 0, %s252
    %s270 = sphi 0, %s270
    %s272 = sphi 0, %s270
    %s273 = sphi 0, %s272
    %s287 = sphi 0, %s273
    %s291 = sphi 0, %s291
    %s293 = sphi 0, %s291
    %s294 = sphi 0, %s293
    %s308 = sphi 0, %s294
    %s312 = sphi 0, %s312
    %s314 = sphi 0, %s312
    %s315 = sphi 0, %s314
    %s329 = sphi 0, %s315
    %s333 = sphi 0, %s333
    %s335 = sphi 0, %s333
    %s336 = sphi 0, %s335
    %s350 = sphi 0, %s336
    %s354 = sphi 0, %s354
    %s356 = sphi 0, %s354
    %s357 = sphi 0, %s356
    %s371 = sphi 0, %s357
    %s375 = sphi 0, %s375
    %s377 = sphi 0, %s375
    %s378 = sphi 0, %s377
    %s392 = sphi 0, %s378
    %s396 = sphi 0, %s396
    %s398 = sphi 0, %s396
    %s399 = sphi 0, %s398
    %s413 = sphi 0, %s399
    %s419 = sphi 0, %s421
    %s422 = sphi 0, %s419
    %s423 = sphi 0, %s422
    %s439 = sphi 0, %s423
    %s445 = sphi 0, %s447
    %s448 = sphi 0, %s445
    %s449 = sphi 0, %s448
    %s465 = sphi 0, %s449
  $region4: #{tfc_tdf_net_forward.3} parent=0 // loop_header_branch
    %29 = sbr.rel (%p27) target = $region8
  $region5: #{tfc_tdf_net_forward.3} parent=0 // loop_body
    %s31 = ssub.s32 %s26, 1
    %s32 = ssub.s32 %s26, 2
    %s33 = sadd.s32 %s26, 1
    %s34 = ssub.s32 %s26, %s33
    %p35 = scmp.eq.s32.totalorder %s34, 0
    %s37 = sadd.s32 %s36, 1
    %s38 = scalar_select %p35, %s36, %s37
    %p41 = pneg %p35
    %p42 = scmp.eq.s32.totalorder %s26, 1
    %p43 = por %p41, %p42
    %p44 = scmp.ne.s32.totalorder %s36, %s39
    %p45 = scmp.eq.s32.totalorder %s26, 0
    %p46 = por %p44, %p45
    %p47 = scmp.ne.s32.totalorder %s36, %s39
    %p48 = scmp.eq.s32.totalorder %s31, 1
    %p49 = por %p47, %p48
    %p50 = scmp.ne.s32.totalorder %s39, %s40
    %p51 = scmp.eq.s32.totalorder %s31, 0
    %p52 = por %p50, %p51
    %p53 = scmp.ne.s32.totalorder %s39, %s40
    %p54 = scmp.eq.s32.totalorder %s32, 1
    %p55 = por %p53, %p54
    %p57 = scmp.ne.s32.totalorder %s40, %s56
    %p58 = scmp.eq.s32.totalorder %s32, 0
    %p59 = por %p57, %p58
    %s61 = sadd.s32 %s60, 1
    %p64 = scmp.eq.s32.totalorder %s26, 1
    %p65 = scmp.ne.s32.totalorder %s60, %s62
    %p66 = scmp.eq.s32.totalorder %s26, 0
    %p67 = por %p65, %p66
    %p68 = scmp.ne.s32.totalorder %s60, %s62
    %p69 = scmp.eq.s32.totalorder %s31, 1
    %p70 = por %p68, %p69
    %p71 = scmp.ne.s32.totalorder %s62, %s63
    %p72 = scmp.eq.s32.totalorder %s31, 0
    %p73 = por %p71, %p72
    %p74 = scmp.ne.s32.totalorder %s62, %s63
    %p75 = scmp.eq.s32.totalorder %s32, 1
    %p76 = por %p74, %p75
    %p78 = scmp.ne.s32.totalorder %s63, %s77
    %p79 = scmp.eq.s32.totalorder %s32, 0
    %p80 = por %p78, %p79
    %s82 = sadd.s32 %s81, 1
    %p85 = scmp.eq.s32.totalorder %s26, 1
    %p86 = scmp.ne.s32.totalorder %s81, %s83
    %p87 = scmp.eq.s32.totalorder %s26, 0
    %p88 = por %p86, %p87
    %p89 = scmp.ne.s32.totalorder %s81, %s83
    %p90 = scmp.eq.s32.totalorder %s31, 1
    %p91 = por %p89, %p90
    %p92 = scmp.ne.s32.totalorder %s83, %s84
    %p93 = scmp.eq.s32.totalorder %s31, 0
    %p94 = por %p92, %p93
    %p95 = scmp.ne.s32.totalorder %s83, %s84
    %p96 = scmp.eq.s32.totalorder %s32, 1
    %p97 = por %p95, %p96
    %p99 = scmp.ne.s32.totalorder %s84, %s98
    %p100 = scmp.eq.s32.totalorder %s32, 0
    %p101 = por %p99, %p100
    %s103 = sadd.s32 %s102, 1
    %p106 = scmp.eq.s32.totalorder %s26, 1
    %p107 = scmp.ne.s32.totalorder %s102, %s104
    %p108 = scmp.eq.s32.totalorder %s26, 0
    %p109 = por %p107, %p108
    %p110 = scmp.ne.s32.totalorder %s102, %s104
    %p111 = scmp.eq.s32.totalorder %s31, 1
    %p112 = por %p110, %p111
    %p113 = scmp.ne.s32.totalorder %s104, %s105
    %p114 = scmp.eq.s32.totalorder %s31, 0
    %p115 = por %p113, %p114
    %p116 = scmp.ne.s32.totalorder %s104, %s105
    %p117 = scmp.eq.s32.totalorder %s32, 1
    %p118 = por %p116, %p117
    %p120 = scmp.ne.s32.totalorder %s105, %s119
    %p121 = scmp.eq.s32.totalorder %s32, 0
    %p122 = por %p120, %p121
    %s124 = sadd.s32 %s123, 1
    %p127 = scmp.eq.s32.totalorder %s26, 1
    %p128 = scmp.ne.s32.totalorder %s123, %s125
    %p129 = scmp.eq.s32.totalorder %s26, 0
    %p130 = por %p128, %p129
    %p131 = scmp.ne.s32.totalorder %s123, %s125
    %p132 = scmp.eq.s32.totalorder %s31, 1
    %p133 = por %p131, %p132
    %p134 = scmp.ne.s32.totalorder %s125, %s126
    %p135 = scmp.eq.s32.totalorder %s31, 0
    %p136 = por %p134, %p135
    %p137 = scmp.ne.s32.totalorder %s125, %s126
    %p138 = scmp.eq.s32.totalorder %s32, 1
    %p139 = por %p137, %p138
    %p141 = scmp.ne.s32.totalorder %s126, %s140
    %p142 = scmp.eq.s32.totalorder %s32, 0
    %p143 = por %p141, %p142
    %s145 = sadd.s32 %s144, 1
    %p148 = scmp.eq.s32.totalorder %s26, 1
    %p149 = scmp.ne.s32.totalorder %s144, %s146
    %p150 = scmp.eq.s32.totalorder %s26, 0
    %p151 = por %p149, %p150
    %p152 = scmp.ne.s32.totalorder %s144, %s146
    %p153 = scmp.eq.s32.totalorder %s31, 1
    %p154 = por %p152, %p153
    %p155 = scmp.ne.s32.totalorder %s146, %s147
    %p156 = scmp.eq.s32.totalorder %s31, 0
    %p157 = por %p155, %p156
    %p158 = scmp.ne.s32.totalorder %s146, %s147
    %p159 = scmp.eq.s32.totalorder %s32, 1
    %p160 = por %p158, %p159
    %p162 = scmp.ne.s32.totalorder %s147, %s161
    %p163 = scmp.eq.s32.totalorder %s32, 0
    %p164 = por %p162, %p163
    %s166 = sadd.s32 %s165, 1
    %p169 = scmp.eq.s32.totalorder %s26, 1
    %p170 = scmp.ne.s32.totalorder %s165, %s167
    %p171 = scmp.eq.s32.totalorder %s26, 0
    %p172 = por %p170, %p171
    %p173 = scmp.ne.s32.totalorder %s165, %s167
    %p174 = scmp.eq.s32.totalorder %s31, 1
    %p175 = por %p173, %p174
    %p176 = scmp.ne.s32.totalorder %s167, %s168
    %p177 = scmp.eq.s32.totalorder %s31, 0
    %p178 = por %p176, %p177
    %p179 = scmp.ne.s32.totalorder %s167, %s168
    %p180 = scmp.eq.s32.totalorder %s32, 1
    %p181 = por %p179, %p180
    %p183 = scmp.ne.s32.totalorder %s168, %s182
    %p184 = scmp.eq.s32.totalorder %s32, 0
    %p185 = por %p183, %p184
    %s187 = sadd.s32 %s186, 1
    %p190 = scmp.eq.s32.totalorder %s26, 1
    %p191 = scmp.ne.s32.totalorder %s186, %s188
    %p192 = scmp.eq.s32.totalorder %s26, 0
    %p193 = por %p191, %p192
    %p194 = scmp.ne.s32.totalorder %s186, %s188
    %p195 = scmp.eq.s32.totalorder %s31, 1
    %p196 = por %p194, %p195
    %p197 = scmp.ne.s32.totalorder %s188, %s189
    %p198 = scmp.eq.s32.totalorder %s31, 0
    %p199 = por %p197, %p198
    %p200 = scmp.ne.s32.totalorder %s188, %s189
    %p201 = scmp.eq.s32.totalorder %s32, 1
    %p202 = por %p200, %p201
    %p204 = scmp.ne.s32.totalorder %s189, %s203
    %p205 = scmp.eq.s32.totalorder %s32, 0
    %p206 = por %p204, %p205
    %s208 = sadd.s32 %s207, 1
    %p211 = scmp.eq.s32.totalorder %s26, 1
    %p212 = scmp.ne.s32.totalorder %s207, %s209
    %p213 = scmp.eq.s32.totalorder %s26, 0
    %p214 = por %p212, %p213
    %p215 = scmp.ne.s32.totalorder %s207, %s209
    %p216 = scmp.eq.s32.totalorder %s31, 1
    %p217 = por %p215, %p216
    %p218 = scmp.ne.s32.totalorder %s209, %s210
    %p219 = scmp.eq.s32.totalorder %s31, 0
    %p220 = por %p218, %p219
    %p221 = scmp.ne.s32.totalorder %s209, %s210
    %p222 = scmp.eq.s32.totalorder %s32, 1
    %p223 = por %p221, %p222
    %p225 = scmp.ne.s32.totalorder %s210, %s224
    %p226 = scmp.eq.s32.totalorder %s32, 0
    %p227 = por %p225, %p226
    %s229 = sadd.s32 %s228, 1
    %p232 = scmp.eq.s32.totalorder %s26, 1
    %p233 = scmp.ne.s32.totalorder %s228, %s230
    %p234 = scmp.eq.s32.totalorder %s26, 0
    %p235 = por %p233, %p234
    %p236 = scmp.ne.s32.totalorder %s228, %s230
    %p237 = scmp.eq.s32.totalorder %s31, 1
    %p238 = por %p236, %p237
    %p239 = scmp.ne.s32.totalorder %s230, %s231
    %p240 = scmp.eq.s32.totalorder %s31, 0
    %p241 = por %p239, %p240
    %p242 = scmp.ne.s32.totalorder %s230, %s231
    %p243 = scmp.eq.s32.totalorder %s32, 1
    %p244 = por %p242, %p243
    %p246 = scmp.ne.s32.totalorder %s231, %s245
    %p247 = scmp.eq.s32.totalorder %s32, 0
    %p248 = por %p246, %p247
    %s250 = sadd.s32 %s249, 1
    %p253 = scmp.eq.s32.totalorder %s26, 1
    %p254 = scmp.ne.s32.totalorder %s249, %s251
    %p255 = scmp.eq.s32.totalorder %s26, 0
    %p256 = por %p254, %p255
    %p257 = scmp.ne.s32.totalorder %s249, %s251
    %p258 = scmp.eq.s32.totalorder %s31, 1
    %p259 = por %p257, %p258
    %p260 = scmp.ne.s32.totalorder %s251, %s252
    %p261 = scmp.eq.s32.totalorder %s31, 0
    %p262 = por %p260, %p261
    %p263 = scmp.ne.s32.totalorder %s251, %s252
    %p264 = scmp.eq.s32.totalorder %s32, 1
    %p265 = por %p263, %p264
    %p267 = scmp.ne.s32.totalorder %s252, %s266
    %p268 = scmp.eq.s32.totalorder %s32, 0
    %p269 = por %p267, %p268
    %s271 = sadd.s32 %s270, 1
    %p274 = scmp.eq.s32.totalorder %s26, 1
    %p275 = scmp.ne.s32.totalorder %s270, %s272
    %p276 = scmp.eq.s32.totalorder %s26, 0
    %p277 = por %p275, %p276
    %p278 = scmp.ne.s32.totalorder %s270, %s272
    %p279 = scmp.eq.s32.totalorder %s31, 1
    %p280 = por %p278, %p279
    %p281 = scmp.ne.s32.totalorder %s272, %s273
    %p282 = scmp.eq.s32.totalorder %s31, 0
    %p283 = por %p281, %p282
    %p284 = scmp.ne.s32.totalorder %s272, %s273
    %p285 = scmp.eq.s32.totalorder %s32, 1
    %p286 = por %p284, %p285
    %p288 = scmp.ne.s32.totalorder %s273, %s287
    %p289 = scmp.eq.s32.totalorder %s32, 0
    %p290 = por %p288, %p289
    %s292 = sadd.s32 %s291, 1
    %p295 = scmp.eq.s32.totalorder %s26, 1
    %p296 = scmp.ne.s32.totalorder %s291, %s293
    %p297 = scmp.eq.s32.totalorder %s26, 0
    %p298 = por %p296, %p297
    %p299 = scmp.ne.s32.totalorder %s291, %s293
    %p300 = scmp.eq.s32.totalorder %s31, 1
    %p301 = por %p299, %p300
    %p302 = scmp.ne.s32.totalorder %s293, %s294
    %p303 = scmp.eq.s32.totalorder %s31, 0
    %p304 = por %p302, %p303
    %p305 = scmp.ne.s32.totalorder %s293, %s294
    %p306 = scmp.eq.s32.totalorder %s32, 1
    %p307 = por %p305, %p306
    %p309 = scmp.ne.s32.totalorder %s294, %s308
    %p310 = scmp.eq.s32.totalorder %s32, 0
    %p311 = por %p309, %p310
    %s313 = sadd.s32 %s312, 1
    %p316 = scmp.eq.s32.totalorder %s26, 1
    %p317 = scmp.ne.s32.totalorder %s312, %s314
    %p318 = scmp.eq.s32.totalorder %s26, 0
    %p319 = por %p317, %p318
    %p320 = scmp.ne.s32.totalorder %s312, %s314
    %p321 = scmp.eq.s32.totalorder %s31, 1
    %p322 = por %p320, %p321
    %p323 = scmp.ne.s32.totalorder %s314, %s315
    %p324 = scmp.eq.s32.totalorder %s31, 0
    %p325 = por %p323, %p324
    %p326 = scmp.ne.s32.totalorder %s314, %s315
    %p327 = scmp.eq.s32.totalorder %s32, 1
    %p328 = por %p326, %p327
    %p330 = scmp.ne.s32.totalorder %s315, %s329
    %p331 = scmp.eq.s32.totalorder %s32, 0
    %p332 = por %p330, %p331
    %s334 = sadd.s32 %s333, 1
    %p337 = scmp.eq.s32.totalorder %s26, 1
    %p338 = scmp.ne.s32.totalorder %s333, %s335
    %p339 = scmp.eq.s32.totalorder %s26, 0
    %p340 = por %p338, %p339
    %p341 = scmp.ne.s32.totalorder %s333, %s335
    %p342 = scmp.eq.s32.totalorder %s31, 1
    %p343 = por %p341, %p342
    %p344 = scmp.ne.s32.totalorder %s335, %s336
    %p345 = scmp.eq.s32.totalorder %s31, 0
    %p346 = por %p344, %p345
    %p347 = scmp.ne.s32.totalorder %s335, %s336
    %p348 = scmp.eq.s32.totalorder %s32, 1
    %p349 = por %p347, %p348
    %p351 = scmp.ne.s32.totalorder %s336, %s350
    %p352 = scmp.eq.s32.totalorder %s32, 0
    %p353 = por %p351, %p352
    %s355 = sadd.s32 %s354, 1
    %p358 = scmp.eq.s32.totalorder %s26, 1
    %p359 = scmp.ne.s32.totalorder %s354, %s356
    %p360 = scmp.eq.s32.totalorder %s26, 0
    %p361 = por %p359, %p360
    %p362 = scmp.ne.s32.totalorder %s354, %s356
    %p363 = scmp.eq.s32.totalorder %s31, 1
    %p364 = por %p362, %p363
    %p365 = scmp.ne.s32.totalorder %s356, %s357
    %p366 = scmp.eq.s32.totalorder %s31, 0
    %p367 = por %p365, %p366
    %p368 = scmp.ne.s32.totalorder %s356, %s357
    %p369 = scmp.eq.s32.totalorder %s32, 1
    %p370 = por %p368, %p369
    %p372 = scmp.ne.s32.totalorder %s357, %s371
    %p373 = scmp.eq.s32.totalorder %s32, 0
    %p374 = por %p372, %p373
    %s376 = sadd.s32 %s375, 1
    %p379 = scmp.eq.s32.totalorder %s26, 1
    %p380 = scmp.ne.s32.totalorder %s375, %s377
    %p381 = scmp.eq.s32.totalorder %s26, 0
    %p382 = por %p380, %p381
    %p383 = scmp.ne.s32.totalorder %s375, %s377
    %p384 = scmp.eq.s32.totalorder %s31, 1
    %p385 = por %p383, %p384
    %p386 = scmp.ne.s32.totalorder %s377, %s378
    %p387 = scmp.eq.s32.totalorder %s31, 0
    %p388 = por %p386, %p387
    %p389 = scmp.ne.s32.totalorder %s377, %s378
    %p390 = scmp.eq.s32.totalorder %s32, 1
    %p391 = por %p389, %p390
    %p393 = scmp.ne.s32.totalorder %s378, %s392
    %p394 = scmp.eq.s32.totalorder %s32, 0
    %p395 = por %p393, %p394
    %s397 = sadd.s32 %s396, 1
    %p400 = scmp.eq.s32.totalorder %s26, 1
    %p401 = scmp.ne.s32.totalorder %s396, %s398
    %p402 = scmp.eq.s32.totalorder %s26, 0
    %p403 = por %p401, %p402
    %p404 = scmp.ne.s32.totalorder %s396, %s398
    %p405 = scmp.eq.s32.totalorder %s31, 1
    %p406 = por %p404, %p405
    %p407 = scmp.ne.s32.totalorder %s398, %s399
    %p408 = scmp.eq.s32.totalorder %s31, 0
    %p409 = por %p407, %p408
    %p410 = scmp.ne.s32.totalorder %s398, %s399
    %p411 = scmp.eq.s32.totalorder %s32, 1
    %p412 = por %p410, %p411
    %p414 = scmp.ne.s32.totalorder %s399, %s413
    %p415 = scmp.eq.s32.totalorder %s32, 0
    %p416 = por %p414, %p415
    %s417 = ssub.s32 %s26, %s33
    %p418 = scmp.eq.s32.totalorder %s417, 0
    %s420 = sadd.s32 %s419, 1
    %s421 = scalar_select %p418, %s419, %s420
    %p424 = pneg %p418
    %p425 = scmp.eq.s32.totalorder %s26, 1
    %p426 = por %p424, %p425
    %p427 = scmp.ne.s32.totalorder %s419, %s422
    %p428 = scmp.eq.s32.totalorder %s26, 0
    %p429 = por %p427, %p428
    %p430 = scmp.ne.s32.totalorder %s419, %s422
    %p431 = scmp.eq.s32.totalorder %s31, 1
    %p432 = por %p430, %p431
    %p433 = scmp.ne.s32.totalorder %s422, %s423
    %p434 = scmp.eq.s32.totalorder %s31, 0
    %p435 = por %p433, %p434
    %p436 = scmp.ne.s32.totalorder %s422, %s423
    %p437 = scmp.eq.s32.totalorder %s32, 1
    %p438 = por %p436, %p437
    %p440 = scmp.ne.s32.totalorder %s423, %s439
    %p441 = scmp.eq.s32.totalorder %s32, 0
    %p442 = por %p440, %p441
    %s443 = ssub.s32 %s26, %s33
    %p444 = scmp.eq.s32.totalorder %s443, 0
    %s446 = sadd.s32 %s445, 1
    %s447 = scalar_select %p444, %s445, %s446
    %p450 = pneg %p444
    %p451 = scmp.eq.s32.totalorder %s26, 1
    %p452 = por %p450, %p451
    %p453 = scmp.ne.s32.totalorder %s445, %s448
    %p454 = scmp.eq.s32.totalorder %s26, 0
    %p455 = por %p453, %p454
    %p456 = scmp.ne.s32.totalorder %s445, %s448
    %p457 = scmp.eq.s32.totalorder %s31, 1
    %p458 = por %p456, %p457
    %p459 = scmp.ne.s32.totalorder %s448, %s449
    %p460 = scmp.eq.s32.totalorder %s31, 0
    %p461 = por %p459, %p460
    %p462 = scmp.ne.s32.totalorder %s448, %s449
    %p463 = scmp.eq.s32.totalorder %s32, 1
    %p464 = por %p462, %p463
    %p466 = scmp.ne.s32.totalorder %s449, %s465
    %p467 = scmp.eq.s32.totalorder %s32, 0
    %p468 = por %p466, %p467
    %p469 = scmp.le.s32.totalorder 1, %s26
    %p470 = scmp.lt.s32.totalorder %s26, 3
    %p471 = pnand %p469, %p470
    %p472 = pneg %p471
    // Predicated region
    $region9: #{tfc_tdf_net_forward.3} parent=5 // pred_check
      _
    $region10: #{tfc_tdf_net_forward.3} parent=5 // pred_check_branch
      %474 = sbr.rel (%p471) target = $region12
    $region11: #{tfc_tdf_net_forward.3} parent=5 // pred_region
      %s475 = ssub.s32 %s26, 1
      // Predicated region
      $region13: #{tfc_tdf_net_forward.3} parent=11 // pred_check
        %p476 = pneg %p73
      $region14: #{tfc_tdf_net_forward.3} parent=11 // pred_check_branch
        %478 = sbr.rel (%p476) target = $region16
      $region15: #{tfc_tdf_net_forward.3} parent=11 // pred_region
        _
      $region16: #{tfc_tdf_net_forward.3} parent=11 // pred_fallthru
        _
      // Predicated region
      $region17: #{tfc_tdf_net_forward.3} parent=11 // pred_check
        %p479 = pneg %p94
      $region18: #{tfc_tdf_net_forward.3} parent=11 // pred_check_branch
        %481 = sbr.rel (%p479) target = $region20
      $region19: #{tfc_tdf_net_forward.3} parent=11 // pred_region
        _
      $region20: #{tfc_tdf_net_forward.3} parent=11 // pred_fallthru
        _
      // Predicated region
      $region21: #{tfc_tdf_net_forward.3} parent=11 // pred_check
        %p482 = pneg %p115
      $region22: #{tfc_tdf_net_forward.3} parent=11 // pred_check_branch
        %484 = sbr.rel (%p482) target = $region24
      $region23: #{tfc_tdf_net_forward.3} parent=11 // pred_region
        _
      $region24: #{tfc_tdf_net_forward.3} parent=11 // pred_fallthru
        _
      // Predicated region
      $region25: #{tfc_tdf_net_forward.3} parent=11 // pred_check
        %p485 = pneg %p136
      $region26: #{tfc_tdf_net_forward.3} parent=11 // pred_check_branch
        %487 = sbr.rel (%p485) target = $region28
      $region27: #{tfc_tdf_net_forward.3} parent=11 // pred_region
        _
      $region28: #{tfc_tdf_net_forward.3} parent=11 // pred_fallthru
        _
      // Predicated region
      $region29: #{tfc_tdf_net_forward.3} parent=11 // pred_check
        %p488 = pneg %p157
      $region30: #{tfc_tdf_net_forward.3} parent=11 // pred_check_branch
        %490 = sbr.rel (%p488) target = $region32
      $region31: #{tfc_tdf_net_forward.3} parent=11 // pred_region
        _
      $region32: #{tfc_tdf_net_forward.3} parent=11 // pred_fallthru
        _
      // Predicated region
      $region33: #{tfc_tdf_net_forward.3} parent=11 // pred_check
        %p491 = pneg %p178
      $region34: #{tfc_tdf_net_forward.3} parent=11 // pred_check_branch
        %493 = sbr.rel (%p491) target = $region36
      $region35: #{tfc_tdf_net_forward.3} parent=11 // pred_region
        _
      $region36: #{tfc_tdf_net_forward.3} parent=11 // pred_fallthru
        _
      // Predicated region
      $region37: #{tfc_tdf_net_forward.3} parent=11 // pred_check
        %p494 = pneg %p199
      $region38: #{tfc_tdf_net_forward.3} parent=11 // pred_check_branch
        %496 = sbr.rel (%p494) target = $region40
      $region39: #{tfc_tdf_net_forward.3} parent=11 // pred_region
        _
      $region40: #{tfc_tdf_net_forward.3} parent=11 // pred_fallthru
        _
      // Predicated region
      $region41: #{tfc_tdf_net_forward.3} parent=11 // pred_check
        %p497 = pneg %p220
      $region42: #{tfc_tdf_net_forward.3} parent=11 // pred_check_branch
        %499 = sbr.rel (%p497) target = $region44
      $region43: #{tfc_tdf_net_forward.3} parent=11 // pred_region
        _
      $region44: #{tfc_tdf_net_forward.3} parent=11 // pred_fallthru
        _
      // Predicated region
      $region45: #{tfc_tdf_net_forward.3} parent=11 // pred_check
        %p500 = pneg %p241
      $region46: #{tfc_tdf_net_forward.3} parent=11 // pred_check_branch
        %502 = sbr.rel (%p500) target = $region48
      $region47: #{tfc_tdf_net_forward.3} parent=11 // pred_region
        _
      $region48: #{tfc_tdf_net_forward.3} parent=11 // pred_fallthru
        _
      // Predicated region
      $region49: #{tfc_tdf_net_forward.3} parent=11 // pred_check
        %p503 = pneg %p262
      $region50: #{tfc_tdf_net_forward.3} parent=11 // pred_check_branch
        %505 = sbr.rel (%p503) target = $region52
      $region51: #{tfc_tdf_net_forward.3} parent=11 // pred_region
        _
      $region52: #{tfc_tdf_net_forward.3} parent=11 // pred_fallthru
        _
      // Predicated region
      $region53: #{tfc_tdf_net_forward.3} parent=11 // pred_check
        %p506 = pneg %p283
      $region54: #{tfc_tdf_net_forward.3} parent=11 // pred_check_branch
        %508 = sbr.rel (%p506) target = $region56
      $region55: #{tfc_tdf_net_forward.3} parent=11 // pred_region
        _
      $region56: #{tfc_tdf_net_forward.3} parent=11 // pred_fallthru
        _
      // Predicated region
      $region57: #{tfc_tdf_net_forward.3} parent=11 // pred_check
        %p509 = pneg %p304
      $region58: #{tfc_tdf_net_forward.3} parent=11 // pred_check_branch
        %511 = sbr.rel (%p509) target = $region60
      $region59: #{tfc_tdf_net_forward.3} parent=11 // pred_region
        _
      $region60: #{tfc_tdf_net_forward.3} parent=11 // pred_fallthru
        _
      // Predicated region
      $region61: #{tfc_tdf_net_forward.3} parent=11 // pred_check
        %p512 = pneg %p325
      $region62: #{tfc_tdf_net_forward.3} parent=11 // pred_check_branch
        %514 = sbr.rel (%p512) target = $region64
      $region63: #{tfc_tdf_net_forward.3} parent=11 // pred_region
        _
      $region64: #{tfc_tdf_net_forward.3} parent=11 // pred_fallthru
        _
      // Predicated region
      $region65: #{tfc_tdf_net_forward.3} parent=11 // pred_check
        %p515 = pneg %p346
      $region66: #{tfc_tdf_net_forward.3} parent=11 // pred_check_branch
        %517 = sbr.rel (%p515) target = $region68
      $region67: #{tfc_tdf_net_forward.3} parent=11 // pred_region
        _
      $region68: #{tfc_tdf_net_forward.3} parent=11 // pred_fallthru
        _
      // Predicated region
      $region69: #{tfc_tdf_net_forward.3} parent=11 // pred_check
        %p518 = pneg %p367
      $region70: #{tfc_tdf_net_forward.3} parent=11 // pred_check_branch
        %520 = sbr.rel (%p518) target = $region72
      $region71: #{tfc_tdf_net_forward.3} parent=11 // pred_region
        _
      $region72: #{tfc_tdf_net_forward.3} parent=11 // pred_fallthru
        _
      // Predicated region
      $region73: #{tfc_tdf_net_forward.3} parent=11 // pred_check
        %p521 = pneg %p388
      $region74: #{tfc_tdf_net_forward.3} parent=11 // pred_check_branch
        %523 = sbr.rel (%p521) target = $region76
      $region75: #{tfc_tdf_net_forward.3} parent=11 // pred_region
        _
      $region76: #{tfc_tdf_net_forward.3} parent=11 // pred_fallthru
        _
      // Predicated region
      $region77: #{tfc_tdf_net_forward.3} parent=11 // pred_check
        %p524 = pneg %p409
      $region78: #{tfc_tdf_net_forward.3} parent=11 // pred_check_branch
        %526 = sbr.rel (%p524) target = $region80
      $region79: #{tfc_tdf_net_forward.3} parent=11 // pred_region
        _
      $region80: #{tfc_tdf_net_forward.3} parent=11 // pred_fallthru
        _
    $region12: #{tfc_tdf_net_forward.3} parent=5 // pred_fallthru
      _
    %p527 = scmp.lt.s32.totalorder %s26, 2
    // Predicated region
    $region81: #{tfc_tdf_net_forward.3} parent=5 // pred_check
      %p528 = pneg %p527
    $region82: #{tfc_tdf_net_forward.3} parent=5 // pred_check_branch
      %530 = sbr.rel (%p528) target = $region84
    $region83: #{tfc_tdf_net_forward.3} parent=5 // pred_region
      // Predicated region
      $region85: #{tfc_tdf_net_forward.3} parent=83 // pred_check
        %p531 = pneg %p46
      $region86: #{tfc_tdf_net_forward.3} parent=83 // pred_check_branch
        %533 = sbr.rel (%p531) target = $region88
      $region87: #{tfc_tdf_net_forward.3} parent=83 // pred_region
        %p534 = scmp.lt.s32.totalorder %s26, 1
        %s535 = scalar_select %p534, %s26, 1
        %s536 = smul.addr %s535, 8
        %s537 = smul.addr %s536, 8
        %s538 = scalar_lea.vmem %s0, %s537
      $region88: #{tfc_tdf_net_forward.3} parent=83 // pred_fallthru
        _
    $region84: #{tfc_tdf_net_forward.3} parent=5 // pred_fallthru
      _
    %p539 = scmp.le.s32.totalorder 1, %s26
    %p540 = scmp.lt.s32.totalorder %s26, 3
    %p541 = pnand %p539, %p540
    %p542 = pneg %p541
    // Predicated region
    $region89: #{tfc_tdf_net_forward.3} parent=5 // pred_check
      _
    $region90: #{tfc_tdf_net_forward.3} parent=5 // pred_check_branch
      %544 = sbr.rel (%p541) target = $region92
    $region91: #{tfc_tdf_net_forward.3} parent=5 // pred_region
      %s545 = ssub.s32 %s26, 1
      %p546 = scmp.lt.s32.totalorder %s31, 1
      %s547 = scalar_select %p546, %s31, 1
      %s548 = smul.addr %s547, 8
      %s549 = smul.addr %s548, 8
      %s550 = scalar_lea.vmem %s0, %s549
      %p551 = pneg %p52
      %p552 = pneg %p49
      %p553 = pneg %p73
      %p554 = pneg %p70
      %p555 = pneg %p94
      %p556 = pneg %p91
      %p557 = pneg %p115
      %p558 = pneg %p112
      %p559 = pneg %p136
      %p560 = pneg %p133
      %p561 = pneg %p157
      %p562 = pneg %p154
      %p563 = pneg %p178
      %p564 = pneg %p175
      %p565 = pneg %p199
      %p566 = pneg %p196
      %p567 = pneg %p220
      %p568 = pneg %p217
      %p569 = pneg %p241
      %p570 = pneg %p238
      %p571 = pneg %p262
      %p572 = pneg %p259
      %p573 = pneg %p283
      %p574 = pneg %p280
      %p575 = pneg %p304
      %p576 = pneg %p301
      %p577 = pneg %p325
      %p578 = pneg %p322
      %p579 = pneg %p346
      %p580 = pneg %p343
      %p581 = pneg %p367
      %p582 = pneg %p364
      %p583 = pneg %p388
      %p584 = pneg %p385
      %p585 = pneg %p409
      %p586 = pneg %p406
      %p587 = pneg %p435
      %p588 = pneg %p432
      %p589 = scmp.lt.s32.totalorder %s31, 1
      %s590 = scalar_select %p589, %s31, 1
      %s591 = smul.addr %s590, 4
      %s592 = smul.addr %s591, 8
      %s593 = scalar_lea.vmem %s18, %s592
      %p594 = pneg %p461
      %p595 = pneg %p458
      %p596 = scmp.lt.s32.totalorder %s31, 1
      %s597 = scalar_select %p596, %s31, 1
      %s598 = smul.addr %s597, 4
      %s599 = smul.addr %s598, 8
      %s600 = scalar_lea.vmem %s19, %s599
      %p601 = scmp.lt.s32.totalorder %s31, 1
      %s602 = scalar_select %p601, %s31, 1
      %s603 = smul.addr %s602, 8
      %s604 = smul.addr %s603, 8
      %s605 = scalar_lea.vmem %s0, %s604
      %p606 = scmp.lt.s32.totalorder %s31, 1
      %s607 = scalar_select %p606, %s31, 1
      %s608 = smul.addr %s607, 4
      %s609 = smul.addr %s608, 8
      %s610 = scalar_lea.vmem %s18, %s609
      %p611 = scmp.lt.s32.totalorder %s31, 1
      %s612 = scalar_select %p611, %s31, 1
      %s613 = smul.addr %s612, 4
      %s614 = smul.addr %s613, 8
      %s615 = scalar_lea.vmem %s19, %s614
      %v617 = vld [vmem:[%s1] sm:$0xf]
      %v618 = vld [vmem:[%s605] sm:$0xff]
      %v619 = vld [vmem:[%s605 + $0x8] sm:$0xff]
      %v620 = vld [vmem:[%s605 + $0x10] sm:$0xff]
      %v621 = vld [vmem:[%s605 + $0x18] sm:$0xff]
      %v622 = vld [vmem:[%s605 + $0x20] sm:$0xff]
      %v623 = vld [vmem:[%s605 + $0x28] sm:$0xff]
      %v624 = vld [vmem:[%s605 + $0x30] sm:$0xff]
      %v625 = vld [vmem:[%s605 + $0x38] sm:$0xff]
      %v626 = vpack.c.bf16 %v622, %v618
      %v627 = vpack.c.bf16 %v623, %v619
      %v628 = vpack.c.bf16 %v624, %v620
      %v629 = vpack.c.bf16 %v625, %v621
      %vm630 = vcmask 130048
      %v632 = vsel %vm630, %v617, 0
      %634 = vmatprep.subr.bf16.mxu0 %v627
      %635 = vmatpush1.bf16.msra.mxu0 %v626
      %636 = vmatprep.subr.bf16.mxu0 0
      %637 = vmatpush1.bf16.msra.mxu0 0
      %638 = vmatprep.subr.bf16.mxu0 0
      %639 = vmatpush1.bf16.msra.mxu0 0
      %640 = vmatprep.subr.bf16.mxu0 0
      %641 = vmatpush1.bf16.msra.mxu0 0
      %642 = vmatprep.subr.bf16.mxu0 0
      %643 = vmatpush1.bf16.msra.mxu0 0
      %644 = vmatprep.subr.bf16.mxu0 0
      %645 = vmatpush1.bf16.msra.mxu0 0
      %646 = vmatprep.subr.bf16.mxu0 0
      %647 = vmatpush1.bf16.msra.mxu0 0
      %648 = vmatprep.subr.bf16.mxu0 0
      %649 = vmatpush1.bf16.msra.mxu0 0
      %650 = vmatprep.subr.bf16.mxu0 0
      %651 = vmatpush1.bf16.msra.mxu0 0
      %652 = vmatprep.subr.bf16.mxu0 0
      %653 = vmatpush1.bf16.msra.mxu0 0
      %654 = vmatprep.subr.bf16.mxu0 0
      %655 = vmatpush1.bf16.msra.mxu0 0
      %656 = vmatprep.subr.bf16.mxu0 0
      %657 = vmatpush1.bf16.msra.mxu0 0
      %658 = vmatprep.subr.bf16.mxu0 0
      %659 = vmatpush1.bf16.msra.mxu0 0
      %660 = vmatprep.subr.bf16.mxu0 0
      %661 = vmatpush1.bf16.msra.mxu0 0
      %662 = vmatprep.subr.bf16.mxu0 0
      %663 = vmatpush1.bf16.msra.mxu0 0
      %664 = vmatprep.subr.bf16.mxu0 0
      %665 = vmatpush1.bf16.msra.mxu0 0
      %666 = vmatprep.mubr.bf16.mxu0 0
      %667 = vmatmul.mubr.bf16.gmra.mrb[0].mxu0 %v632
      %v668 = vpop.f32.mrb[0].mxu0
      %v669 = vadd.f32 0.0, %v668
      %v670 = vpop.f32.mrb[0].mxu0
      %v671 = vadd.f32 0.0, %v670
      %v672 = vpop.f32.mrb[0].mxu0
      %v673 = vpop.f32.mrb[0].mxu0
      %674 = vdwg.mxu0
      %675 = vmatprep.subr.bf16.mxu0 %v629
      %676 = vmatpush1.bf16.msra.mxu0 %v628
      %677 = vmatprep.subr.bf16.mxu0 0
      %678 = vmatpush1.bf16.msra.mxu0 0
      %679 = vmatprep.subr.bf16.mxu0 0
      %680 = vmatpush1.bf16.msra.mxu0 0
      %681 = vmatprep.subr.bf16.mxu0 0
      %682 = vmatpush1.bf16.msra.mxu0 0
      %683 = vmatprep.subr.bf16.mxu0 0
      %684 = vmatpush1.bf16.msra.mxu0 0
      %685 = vmatprep.subr.bf16.mxu0 0
      %686 = vmatpush1.bf16.msra.mxu0 0
      %687 = vmatprep.subr.bf16.mxu0 0
      %688 = vmatpush1.bf16.msra.mxu0 0
      %689 = vmatprep.subr.bf16.mxu0 0
      %690 = vmatpush1.bf16.msra.mxu0 0
      %691 = vmatprep.subr.bf16.mxu0 0
      %692 = vmatpush1.bf16.msra.mxu0 0
      %693 = vmatprep.subr.bf16.mxu0 0
      %694 = vmatpush1.bf16.msra.mxu0 0
      %695 = vmatprep.subr.bf16.mxu0 0
      %696 = vmatpush1.bf16.msra.mxu0 0
      %697 = vmatprep.subr.bf16.mxu0 0
      %698 = vmatpush1.bf16.msra.mxu0 0
      %699 = vmatprep.subr.bf16.mxu0 0
      %700 = vmatpush1.bf16.msra.mxu0 0
      %701 = vmatprep.subr.bf16.mxu0 0
      %702 = vmatpush1.bf16.msra.mxu0 0
      %703 = vmatprep.subr.bf16.mxu0 0
      %704 = vmatpush1.bf16.msra.mxu0 0
      %705 = vmatprep.subr.bf16.mxu0 0
      %706 = vmatpush1.bf16.msra.mxu0 0
      %707 = vmatprep.mubr.bf16.mxu0 0
      %708 = vmatmul.mubr.bf16.gmra.mrb[0].mxu0 %v632
      %v709 = vpop.f32.mrb[0].mxu0
      %v710 = vadd.f32 0.0, %v709
      %v711 = vpop.f32.mrb[0].mxu0
      %v712 = vadd.f32 0.0, %v711
      %v713 = vpop.f32.mrb[0].mxu0
      %v714 = vpop.f32.mrb[0].mxu0
      %715 = vdwg.mxu0
      %v716 = vld [vmem:[%s2] sm:$0xf]
      %v717 = vpack.c.bf16 %v669, %v669
      %v718 = vpack.c.bf16 %v671, %v671
      %v719 = vpack.c.bf16 %v710, %v710
      %v720 = vpack.c.bf16 %v712, %v712
      %vm721 = vcmask 64512
      %v723 = vsel %vm721, %v716, 0
      %vm725 = vcmask 1043456
      %v727 = vsel %vm725, %v717, 0
      %v730 = vsel %vm725, %v718, 0
      %v733 = vsel %vm725, %v719, 0
      %v736 = vsel %vm725, %v720, 0
      %738 = vmatprep.subr.bf16.mxu0 %v730
      %739 = vmatpush1.bf16.msra.mxu0 %v727
      %740 = vmatprep.subr.bf16.mxu0 0
      %741 = vmatpush1.bf16.msra.mxu0 0
      %742 = vmatprep.subr.bf16.mxu0 0
      %743 = vmatpush1.bf16.msra.mxu0 0
      %744 = vmatprep.subr.bf16.mxu0 0
      %745 = vmatpush1.bf16.msra.mxu0 0
      %746 = vmatprep.subr.bf16.mxu0 0
      %747 = vmatpush1.bf16.msra.mxu0 0
      %748 = vmatprep.subr.bf16.mxu0 0
      %749 = vmatpush1.bf16.msra.mxu0 0
      %750 = vmatprep.subr.bf16.mxu0 0
      %751 = vmatpush1.bf16.msra.mxu0 0
      %752 = vmatprep.subr.bf16.mxu0 0
      %753 = vmatpush1.bf16.msra.mxu0 0
      %754 = vmatprep.subr.bf16.mxu0 0
      %755 = vmatpush1.bf16.msra.mxu0 0
      %756 = vmatprep.subr.bf16.mxu0 0
      %757 = vmatpush1.bf16.msra.mxu0 0
      %758 = vmatprep.subr.bf16.mxu0 0
      %759 = vmatpush1.bf16.msra.mxu0 0
      %760 = vmatprep.subr.bf16.mxu0 0
      %761 = vmatpush1.bf16.msra.mxu0 0
      %762 = vmatprep.subr.bf16.mxu0 0
      %763 = vmatpush1.bf16.msra.mxu0 0
      %764 = vmatprep.subr.bf16.mxu0 0
      %765 = vmatpush1.bf16.msra.mxu0 0
      %766 = vmatprep.subr.bf16.mxu0 0
      %767 = vmatpush1.bf16.msra.mxu0 0
      %768 = vmatprep.subr.bf16.mxu0 0
      %769 = vmatpush1.bf16.msra.mxu0 0
      %770 = vmatprep.mubr.bf16.mxu0 0
      %771 = vmatmul.mubr.bf16.gmra.mrb[0].mxu0 %v723
      %v772 = vpop.f32.mrb[0].mxu0
      %v773 = vadd.f32 0.0, %v772
      %v774 = vpop.f32.mrb[0].mxu0
      %v775 = vadd.f32 0.0, %v774
      %v776 = vpop.f32.mrb[0].mxu0
      %v777 = vpop.f32.mrb[0].mxu0
      %778 = vdwg.mxu0
      %779 = vmatprep.subr.bf16.mxu0 %v736
      %780 = vmatpush1.bf16.msra.mxu0 %v733
      %781 = vmatprep.subr.bf16.mxu0 0
      %782 = vmatpush1.bf16.msra.mxu0 0
      %783 = vmatprep.subr.bf16.mxu0 0
      %784 = vmatpush1.bf16.msra.mxu0 0
      %785 = vmatprep.subr.bf16.mxu0 0
      %786 = vmatpush1.bf16.msra.mxu0 0
      %787 = vmatprep.subr.bf16.mxu0 0
      %788 = vmatpush1.bf16.msra.mxu0 0
      %789 = vmatprep.subr.bf16.mxu0 0
      %790 = vmatpush1.bf16.msra.mxu0 0
      %791 = vmatprep.subr.bf16.mxu0 0
      %792 = vmatpush1.bf16.msra.mxu0 0
      %793 = vmatprep.subr.bf16.mxu0 0
      %794 = vmatpush1.bf16.msra.mxu0 0
      %795 = vmatprep.subr.bf16.mxu0 0
      %796 = vmatpush1.bf16.msra.mxu0 0
      %797 = vmatprep.subr.bf16.mxu0 0
      %798 = vmatpush1.bf16.msra.mxu0 0
      %799 = vmatprep.subr.bf16.mxu0 0
      %800 = vmatpush1.bf16.msra.mxu0 0
      %801 = vmatprep.subr.bf16.mxu0 0
      %802 = vmatpush1.bf16.msra.mxu0 0
      %803 = vmatprep.subr.bf16.mxu0 0
      %804 = vmatpush1.bf16.msra.mxu0 0
      %805 = vmatprep.subr.bf16.mxu0 0
      %806 = vmatpush1.bf16.msra.mxu0 0
      %807 = vmatprep.subr.bf16.mxu0 0
      %808 = vmatpush1.bf16.msra.mxu0 0
      %809 = vmatprep.subr.bf16.mxu0 0
      %810 = vmatpush1.bf16.msra.mxu0 0
      %811 = vmatprep.mubr.bf16.mxu0 0
      %812 = vmatmul.mubr.bf16.gmra.mrb[0].mxu0 %v723
      %v813 = vpop.f32.mrb[0].mxu0
      %v814 = vadd.f32 0.0, %v813
      %v815 = vpop.f32.mrb[0].mxu0
      %v816 = vadd.f32 0.0, %v815
      %v817 = vpop.f32.mrb[0].mxu0
      %v818 = vpop.f32.mrb[0].mxu0
      %819 = vdwg.mxu0
      %v820 = vld [vmem:[%s3] sm:$0xff]
      %v821 = vld [vmem:[%s4] sm:$0xff]
      %v822 = vadd.f32 %v669, %v671
      %v823 = vadd.f32 %v822, %v710
      %v824 = vadd.f32 %v823, %v712
      %825 = vadd.xlane.f32.xlu0 %v824
      %v826 = vpop.xlane.xlu0 %825
      %v827 = vrcp.pop 512.0
      %v828 = vmul.f32 %v826, %v827
      %v829 = vsub.f32 %v669, %v828
      %v830 = vsub.f32 %v671, %v828
      %v831 = vsub.f32 %v710, %v828
      %v832 = vsub.f32 %v712, %v828
      %v833 = vmul.f32 %v829, %v829
      %v834 = vmul.f32 %v830, %v830
      %v835 = vmul.f32 %v831, %v831
      %v836 = vmul.f32 %v832, %v832
      %v837 = vadd.f32 %v833, %v834
      %v838 = vadd.f32 %v837, %v835
      %v839 = vadd.f32 %v838, %v836
      %840 = vadd.xlane.f32.xlu0 %v839
      %v841 = vpop.xlane.xlu0 %840
      %v842 = vmul.f32 %v841, %v827
      %v843 = vadd.f32 %v842, 1e-05
      %v844 = vrsqrt.pop %v843
      %v845 = vmul.f32 %v829, %v844
      %v846 = vmul.f32 %v830, %v844
      %v847 = vmul.f32 %v831, %v844
      %v848 = vmul.f32 %v832, %v844
      %850 = vset.pattern.permute.xlu0 0
      %851 = vperm.xlu0 %850, %v820
      %v852 = vpop.permute.xlu0 %851
      %v854 = vmul.f32 %v845, %v852
      %v855 = vmul.f32 %v846, %v852
      %v856 = vmul.f32 %v847, %v852
      %v857 = vmul.f32 %v848, %v852
      %859 = vset.pattern.permute.xlu0 0
      %860 = vperm.xlu0 %859, %v821
      %v861 = vpop.permute.xlu0 %860
      %v863 = vadd.f32 %v854, %v861
      %v864 = vadd.f32 %v855, %v861
      %v865 = vadd.f32 %v856, %v861
      %v866 = vadd.f32 %v857, %v861
      %v867 = vmax.f32 %v863, 0.0
      %v868 = vmax.f32 %v864, 0.0
      %v869 = vmax.f32 %v865, 0.0
      %v870 = vmax.f32 %v866, 0.0
      %v871 = vld [vmem:[%s5] sm:$0xf]
      %876 = vrot.lane.b32.xlu0 %v867, 33
      %v877 = vpop.permute.xlu0 %876
      %878 = vrot.lane.b32.xlu0 %v868, 33
      %v879 = vpop.permute.xlu0 %878
      %880 = vrot.lane.b32.xlu0 %v869, 33
      %v881 = vpop.permute.xlu0 %880
      %882 = vrot.lane.b32.xlu0 %v870, 33
      %v883 = vpop.permute.xlu0 %882
      %vm884 = vcmask 269312
      %v885 = vsel %vm884, %v877, %v879
      %v886 = vsel %vm884, %v879, %v881
      %v887 = vsel %vm884, %v881, %v883
      %v893 = vsel %vm884, 0.0, %v877
      %v894 = vsel %vm884, %v883, 0.0
      %v895 = vld [vmem:[%s15] ss:$8 sm:$0xf]
      %v897 = vlaneseq
      %v898 = vshrl.u32 %v897, 7
      %v899 = vsub.s32 0, %v898
      %v900 = vrot.slane %v895, %v899
      %v901 = vlaneseq
      %v902 = vshrl.u32 %v901, 7
      %v903 = vsub.s32 1, %v902
      %v904 = vrot.slane %v895, %v903
      %v905 = vlaneseq
      %v906 = vshrl.u32 %v905, 7
      %v907 = vsub.s32 2, %v906
      %v908 = vrot.slane %v895, %v907
      %v909 = vlaneseq
      %v910 = vshrl.u32 %v909, 7
      %v911 = vsub.s32 3, %v910
      %v912 = vrot.slane %v895, %v911
      %v917 = vmul.f32 %v893, %v900
      %v918 = vmul.f32 %v885, %v904
      %v919 = vmul.f32 %v886, %v908
      %v920 = vmul.f32 %v887, %v912
      %s921 = scalar_lea.vmem %s15, 1
      %v922 = vld [vmem:[%s921] ss:$8 sm:$0xf]
      %v924 = vlaneseq
      %v925 = vshrl.u32 %v924, 7
      %v926 = vsub.s32 0, %v925
      %v927 = vrot.slane %v922, %v926
      %v928 = vlaneseq
      %v929 = vshrl.u32 %v928, 7
      %v930 = vsub.s32 1, %v929
      %v931 = vrot.slane %v922, %v930
      %v932 = vlaneseq
      %v933 = vshrl.u32 %v932, 7
      %v934 = vsub.s32 2, %v933
      %v935 = vrot.slane %v922, %v934
      %v936 = vlaneseq
      %v937 = vshrl.u32 %v936, 7
      %v938 = vsub.s32 3, %v937
      %v939 = vrot.slane %v922, %v938
      %940 = vrot.lane.b32.xlu0 %v927, 1
      %v941 = vpop.permute.xlu0 %940
      %942 = vrot.lane.b32.xlu0 %v931, 1
      %v943 = vpop.permute.xlu0 %942
      %944 = vrot.lane.b32.xlu0 %v935, 1
      %v945 = vpop.permute.xlu0 %944
      %946 = vrot.lane.b32.xlu0 %v939, 1
      %v947 = vpop.permute.xlu0 %946
      %vm948 = vcmask 7168
      %v949 = vsel %vm948, %v941, %v943
      %v950 = vsel %vm948, %v943, %v945
      %v951 = vsel %vm948, %v945, %v947
      %v957 = vmul.f32 %v893, %v941
      %v958 = vmul.f32 %v885, %v949
      %v959 = vmul.f32 %v886, %v950
      %v960 = vmul.f32 %v887, %v951
      %v961 = vmul.f32 %v894, %v947
      %s962 = scalar_lea.vmem %s15, 2
      %v963 = vld [vmem:[%s962] ss:$8 sm:$0xf]
      %v965 = vlaneseq
      %v966 = vshrl.u32 %v965, 7
      %v967 = vsub.s32 0, %v966
      %v968 = vrot.slane %v963, %v967
      %v969 = vlaneseq
      %v970 = vshrl.u32 %v969, 7
      %v971 = vsub.s32 1, %v970
      %v972 = vrot.slane %v963, %v971
      %v973 = vlaneseq
      %v974 = vshrl.u32 %v973, 7
      %v975 = vsub.s32 2, %v974
      %v976 = vrot.slane %v963, %v975
      %v977 = vlaneseq
      %v978 = vshrl.u32 %v977, 7
      %v979 = vsub.s32 3, %v978
      %v980 = vrot.slane %v963, %v979
      %981 = vrot.lane.b32.xlu0 %v968, 2
      %v982 = vpop.permute.xlu0 %981
      %983 = vrot.lane.b32.xlu0 %v972, 2
      %v984 = vpop.permute.xlu0 %983
      %985 = vrot.lane.b32.xlu0 %v976, 2
      %v986 = vpop.permute.xlu0 %985
      %987 = vrot.lane.b32.xlu0 %v980, 2
      %v988 = vpop.permute.xlu0 %987
      %vm989 = vcmask 15360
      %v990 = vsel %vm989, %v982, %v984
      %v991 = vsel %vm989, %v984, %v986
      %v992 = vsel %vm989, %v986, %v988
      %v998 = vmul.f32 %v893, %v982
      %v999 = vmul.f32 %v885, %v990
      %v1000 = vmul.f32 %v886, %v991
      %v1001 = vmul.f32 %v887, %v992
      %v1002 = vmul.f32 %v894, %v988
      %s1003 = scalar_lea.vmem %s15, 3
      %v1004 = vld [vmem:[%s1003] ss:$8 sm:$0xf]
      %v1006 = vlaneseq
      %v1007 = vshrl.u32 %v1006, 7
      %v1008 = vsub.s32 0, %v1007
      %v1009 = vrot.slane %v1004, %v1008
      %v1010 = vlaneseq
      %v1011 = vshrl.u32 %v1010, 7
      %v1012 = vsub.s32 1, %v1011
      %v1013 = vrot.slane %v1004, %v1012
      %v1014 = vlaneseq
      %v1015 = vshrl.u32 %v1014, 7
      %v1016 = vsub.s32 2, %v1015
      %v1017 = vrot.slane %v1004, %v1016
      %v1018 = vlaneseq
      %v1019 = vshrl.u32 %v1018, 7
      %v1020 = vsub.s32 3, %v1019
      %v1021 = vrot.slane %v1004, %v1020
      %1022 = vrot.lane.b32.xlu0 %v1009, 32
      %v1023 = vpop.permute.xlu0 %1022
      %1024 = vrot.lane.b32.xlu0 %v1013, 32
      %v1025 = vpop.permute.xlu0 %1024
      %1026 = vrot.lane.b32.xlu0 %v1017, 32
      %v1027 = vpop.permute.xlu0 %1026
      %1028 = vrot.lane.b32.xlu0 %v1021, 32
      %v1029 = vpop.permute.xlu0 %1028
      %vm1030 = vcmask 261120
      %v1031 = vsel %vm1030, %v1023, %v1025
      %v1032 = vsel %vm1030, %v1025, %v1027
      %v1033 = vsel %vm1030, %v1027, %v1029
      %v1039 = vmul.f32 %v893, %v1023
      %v1040 = vmul.f32 %v885, %v1031
      %v1041 = vmul.f32 %v886, %v1032
      %v1042 = vmul.f32 %v887, %v1033
      %v1043 = vmul.f32 %v894, %v1029
      %s1044 = scalar_lea.vmem %s15, 5
      %v1045 = vld [vmem:[%s1044] ss:$8 sm:$0xf]
      %v1047 = vlaneseq
      %v1048 = vshrl.u32 %v1047, 7
      %v1049 = vsub.s32 0, %v1048
      %v1050 = vrot.slane %v1045, %v1049
      %v1051 = vlaneseq
      %v1052 = vshrl.u32 %v1051, 7
      %v1053 = vsub.s32 1, %v1052
      %v1054 = vrot.slane %v1045, %v1053
      %v1055 = vlaneseq
      %v1056 = vshrl.u32 %v1055, 7
      %v1057 = vsub.s32 2, %v1056
      %v1058 = vrot.slane %v1045, %v1057
      %v1059 = vlaneseq
      %v1060 = vshrl.u32 %v1059, 7
      %v1061 = vsub.s32 3, %v1060
      %v1062 = vrot.slane %v1045, %v1061
      %1063 = vrot.lane.b32.xlu0 %v1050, 34
      %v1064 = vpop.permute.xlu0 %1063
      %1065 = vrot.lane.b32.xlu0 %v1054, 34
      %v1066 = vpop.permute.xlu0 %1065
      %1067 = vrot.lane.b32.xlu0 %v1058, 34
      %v1068 = vpop.permute.xlu0 %1067
      %1069 = vrot.lane.b32.xlu0 %v1062, 34
      %v1070 = vpop.permute.xlu0 %1069
      %vm1071 = vcmask 277504
      %v1072 = vsel %vm1071, %v1064, %v1066
      %v1073 = vsel %vm1071, %v1066, %v1068
      %v1074 = vsel %vm1071, %v1068, %v1070
      %v1080 = vmul.f32 %v893, %v1064
      %v1081 = vmul.f32 %v885, %v1072
      %v1082 = vmul.f32 %v886, %v1073
      %v1083 = vmul.f32 %v887, %v1074
      %v1084 = vmul.f32 %v894, %v1070
      %s1085 = scalar_lea.vmem %s15, 6
      %v1086 = vld [vmem:[%s1085] ss:$8 sm:$0xf]
      %v1088 = vlaneseq
      %v1089 = vshrl.u32 %v1088, 7
      %v1090 = vsub.s32 0, %v1089
      %v1091 = vrot.slane %v1086, %v1090
      %v1092 = vlaneseq
      %v1093 = vshrl.u32 %v1092, 7
      %v1094 = vsub.s32 1, %v1093
      %v1095 = vrot.slane %v1086, %v1094
      %v1096 = vlaneseq
      %v1097 = vshrl.u32 %v1096, 7
      %v1098 = vsub.s32 2, %v1097
      %v1099 = vrot.slane %v1086, %v1098
      %v1100 = vlaneseq
      %v1101 = vshrl.u32 %v1100, 7
      %v1102 = vsub.s32 3, %v1101
      %v1103 = vrot.slane %v1086, %v1102
      %1104 = vrot.lane.b32.xlu0 %v1091, 64
      %v1105 = vpop.permute.xlu0 %1104
      %1106 = vrot.lane.b32.xlu0 %v1095, 64
      %v1107 = vpop.permute.xlu0 %1106
      %1108 = vrot.lane.b32.xlu0 %v1099, 64
      %v1109 = vpop.permute.xlu0 %1108
      %1110 = vrot.lane.b32.xlu0 %v1103, 64
      %v1111 = vpop.permute.xlu0 %1110
      %vm1112 = vcmask 523264
      %v1113 = vsel %vm1112, %v1105, %v1107
      %v1114 = vsel %vm1112, %v1107, %v1109
      %v1115 = vsel %vm1112, %v1109, %v1111
      %v1121 = vmul.f32 %v893, %v1105
      %v1122 = vmul.f32 %v885, %v1113
      %v1123 = vmul.f32 %v886, %v1114
      %v1124 = vmul.f32 %v887, %v1115
      %v1125 = vmul.f32 %v894, %v1111
      %s1126 = scalar_lea.vmem %s15, 7
      %v1127 = vld [vmem:[%s1126] ss:$8 sm:$0xf]
      %v1129 = vlaneseq
      %v1130 = vshrl.u32 %v1129, 7
      %v1131 = vsub.s32 0, %v1130
      %v1132 = vrot.slane %v1127, %v1131
      %v1133 = vlaneseq
      %v1134 = vshrl.u32 %v1133, 7
      %v1135 = vsub.s32 1, %v1134
      %v1136 = vrot.slane %v1127, %v1135
      %v1137 = vlaneseq
      %v1138 = vshrl.u32 %v1137, 7
      %v1139 = vsub.s32 2, %v1138
      %v1140 = vrot.slane %v1127, %v1139
      %v1141 = vlaneseq
      %v1142 = vshrl.u32 %v1141, 7
      %v1143 = vsub.s32 3, %v1142
      %v1144 = vrot.slane %v1127, %v1143
      %1145 = vrot.lane.b32.xlu0 %v1132, 65
      %v1146 = vpop.permute.xlu0 %1145
      %1147 = vrot.lane.b32.xlu0 %v1136, 65
      %v1148 = vpop.permute.xlu0 %1147
      %1149 = vrot.lane.b32.xlu0 %v1140, 65
      %v1150 = vpop.permute.xlu0 %1149
      %1151 = vrot.lane.b32.xlu0 %v1144, 65
      %v1152 = vpop.permute.xlu0 %1151
      %vm1153 = vcmask 531456
      %v1154 = vsel %vm1153, %v1146, %v1148
      %v1155 = vsel %vm1153, %v1148, %v1150
      %v1156 = vsel %vm1153, %v1150, %v1152
      %v1162 = vmul.f32 %v893, %v1146
      %v1163 = vmul.f32 %v885, %v1154
      %v1164 = vmul.f32 %v886, %v1155
      %v1165 = vmul.f32 %v887, %v1156
      %v1166 = vmul.f32 %v894, %v1152
      %s1167 = scalar_lea.vmem %s15, 32
      %v1168 = vld [vmem:[%s1167] ss:$8 sm:$0xf]
      %v1170 = vlaneseq
      %v1171 = vshrl.u32 %v1170, 7
      %v1172 = vsub.s32 0, %v1171
      %v1173 = vrot.slane %v1168, %v1172
      %v1174 = vlaneseq
      %v1175 = vshrl.u32 %v1174, 7
      %v1176 = vsub.s32 1, %v1175
      %v1177 = vrot.slane %v1168, %v1176
      %v1178 = vlaneseq
      %v1179 = vshrl.u32 %v1178, 7
      %v1180 = vsub.s32 2, %v1179
      %v1181 = vrot.slane %v1168, %v1180
      %v1182 = vlaneseq
      %v1183 = vshrl.u32 %v1182, 7
      %v1184 = vsub.s32 3, %v1183
      %v1185 = vrot.slane %v1168, %v1184
      %1186 = vrot.lane.b32.xlu0 %v1173, 66
      %v1187 = vpop.permute.xlu0 %1186
      %1188 = vrot.lane.b32.xlu0 %v1177, 66
      %v1189 = vpop.permute.xlu0 %1188
      %1190 = vrot.lane.b32.xlu0 %v1181, 66
      %v1191 = vpop.permute.xlu0 %1190
      %1192 = vrot.lane.b32.xlu0 %v1185, 66
      %v1193 = vpop.permute.xlu0 %1192
      %vm1194 = vcmask 539648
      %v1195 = vsel %vm1194, %v1187, %v1189
      %v1196 = vsel %vm1194, %v1189, %v1191
      %v1197 = vsel %vm1194, %v1191, %v1193
      %v1203 = vmul.f32 %v893, %v1187
      %v1204 = vmul.f32 %v885, %v1195
      %v1205 = vmul.f32 %v886, %v1196
      %v1206 = vmul.f32 %v887, %v1197
      %v1207 = vmul.f32 %v894, %v1193
      %1213 = vrot.lane.b32.xlu0 %v957, 127
      %v1214 = vpop.permute.xlu0 %1213
      %1215 = vrot.lane.b32.xlu0 %v958, 127
      %v1216 = vpop.permute.xlu0 %1215
      %1217 = vrot.lane.b32.xlu0 %v959, 127
      %v1218 = vpop.permute.xlu0 %1217
      %1219 = vrot.lane.b32.xlu0 %v960, 127
      %v1220 = vpop.permute.xlu0 %1219
      %1221 = vrot.lane.b32.xlu0 %v961, 127
      %v1222 = vpop.permute.xlu0 %1221
      %vm1223 = vcmask 1039360
      %v1224 = vsel %vm1223, %v1214, %v1216
      %v1225 = vsel %vm1223, %v1216, %v1218
      %v1226 = vsel %vm1223, %v1218, %v1220
      %v1227 = vsel %vm1223, %v1220, %v1222
      %1237 = vrot.lane.b32.xlu0 %v998, 126
      %v1238 = vpop.permute.xlu0 %1237
      %1239 = vrot.lane.b32.xlu0 %v999, 126
      %v1240 = vpop.permute.xlu0 %1239
      %1241 = vrot.lane.b32.xlu0 %v1000, 126
      %v1242 = vpop.permute.xlu0 %1241
      %1243 = vrot.lane.b32.xlu0 %v1001, 126
      %v1244 = vpop.permute.xlu0 %1243
      %1245 = vrot.lane.b32.xlu0 %v1002, 126
      %v1246 = vpop.permute.xlu0 %1245
      %vm1247 = vcmask 1031168
      %v1248 = vsel %vm1247, %v1238, %v1240
      %v1249 = vsel %vm1247, %v1240, %v1242
      %v1250 = vsel %vm1247, %v1242, %v1244
      %v1251 = vsel %vm1247, %v1244, %v1246
      %1261 = vrot.lane.b32.xlu0 %v1039, 96
      %v1262 = vpop.permute.xlu0 %1261
      %1263 = vrot.lane.b32.xlu0 %v1040, 96
      %v1264 = vpop.permute.xlu0 %1263
      %1265 = vrot.lane.b32.xlu0 %v1041, 96
      %v1266 = vpop.permute.xlu0 %1265
      %1267 = vrot.lane.b32.xlu0 %v1042, 96
      %v1268 = vpop.permute.xlu0 %1267
      %1269 = vrot.lane.b32.xlu0 %v1043, 96
      %v1270 = vpop.permute.xlu0 %1269
      %vm1271 = vcmask 785408
      %v1272 = vsel %vm1271, %v1262, %v1264
      %v1273 = vsel %vm1271, %v1264, %v1266
      %v1274 = vsel %vm1271, %v1266, %v1268
      %v1275 = vsel %vm1271, %v1268, %v1270
      %1282 = vrot.lane.b32.xlu0 %v893, 95
      %v1283 = vpop.permute.xlu0 %1282
      %1284 = vrot.lane.b32.xlu0 %v885, 95
      %v1285 = vpop.permute.xlu0 %1284
      %1286 = vrot.lane.b32.xlu0 %v886, 95
      %v1287 = vpop.permute.xlu0 %1286
      %1288 = vrot.lane.b32.xlu0 %v887, 95
      %v1289 = vpop.permute.xlu0 %1288
      %1290 = vrot.lane.b32.xlu0 %v894, 95
      %v1291 = vpop.permute.xlu0 %1290
      %vm1292 = vcmask 777216
      %v1293 = vsel %vm1292, %v1283, %v1285
      %v1294 = vsel %vm1292, %v1285, %v1287
      %v1295 = vsel %vm1292, %v1287, %v1289
      %v1296 = vsel %vm1292, %v1289, %v1291
      %1306 = vrot.lane.b32.xlu0 %v1080, 94
      %v1307 = vpop.permute.xlu0 %1306
      %1308 = vrot.lane.b32.xlu0 %v1081, 94
      %v1309 = vpop.permute.xlu0 %1308
      %1310 = vrot.lane.b32.xlu0 %v1082, 94
      %v1311 = vpop.permute.xlu0 %1310
      %1312 = vrot.lane.b32.xlu0 %v1083, 94
      %v1313 = vpop.permute.xlu0 %1312
      %1314 = vrot.lane.b32.xlu0 %v1084, 94
      %v1315 = vpop.permute.xlu0 %1314
      %vm1316 = vcmask 769024
      %v1317 = vsel %vm1316, %v1307, %v1309
      %v1318 = vsel %vm1316, %v1309, %v1311
      %v1319 = vsel %vm1316, %v1311, %v1313
      %v1320 = vsel %vm1316, %v1313, %v1315
      %1330 = vrot.lane.b32.xlu0 %v1121, 64
      %v1331 = vpop.permute.xlu0 %1330
      %1332 = vrot.lane.b32.xlu0 %v1122, 64
      %v1333 = vpop.permute.xlu0 %1332
      %1334 = vrot.lane.b32.xlu0 %v1123, 64
      %v1335 = vpop.permute.xlu0 %1334
      %1336 = vrot.lane.b32.xlu0 %v1124, 64
      %v1337 = vpop.permute.xlu0 %1336
      %1338 = vrot.lane.b32.xlu0 %v1125, 64
      %v1339 = vpop.permute.xlu0 %1338
      %v1340 = vsel %vm1112, %v1331, %v1333
      %v1341 = vsel %vm1112, %v1333, %v1335
      %v1342 = vsel %vm1112, %v1335, %v1337
      %v1343 = vsel %vm1112, %v1337, %v1339
      %1353 = vrot.lane.b32.xlu0 %v1162, 63
      %v1354 = vpop.permute.xlu0 %1353
      %1355 = vrot.lane.b32.xlu0 %v1163, 63
      %v1356 = vpop.permute.xlu0 %1355
      %1357 = vrot.lane.b32.xlu0 %v1164, 63
      %v1358 = vpop.permute.xlu0 %1357
      %1359 = vrot.lane.b32.xlu0 %v1165, 63
      %v1360 = vpop.permute.xlu0 %1359
      %1361 = vrot.lane.b32.xlu0 %v1166, 63
      %v1362 = vpop.permute.xlu0 %1361
      %vm1363 = vcmask 515072
      %v1364 = vsel %vm1363, %v1354, %v1356
      %v1365 = vsel %vm1363, %v1356, %v1358
      %v1366 = vsel %vm1363, %v1358, %v1360
      %v1367 = vsel %vm1363, %v1360, %v1362
      %1377 = vrot.lane.b32.xlu0 %v1203, 62
      %v1378 = vpop.permute.xlu0 %1377
      %1379 = vrot.lane.b32.xlu0 %v1204, 62
      %v1380 = vpop.permute.xlu0 %1379
      %1381 = vrot.lane.b32.xlu0 %v1205, 62
      %v1382 = vpop.permute.xlu0 %1381
      %1383 = vrot.lane.b32.xlu0 %v1206, 62
      %v1384 = vpop.permute.xlu0 %1383
      %1385 = vrot.lane.b32.xlu0 %v1207, 62
      %v1386 = vpop.permute.xlu0 %1385
      %vm1387 = vcmask 506880
      %v1388 = vsel %vm1387, %v1378, %v1380
      %v1389 = vsel %vm1387, %v1380, %v1382
      %v1390 = vsel %vm1387, %v1382, %v1384
      %v1391 = vsel %vm1387, %v1384, %v1386
      %v1396 = vpack.c.bf16 %v1224, %v917
      %v1397 = vpack.c.bf16 %v1225, %v918
      %v1398 = vpack.c.bf16 %v1226, %v919
      %v1399 = vpack.c.bf16 %v1227, %v920
      %v1400 = vpack.c.bf16 %v1272, %v1248
      %v1401 = vpack.c.bf16 %v1273, %v1249
      %v1402 = vpack.c.bf16 %v1274, %v1250
      %v1403 = vpack.c.bf16 %v1275, %v1251
      %v1404 = vpack.c.bf16 %v1317, %v1293
      %v1405 = vpack.c.bf16 %v1318, %v1294
      %v1406 = vpack.c.bf16 %v1319, %v1295
      %v1407 = vpack.c.bf16 %v1320, %v1296
      %v1408 = vpack.c.bf16 %v1364, %v1340
      %v1409 = vpack.c.bf16 %v1365, %v1341
      %v1410 = vpack.c.bf16 %v1366, %v1342
      %v1411 = vpack.c.bf16 %v1367, %v1343
      %v1412 = vpack.c.bf16 %v1388, %v1388
      %v1413 = vpack.c.bf16 %v1389, %v1389
      %v1414 = vpack.c.bf16 %v1390, %v1390
      %v1415 = vpack.c.bf16 %v1391, %v1391
      %vm1416 = vcmask 588800
      %v1418 = vsel %vm1416, %v871, 0
      %v1421 = vsel %vm725, %v1412, 0
      %v1424 = vsel %vm725, %v1413, 0
      %v1427 = vsel %vm725, %v1414, 0
      %v1430 = vsel %vm725, %v1415, 0
      %1432 = vmatprep.subr.bf16.mxu0 %v1397
      %1433 = vmatpush1.bf16.msra.mxu0 %v1396
      %1434 = vmatprep.subr.bf16.mxu0 %v1401
      %1435 = vmatpush1.bf16.msra.mxu0 %v1400
      %1436 = vmatprep.subr.bf16.mxu0 %v1405
      %1437 = vmatpush1.bf16.msra.mxu0 %v1404
      %1438 = vmatprep.subr.bf16.mxu0 %v1409
      %1439 = vmatpush1.bf16.msra.mxu0 %v1408
      %1440 = vmatprep.subr.bf16.mxu0 %v1424
      %1441 = vmatpush1.bf16.msra.mxu0 %v1421
      %1442 = vmatprep.subr.bf16.mxu0 0
      %1443 = vmatpush1.bf16.msra.mxu0 0
      %1444 = vmatprep.subr.bf16.mxu0 0
      %1445 = vmatpush1.bf16.msra.mxu0 0
      %1446 = vmatprep.subr.bf16.mxu0 0
      %1447 = vmatpush1.bf16.msra.mxu0 0
      %1448 = vmatprep.subr.bf16.mxu0 0
      %1449 = vmatpush1.bf16.msra.mxu0 0
      %1450 = vmatprep.subr.bf16.mxu0 0
      %1451 = vmatpush1.bf16.msra.mxu0 0
      %1452 = vmatprep.subr.bf16.mxu0 0
      %1453 = vmatpush1.bf16.msra.mxu0 0
      %1454 = vmatprep.subr.bf16.mxu0 0
      %1455 = vmatpush1.bf16.msra.mxu0 0
      %1456 = vmatprep.subr.bf16.mxu0 0
      %1457 = vmatpush1.bf16.msra.mxu0 0
      %1458 = vmatprep.subr.bf16.mxu0 0
      %1459 = vmatpush1.bf16.msra.mxu0 0
      %1460 = vmatprep.subr.bf16.mxu0 0
      %1461 = vmatpush1.bf16.msra.mxu0 0
      %1462 = vmatprep.subr.bf16.mxu0 0
      %1463 = vmatpush1.bf16.msra.mxu0 0
      %1464 = vmatprep.mubr.bf16.mxu0 0
      %1465 = vmatmul.mubr.bf16.gmra.mrb[0].mxu0 %v1418
      %v1466 = vpop.f32.mrb[0].mxu0
      %v1467 = vadd.f32 0.0, %v1466
      %v1468 = vpop.f32.mrb[0].mxu0
      %v1469 = vadd.f32 0.0, %v1468
      %v1470 = vpop.f32.mrb[0].mxu0
      %v1471 = vpop.f32.mrb[0].mxu0
      %1472 = vdwg.mxu0
      %1473 = vmatprep.subr.bf16.mxu0 %v1399
      %1474 = vmatpush1.bf16.msra.mxu0 %v1398
      %1475 = vmatprep.subr.bf16.mxu0 %v1403
      %1476 = vmatpush1.bf16.msra.mxu0 %v1402
      %1477 = vmatprep.subr.bf16.mxu0 %v1407
      %1478 = vmatpush1.bf16.msra.mxu0 %v1406
      %1479 = vmatprep.subr.bf16.mxu0 %v1411
      %1480 = vmatpush1.bf16.msra.mxu0 %v1410
      %1481 = vmatprep.subr.bf16.mxu0 %v1430
      %1482 = vmatpush1.bf16.msra.mxu0 %v1427
      %1483 = vmatprep.subr.bf16.mxu0 0
      %1484 = vmatpush1.bf16.msra.mxu0 0
      %1485 = vmatprep.subr.bf16.mxu0 0
      %1486 = vmatpush1.bf16.msra.mxu0 0
      %1487 = vmatprep.subr.bf16.mxu0 0
      %1488 = vmatpush1.bf16.msra.mxu0 0
      %1489 = vmatprep.subr.bf16.mxu0 0
      %1490 = vmatpush1.bf16.msra.mxu0 0
      %1491 = vmatprep.subr.bf16.mxu0 0
      %1492 = vmatpush1.bf16.msra.mxu0 0
      %1493 = vmatprep.subr.bf16.mxu0 0
      %1494 = vmatpush1.bf16.msra.mxu0 0
      %1495 = vmatprep.subr.bf16.mxu0 0
      %1496 = vmatpush1.bf16.msra.mxu0 0
      %1497 = vmatprep.subr.bf16.mxu0 0
      %1498 = vmatpush1.bf16.msra.mxu0 0
      %1499 = vmatprep.subr.bf16.mxu0 0
      %1500 = vmatpush1.bf16.msra.mxu0 0
      %1501 = vmatprep.subr.bf16.mxu0 0
      %1502 = vmatpush1.bf16.msra.mxu0 0
      %1503 = vmatprep.subr.bf16.mxu0 0
      %1504 = vmatpush1.bf16.msra.mxu0 0
      %1505 = vmatprep.mubr.bf16.mxu0 0
      %1506 = vmatmul.mubr.bf16.gmra.mrb[0].mxu0 %v1418
      %v1507 = vpop.f32.mrb[0].mxu0
      %v1508 = vadd.f32 0.0, %v1507
      %v1509 = vpop.f32.mrb[0].mxu0
      %v1510 = vadd.f32 0.0, %v1509
      %v1511 = vpop.f32.mrb[0].mxu0
      %v1512 = vpop.f32.mrb[0].mxu0
      %1513 = vdwg.mxu0
      %v1514 = vld [vmem:[%s6] sm:$0xff]
      %v1515 = vld [vmem:[%s7] sm:$0xff]
      %v1516 = vadd.f32 %v1467, %v1469
      %v1517 = vadd.f32 %v1516, %v1508
      %v1518 = vadd.f32 %v1517, %v1510
      %1519 = vadd.xlane.f32.xlu0 %v1518
      %v1520 = vpop.xlane.xlu0 %1519
      %v1521 = vmul.f32 %v1520, %v827
      %v1522 = vsub.f32 %v1467, %v1521
      %v1523 = vsub.f32 %v1469, %v1521
      %v1524 = vsub.f32 %v1508, %v1521
      %v1525 = vsub.f32 %v1510, %v1521
      %v1526 = vmul.f32 %v1522, %v1522
      %v1527 = vmul.f32 %v1523, %v1523
      %v1528 = vmul.f32 %v1524, %v1524
      %v1529 = vmul.f32 %v1525, %v1525
      %v1530 = vadd.f32 %v1526, %v1527
      %v1531 = vadd.f32 %v1530, %v1528
      %v1532 = vadd.f32 %v1531, %v1529
      %1533 = vadd.xlane.f32.xlu0 %v1532
      %v1534 = vpop.xlane.xlu0 %1533
      %v1535 = vmul.f32 %v1534, %v827
      %v1536 = vadd.f32 %v1535, 1e-05
      %v1537 = vrsqrt.pop %v1536
      %v1538 = vmul.f32 %v1522, %v1537
      %v1539 = vmul.f32 %v1523, %v1537
      %v1540 = vmul.f32 %v1524, %v1537
      %v1541 = vmul.f32 %v1525, %v1537
      %1543 = vset.pattern.permute.xlu0 0
      %1544 = vperm.xlu0 %1543, %v1514
      %v1545 = vpop.permute.xlu0 %1544
      %v1547 = vmul.f32 %v1538, %v1545
      %v1548 = vmul.f32 %v1539, %v1545
      %v1549 = vmul.f32 %v1540, %v1545
      %v1550 = vmul.f32 %v1541, %v1545
      %1552 = vset.pattern.permute.xlu0 0
      %1553 = vperm.xlu0 %1552, %v1515
      %v1554 = vpop.permute.xlu0 %1553
      %v1556 = vadd.f32 %v1547, %v1554
      %v1557 = vadd.f32 %v1548, %v1554
      %v1558 = vadd.f32 %v1549, %v1554
      %v1559 = vadd.f32 %v1550, %v1554
      %v1560 = vmax.f32 %v1556, 0.0
      %v1561 = vmax.f32 %v1557, 0.0
      %v1562 = vmax.f32 %v1558, 0.0
      %v1563 = vmax.f32 %v1559, 0.0
      %v1564 = vld [vmem:[%s8] sm:$0xf]
      %v1565 = vld [vmem:[%s8 + $0x4] sm:$0xf]
      %v1566 = vld [vmem:[%s8 + $0x8] sm:$0xf]
      %v1567 = vld [vmem:[%s8 + $0xc] sm:$0xf]
      %v1568 = vld [vmem:[%s8 + $0x10] sm:$0xf]
      %v1569 = vld [vmem:[%s8 + $0x14] sm:$0xf]
      %v1570 = vld [vmem:[%s8 + $0x18] sm:$0xf]
      %v1571 = vld [vmem:[%s8 + $0x1c] sm:$0xf]
      %v1572 = vld [vmem:[%s8 + $0x20] sm:$0xf]
      %v1573 = vld [vmem:[%s8 + $0x24] sm:$0xf]
      %v1574 = vld [vmem:[%s8 + $0x28] sm:$0xf]
      %v1575 = vld [vmem:[%s8 + $0x2c] sm:$0xf]
      %v1576 = vld [vmem:[%s8 + $0x30] sm:$0xf]
      %v1577 = vld [vmem:[%s8 + $0x34] sm:$0xf]
      %v1578 = vld [vmem:[%s8 + $0x38] sm:$0xf]
      %v1579 = vld [vmem:[%s8 + $0x3c] sm:$0xf]
      %v1580 = vld [vmem:[%s8 + $0x40] sm:$0xf]
      %v1581 = vld [vmem:[%s8 + $0x44] sm:$0xf]
      %v1582 = vld [vmem:[%s8 + $0x48] sm:$0xf]
      %v1583 = vld [vmem:[%s8 + $0x4c] sm:$0xf]
      %v1584 = vld [vmem:[%s8 + $0x50] sm:$0xf]
      %v1585 = vld [vmem:[%s8 + $0x54] sm:$0xf]
      %v1586 = vld [vmem:[%s8 + $0x58] sm:$0xf]
      %v1587 = vld [vmem:[%s8 + $0x5c] sm:$0xf]
      %v1588 = vld [vmem:[%s8 + $0x60] sm:$0xf]
      %v1589 = vld [vmem:[%s8 + $0x64] sm:$0xf]
      %v1590 = vld [vmem:[%s8 + $0x68] sm:$0xf]
      %v1591 = vld [vmem:[%s8 + $0x6c] sm:$0xf]
      %v1592 = vld [vmem:[%s8 + $0x70] sm:$0xf]
      %v1593 = vld [vmem:[%s8 + $0x74] sm:$0xf]
      %v1594 = vld [vmem:[%s8 + $0x78] sm:$0xf]
      %v1595 = vld [vmem:[%s8 + $0x7c] sm:$0xf]
      %v1596 = vld [vmem:[%s8 + $0x80] sm:$0xf]
      %v1597 = vld [vmem:[%s8 + $0x84] sm:$0xf]
      %v1598 = vld [vmem:[%s8 + $0x88] sm:$0xf]
      %v1599 = vld [vmem:[%s8 + $0x8c] sm:$0xf]
      %v1600 = vld [vmem:[%s8 + $0x90] sm:$0xf]
      %v1601 = vld [vmem:[%s8 + $0x94] sm:$0xf]
      %v1602 = vld [vmem:[%s8 + $0x98] sm:$0xf]
      %v1603 = vld [vmem:[%s8 + $0x9c] sm:$0xf]
      %v1604 = vld [vmem:[%s8 + $0xa0] sm:$0xf]
      %v1605 = vld [vmem:[%s8 + $0xa4] sm:$0xf]
      %v1606 = vld [vmem:[%s8 + $0xa8] sm:$0xf]
      %v1607 = vld [vmem:[%s8 + $0xac] sm:$0xf]
      %v1608 = vld [vmem:[%s8 + $0xb0] sm:$0xf]
      %v1609 = vld [vmem:[%s8 + $0xb4] sm:$0xf]
      %v1610 = vld [vmem:[%s8 + $0xb8] sm:$0xf]
      %v1611 = vld [vmem:[%s8 + $0xbc] sm:$0xf]
      %v1612 = vld [vmem:[%s8 + $0xc0] sm:$0xf]
      %v1613 = vld [vmem:[%s8 + $0xc4] sm:$0xf]
      %v1614 = vld [vmem:[%s8 + $0xc8] sm:$0xf]
      %v1615 = vld [vmem:[%s8 + $0xcc] sm:$0xf]
      %v1616 = vld [vmem:[%s8 + $0xd0] sm:$0xf]
      %v1617 = vld [vmem:[%s8 + $0xd4] sm:$0xf]
      %v1618 = vld [vmem:[%s8 + $0xd8] sm:$0xf]
      %v1619 = vld [vmem:[%s8 + $0xdc] sm:$0xf]
      %v1620 = vld [vmem:[%s8 + $0xe0] sm:$0xf]
      %v1621 = vld [vmem:[%s8 + $0xe4] sm:$0xf]
      %v1622 = vld [vmem:[%s8 + $0xe8] sm:$0xf]
      %v1623 = vld [vmem:[%s8 + $0xec] sm:$0xf]
      %v1624 = vld [vmem:[%s8 + $0xf0] sm:$0xf]
      %v1625 = vld [vmem:[%s8 + $0xf4] sm:$0xf]
      %v1626 = vld [vmem:[%s8 + $0xf8] sm:$0xf]
      %v1627 = vld [vmem:[%s8 + $0xfc] sm:$0xf]
      %v1628 = vpack.c.bf16 %v1560, %v1560
      %v1629 = vpack.c.bf16 %v1561, %v1561
      %v1630 = vpack.c.bf16 %v1562, %v1562
      %v1631 = vpack.c.bf16 %v1563, %v1563
      %v1696 = vunpack.c.l.b16 %v1564
      %v1697 = vunpack.c.l.b16 %v1565
      %v1698 = vunpack.c.l.b16 %v1566
      %v1699 = vunpack.c.l.b16 %v1567
      %v1700 = vunpack.c.l.b16 %v1568
      %v1701 = vunpack.c.l.b16 %v1569
      %v1702 = vunpack.c.l.b16 %v1570
      %v1703 = vunpack.c.l.b16 %v1571
      %v1704 = vunpack.c.l.b16 %v1572
      %v1705 = vunpack.c.l.b16 %v1573
      %v1706 = vunpack.c.l.b16 %v1574
      %v1707 = vunpack.c.l.b16 %v1575
      %v1708 = vunpack.c.l.b16 %v1576
      %v1709 = vunpack.c.l.b16 %v1577
      %v1710 = vunpack.c.l.b16 %v1578
      %v1711 = vunpack.c.l.b16 %v1579
      %v1712 = vunpack.c.l.b16 %v1580
      %v1713 = vunpack.c.l.b16 %v1581
      %v1714 = vunpack.c.l.b16 %v1582
      %v1715 = vunpack.c.l.b16 %v1583
      %v1716 = vunpack.c.l.b16 %v1584
      %v1717 = vunpack.c.l.b16 %v1585
      %v1718 = vunpack.c.l.b16 %v1586
      %v1719 = vunpack.c.l.b16 %v1587
      %v1720 = vunpack.c.l.b16 %v1588
      %v1721 = vunpack.c.l.b16 %v1589
      %v1722 = vunpack.c.l.b16 %v1590
      %v1723 = vunpack.c.l.b16 %v1591
      %v1724 = vunpack.c.l.b16 %v1592
      %v1725 = vunpack.c.l.b16 %v1593
      %v1726 = vunpack.c.l.b16 %v1594
      %v1727 = vunpack.c.l.b16 %v1595
      %v1728 = vunpack.c.l.b16 %v1596
      %v1729 = vunpack.c.l.b16 %v1597
      %v1730 = vunpack.c.l.b16 %v1598
      %v1731 = vunpack.c.l.b16 %v1599
      %v1732 = vunpack.c.l.b16 %v1600
      %v1733 = vunpack.c.l.b16 %v1601
      %v1734 = vunpack.c.l.b16 %v1602
      %v1735 = vunpack.c.l.b16 %v1603
      %v1736 = vunpack.c.l.b16 %v1604
      %v1737 = vunpack.c.l.b16 %v1605
      %v1738 = vunpack.c.l.b16 %v1606
      %v1739 = vunpack.c.l.b16 %v1607
      %v1740 = vunpack.c.l.b16 %v1608
      %v1741 = vunpack.c.l.b16 %v1609
      %v1742 = vunpack.c.l.b16 %v1610
      %v1743 = vunpack.c.l.b16 %v1611
      %v1744 = vunpack.c.l.b16 %v1612
      %v1745 = vunpack.c.l.b16 %v1613
      %v1746 = vunpack.c.l.b16 %v1614
      %v1747 = vunpack.c.l.b16 %v1615
      %v1748 = vunpack.c.l.b16 %v1616
      %v1749 = vunpack.c.l.b16 %v1617
      %v1750 = vunpack.c.l.b16 %v1618
      %v1751 = vunpack.c.l.b16 %v1619
      %v1752 = vunpack.c.l.b16 %v1620
      %v1753 = vunpack.c.l.b16 %v1621
      %v1754 = vunpack.c.l.b16 %v1622
      %v1755 = vunpack.c.l.b16 %v1623
      %v1756 = vunpack.c.l.b16 %v1624
      %v1757 = vunpack.c.l.b16 %v1625
      %v1758 = vunpack.c.l.b16 %v1626
      %v1759 = vunpack.c.l.b16 %v1627
      %v1760 = vpack.c.b16 %v1697, %v1696
      %v1761 = vpack.c.b16 %v1699, %v1698
      %v1762 = vpack.c.b16 %v1701, %v1700
      %v1763 = vpack.c.b16 %v1703, %v1702
      %v1764 = vpack.c.b16 %v1705, %v1704
      %v1765 = vpack.c.b16 %v1707, %v1706
      %v1766 = vpack.c.b16 %v1709, %v1708
      %v1767 = vpack.c.b16 %v1711, %v1710
      %v1768 = vpack.c.b16 %v1713, %v1712
      %v1769 = vpack.c.b16 %v1715, %v1714
      %v1770 = vpack.c.b16 %v1717, %v1716
      %v1771 = vpack.c.b16 %v1719, %v1718
      %v1772 = vpack.c.b16 %v1721, %v1720
      %v1773 = vpack.c.b16 %v1723, %v1722
      %v1774 = vpack.c.b16 %v1725, %v1724
      %v1775 = vpack.c.b16 %v1727, %v1726
      %v1776 = vpack.c.b16 %v1729, %v1728
      %v1777 = vpack.c.b16 %v1731, %v1730
      %v1778 = vpack.c.b16 %v1733, %v1732
      %v1779 = vpack.c.b16 %v1735, %v1734
      %v1780 = vpack.c.b16 %v1737, %v1736
      %v1781 = vpack.c.b16 %v1739, %v1738
      %v1782 = vpack.c.b16 %v1741, %v1740
      %v1783 = vpack.c.b16 %v1743, %v1742
      %v1784 = vpack.c.b16 %v1745, %v1744
      %v1785 = vpack.c.b16 %v1747, %v1746
      %v1786 = vpack.c.b16 %v1749, %v1748
      %v1787 = vpack.c.b16 %v1751, %v1750
      %v1788 = vpack.c.b16 %v1753, %v1752
      %v1789 = vpack.c.b16 %v1755, %v1754
      %v1790 = vpack.c.b16 %v1757, %v1756
      %v1791 = vpack.c.b16 %v1759, %v1758
      %1824 = vmatprep.subr.bf16.mxu0 0
      %1825 = vmatpush1.bf16.msra.mxu0 %v1760
      %1826 = vmatprep.subr.bf16.mxu0 0
      %1827 = vmatpush1.bf16.msra.mxu0 %v1761
      %1828 = vmatprep.subr.bf16.mxu0 0
      %1829 = vmatpush1.bf16.msra.mxu0 %v1762
      %1830 = vmatprep.subr.bf16.mxu0 0
      %1831 = vmatpush1.bf16.msra.mxu0 %v1763
      %1832 = vmatprep.subr.bf16.mxu0 0
      %1833 = vmatpush1.bf16.msra.mxu0 %v1764
      %1834 = vmatprep.subr.bf16.mxu0 0
      %1835 = vmatpush1.bf16.msra.mxu0 %v1765
      %1836 = vmatprep.subr.bf16.mxu0 0
      %1837 = vmatpush1.bf16.msra.mxu0 %v1766
      %1838 = vmatprep.subr.bf16.mxu0 0
      %1839 = vmatpush1.bf16.msra.mxu0 %v1767
      %1840 = vmatprep.subr.bf16.mxu0 0
      %1841 = vmatpush1.bf16.msra.mxu0 %v1768
      %1842 = vmatprep.subr.bf16.mxu0 0
      %1843 = vmatpush1.bf16.msra.mxu0 %v1769
      %1844 = vmatprep.subr.bf16.mxu0 0
      %1845 = vmatpush1.bf16.msra.mxu0 %v1770
      %1846 = vmatprep.subr.bf16.mxu0 0
      %1847 = vmatpush1.bf16.msra.mxu0 %v1771
      %1848 = vmatprep.subr.bf16.mxu0 0
      %1849 = vmatpush1.bf16.msra.mxu0 %v1772
      %1850 = vmatprep.subr.bf16.mxu0 0
      %1851 = vmatpush1.bf16.msra.mxu0 %v1773
      %1852 = vmatprep.subr.bf16.mxu0 0
      %1853 = vmatpush1.bf16.msra.mxu0 %v1774
      %1854 = vmatprep.subr.bf16.mxu0 0
      %1855 = vmatpush1.bf16.msra.mxu0 %v1775
      %1856 = vmatprep.mubr.bf16.mxu0 %v1629
      %1857 = vmatmul.mubr.bf16.gmra.mrb[0].mxu0 %v1628
      %v1858 = vpop.f32.mrb[0].mxu0
      %v1859 = vadd.f32 0.0, %v1858
      %v1860 = vpop.f32.mrb[0].mxu0
      %v1861 = vpop.f32.mrb[0].mxu0
      %v1862 = vpop.f32.mrb[0].mxu0
      %1863 = vdwg.mxu0
      %1864 = vmatprep.subr.bf16.mxu0 0
      %1865 = vmatpush1.bf16.msra.mxu0 %v1776
      %1866 = vmatprep.subr.bf16.mxu0 0
      %1867 = vmatpush1.bf16.msra.mxu0 %v1777
      %1868 = vmatprep.subr.bf16.mxu0 0
      %1869 = vmatpush1.bf16.msra.mxu0 %v1778
      %1870 = vmatprep.subr.bf16.mxu0 0
      %1871 = vmatpush1.bf16.msra.mxu0 %v1779
      %1872 = vmatprep.subr.bf16.mxu0 0
      %1873 = vmatpush1.bf16.msra.mxu0 %v1780
      %1874 = vmatprep.subr.bf16.mxu0 0
      %1875 = vmatpush1.bf16.msra.mxu0 %v1781
      %1876 = vmatprep.subr.bf16.mxu0 0
      %1877 = vmatpush1.bf16.msra.mxu0 %v1782
      %1878 = vmatprep.subr.bf16.mxu0 0
      %1879 = vmatpush1.bf16.msra.mxu0 %v1783
      %1880 = vmatprep.subr.bf16.mxu0 0
      %1881 = vmatpush1.bf16.msra.mxu0 %v1784
      %1882 = vmatprep.subr.bf16.mxu0 0
      %1883 = vmatpush1.bf16.msra.mxu0 %v1785
      %1884 = vmatprep.subr.bf16.mxu0 0
      %1885 = vmatpush1.bf16.msra.mxu0 %v1786
      %1886 = vmatprep.subr.bf16.mxu0 0
      %1887 = vmatpush1.bf16.msra.mxu0 %v1787
      %1888 = vmatprep.subr.bf16.mxu0 0
      %1889 = vmatpush1.bf16.msra.mxu0 %v1788
      %1890 = vmatprep.subr.bf16.mxu0 0
      %1891 = vmatpush1.bf16.msra.mxu0 %v1789
      %1892 = vmatprep.subr.bf16.mxu0 0
      %1893 = vmatpush1.bf16.msra.mxu0 %v1790
      %1894 = vmatprep.subr.bf16.mxu0 0
      %1895 = vmatpush1.bf16.msra.mxu0 %v1791
      %1896 = vmatprep.mubr.bf16.mxu0 %v1631
      %1897 = vmatmul.mubr.bf16.gmra.mrb[0].mxu0 %v1630
      %v1898 = vpop.f32.mrb[0].mxu0
      %v1899 = vadd.f32 %v1859, %v1898
      %v1900 = vpop.f32.mrb[0].mxu0
      %v1901 = vpop.f32.mrb[0].mxu0
      %v1902 = vpop.f32.mrb[0].mxu0
      %1903 = vdwg.mxu0
      %v1904 = vld [vmem:[%s9] sm:$0xff]
      %v1905 = vld [vmem:[%s10] sm:$0xff]
      %1906 = vadd.xlane.f32.xlu0 %v1899
      %v1907 = vpop.xlane.xlu0 %1906
      %v1908 = vrcp.pop 128.0
      %v1909 = vmul.f32 %v1907, %v1908
      %v1910 = vsub.f32 %v1899, %v1909
      %v1911 = vmul.f32 %v1910, %v1910
      %1912 = vadd.xlane.f32.xlu0 %v1911
      %v1913 = vpop.xlane.xlu0 %1912
      %v1914 = vmul.f32 %v1913, %v1908
      %v1915 = vadd.f32 %v1914, 1e-05
      %v1916 = vrsqrt.pop %v1915
      %v1917 = vmul.f32 %v1910, %v1916
      %1919 = vset.pattern.permute.xlu0 0
      %1920 = vperm.xlu0 %1919, %v1904
      %v1921 = vpop.permute.xlu0 %1920
      %v1923 = vmul.f32 %v1917, %v1921
      %1925 = vset.pattern.permute.xlu0 0
      %1926 = vperm.xlu0 %1925, %v1905
      %v1927 = vpop.permute.xlu0 %1926
      %v1929 = vadd.f32 %v1923, %v1927
      %v1930 = vmax.f32 %v1929, 0.0
      %v1931 = vld [vmem:[%s11] sm:$0xff]
      %v1932 = vld [vmem:[%s11 + $0x8] sm:$0xff]
      %v1933 = vld [vmem:[%s11 + $0x10] sm:$0xff]
      %v1934 = vld [vmem:[%s11 + $0x18] sm:$0xff]
      %v1935 = vld [vmem:[%s11 + $0x20] sm:$0xff]
      %v1936 = vld [vmem:[%s11 + $0x28] sm:$0xff]
      %v1937 = vld [vmem:[%s11 + $0x30] sm:$0xff]
      %v1938 = vld [vmem:[%s11 + $0x38] sm:$0xff]
      %v1939 = vld [vmem:[%s11 + $0x40] sm:$0xff]
      %v1940 = vld [vmem:[%s11 + $0x48] sm:$0xff]
      %v1941 = vld [vmem:[%s11 + $0x50] sm:$0xff]
      %v1942 = vld [vmem:[%s11 + $0x58] sm:$0xff]
      %v1943 = vld [vmem:[%s11 + $0x60] sm:$0xff]
      %v1944 = vld [vmem:[%s11 + $0x68] sm:$0xff]
      %v1945 = vld [vmem:[%s11 + $0x70] sm:$0xff]
      %v1946 = vld [vmem:[%s11 + $0x78] sm:$0xff]
      %v1947 = vld [vmem:[%s11 + $0x80] sm:$0xff]
      %v1948 = vld [vmem:[%s11 + $0x88] sm:$0xff]
      %v1949 = vld [vmem:[%s11 + $0x90] sm:$0xff]
      %v1950 = vld [vmem:[%s11 + $0x98] sm:$0xff]
      %v1951 = vld [vmem:[%s11 + $0xa0] sm:$0xff]
      %v1952 = vld [vmem:[%s11 + $0xa8] sm:$0xff]
      %v1953 = vld [vmem:[%s11 + $0xb0] sm:$0xff]
      %v1954 = vld [vmem:[%s11 + $0xb8] sm:$0xff]
      %v1955 = vld [vmem:[%s11 + $0xc0] sm:$0xff]
      %v1956 = vld [vmem:[%s11 + $0xc8] sm:$0xff]
      %v1957 = vld [vmem:[%s11 + $0xd0] sm:$0xff]
      %v1958 = vld [vmem:[%s11 + $0xd8] sm:$0xff]
      %v1959 = vld [vmem:[%s11 + $0xe0] sm:$0xff]
      %v1960 = vld [vmem:[%s11 + $0xe8] sm:$0xff]
      %v1961 = vld [vmem:[%s11 + $0xf0] sm:$0xff]
      %v1962 = vld [vmem:[%s11 + $0xf8] sm:$0xff]
      %v1963 = vpack.c.bf16 %v1930, %v1930
      %v1996 = vunpack.c.l.b16 %v1931
      %v1997 = vunpack.c.h.b16 %v1931
      %v1998 = vunpack.c.l.b16 %v1932
      %v1999 = vunpack.c.h.b16 %v1932
      %v2000 = vunpack.c.l.b16 %v1933
      %v2001 = vunpack.c.h.b16 %v1933
      %v2002 = vunpack.c.l.b16 %v1934
      %v2003 = vunpack.c.h.b16 %v1934
      %v2004 = vunpack.c.l.b16 %v1935
      %v2005 = vunpack.c.h.b16 %v1935
      %v2006 = vunpack.c.l.b16 %v1936
      %v2007 = vunpack.c.h.b16 %v1936
      %v2008 = vunpack.c.l.b16 %v1937
      %v2009 = vunpack.c.h.b16 %v1937
      %v2010 = vunpack.c.l.b16 %v1938
      %v2011 = vunpack.c.h.b16 %v1938
      %v2012 = vunpack.c.l.b16 %v1939
      %v2013 = vunpack.c.h.b16 %v1939
      %v2014 = vunpack.c.l.b16 %v1940
      %v2015 = vunpack.c.h.b16 %v1940
      %v2016 = vunpack.c.l.b16 %v1941
      %v2017 = vunpack.c.h.b16 %v1941
      %v2018 = vunpack.c.l.b16 %v1942
      %v2019 = vunpack.c.h.b16 %v1942
      %v2020 = vunpack.c.l.b16 %v1943
      %v2021 = vunpack.c.h.b16 %v1943
      %v2022 = vunpack.c.l.b16 %v1944
      %v2023 = vunpack.c.h.b16 %v1944
      %v2024 = vunpack.c.l.b16 %v1945
      %v2025 = vunpack.c.h.b16 %v1945
      %v2026 = vunpack.c.l.b16 %v1946
      %v2027 = vunpack.c.h.b16 %v1946
      %v2028 = vunpack.c.l.b16 %v1947
      %v2029 = vunpack.c.h.b16 %v1947
      %v2030 = vunpack.c.l.b16 %v1948
      %v2031 = vunpack.c.h.b16 %v1948
      %v2032 = vunpack.c.l.b16 %v1949
      %v2033 = vunpack.c.h.b16 %v1949
      %v2034 = vunpack.c.l.b16 %v1950
      %v2035 = vunpack.c.h.b16 %v1950
      %v2036 = vunpack.c.l.b16 %v1951
      %v2037 = vunpack.c.h.b16 %v1951
      %v2038 = vunpack.c.l.b16 %v1952
      %v2039 = vunpack.c.h.b16 %v1952
      %v2040 = vunpack.c.l.b16 %v1953
      %v2041 = vunpack.c.h.b16 %v1953
      %v2042 = vunpack.c.l.b16 %v1954
      %v2043 = vunpack.c.h.b16 %v1954
      %v2044 = vunpack.c.l.b16 %v1955
      %v2045 = vunpack.c.h.b16 %v1955
      %v2046 = vunpack.c.l.b16 %v1956
      %v2047 = vunpack.c.h.b16 %v1956
      %v2048 = vunpack.c.l.b16 %v1957
      %v2049 = vunpack.c.h.b16 %v1957
      %v2050 = vunpack.c.l.b16 %v1958
      %v2051 = vunpack.c.h.b16 %v1958
      %v2052 = vunpack.c.l.b16 %v1959
      %v2053 = vunpack.c.h.b16 %v1959
      %v2054 = vunpack.c.l.b16 %v1960
      %v2055 = vunpack.c.h.b16 %v1960
      %v2056 = vunpack.c.l.b16 %v1961
      %v2057 = vunpack.c.h.b16 %v1961
      %v2058 = vunpack.c.l.b16 %v1962
      %v2059 = vunpack.c.h.b16 %v1962
      %v2060 = vpack.c.b16 %v2000, %v1996
      %v2061 = vpack.c.b16 %v2001, %v1997
      %v2062 = vpack.c.b16 %v2002, %v1998
      %v2063 = vpack.c.b16 %v2003, %v1999
      %v2064 = vpack.c.b16 %v2008, %v2004
      %v2065 = vpack.c.b16 %v2009, %v2005
      %v2066 = vpack.c.b16 %v2010, %v2006
      %v2067 = vpack.c.b16 %v2011, %v2007
      %v2068 = vpack.c.b16 %v2016, %v2012
      %v2069 = vpack.c.b16 %v2017, %v2013
      %v2070 = vpack.c.b16 %v2018, %v2014
      %v2071 = vpack.c.b16 %v2019, %v2015
      %v2072 = vpack.c.b16 %v2024, %v2020
      %v2073 = vpack.c.b16 %v2025, %v2021
      %v2074 = vpack.c.b16 %v2026, %v2022
      %v2075 = vpack.c.b16 %v2027, %v2023
      %v2076 = vpack.c.b16 %v2032, %v2028
      %v2077 = vpack.c.b16 %v2033, %v2029
      %v2078 = vpack.c.b16 %v2034, %v2030
      %v2079 = vpack.c.b16 %v2035, %v2031
      %v2080 = vpack.c.b16 %v2040, %v2036
      %v2081 = vpack.c.b16 %v2041, %v2037
      %v2082 = vpack.c.b16 %v2042, %v2038
      %v2083 = vpack.c.b16 %v2043, %v2039
      %v2084 = vpack.c.b16 %v2048, %v2044
      %v2085 = vpack.c.b16 %v2049, %v2045
      %v2086 = vpack.c.b16 %v2050, %v2046
      %v2087 = vpack.c.b16 %v2051, %v2047
      %v2088 = vpack.c.b16 %v2056, %v2052
      %v2089 = vpack.c.b16 %v2057, %v2053
      %v2090 = vpack.c.b16 %v2058, %v2054
      %v2091 = vpack.c.b16 %v2059, %v2055
      %2124 = vmatprep.subr.bf16.mxu0 %v2061
      %2125 = vmatpush1.bf16.msra.mxu0 %v2060
      %2126 = vmatprep.subr.bf16.mxu0 %v2065
      %2127 = vmatpush1.bf16.msra.mxu0 %v2064
      %2128 = vmatprep.subr.bf16.mxu0 %v2069
      %2129 = vmatpush1.bf16.msra.mxu0 %v2068
      %2130 = vmatprep.subr.bf16.mxu0 %v2073
      %2131 = vmatpush1.bf16.msra.mxu0 %v2072
      %2132 = vmatprep.subr.bf16.mxu0 %v2077
      %2133 = vmatpush1.bf16.msra.mxu0 %v2076
      %2134 = vmatprep.subr.bf16.mxu0 %v2081
      %2135 = vmatpush1.bf16.msra.mxu0 %v2080
      %2136 = vmatprep.subr.bf16.mxu0 %v2085
      %2137 = vmatpush1.bf16.msra.mxu0 %v2084
      %2138 = vmatprep.subr.bf16.mxu0 %v2089
      %2139 = vmatpush1.bf16.msra.mxu0 %v2088
      %2140 = vmatprep.subr.bf16.mxu0 0
      %2141 = vmatpush1.bf16.msra.mxu0 0
      %2142 = vmatprep.subr.bf16.mxu0 0
      %2143 = vmatpush1.bf16.msra.mxu0 0
      %2144 = vmatprep.subr.bf16.mxu0 0
      %2145 = vmatpush1.bf16.msra.mxu0 0
      %2146 = vmatprep.subr.bf16.mxu0 0
      %2147 = vmatpush1.bf16.msra.mxu0 0
      %2148 = vmatprep.subr.bf16.mxu0 0
      %2149 = vmatpush1.bf16.msra.mxu0 0
      %2150 = vmatprep.subr.bf16.mxu0 0
      %2151 = vmatpush1.bf16.msra.mxu0 0
      %2152 = vmatprep.subr.bf16.mxu0 0
      %2153 = vmatpush1.bf16.msra.mxu0 0
      %2154 = vmatprep.subr.bf16.mxu0 0
      %2155 = vmatpush1.bf16.msra.mxu0 0
      %2156 = vmatprep.mubr.bf16.mxu0 0
      %2157 = vmatmul.mubr.bf16.gmra.mrb[0].mxu0 %v1963
      %v2158 = vpop.f32.mrb[0].mxu0
      %v2159 = vadd.f32 0.0, %v2158
      %v2160 = vpop.f32.mrb[0].mxu0
      %v2161 = vadd.f32 0.0, %v2160
      %v2162 = vpop.f32.mrb[0].mxu0
      %v2163 = vpop.f32.mrb[0].mxu0
      %2164 = vdwg.mxu0
      %2165 = vmatprep.subr.bf16.mxu0 %v2063
      %2166 = vmatpush1.bf16.msra.mxu0 %v2062
      %2167 = vmatprep.subr.bf16.mxu0 %v2067
      %2168 = vmatpush1.bf16.msra.mxu0 %v2066
      %2169 = vmatprep.subr.bf16.mxu0 %v2071
      %2170 = vmatpush1.bf16.msra.mxu0 %v2070
      %2171 = vmatprep.subr.bf16.mxu0 %v2075
      %2172 = vmatpush1.bf16.msra.mxu0 %v2074
      %2173 = vmatprep.subr.bf16.mxu0 %v2079
      %2174 = vmatpush1.bf16.msra.mxu0 %v2078
      %2175 = vmatprep.subr.bf16.mxu0 %v2083
      %2176 = vmatpush1.bf16.msra.mxu0 %v2082
      %2177 = vmatprep.subr.bf16.mxu0 %v2087
      %2178 = vmatpush1.bf16.msra.mxu0 %v2086
      %2179 = vmatprep.subr.bf16.mxu0 %v2091
      %2180 = vmatpush1.bf16.msra.mxu0 %v2090
      %2181 = vmatprep.subr.bf16.mxu0 0
      %2182 = vmatpush1.bf16.msra.mxu0 0
      %2183 = vmatprep.subr.bf16.mxu0 0
      %2184 = vmatpush1.bf16.msra.mxu0 0
      %2185 = vmatprep.subr.bf16.mxu0 0
      %2186 = vmatpush1.bf16.msra.mxu0 0
      %2187 = vmatprep.subr.bf16.mxu0 0
      %2188 = vmatpush1.bf16.msra.mxu0 0
      %2189 = vmatprep.subr.bf16.mxu0 0
      %2190 = vmatpush1.bf16.msra.mxu0 0
      %2191 = vmatprep.subr.bf16.mxu0 0
      %2192 = vmatpush1.bf16.msra.mxu0 0
      %2193 = vmatprep.subr.bf16.mxu0 0
      %2194 = vmatpush1.bf16.msra.mxu0 0
      %2195 = vmatprep.subr.bf16.mxu0 0
      %2196 = vmatpush1.bf16.msra.mxu0 0
      %2197 = vmatprep.mubr.bf16.mxu0 0
      %2198 = vmatmul.mubr.bf16.gmra.mrb[0].mxu0 %v1963
      %v2199 = vpop.f32.mrb[0].mxu0
      %v2200 = vadd.f32 0.0, %v2199
      %v2201 = vpop.f32.mrb[0].mxu0
      %v2202 = vadd.f32 0.0, %v2201
      %v2203 = vpop.f32.mrb[0].mxu0
      %v2204 = vpop.f32.mrb[0].mxu0
      %2205 = vdwg.mxu0
      %v2206 = vadd.f32 %v1467, %v2159
      %v2207 = vadd.f32 %v1469, %v2161
      %v2208 = vadd.f32 %v1508, %v2200
      %v2209 = vadd.f32 %v1510, %v2202
      %v2210 = vld [vmem:[%s12] sm:$0xff]
      %v2211 = vld [vmem:[%s13] sm:$0xff]
      %v2212 = vadd.f32 %v2206, %v2207
      %v2213 = vadd.f32 %v2212, %v2208
      %v2214 = vadd.f32 %v2213, %v2209
      %2215 = vadd.xlane.f32.xlu0 %v2214
      %v2216 = vpop.xlane.xlu0 %2215
      %v2217 = vmul.f32 %v2216, %v827
      %v2218 = vsub.f32 %v2206, %v2217
      %v2219 = vsub.f32 %v2207, %v2217
      %v2220 = vsub.f32 %v2208, %v2217
      %v2221 = vsub.f32 %v2209, %v2217
      %v2222 = vmul.f32 %v2218, %v2218
      %v2223 = vmul.f32 %v2219, %v2219
      %v2224 = vmul.f32 %v2220, %v2220
      %v2225 = vmul.f32 %v2221, %v2221
      %v2226 = vadd.f32 %v2222, %v2223
      %v2227 = vadd.f32 %v2226, %v2224
      %v2228 = vadd.f32 %v2227, %v2225
      %2229 = vadd.xlane.f32.xlu0 %v2228
      %v2230 = vpop.xlane.xlu0 %2229
      %v2231 = vmul.f32 %v2230, %v827
      %v2232 = vadd.f32 %v2231, 1e-05
      %v2233 = vrsqrt.pop %v2232
      %v2234 = vmul.f32 %v2218, %v2233
      %v2235 = vmul.f32 %v2219, %v2233
      %v2236 = vmul.f32 %v2220, %v2233
      %v2237 = vmul.f32 %v2221, %v2233
      %2239 = vset.pattern.permute.xlu0 0
      %2240 = vperm.xlu0 %2239, %v2210
      %v2241 = vpop.permute.xlu0 %2240
      %v2243 = vmul.f32 %v2234, %v2241
      %v2244 = vmul.f32 %v2235, %v2241
      %v2245 = vmul.f32 %v2236, %v2241
      %v2246 = vmul.f32 %v2237, %v2241
      %2248 = vset.pattern.permute.xlu0 0
      %2249 = vperm.xlu0 %2248, %v2211
      %v2250 = vpop.permute.xlu0 %2249
      %v2252 = vadd.f32 %v2243, %v2250
      %v2253 = vadd.f32 %v2244, %v2250
      %v2254 = vadd.f32 %v2245, %v2250
      %v2255 = vadd.f32 %v2246, %v2250
      %v2256 = vmax.f32 %v2252, 0.0
      %v2257 = vmax.f32 %v2253, 0.0
      %v2258 = vmax.f32 %v2254, 0.0
      %v2259 = vmax.f32 %v2255, 0.0
      %v2260 = vld [vmem:[%s14] sm:$0xf]
      %2265 = vrot.lane.b32.xlu0 %v2256, 33
      %v2266 = vpop.permute.xlu0 %2265
      %2267 = vrot.lane.b32.xlu0 %v2257, 33
      %v2268 = vpop.permute.xlu0 %2267
      %2269 = vrot.lane.b32.xlu0 %v2258, 33
      %v2270 = vpop.permute.xlu0 %2269
      %2271 = vrot.lane.b32.xlu0 %v2259, 33
      %v2272 = vpop.permute.xlu0 %2271
      %v2273 = vsel %vm884, %v2266, %v2268
      %v2274 = vsel %vm884, %v2268, %v2270
      %v2275 = vsel %vm884, %v2270, %v2272
      %v2281 = vsel %vm884, 0.0, %v2266
      %v2282 = vsel %vm884, %v2272, 0.0
      %v2283 = vmul.f32 %v2281, %v900
      %v2284 = vmul.f32 %v2273, %v904
      %v2285 = vmul.f32 %v2274, %v908
      %v2286 = vmul.f32 %v2275, %v912
      %v2287 = vmul.f32 %v2281, %v941
      %v2288 = vmul.f32 %v2273, %v949
      %v2289 = vmul.f32 %v2274, %v950
      %v2290 = vmul.f32 %v2275, %v951
      %v2291 = vmul.f32 %v2282, %v947
      %v2292 = vmul.f32 %v2281, %v982
      %v2293 = vmul.f32 %v2273, %v990
      %v2294 = vmul.f32 %v2274, %v991
      %v2295 = vmul.f32 %v2275, %v992
      %v2296 = vmul.f32 %v2282, %v988
      %v2297 = vmul.f32 %v2281, %v1023
      %v2298 = vmul.f32 %v2273, %v1031
      %v2299 = vmul.f32 %v2274, %v1032
      %v2300 = vmul.f32 %v2275, %v1033
      %v2301 = vmul.f32 %v2282, %v1029
      %v2302 = vmul.f32 %v2281, %v1064
      %v2303 = vmul.f32 %v2273, %v1072
      %v2304 = vmul.f32 %v2274, %v1073
      %v2305 = vmul.f32 %v2275, %v1074
      %v2306 = vmul.f32 %v2282, %v1070
      %v2307 = vmul.f32 %v2281, %v1105
      %v2308 = vmul.f32 %v2273, %v1113
      %v2309 = vmul.f32 %v2274, %v1114
      %v2310 = vmul.f32 %v2275, %v1115
      %v2311 = vmul.f32 %v2282, %v1111
      %v2312 = vmul.f32 %v2281, %v1146
      %v2313 = vmul.f32 %v2273, %v1154
      %v2314 = vmul.f32 %v2274, %v1155
      %v2315 = vmul.f32 %v2275, %v1156
      %v2316 = vmul.f32 %v2282, %v1152
      %v2317 = vmul.f32 %v2281, %v1187
      %v2318 = vmul.f32 %v2273, %v1195
      %v2319 = vmul.f32 %v2274, %v1196
      %v2320 = vmul.f32 %v2275, %v1197
      %v2321 = vmul.f32 %v2282, %v1193
      %2327 = vrot.lane.b32.xlu0 %v2287, 127
      %v2328 = vpop.permute.xlu0 %2327
      %2329 = vrot.lane.b32.xlu0 %v2288, 127
      %v2330 = vpop.permute.xlu0 %2329
      %2331 = vrot.lane.b32.xlu0 %v2289, 127
      %v2332 = vpop.permute.xlu0 %2331
      %2333 = vrot.lane.b32.xlu0 %v2290, 127
      %v2334 = vpop.permute.xlu0 %2333
      %2335 = vrot.lane.b32.xlu0 %v2291, 127
      %v2336 = vpop.permute.xlu0 %2335
      %v2337 = vsel %vm1223, %v2328, %v2330
      %v2338 = vsel %vm1223, %v2330, %v2332
      %v2339 = vsel %vm1223, %v2332, %v2334
      %v2340 = vsel %vm1223, %v2334, %v2336
      %2350 = vrot.lane.b32.xlu0 %v2292, 126
      %v2351 = vpop.permute.xlu0 %2350
      %2352 = vrot.lane.b32.xlu0 %v2293, 126
      %v2353 = vpop.permute.xlu0 %2352
      %2354 = vrot.lane.b32.xlu0 %v2294, 126
      %v2355 = vpop.permute.xlu0 %2354
      %2356 = vrot.lane.b32.xlu0 %v2295, 126
      %v2357 = vpop.permute.xlu0 %2356
      %2358 = vrot.lane.b32.xlu0 %v2296, 126
      %v2359 = vpop.permute.xlu0 %2358
      %v2360 = vsel %vm1247, %v2351, %v2353
      %v2361 = vsel %vm1247, %v2353, %v2355
      %v2362 = vsel %vm1247, %v2355, %v2357
      %v2363 = vsel %vm1247, %v2357, %v2359
      %2373 = vrot.lane.b32.xlu0 %v2297, 96
      %v2374 = vpop.permute.xlu0 %2373
      %2375 = vrot.lane.b32.xlu0 %v2298, 96
      %v2376 = vpop.permute.xlu0 %2375
      %2377 = vrot.lane.b32.xlu0 %v2299, 96
      %v2378 = vpop.permute.xlu0 %2377
      %2379 = vrot.lane.b32.xlu0 %v2300, 96
      %v2380 = vpop.permute.xlu0 %2379
      %2381 = vrot.lane.b32.xlu0 %v2301, 96
      %v2382 = vpop.permute.xlu0 %2381
      %v2383 = vsel %vm1271, %v2374, %v2376
      %v2384 = vsel %vm1271, %v2376, %v2378
      %v2385 = vsel %vm1271, %v2378, %v2380
      %v2386 = vsel %vm1271, %v2380, %v2382
      %2393 = vrot.lane.b32.xlu0 %v2281, 95
      %v2394 = vpop.permute.xlu0 %2393
      %2395 = vrot.lane.b32.xlu0 %v2273, 95
      %v2396 = vpop.permute.xlu0 %2395
      %2397 = vrot.lane.b32.xlu0 %v2274, 95
      %v2398 = vpop.permute.xlu0 %2397
      %2399 = vrot.lane.b32.xlu0 %v2275, 95
      %v2400 = vpop.permute.xlu0 %2399
      %2401 = vrot.lane.b32.xlu0 %v2282, 95
      %v2402 = vpop.permute.xlu0 %2401
      %v2403 = vsel %vm1292, %v2394, %v2396
      %v2404 = vsel %vm1292, %v2396, %v2398
      %v2405 = vsel %vm1292, %v2398, %v2400
      %v2406 = vsel %vm1292, %v2400, %v2402
      %2416 = vrot.lane.b32.xlu0 %v2302, 94
      %v2417 = vpop.permute.xlu0 %2416
      %2418 = vrot.lane.b32.xlu0 %v2303, 94
      %v2419 = vpop.permute.xlu0 %2418
      %2420 = vrot.lane.b32.xlu0 %v2304, 94
      %v2421 = vpop.permute.xlu0 %2420
      %2422 = vrot.lane.b32.xlu0 %v2305, 94
      %v2423 = vpop.permute.xlu0 %2422
      %2424 = vrot.lane.b32.xlu0 %v2306, 94
      %v2425 = vpop.permute.xlu0 %2424
      %v2426 = vsel %vm1316, %v2417, %v2419
      %v2427 = vsel %vm1316, %v2419, %v2421
      %v2428 = vsel %vm1316, %v2421, %v2423
      %v2429 = vsel %vm1316, %v2423, %v2425
      %2439 = vrot.lane.b32.xlu0 %v2307, 64
      %v2440 = vpop.permute.xlu0 %2439
      %2441 = vrot.lane.b32.xlu0 %v2308, 64
      %v2442 = vpop.permute.xlu0 %2441
      %2443 = vrot.lane.b32.xlu0 %v2309, 64
      %v2444 = vpop.permute.xlu0 %2443
      %2445 = vrot.lane.b32.xlu0 %v2310, 64
      %v2446 = vpop.permute.xlu0 %2445
      %2447 = vrot.lane.b32.xlu0 %v2311, 64
      %v2448 = vpop.permute.xlu0 %2447
      %v2449 = vsel %vm1112, %v2440, %v2442
      %v2450 = vsel %vm1112, %v2442, %v2444
      %v2451 = vsel %vm1112, %v2444, %v2446
      %v2452 = vsel %vm1112, %v2446, %v2448
      %2462 = vrot.lane.b32.xlu0 %v2312, 63
      %v2463 = vpop.permute.xlu0 %2462
      %2464 = vrot.lane.b32.xlu0 %v2313, 63
      %v2465 = vpop.permute.xlu0 %2464
      %2466 = vrot.lane.b32.xlu0 %v2314, 63
      %v2467 = vpop.permute.xlu0 %2466
      %2468 = vrot.lane.b32.xlu0 %v2315, 63
      %v2469 = vpop.permute.xlu0 %2468
      %2470 = vrot.lane.b32.xlu0 %v2316, 63
      %v2471 = vpop.permute.xlu0 %2470
      %v2472 = vsel %vm1363, %v2463, %v2465
      %v2473 = vsel %vm1363, %v2465, %v2467
      %v2474 = vsel %vm1363, %v2467, %v2469
      %v2475 = vsel %vm1363, %v2469, %v2471
      %2485 = vrot.lane.b32.xlu0 %v2317, 62
      %v2486 = vpop.permute.xlu0 %2485
      %2487 = vrot.lane.b32.xlu0 %v2318, 62
      %v2488 = vpop.permute.xlu0 %2487
      %2489 = vrot.lane.b32.xlu0 %v2319, 62
      %v2490 = vpop.permute.xlu0 %2489
      %2491 = vrot.lane.b32.xlu0 %v2320, 62
      %v2492 = vpop.permute.xlu0 %2491
      %2493 = vrot.lane.b32.xlu0 %v2321, 62
      %v2494 = vpop.permute.xlu0 %2493
      %v2495 = vsel %vm1387, %v2486, %v2488
      %v2496 = vsel %vm1387, %v2488, %v2490
      %v2497 = vsel %vm1387, %v2490, %v2492
      %v2498 = vsel %vm1387, %v2492, %v2494
      %v2503 = vpack.c.bf16 %v2337, %v2283
      %v2504 = vpack.c.bf16 %v2338, %v2284
      %v2505 = vpack.c.bf16 %v2339, %v2285
      %v2506 = vpack.c.bf16 %v2340, %v2286
      %v2507 = vpack.c.bf16 %v2383, %v2360
      %v2508 = vpack.c.bf16 %v2384, %v2361
      %v2509 = vpack.c.bf16 %v2385, %v2362
      %v2510 = vpack.c.bf16 %v2386, %v2363
      %v2511 = vpack.c.bf16 %v2426, %v2403
      %v2512 = vpack.c.bf16 %v2427, %v2404
      %v2513 = vpack.c.bf16 %v2428, %v2405
      %v2514 = vpack.c.bf16 %v2429, %v2406
      %v2515 = vpack.c.bf16 %v2472, %v2449
      %v2516 = vpack.c.bf16 %v2473, %v2450
      %v2517 = vpack.c.bf16 %v2474, %v2451
      %v2518 = vpack.c.bf16 %v2475, %v2452
      %v2519 = vpack.c.bf16 %v2495, %v2495
      %v2520 = vpack.c.bf16 %v2496, %v2496
      %v2521 = vpack.c.bf16 %v2497, %v2497
      %v2522 = vpack.c.bf16 %v2498, %v2498
      %v2524 = vsel %vm1416, %v2260, 0
      %v2527 = vsel %vm725, %v2519, 0
      %v2530 = vsel %vm725, %v2520, 0
      %v2533 = vsel %vm725, %v2521, 0
      %v2536 = vsel %vm725, %v2522, 0
      %2538 = vmatprep.subr.bf16.mxu0 %v2504
      %2539 = vmatpush1.bf16.msra.mxu0 %v2503
      %2540 = vmatprep.subr.bf16.mxu0 %v2508
      %2541 = vmatpush1.bf16.msra.mxu0 %v2507
      %2542 = vmatprep.subr.bf16.mxu0 %v2512
      %2543 = vmatpush1.bf16.msra.mxu0 %v2511
      %2544 = vmatprep.subr.bf16.mxu0 %v2516
      %2545 = vmatpush1.bf16.msra.mxu0 %v2515
      %2546 = vmatprep.subr.bf16.mxu0 %v2530
      %2547 = vmatpush1.bf16.msra.mxu0 %v2527
      %2548 = vmatprep.subr.bf16.mxu0 0
      %2549 = vmatpush1.bf16.msra.mxu0 0
      %2550 = vmatprep.subr.bf16.mxu0 0
      %2551 = vmatpush1.bf16.msra.mxu0 0
      %2552 = vmatprep.subr.bf16.mxu0 0
      %2553 = vmatpush1.bf16.msra.mxu0 0
      %2554 = vmatprep.subr.bf16.mxu0 0
      %2555 = vmatpush1.bf16.msra.mxu0 0
      %2556 = vmatprep.subr.bf16.mxu0 0
      %2557 = vmatpush1.bf16.msra.mxu0 0
      %2558 = vmatprep.subr.bf16.mxu0 0
      %2559 = vmatpush1.bf16.msra.mxu0 0
      %2560 = vmatprep.subr.bf16.mxu0 0
      %2561 = vmatpush1.bf16.msra.mxu0 0
      %2562 = vmatprep.subr.bf16.mxu0 0
      %2563 = vmatpush1.bf16.msra.mxu0 0
      %2564 = vmatprep.subr.bf16.mxu0 0
      %2565 = vmatpush1.bf16.msra.mxu0 0
      %2566 = vmatprep.subr.bf16.mxu0 0
      %2567 = vmatpush1.bf16.msra.mxu0 0
      %2568 = vmatprep.subr.bf16.mxu0 0
      %2569 = vmatpush1.bf16.msra.mxu0 0
      %2570 = vmatprep.mubr.bf16.mxu0 0
      %2571 = vmatmul.mubr.bf16.gmra.mrb[0].mxu0 %v2524
      %v2572 = vpop.f32.mrb[0].mxu0
      %v2573 = vadd.f32 %v773, %v2572
      %v2574 = vpop.f32.mrb[0].mxu0
      %v2575 = vadd.f32 %v775, %v2574
      %v2576 = vpop.f32.mrb[0].mxu0
      %v2577 = vpop.f32.mrb[0].mxu0
      %2578 = vdwg.mxu0
      %2579 = vmatprep.subr.bf16.mxu0 %v2506
      %2580 = vmatpush1.bf16.msra.mxu0 %v2505
      %2581 = vmatprep.subr.bf16.mxu0 %v2510
      %2582 = vmatpush1.bf16.msra.mxu0 %v2509
      %2583 = vmatprep.subr.bf16.mxu0 %v2514
      %2584 = vmatpush1.bf16.msra.mxu0 %v2513
      %2585 = vmatprep.subr.bf16.mxu0 %v2518
      %2586 = vmatpush1.bf16.msra.mxu0 %v2517
      %2587 = vmatprep.subr.bf16.mxu0 %v2536
      %2588 = vmatpush1.bf16.msra.mxu0 %v2533
      %2589 = vmatprep.subr.bf16.mxu0 0
      %2590 = vmatpush1.bf16.msra.mxu0 0
      %2591 = vmatprep.subr.bf16.mxu0 0
      %2592 = vmatpush1.bf16.msra.mxu0 0
      %2593 = vmatprep.subr.bf16.mxu0 0
      %2594 = vmatpush1.bf16.msra.mxu0 0
      %2595 = vmatprep.subr.bf16.mxu0 0
      %2596 = vmatpush1.bf16.msra.mxu0 0
      %2597 = vmatprep.subr.bf16.mxu0 0
      %2598 = vmatpush1.bf16.msra.mxu0 0
      %2599 = vmatprep.subr.bf16.mxu0 0
      %2600 = vmatpush1.bf16.msra.mxu0 0
      %2601 = vmatprep.subr.bf16.mxu0 0
      %2602 = vmatpush1.bf16.msra.mxu0 0
      %2603 = vmatprep.subr.bf16.mxu0 0
      %2604 = vmatpush1.bf16.msra.mxu0 0
      %2605 = vmatprep.subr.bf16.mxu0 0
      %2606 = vmatpush1.bf16.msra.mxu0 0
      %2607 = vmatprep.subr.bf16.mxu0 0
      %2608 = vmatpush1.bf16.msra.mxu0 0
      %2609 = vmatprep.subr.bf16.mxu0 0
      %2610 = vmatpush1.bf16.msra.mxu0 0
      %2611 = vmatprep.mubr.bf16.mxu0 0
      %2612 = vmatmul.mubr.bf16.gmra.mrb[0].mxu0 %v2524
      %v2613 = vpop.f32.mrb[0].mxu0
      %v2614 = vadd.f32 %v814, %v2613
      %v2615 = vpop.f32.mrb[0].mxu0
      %v2616 = vadd.f32 %v816, %v2615
      %v2617 = vpop.f32.mrb[0].mxu0
      %v2618 = vpop.f32.mrb[0].mxu0
      %2619 = vdwg.mxu0
      %2620 = vst [vmem:[%s610] sm:$0xff] %v2573
      %2621 = vst [vmem:[%s610 + $0x8] sm:$0xff] %v2575
      %2622 = vst [vmem:[%s610 + $0x10] sm:$0xff] %v2614
      %2623 = vst [vmem:[%s610 + $0x18] sm:$0xff] %v2616
      %v2624 = vld [vmem:[%s16] sm:$0xff]
      %v2625 = vld [vmem:[%s17] sm:$0xff]
      %v2626 = vadd.f32 %v2573, %v2575
      %v2627 = vadd.f32 %v2626, %v2614
      %v2628 = vadd.f32 %v2627, %v2616
      %2629 = vadd.xlane.f32.xlu0 %v2628
      %v2630 = vpop.xlane.xlu0 %2629
      %v2631 = vmul.f32 %v2630, %v827
      %v2632 = vsub.f32 %v2573, %v2631
      %v2633 = vsub.f32 %v2575, %v2631
      %v2634 = vsub.f32 %v2614, %v2631
      %v2635 = vsub.f32 %v2616, %v2631
      %v2636 = vmul.f32 %v2632, %v2632
      %v2637 = vmul.f32 %v2633, %v2633
      %v2638 = vmul.f32 %v2634, %v2634
      %v2639 = vmul.f32 %v2635, %v2635
      %v2640 = vadd.f32 %v2636, %v2637
      %v2641 = vadd.f32 %v2640, %v2638
      %v2642 = vadd.f32 %v2641, %v2639
      %2643 = vadd.xlane.f32.xlu0 %v2642
      %v2644 = vpop.xlane.xlu0 %2643
      %v2645 = vmul.f32 %v2644, %v827
      %v2646 = vadd.f32 %v2645, 1e-05
      %v2647 = vrsqrt.pop %v2646
      %v2648 = vmul.f32 %v2632, %v2647
      %v2649 = vmul.f32 %v2633, %v2647
      %v2650 = vmul.f32 %v2634, %v2647
      %v2651 = vmul.f32 %v2635, %v2647
      %2653 = vset.pattern.permute.xlu0 0
      %2654 = vperm.xlu0 %2653, %v2624
      %v2655 = vpop.permute.xlu0 %2654
      %v2657 = vmul.f32 %v2648, %v2655
      %v2658 = vmul.f32 %v2649, %v2655
      %v2659 = vmul.f32 %v2650, %v2655
      %v2660 = vmul.f32 %v2651, %v2655
      %2662 = vset.pattern.permute.xlu0 0
      %2663 = vperm.xlu0 %2662, %v2625
      %v2664 = vpop.permute.xlu0 %2663
      %v2666 = vadd.f32 %v2657, %v2664
      %v2667 = vadd.f32 %v2658, %v2664
      %v2668 = vadd.f32 %v2659, %v2664
      %v2669 = vadd.f32 %v2660, %v2664
      %v2670 = vmax.f32 %v2666, 0.0
      %v2671 = vmax.f32 %v2667, 0.0
      %v2672 = vmax.f32 %v2668, 0.0
      %v2673 = vmax.f32 %v2669, 0.0
      %2674 = vst [vmem:[%s615] sm:$0xff] %v2670
      %2675 = vst [vmem:[%s615 + $0x8] sm:$0xff] %v2671
      %2676 = vst [vmem:[%s615 + $0x10] sm:$0xff] %v2672
      %2677 = vst [vmem:[%s615 + $0x18] sm:$0xff] %v2673
      %p2678 = scmp.lt.s32.totalorder %s31, 1
      %s2679 = scalar_select %p2678, %s31, 1
      %s2680 = smul.addr %s2679, 4
      %s2681 = smul.addr %s2680, 8
      %s2682 = scalar_lea.vmem %s18, %s2681
      %p2683 = scmp.lt.s32.totalorder %s31, 1
      %s2684 = scalar_select %p2683, %s31, 1
      %s2685 = smul.addr %s2684, 4
      %s2686 = smul.addr %s2685, 8
      %s2687 = scalar_lea.vmem %s19, %s2686
      // Predicated region
      $region93: #{tfc_tdf_net_forward.3} parent=91 // pred_check
        %p2688 = pneg %p432
      $region94: #{tfc_tdf_net_forward.3} parent=91 // pred_check_branch
        %2690 = sbr.rel (%p2688) target = $region96
      $region95: #{tfc_tdf_net_forward.3} parent=91 // pred_region
        _
      $region96: #{tfc_tdf_net_forward.3} parent=91 // pred_fallthru
        _
      // Predicated region
      $region97: #{tfc_tdf_net_forward.3} parent=91 // pred_check
        %p2691 = pneg %p458
      $region98: #{tfc_tdf_net_forward.3} parent=91 // pred_check_branch
        %2693 = sbr.rel (%p2691) target = $region100
      $region99: #{tfc_tdf_net_forward.3} parent=91 // pred_region
        _
      $region100: #{tfc_tdf_net_forward.3} parent=91 // pred_fallthru
        _
    $region92: #{tfc_tdf_net_forward.3} parent=5 // pred_fallthru
      _
    %p2694 = scmp.le.s32.totalorder 2, %s26
    // Predicated region
    $region101: #{tfc_tdf_net_forward.3} parent=5 // pred_check
      %p2695 = pneg %p2694
    $region102: #{tfc_tdf_net_forward.3} parent=5 // pred_check_branch
      %2697 = sbr.rel (%p2695) target = $region104
    $region103: #{tfc_tdf_net_forward.3} parent=5 // pred_region
      %s2698 = ssub.s32 %s26, 2
      // Predicated region
      $region105: #{tfc_tdf_net_forward.3} parent=103 // pred_check
        %p2699 = pneg %p438
      $region106: #{tfc_tdf_net_forward.3} parent=103 // pred_check_branch
        %2701 = sbr.rel (%p2699) target = $region108
      $region107: #{tfc_tdf_net_forward.3} parent=103 // pred_region
        %p2702 = scmp.lt.s32.totalorder %s32, 1
        %s2703 = scalar_select %p2702, %s32, 1
        %s2704 = smul.addr %s2703, 4
        %s2705 = smul.addr %s2704, 8
        %s2706 = scalar_lea.vmem %s18, %s2705
      $region108: #{tfc_tdf_net_forward.3} parent=103 // pred_fallthru
        _
      // Predicated region
      $region109: #{tfc_tdf_net_forward.3} parent=103 // pred_check
        %p2707 = pneg %p464
      $region110: #{tfc_tdf_net_forward.3} parent=103 // pred_check_branch
        %2709 = sbr.rel (%p2707) target = $region112
      $region111: #{tfc_tdf_net_forward.3} parent=103 // pred_region
        %p2710 = scmp.lt.s32.totalorder %s32, 1
        %s2711 = scalar_select %p2710, %s32, 1
        %s2712 = smul.addr %s2711, 4
        %s2713 = smul.addr %s2712, 8
        %s2714 = scalar_lea.vmem %s19, %s2713
      $region112: #{tfc_tdf_net_forward.3} parent=103 // pred_fallthru
        _
    $region104: #{tfc_tdf_net_forward.3} parent=5 // pred_fallthru
      _
  $region6: #{tfc_tdf_net_forward.3} parent=0 // loop_footer
    %s30 = sadd.s32 1, %s26
  $region7: #{tfc_tdf_net_forward.3} parent=0 // loop_footer_branch
    %25 = sbr.rel target = $region3
  $region8: #{tfc_tdf_net_forward.3} parent=0 // loop_exit
    _

// kernel: tfc_tdf_net_forward.4
$region0: #{tfc_tdf_net_forward.4}
  #allocation0 [shape = 'u32[]', space=smem, size = 0x4, offset = 0x4, fixed_abs, tag = 'smem constant byte address 0x4 - core index']
  #allocation1 [shape = 'u32[144,128]{1,0:T(1,128)}', space=vmem, size = 0x12000, scoped, tag = 'internal scratch']
  %s0 = inlined_call_operand.vmem [shape: f32[2,32,128], index: 0, kind: input, shape index: {}]
  %s1 = inlined_call_operand.vmem [shape: bf16[12,32], index: 1, kind: input, shape index: {}]
  %s2 = inlined_call_operand.vmem [shape: bf16[12,12], index: 2, kind: input, shape index: {}]
  %s3 = inlined_call_operand.vmem [shape: f32[12,1], index: 3, kind: input, shape index: {}]
  %s4 = inlined_call_operand.vmem [shape: f32[12,1], index: 4, kind: input, shape index: {}]
  %s5 = inlined_call_operand.vmem [shape: bf16[12,108], index: 5, kind: input, shape index: {}]
  %s6 = inlined_call_operand.vmem [shape: f32[12,1], index: 6, kind: input, shape index: {}]
  %s7 = inlined_call_operand.vmem [shape: f32[12,1], index: 7, kind: input, shape index: {}]
  %s8 = inlined_call_operand.vmem [shape: bf16[128,32], index: 8, kind: input, shape index: {}]
  %s9 = inlined_call_operand.vmem [shape: f32[12,1], index: 9, kind: input, shape index: {}]
  %s10 = inlined_call_operand.vmem [shape: f32[12,1], index: 10, kind: input, shape index: {}]
  %s11 = inlined_call_operand.vmem [shape: bf16[32,128], index: 11, kind: input, shape index: {}]
  %s12 = inlined_call_operand.vmem [shape: f32[12,1], index: 12, kind: input, shape index: {}]
  %s13 = inlined_call_operand.vmem [shape: f32[12,1], index: 13, kind: input, shape index: {}]
  %s14 = inlined_call_operand.vmem [shape: bf16[12,108], index: 14, kind: input, shape index: {}]
  %s15 = inlined_call_operand.vmem [shape: f32[9,128], index: 15, kind: input, shape index: {}]
  %s16 = inlined_call_operand.vmem [shape: f32[12,1], index: 16, kind: input, shape index: {}]
  %s17 = inlined_call_operand.vmem [shape: f32[12,1], index: 17, kind: input, shape index: {}]
  %s18 = inlined_call_operand.vmem [shape: bf16[32,12], index: 18, kind: input, shape index: {}]
  %s19 = inlined_call_operand.vmem [shape: f32[2,32,128], index: 19, kind: output, shape index: {}]
  %s20 = sld [smem:[#allocation0]]
  $region109: #{tfc_tdf_net_forward.4} parent=0
    _
  %s22 = ssub.s32 1, %s20
  %s23 = scalar_select 0, %s22, %s20
  loop: start=0, step=1, limit=4
  $region2: #{tfc_tdf_net_forward.4} parent=0 // loop_pre_header
    _
  $region3: #{tfc_tdf_net_forward.4} parent=0 // loop_header
    %s25 = sphi 0, %s29
    %p26 = scmp.ge.s32.totalorder %s25, 4
    %s35 = sphi 0, %s37
    %s38 = sphi 0, %s35
    %s39 = sphi 0, %s38
    %s55 = sphi 0, %s39
    %s59 = sphi 0, %s59
    %s61 = sphi 0, %s59
    %s62 = sphi 0, %s61
    %s76 = sphi 0, %s62
    %s80 = sphi 0, %s80
    %s82 = sphi 0, %s80
    %s83 = sphi 0, %s82
    %s97 = sphi 0, %s83
    %s101 = sphi 0, %s101
    %s103 = sphi 0, %s101
    %s104 = sphi 0, %s103
    %s118 = sphi 0, %s104
    %s122 = sphi 0, %s122
    %s124 = sphi 0, %s122
    %s125 = sphi 0, %s124
    %s139 = sphi 0, %s125
    %s143 = sphi 0, %s143
    %s145 = sphi 0, %s143
    %s146 = sphi 0, %s145
    %s160 = sphi 0, %s146
    %s164 = sphi 0, %s164
    %s166 = sphi 0, %s164
    %s167 = sphi 0, %s166
    %s181 = sphi 0, %s167
    %s185 = sphi 0, %s185
    %s187 = sphi 0, %s185
    %s188 = sphi 0, %s187
    %s202 = sphi 0, %s188
    %s206 = sphi 0, %s206
    %s208 = sphi 0, %s206
    %s209 = sphi 0, %s208
    %s223 = sphi 0, %s209
    %s227 = sphi 0, %s227
    %s229 = sphi 0, %s227
    %s230 = sphi 0, %s229
    %s244 = sphi 0, %s230
    %s248 = sphi 0, %s248
    %s250 = sphi 0, %s248
    %s251 = sphi 0, %s250
    %s265 = sphi 0, %s251
    %s269 = sphi 0, %s269
    %s271 = sphi 0, %s269
    %s272 = sphi 0, %s271
    %s286 = sphi 0, %s272
    %s290 = sphi 0, %s290
    %s292 = sphi 0, %s290
    %s293 = sphi 0, %s292
    %s307 = sphi 0, %s293
    %s311 = sphi 0, %s311
    %s313 = sphi 0, %s311
    %s314 = sphi 0, %s313
    %s328 = sphi 0, %s314
    %s332 = sphi 0, %s332
    %s334 = sphi 0, %s332
    %s335 = sphi 0, %s334
    %s349 = sphi 0, %s335
    %s353 = sphi 0, %s353
    %s355 = sphi 0, %s353
    %s356 = sphi 0, %s355
    %s370 = sphi 0, %s356
    %s374 = sphi 0, %s374
    %s376 = sphi 0, %s374
    %s377 = sphi 0, %s376
    %s391 = sphi 0, %s377
    %s395 = sphi 0, %s395
    %s397 = sphi 0, %s395
    %s398 = sphi 0, %s397
    %s412 = sphi 0, %s398
    %s416 = sphi 0, %s416
    %s418 = sphi 0, %s416
    %s419 = sphi 0, %s418
    %s433 = sphi 0, %s419
    %s439 = sphi 0, %s441
    %s442 = sphi 0, %s439
    %s443 = sphi 0, %s442
    %s459 = sphi 0, %s443
  $region4: #{tfc_tdf_net_forward.4} parent=0 // loop_header_branch
    %28 = sbr.rel (%p26) target = $region8
  $region5: #{tfc_tdf_net_forward.4} parent=0 // loop_body
    %s30 = ssub.s32 %s25, 1
    %s31 = ssub.s32 %s25, 2
    %s32 = sadd.s32 %s25, 1
    %s33 = ssub.s32 %s25, %s32
    %p34 = scmp.eq.s32.totalorder %s33, 0
    %s36 = sadd.s32 %s35, 1
    %s37 = scalar_select %p34, %s35, %s36
    %p40 = pneg %p34
    %p41 = scmp.eq.s32.totalorder %s25, 1
    %p42 = por %p40, %p41
    %p43 = scmp.ne.s32.totalorder %s35, %s38
    %p44 = scmp.eq.s32.totalorder %s25, 0
    %p45 = por %p43, %p44
    %p46 = scmp.ne.s32.totalorder %s35, %s38
    %p47 = scmp.eq.s32.totalorder %s30, 1
    %p48 = por %p46, %p47
    %p49 = scmp.ne.s32.totalorder %s38, %s39
    %p50 = scmp.eq.s32.totalorder %s30, 0
    %p51 = por %p49, %p50
    %p52 = scmp.ne.s32.totalorder %s38, %s39
    %p53 = scmp.eq.s32.totalorder %s31, 1
    %p54 = por %p52, %p53
    %p56 = scmp.ne.s32.totalorder %s39, %s55
    %p57 = scmp.eq.s32.totalorder %s31, 0
    %p58 = por %p56, %p57
    %s60 = sadd.s32 %s59, 1
    %p63 = scmp.eq.s32.totalorder %s25, 1
    %p64 = scmp.ne.s32.totalorder %s59, %s61
    %p65 = scmp.eq.s32.totalorder %s25, 0
    %p66 = por %p64, %p65
    %p67 = scmp.ne.s32.totalorder %s59, %s61
    %p68 = scmp.eq.s32.totalorder %s30, 1
    %p69 = por %p67, %p68
    %p70 = scmp.ne.s32.totalorder %s61, %s62
    %p71 = scmp.eq.s32.totalorder %s30, 0
    %p72 = por %p70, %p71
    %p73 = scmp.ne.s32.totalorder %s61, %s62
    %p74 = scmp.eq.s32.totalorder %s31, 1
    %p75 = por %p73, %p74
    %p77 = scmp.ne.s32.totalorder %s62, %s76
    %p78 = scmp.eq.s32.totalorder %s31, 0
    %p79 = por %p77, %p78
    %s81 = sadd.s32 %s80, 1
    %p84 = scmp.eq.s32.totalorder %s25, 1
    %p85 = scmp.ne.s32.totalorder %s80, %s82
    %p86 = scmp.eq.s32.totalorder %s25, 0
    %p87 = por %p85, %p86
    %p88 = scmp.ne.s32.totalorder %s80, %s82
    %p89 = scmp.eq.s32.totalorder %s30, 1
    %p90 = por %p88, %p89
    %p91 = scmp.ne.s32.totalorder %s82, %s83
    %p92 = scmp.eq.s32.totalorder %s30, 0
    %p93 = por %p91, %p92
    %p94 = scmp.ne.s32.totalorder %s82, %s83
    %p95 = scmp.eq.s32.totalorder %s31, 1
    %p96 = por %p94, %p95
    %p98 = scmp.ne.s32.totalorder %s83, %s97
    %p99 = scmp.eq.s32.totalorder %s31, 0
    %p100 = por %p98, %p99
    %s102 = sadd.s32 %s101, 1
    %p105 = scmp.eq.s32.totalorder %s25, 1
    %p106 = scmp.ne.s32.totalorder %s101, %s103
    %p107 = scmp.eq.s32.totalorder %s25, 0
    %p108 = por %p106, %p107
    %p109 = scmp.ne.s32.totalorder %s101, %s103
    %p110 = scmp.eq.s32.totalorder %s30, 1
    %p111 = por %p109, %p110
    %p112 = scmp.ne.s32.totalorder %s103, %s104
    %p113 = scmp.eq.s32.totalorder %s30, 0
    %p114 = por %p112, %p113
    %p115 = scmp.ne.s32.totalorder %s103, %s104
    %p116 = scmp.eq.s32.totalorder %s31, 1
    %p117 = por %p115, %p116
    %p119 = scmp.ne.s32.totalorder %s104, %s118
    %p120 = scmp.eq.s32.totalorder %s31, 0
    %p121 = por %p119, %p120
    %s123 = sadd.s32 %s122, 1
    %p126 = scmp.eq.s32.totalorder %s25, 1
    %p127 = scmp.ne.s32.totalorder %s122, %s124
    %p128 = scmp.eq.s32.totalorder %s25, 0
    %p129 = por %p127, %p128
    %p130 = scmp.ne.s32.totalorder %s122, %s124
    %p131 = scmp.eq.s32.totalorder %s30, 1
    %p132 = por %p130, %p131
    %p133 = scmp.ne.s32.totalorder %s124, %s125
    %p134 = scmp.eq.s32.totalorder %s30, 0
    %p135 = por %p133, %p134
    %p136 = scmp.ne.s32.totalorder %s124, %s125
    %p137 = scmp.eq.s32.totalorder %s31, 1
    %p138 = por %p136, %p137
    %p140 = scmp.ne.s32.totalorder %s125, %s139
    %p141 = scmp.eq.s32.totalorder %s31, 0
    %p142 = por %p140, %p141
    %s144 = sadd.s32 %s143, 1
    %p147 = scmp.eq.s32.totalorder %s25, 1
    %p148 = scmp.ne.s32.totalorder %s143, %s145
    %p149 = scmp.eq.s32.totalorder %s25, 0
    %p150 = por %p148, %p149
    %p151 = scmp.ne.s32.totalorder %s143, %s145
    %p152 = scmp.eq.s32.totalorder %s30, 1
    %p153 = por %p151, %p152
    %p154 = scmp.ne.s32.totalorder %s145, %s146
    %p155 = scmp.eq.s32.totalorder %s30, 0
    %p156 = por %p154, %p155
    %p157 = scmp.ne.s32.totalorder %s145, %s146
    %p158 = scmp.eq.s32.totalorder %s31, 1
    %p159 = por %p157, %p158
    %p161 = scmp.ne.s32.totalorder %s146, %s160
    %p162 = scmp.eq.s32.totalorder %s31, 0
    %p163 = por %p161, %p162
    %s165 = sadd.s32 %s164, 1
    %p168 = scmp.eq.s32.totalorder %s25, 1
    %p169 = scmp.ne.s32.totalorder %s164, %s166
    %p170 = scmp.eq.s32.totalorder %s25, 0
    %p171 = por %p169, %p170
    %p172 = scmp.ne.s32.totalorder %s164, %s166
    %p173 = scmp.eq.s32.totalorder %s30, 1
    %p174 = por %p172, %p173
    %p175 = scmp.ne.s32.totalorder %s166, %s167
    %p176 = scmp.eq.s32.totalorder %s30, 0
    %p177 = por %p175, %p176
    %p178 = scmp.ne.s32.totalorder %s166, %s167
    %p179 = scmp.eq.s32.totalorder %s31, 1
    %p180 = por %p178, %p179
    %p182 = scmp.ne.s32.totalorder %s167, %s181
    %p183 = scmp.eq.s32.totalorder %s31, 0
    %p184 = por %p182, %p183
    %s186 = sadd.s32 %s185, 1
    %p189 = scmp.eq.s32.totalorder %s25, 1
    %p190 = scmp.ne.s32.totalorder %s185, %s187
    %p191 = scmp.eq.s32.totalorder %s25, 0
    %p192 = por %p190, %p191
    %p193 = scmp.ne.s32.totalorder %s185, %s187
    %p194 = scmp.eq.s32.totalorder %s30, 1
    %p195 = por %p193, %p194
    %p196 = scmp.ne.s32.totalorder %s187, %s188
    %p197 = scmp.eq.s32.totalorder %s30, 0
    %p198 = por %p196, %p197
    %p199 = scmp.ne.s32.totalorder %s187, %s188
    %p200 = scmp.eq.s32.totalorder %s31, 1
    %p201 = por %p199, %p200
    %p203 = scmp.ne.s32.totalorder %s188, %s202
    %p204 = scmp.eq.s32.totalorder %s31, 0
    %p205 = por %p203, %p204
    %s207 = sadd.s32 %s206, 1
    %p210 = scmp.eq.s32.totalorder %s25, 1
    %p211 = scmp.ne.s32.totalorder %s206, %s208
    %p212 = scmp.eq.s32.totalorder %s25, 0
    %p213 = por %p211, %p212
    %p214 = scmp.ne.s32.totalorder %s206, %s208
    %p215 = scmp.eq.s32.totalorder %s30, 1
    %p216 = por %p214, %p215
    %p217 = scmp.ne.s32.totalorder %s208, %s209
    %p218 = scmp.eq.s32.totalorder %s30, 0
    %p219 = por %p217, %p218
    %p220 = scmp.ne.s32.totalorder %s208, %s209
    %p221 = scmp.eq.s32.totalorder %s31, 1
    %p222 = por %p220, %p221
    %p224 = scmp.ne.s32.totalorder %s209, %s223
    %p225 = scmp.eq.s32.totalorder %s31, 0
    %p226 = por %p224, %p225
    %s228 = sadd.s32 %s227, 1
    %p231 = scmp.eq.s32.totalorder %s25, 1
    %p232 = scmp.ne.s32.totalorder %s227, %s229
    %p233 = scmp.eq.s32.totalorder %s25, 0
    %p234 = por %p232, %p233
    %p235 = scmp.ne.s32.totalorder %s227, %s229
    %p236 = scmp.eq.s32.totalorder %s30, 1
    %p237 = por %p235, %p236
    %p238 = scmp.ne.s32.totalorder %s229, %s230
    %p239 = scmp.eq.s32.totalorder %s30, 0
    %p240 = por %p238, %p239
    %p241 = scmp.ne.s32.totalorder %s229, %s230
    %p242 = scmp.eq.s32.totalorder %s31, 1
    %p243 = por %p241, %p242
    %p245 = scmp.ne.s32.totalorder %s230, %s244
    %p246 = scmp.eq.s32.totalorder %s31, 0
    %p247 = por %p245, %p246
    %s249 = sadd.s32 %s248, 1
    %p252 = scmp.eq.s32.totalorder %s25, 1
    %p253 = scmp.ne.s32.totalorder %s248, %s250
    %p254 = scmp.eq.s32.totalorder %s25, 0
    %p255 = por %p253, %p254
    %p256 = scmp.ne.s32.totalorder %s248, %s250
    %p257 = scmp.eq.s32.totalorder %s30, 1
    %p258 = por %p256, %p257
    %p259 = scmp.ne.s32.totalorder %s250, %s251
    %p260 = scmp.eq.s32.totalorder %s30, 0
    %p261 = por %p259, %p260
    %p262 = scmp.ne.s32.totalorder %s250, %s251
    %p263 = scmp.eq.s32.totalorder %s31, 1
    %p264 = por %p262, %p263
    %p266 = scmp.ne.s32.totalorder %s251, %s265
    %p267 = scmp.eq.s32.totalorder %s31, 0
    %p268 = por %p266, %p267
    %s270 = sadd.s32 %s269, 1
    %p273 = scmp.eq.s32.totalorder %s25, 1
    %p274 = scmp.ne.s32.totalorder %s269, %s271
    %p275 = scmp.eq.s32.totalorder %s25, 0
    %p276 = por %p274, %p275
    %p277 = scmp.ne.s32.totalorder %s269, %s271
    %p278 = scmp.eq.s32.totalorder %s30, 1
    %p279 = por %p277, %p278
    %p280 = scmp.ne.s32.totalorder %s271, %s272
    %p281 = scmp.eq.s32.totalorder %s30, 0
    %p282 = por %p280, %p281
    %p283 = scmp.ne.s32.totalorder %s271, %s272
    %p284 = scmp.eq.s32.totalorder %s31, 1
    %p285 = por %p283, %p284
    %p287 = scmp.ne.s32.totalorder %s272, %s286
    %p288 = scmp.eq.s32.totalorder %s31, 0
    %p289 = por %p287, %p288
    %s291 = sadd.s32 %s290, 1
    %p294 = scmp.eq.s32.totalorder %s25, 1
    %p295 = scmp.ne.s32.totalorder %s290, %s292
    %p296 = scmp.eq.s32.totalorder %s25, 0
    %p297 = por %p295, %p296
    %p298 = scmp.ne.s32.totalorder %s290, %s292
    %p299 = scmp.eq.s32.totalorder %s30, 1
    %p300 = por %p298, %p299
    %p301 = scmp.ne.s32.totalorder %s292, %s293
    %p302 = scmp.eq.s32.totalorder %s30, 0
    %p303 = por %p301, %p302
    %p304 = scmp.ne.s32.totalorder %s292, %s293
    %p305 = scmp.eq.s32.totalorder %s31, 1
    %p306 = por %p304, %p305
    %p308 = scmp.ne.s32.totalorder %s293, %s307
    %p309 = scmp.eq.s32.totalorder %s31, 0
    %p310 = por %p308, %p309
    %s312 = sadd.s32 %s311, 1
    %p315 = scmp.eq.s32.totalorder %s25, 1
    %p316 = scmp.ne.s32.totalorder %s311, %s313
    %p317 = scmp.eq.s32.totalorder %s25, 0
    %p318 = por %p316, %p317
    %p319 = scmp.ne.s32.totalorder %s311, %s313
    %p320 = scmp.eq.s32.totalorder %s30, 1
    %p321 = por %p319, %p320
    %p322 = scmp.ne.s32.totalorder %s313, %s314
    %p323 = scmp.eq.s32.totalorder %s30, 0
    %p324 = por %p322, %p323
    %p325 = scmp.ne.s32.totalorder %s313, %s314
    %p326 = scmp.eq.s32.totalorder %s31, 1
    %p327 = por %p325, %p326
    %p329 = scmp.ne.s32.totalorder %s314, %s328
    %p330 = scmp.eq.s32.totalorder %s31, 0
    %p331 = por %p329, %p330
    %s333 = sadd.s32 %s332, 1
    %p336 = scmp.eq.s32.totalorder %s25, 1
    %p337 = scmp.ne.s32.totalorder %s332, %s334
    %p338 = scmp.eq.s32.totalorder %s25, 0
    %p339 = por %p337, %p338
    %p340 = scmp.ne.s32.totalorder %s332, %s334
    %p341 = scmp.eq.s32.totalorder %s30, 1
    %p342 = por %p340, %p341
    %p343 = scmp.ne.s32.totalorder %s334, %s335
    %p344 = scmp.eq.s32.totalorder %s30, 0
    %p345 = por %p343, %p344
    %p346 = scmp.ne.s32.totalorder %s334, %s335
    %p347 = scmp.eq.s32.totalorder %s31, 1
    %p348 = por %p346, %p347
    %p350 = scmp.ne.s32.totalorder %s335, %s349
    %p351 = scmp.eq.s32.totalorder %s31, 0
    %p352 = por %p350, %p351
    %s354 = sadd.s32 %s353, 1
    %p357 = scmp.eq.s32.totalorder %s25, 1
    %p358 = scmp.ne.s32.totalorder %s353, %s355
    %p359 = scmp.eq.s32.totalorder %s25, 0
    %p360 = por %p358, %p359
    %p361 = scmp.ne.s32.totalorder %s353, %s355
    %p362 = scmp.eq.s32.totalorder %s30, 1
    %p363 = por %p361, %p362
    %p364 = scmp.ne.s32.totalorder %s355, %s356
    %p365 = scmp.eq.s32.totalorder %s30, 0
    %p366 = por %p364, %p365
    %p367 = scmp.ne.s32.totalorder %s355, %s356
    %p368 = scmp.eq.s32.totalorder %s31, 1
    %p369 = por %p367, %p368
    %p371 = scmp.ne.s32.totalorder %s356, %s370
    %p372 = scmp.eq.s32.totalorder %s31, 0
    %p373 = por %p371, %p372
    %s375 = sadd.s32 %s374, 1
    %p378 = scmp.eq.s32.totalorder %s25, 1
    %p379 = scmp.ne.s32.totalorder %s374, %s376
    %p380 = scmp.eq.s32.totalorder %s25, 0
    %p381 = por %p379, %p380
    %p382 = scmp.ne.s32.totalorder %s374, %s376
    %p383 = scmp.eq.s32.totalorder %s30, 1
    %p384 = por %p382, %p383
    %p385 = scmp.ne.s32.totalorder %s376, %s377
    %p386 = scmp.eq.s32.totalorder %s30, 0
    %p387 = por %p385, %p386
    %p388 = scmp.ne.s32.totalorder %s376, %s377
    %p389 = scmp.eq.s32.totalorder %s31, 1
    %p390 = por %p388, %p389
    %p392 = scmp.ne.s32.totalorder %s377, %s391
    %p393 = scmp.eq.s32.totalorder %s31, 0
    %p394 = por %p392, %p393
    %s396 = sadd.s32 %s395, 1
    %p399 = scmp.eq.s32.totalorder %s25, 1
    %p400 = scmp.ne.s32.totalorder %s395, %s397
    %p401 = scmp.eq.s32.totalorder %s25, 0
    %p402 = por %p400, %p401
    %p403 = scmp.ne.s32.totalorder %s395, %s397
    %p404 = scmp.eq.s32.totalorder %s30, 1
    %p405 = por %p403, %p404
    %p406 = scmp.ne.s32.totalorder %s397, %s398
    %p407 = scmp.eq.s32.totalorder %s30, 0
    %p408 = por %p406, %p407
    %p409 = scmp.ne.s32.totalorder %s397, %s398
    %p410 = scmp.eq.s32.totalorder %s31, 1
    %p411 = por %p409, %p410
    %p413 = scmp.ne.s32.totalorder %s398, %s412
    %p414 = scmp.eq.s32.totalorder %s31, 0
    %p415 = por %p413, %p414
    %s417 = sadd.s32 %s416, 1
    %p420 = scmp.eq.s32.totalorder %s25, 1
    %p421 = scmp.ne.s32.totalorder %s416, %s418
    %p422 = scmp.eq.s32.totalorder %s25, 0
    %p423 = por %p421, %p422
    %p424 = scmp.ne.s32.totalorder %s416, %s418
    %p425 = scmp.eq.s32.totalorder %s30, 1
    %p426 = por %p424, %p425
    %p427 = scmp.ne.s32.totalorder %s418, %s419
    %p428 = scmp.eq.s32.totalorder %s30, 0
    %p429 = por %p427, %p428
    %p430 = scmp.ne.s32.totalorder %s418, %s419
    %p431 = scmp.eq.s32.totalorder %s31, 1
    %p432 = por %p430, %p431
    %p434 = scmp.ne.s32.totalorder %s419, %s433
    %p435 = scmp.eq.s32.totalorder %s31, 0
    %p436 = por %p434, %p435
    %s437 = ssub.s32 %s25, %s32
    %p438 = scmp.eq.s32.totalorder %s437, 0
    %s440 = sadd.s32 %s439, 1
    %s441 = scalar_select %p438, %s439, %s440
    %p444 = pneg %p438
    %p445 = scmp.eq.s32.totalorder %s25, 1
    %p446 = por %p444, %p445
    %p447 = scmp.ne.s32.totalorder %s439, %s442
    %p448 = scmp.eq.s32.totalorder %s25, 0
    %p449 = por %p447, %p448
    %p450 = scmp.ne.s32.totalorder %s439, %s442
    %p451 = scmp.eq.s32.totalorder %s30, 1
    %p452 = por %p450, %p451
    %p453 = scmp.ne.s32.totalorder %s442, %s443
    %p454 = scmp.eq.s32.totalorder %s30, 0
    %p455 = por %p453, %p454
    %p456 = scmp.ne.s32.totalorder %s442, %s443
    %p457 = scmp.eq.s32.totalorder %s31, 1
    %p458 = por %p456, %p457
    %p460 = scmp.ne.s32.totalorder %s443, %s459
    %p461 = scmp.eq.s32.totalorder %s31, 0
    %p462 = por %p460, %p461
    %p463 = scmp.le.s32.totalorder 1, %s25
    %p464 = scmp.lt.s32.totalorder %s25, 3
    %p465 = pnand %p463, %p464
    %p466 = pneg %p465
    // Predicated region
    $region9: #{tfc_tdf_net_forward.4} parent=5 // pred_check
      _
    $region10: #{tfc_tdf_net_forward.4} parent=5 // pred_check_branch
      %468 = sbr.rel (%p465) target = $region12
    $region11: #{tfc_tdf_net_forward.4} parent=5 // pred_region
      %s469 = ssub.s32 %s25, 1
      // Predicated region
      $region13: #{tfc_tdf_net_forward.4} parent=11 // pred_check
        %p470 = pneg %p72
      $region14: #{tfc_tdf_net_forward.4} parent=11 // pred_check_branch
        %472 = sbr.rel (%p470) target = $region16
      $region15: #{tfc_tdf_net_forward.4} parent=11 // pred_region
        _
      $region16: #{tfc_tdf_net_forward.4} parent=11 // pred_fallthru
        _
      // Predicated region
      $region17: #{tfc_tdf_net_forward.4} parent=11 // pred_check
        %p473 = pneg %p93
      $region18: #{tfc_tdf_net_forward.4} parent=11 // pred_check_branch
        %475 = sbr.rel (%p473) target = $region20
      $region19: #{tfc_tdf_net_forward.4} parent=11 // pred_region
        _
      $region20: #{tfc_tdf_net_forward.4} parent=11 // pred_fallthru
        _
      // Predicated region
      $region21: #{tfc_tdf_net_forward.4} parent=11 // pred_check
        %p476 = pneg %p114
      $region22: #{tfc_tdf_net_forward.4} parent=11 // pred_check_branch
        %478 = sbr.rel (%p476) target = $region24
      $region23: #{tfc_tdf_net_forward.4} parent=11 // pred_region
        _
      $region24: #{tfc_tdf_net_forward.4} parent=11 // pred_fallthru
        _
      // Predicated region
      $region25: #{tfc_tdf_net_forward.4} parent=11 // pred_check
        %p479 = pneg %p135
      $region26: #{tfc_tdf_net_forward.4} parent=11 // pred_check_branch
        %481 = sbr.rel (%p479) target = $region28
      $region27: #{tfc_tdf_net_forward.4} parent=11 // pred_region
        _
      $region28: #{tfc_tdf_net_forward.4} parent=11 // pred_fallthru
        _
      // Predicated region
      $region29: #{tfc_tdf_net_forward.4} parent=11 // pred_check
        %p482 = pneg %p156
      $region30: #{tfc_tdf_net_forward.4} parent=11 // pred_check_branch
        %484 = sbr.rel (%p482) target = $region32
      $region31: #{tfc_tdf_net_forward.4} parent=11 // pred_region
        _
      $region32: #{tfc_tdf_net_forward.4} parent=11 // pred_fallthru
        _
      // Predicated region
      $region33: #{tfc_tdf_net_forward.4} parent=11 // pred_check
        %p485 = pneg %p177
      $region34: #{tfc_tdf_net_forward.4} parent=11 // pred_check_branch
        %487 = sbr.rel (%p485) target = $region36
      $region35: #{tfc_tdf_net_forward.4} parent=11 // pred_region
        _
      $region36: #{tfc_tdf_net_forward.4} parent=11 // pred_fallthru
        _
      // Predicated region
      $region37: #{tfc_tdf_net_forward.4} parent=11 // pred_check
        %p488 = pneg %p198
      $region38: #{tfc_tdf_net_forward.4} parent=11 // pred_check_branch
        %490 = sbr.rel (%p488) target = $region40
      $region39: #{tfc_tdf_net_forward.4} parent=11 // pred_region
        _
      $region40: #{tfc_tdf_net_forward.4} parent=11 // pred_fallthru
        _
      // Predicated region
      $region41: #{tfc_tdf_net_forward.4} parent=11 // pred_check
        %p491 = pneg %p219
      $region42: #{tfc_tdf_net_forward.4} parent=11 // pred_check_branch
        %493 = sbr.rel (%p491) target = $region44
      $region43: #{tfc_tdf_net_forward.4} parent=11 // pred_region
        _
      $region44: #{tfc_tdf_net_forward.4} parent=11 // pred_fallthru
        _
      // Predicated region
      $region45: #{tfc_tdf_net_forward.4} parent=11 // pred_check
        %p494 = pneg %p240
      $region46: #{tfc_tdf_net_forward.4} parent=11 // pred_check_branch
        %496 = sbr.rel (%p494) target = $region48
      $region47: #{tfc_tdf_net_forward.4} parent=11 // pred_region
        _
      $region48: #{tfc_tdf_net_forward.4} parent=11 // pred_fallthru
        _
      // Predicated region
      $region49: #{tfc_tdf_net_forward.4} parent=11 // pred_check
        %p497 = pneg %p261
      $region50: #{tfc_tdf_net_forward.4} parent=11 // pred_check_branch
        %499 = sbr.rel (%p497) target = $region52
      $region51: #{tfc_tdf_net_forward.4} parent=11 // pred_region
        _
      $region52: #{tfc_tdf_net_forward.4} parent=11 // pred_fallthru
        _
      // Predicated region
      $region53: #{tfc_tdf_net_forward.4} parent=11 // pred_check
        %p500 = pneg %p282
      $region54: #{tfc_tdf_net_forward.4} parent=11 // pred_check_branch
        %502 = sbr.rel (%p500) target = $region56
      $region55: #{tfc_tdf_net_forward.4} parent=11 // pred_region
        _
      $region56: #{tfc_tdf_net_forward.4} parent=11 // pred_fallthru
        _
      // Predicated region
      $region57: #{tfc_tdf_net_forward.4} parent=11 // pred_check
        %p503 = pneg %p303
      $region58: #{tfc_tdf_net_forward.4} parent=11 // pred_check_branch
        %505 = sbr.rel (%p503) target = $region60
      $region59: #{tfc_tdf_net_forward.4} parent=11 // pred_region
        _
      $region60: #{tfc_tdf_net_forward.4} parent=11 // pred_fallthru
        _
      // Predicated region
      $region61: #{tfc_tdf_net_forward.4} parent=11 // pred_check
        %p506 = pneg %p324
      $region62: #{tfc_tdf_net_forward.4} parent=11 // pred_check_branch
        %508 = sbr.rel (%p506) target = $region64
      $region63: #{tfc_tdf_net_forward.4} parent=11 // pred_region
        _
      $region64: #{tfc_tdf_net_forward.4} parent=11 // pred_fallthru
        _
      // Predicated region
      $region65: #{tfc_tdf_net_forward.4} parent=11 // pred_check
        %p509 = pneg %p345
      $region66: #{tfc_tdf_net_forward.4} parent=11 // pred_check_branch
        %511 = sbr.rel (%p509) target = $region68
      $region67: #{tfc_tdf_net_forward.4} parent=11 // pred_region
        _
      $region68: #{tfc_tdf_net_forward.4} parent=11 // pred_fallthru
        _
      // Predicated region
      $region69: #{tfc_tdf_net_forward.4} parent=11 // pred_check
        %p512 = pneg %p366
      $region70: #{tfc_tdf_net_forward.4} parent=11 // pred_check_branch
        %514 = sbr.rel (%p512) target = $region72
      $region71: #{tfc_tdf_net_forward.4} parent=11 // pred_region
        _
      $region72: #{tfc_tdf_net_forward.4} parent=11 // pred_fallthru
        _
      // Predicated region
      $region73: #{tfc_tdf_net_forward.4} parent=11 // pred_check
        %p515 = pneg %p387
      $region74: #{tfc_tdf_net_forward.4} parent=11 // pred_check_branch
        %517 = sbr.rel (%p515) target = $region76
      $region75: #{tfc_tdf_net_forward.4} parent=11 // pred_region
        _
      $region76: #{tfc_tdf_net_forward.4} parent=11 // pred_fallthru
        _
      // Predicated region
      $region77: #{tfc_tdf_net_forward.4} parent=11 // pred_check
        %p518 = pneg %p408
      $region78: #{tfc_tdf_net_forward.4} parent=11 // pred_check_branch
        %520 = sbr.rel (%p518) target = $region80
      $region79: #{tfc_tdf_net_forward.4} parent=11 // pred_region
        _
      $region80: #{tfc_tdf_net_forward.4} parent=11 // pred_fallthru
        _
      // Predicated region
      $region81: #{tfc_tdf_net_forward.4} parent=11 // pred_check
        %p521 = pneg %p429
      $region82: #{tfc_tdf_net_forward.4} parent=11 // pred_check_branch
        %523 = sbr.rel (%p521) target = $region84
      $region83: #{tfc_tdf_net_forward.4} parent=11 // pred_region
        _
      $region84: #{tfc_tdf_net_forward.4} parent=11 // pred_fallthru
        _
    $region12: #{tfc_tdf_net_forward.4} parent=5 // pred_fallthru
      _
    %p524 = scmp.lt.s32.totalorder %s25, 2
    // Predicated region
    $region85: #{tfc_tdf_net_forward.4} parent=5 // pred_check
      %p525 = pneg %p524
    $region86: #{tfc_tdf_net_forward.4} parent=5 // pred_check_branch
      %527 = sbr.rel (%p525) target = $region88
    $region87: #{tfc_tdf_net_forward.4} parent=5 // pred_region
      // Predicated region
      $region89: #{tfc_tdf_net_forward.4} parent=87 // pred_check
        %p528 = pneg %p45
      $region90: #{tfc_tdf_net_forward.4} parent=87 // pred_check_branch
        %530 = sbr.rel (%p528) target = $region92
      $region91: #{tfc_tdf_net_forward.4} parent=87 // pred_region
        %p531 = scmp.lt.s32.totalorder %s25, 1
        %s532 = scalar_select %p531, %s25, 1
        %s533 = smul.addr %s532, 4
        %s534 = smul.addr %s533, 8
        %s535 = scalar_lea.vmem %s0, %s534
      $region92: #{tfc_tdf_net_forward.4} parent=87 // pred_fallthru
        _
    $region88: #{tfc_tdf_net_forward.4} parent=5 // pred_fallthru
      _
    %p536 = scmp.le.s32.totalorder 1, %s25
    %p537 = scmp.lt.s32.totalorder %s25, 3
    %p538 = pnand %p536, %p537
    %p539 = pneg %p538
    // Predicated region
    $region93: #{tfc_tdf_net_forward.4} parent=5 // pred_check
      _
    $region94: #{tfc_tdf_net_forward.4} parent=5 // pred_check_branch
      %541 = sbr.rel (%p538) target = $region96
    $region95: #{tfc_tdf_net_forward.4} parent=5 // pred_region
      %s542 = ssub.s32 %s25, 1
      %p543 = scmp.lt.s32.totalorder %s30, 1
      %s544 = scalar_select %p543, %s30, 1
      %s545 = smul.addr %s544, 4
      %s546 = smul.addr %s545, 8
      %s547 = scalar_lea.vmem %s0, %s546
      %p548 = pneg %p51
      %p549 = pneg %p48
      %p550 = pneg %p72
      %p551 = pneg %p69
      %p552 = pneg %p93
      %p553 = pneg %p90
      %p554 = pneg %p114
      %p555 = pneg %p111
      %p556 = pneg %p135
      %p557 = pneg %p132
      %p558 = pneg %p156
      %p559 = pneg %p153
      %p560 = pneg %p177
      %p561 = pneg %p174
      %p562 = pneg %p198
      %p563 = pneg %p195
      %p564 = pneg %p219
      %p565 = pneg %p216
      %p566 = pneg %p240
      %p567 = pneg %p237
      %p568 = pneg %p261
      %p569 = pneg %p258
      %p570 = pneg %p282
      %p571 = pneg %p279
      %p572 = pneg %p303
      %p573 = pneg %p300
      %p574 = pneg %p324
      %p575 = pneg %p321
      %p576 = pneg %p345
      %p577 = pneg %p342
      %p578 = pneg %p366
      %p579 = pneg %p363
      %p580 = pneg %p387
      %p581 = pneg %p384
      %p582 = pneg %p408
      %p583 = pneg %p405
      %p584 = pneg %p429
      %p585 = pneg %p426
      %p586 = pneg %p455
      %p587 = pneg %p452
      %p588 = scmp.lt.s32.totalorder %s30, 1
      %s589 = scalar_select %p588, %s30, 1
      %s590 = smul.addr %s589, 4
      %s591 = smul.addr %s590, 8
      %s592 = scalar_lea.vmem %s19, %s591
      %p593 = scmp.lt.s32.totalorder %s30, 1
      %s594 = scalar_select %p593, %s30, 1
      %s595 = smul.addr %s594, 4
      %s596 = smul.addr %s595, 8
      %s597 = scalar_lea.vmem %s0, %s596
      %p598 = scmp.lt.s32.totalorder %s30, 1
      %s599 = scalar_select %p598, %s30, 1
      %s600 = smul.addr %s599, 4
      %s601 = smul.addr %s600, 8
      %s602 = scalar_lea.vmem %s19, %s601
      %v604 = vld [vmem:[%s1] sm:$0xf]
      %v605 = vld [vmem:[%s1 + $0x4] sm:$0x3]
      %v606 = vld [vmem:[%s597] sm:$0xff]
      %v607 = vld [vmem:[%s597 + $0x8] sm:$0xff]
      %v608 = vld [vmem:[%s597 + $0x10] sm:$0xff]
      %v609 = vld [vmem:[%s597 + $0x18] sm:$0xff]
      %v610 = vpack.c.bf16 %v607, %v606
      %v611 = vpack.c.bf16 %v609, %v608
      %v614 = vunpack.c.l.b16 %v604
      %v615 = vunpack.c.l.b16 %v605
      %v616 = vpack.c.b16 %v615, %v614
      %vm617 = vcmask 261120
      %v619 = vsel %vm617, %v616, 0
      %621 = vmatprep.subr.bf16.mxu0 0
      %622 = vmatpush1.bf16.msra.mxu0 %v610
      %623 = vmatprep.subr.bf16.mxu0 0
      %624 = vmatpush1.bf16.msra.mxu0 %v611
      %625 = vmatprep.subr.bf16.mxu0 0
      %626 = vmatpush1.bf16.msra.mxu0 0
      %627 = vmatprep.subr.bf16.mxu0 0
      %628 = vmatpush1.bf16.msra.mxu0 0
      %629 = vmatprep.subr.bf16.mxu0 0
      %630 = vmatpush1.bf16.msra.mxu0 0
      %631 = vmatprep.subr.bf16.mxu0 0
      %632 = vmatpush1.bf16.msra.mxu0 0
      %633 = vmatprep.subr.bf16.mxu0 0
      %634 = vmatpush1.bf16.msra.mxu0 0
      %635 = vmatprep.subr.bf16.mxu0 0
      %636 = vmatpush1.bf16.msra.mxu0 0
      %637 = vmatprep.subr.bf16.mxu0 0
      %638 = vmatpush1.bf16.msra.mxu0 0
      %639 = vmatprep.subr.bf16.mxu0 0
      %640 = vmatpush1.bf16.msra.mxu0 0
      %641 = vmatprep.subr.bf16.mxu0 0
      %642 = vmatpush1.bf16.msra.mxu0 0
      %643 = vmatprep.subr.bf16.mxu0 0
      %644 = vmatpush1.bf16.msra.mxu0 0
      %645 = vmatprep.subr.bf16.mxu0 0
      %646 = vmatpush1.bf16.msra.mxu0 0
      %647 = vmatprep.subr.bf16.mxu0 0
      %648 = vmatpush1.bf16.msra.mxu0 0
      %649 = vmatprep.subr.bf16.mxu0 0
      %650 = vmatpush1.bf16.msra.mxu0 0
      %651 = vmatprep.subr.bf16.mxu0 0
      %652 = vmatpush1.bf16.msra.mxu0 0
      %653 = vmatprep.mubr.bf16.mxu0 0
      %654 = vmatmul.mubr.bf16.gmra.mrb[0].mxu0 %v619
      %v655 = vpop.f32.mrb[0].mxu0
      %v656 = vadd.f32 0.0, %v655
      %v657 = vpop.f32.mrb[0].mxu0
      %v658 = vpop.f32.mrb[0].mxu0
      %v659 = vadd.f32 0.0, %v658
      %v660 = vpop.f32.mrb[0].mxu0
      %661 = vdwg.mxu0
      %v662 = vld [vmem:[%s2] sm:$0xf]
      %v663 = vld [vmem:[%s2 + $0x4] sm:$0x3]
      %v664 = vpack.c.bf16 %v659, %v656
      %v667 = vunpack.c.l.b16 %v662
      %v668 = vunpack.c.l.b16 %v663
      %v669 = vpack.c.b16 %v668, %v667
      %vm670 = vcmask 97280
      %v672 = vsel %vm670, %v669, 0
      %vm674 = vcmask 1045504
      %v676 = vsel %vm674, %v664, 0
      %678 = vmatprep.subr.bf16.mxu0 0
      %679 = vmatpush1.bf16.msra.mxu0 %v676
      %680 = vmatprep.subr.bf16.mxu0 0
      %681 = vmatpush1.bf16.msra.mxu0 0
      %682 = vmatprep.subr.bf16.mxu0 0
      %683 = vmatpush1.bf16.msra.mxu0 0
      %684 = vmatprep.subr.bf16.mxu0 0
      %685 = vmatpush1.bf16.msra.mxu0 0
      %686 = vmatprep.subr.bf16.mxu0 0
      %687 = vmatpush1.bf16.msra.mxu0 0
      %688 = vmatprep.subr.bf16.mxu0 0
      %689 = vmatpush1.bf16.msra.mxu0 0
      %690 = vmatprep.subr.bf16.mxu0 0
      %691 = vmatpush1.bf16.msra.mxu0 0
      %692 = vmatprep.subr.bf16.mxu0 0
      %693 = vmatpush1.bf16.msra.mxu0 0
      %694 = vmatprep.subr.bf16.mxu0 0
      %695 = vmatpush1.bf16.msra.mxu0 0
      %696 = vmatprep.subr.bf16.mxu0 0
      %697 = vmatpush1.bf16.msra.mxu0 0
      %698 = vmatprep.subr.bf16.mxu0 0
      %699 = vmatpush1.bf16.msra.mxu0 0
      %700 = vmatprep.subr.bf16.mxu0 0
      %701 = vmatpush1.bf16.msra.mxu0 0
      %702 = vmatprep.subr.bf16.mxu0 0
      %703 = vmatpush1.bf16.msra.mxu0 0
      %704 = vmatprep.subr.bf16.mxu0 0
      %705 = vmatpush1.bf16.msra.mxu0 0
      %706 = vmatprep.subr.bf16.mxu0 0
      %707 = vmatpush1.bf16.msra.mxu0 0
      %708 = vmatprep.subr.bf16.mxu0 0
      %709 = vmatpush1.bf16.msra.mxu0 0
      %710 = vmatprep.mubr.bf16.mxu0 0
      %711 = vmatmul.mubr.bf16.gmra.mrb[0].mxu0 %v672
      %v712 = vpop.f32.mrb[0].mxu0
      %v713 = vadd.f32 0.0, %v712
      %v714 = vpop.f32.mrb[0].mxu0
      %v715 = vpop.f32.mrb[0].mxu0
      %v716 = vadd.f32 0.0, %v715
      %v717 = vpop.f32.mrb[0].mxu0
      %718 = vdwg.mxu0
      %v719 = vld [vmem:[%s3] sm:$0xff]
      %v720 = vld [vmem:[%s3 + $0x8] sm:$0xf]
      %v721 = vld [vmem:[%s4] sm:$0xff]
      %v722 = vld [vmem:[%s4 + $0x8] sm:$0xf]
      %723 = vadd.xlane.f32.xlu0 %v656
      %v724 = vpop.xlane.xlu0 %723
      %vm725 = vcmask 1043456
      %v726 = vsel %vm725, %v659, 0.0
      %727 = vadd.xlane.f32.xlu0 %v726
      %v728 = vpop.xlane.xlu0 %727
      %v729 = vrcp.pop 128.0
      %v730 = vmul.f32 %v724, %v729
      %v731 = vmul.f32 %v728, %v729
      %v732 = vsub.f32 %v656, %v730
      %v733 = vsub.f32 %v659, %v731
      %v734 = vmul.f32 %v732, %v732
      %v735 = vmul.f32 %v733, %v733
      %736 = vadd.xlane.f32.xlu0 %v734
      %v737 = vpop.xlane.xlu0 %736
      %v738 = vsel %vm725, %v735, 0.0
      %739 = vadd.xlane.f32.xlu0 %v738
      %v740 = vpop.xlane.xlu0 %739
      %v741 = vmul.f32 %v737, %v729
      %v742 = vmul.f32 %v740, %v729
      %v743 = vadd.f32 %v741, 1e-05
      %v744 = vadd.f32 %v742, 1e-05
      %v745 = vrsqrt.pop %v743
      %v746 = vrsqrt.pop %v744
      %v747 = vmul.f32 %v732, %v745
      %v748 = vmul.f32 %v733, %v746
      %750 = vset.pattern.permute.xlu0 0
      %751 = vperm.xlu0 %750, %v719
      %v752 = vpop.permute.xlu0 %751
      %755 = vset.pattern.permute.xlu0 0
      %756 = vperm.xlu0 %755, %v720
      %v757 = vpop.permute.xlu0 %756
      %v759 = vmul.f32 %v747, %v752
      %v760 = vmul.f32 %v748, %v757
      %762 = vset.pattern.permute.xlu0 0
      %763 = vperm.xlu0 %762, %v721
      %v764 = vpop.permute.xlu0 %763
      %767 = vset.pattern.permute.xlu0 0
      %768 = vperm.xlu0 %767, %v722
      %v769 = vpop.permute.xlu0 %768
      %v771 = vadd.f32 %v759, %v764
      %v772 = vadd.f32 %v760, %v769
      %v773 = vmax.f32 %v771, 0.0
      %v774 = vmax.f32 %v772, 0.0
      %v775 = vld [vmem:[%s5] sm:$0xf]
      %v776 = vld [vmem:[%s5 + $0x4] sm:$0x3]
      %779 = vrot.lane.b32.xlu0 %v773, 17
      %v780 = vpop.permute.xlu0 %779
      %781 = vrot.lane.b32.xlu0 %v774, 17
      %v782 = vpop.permute.xlu0 %781
      %vm785 = vcmask 138240
      %v786 = vsel %vm785, 0.0, %v780
      %v787 = vsel %vm785, 0.0, %v782
      %v788 = vsel %vm785, %v780, 0.0
      %v789 = vsel %vm785, %v782, 0.0
      %v790 = vld [vmem:[%s15] sm:$0x1]
      %v791 = vlaneseq
      %v792 = vshrl.u32 %v791, 7
      %v793 = vsub.s32 0, %v792
      %v794 = vrot.slane %v790, %v793
      %v795 = vmul.f32 %v786, %v794
      %v796 = vmul.f32 %v787, %v794
      %v797 = vld [vmem:[%s15 + $0x1] sm:$0x1]
      %v798 = vlaneseq
      %v799 = vshrl.u32 %v798, 7
      %v800 = vsub.s32 0, %v799
      %v801 = vrot.slane %v797, %v800
      %803 = vrot.lane.b32.xlu0 %v801, 1
      %v804 = vpop.permute.xlu0 %803
      %v806 = vmul.f32 %v786, %v804
      %v807 = vmul.f32 %v788, %v804
      %v808 = vmul.f32 %v787, %v804
      %v809 = vmul.f32 %v789, %v804
      %v810 = vld [vmem:[%s15 + $0x2] sm:$0x1]
      %v811 = vlaneseq
      %v812 = vshrl.u32 %v811, 7
      %v813 = vsub.s32 0, %v812
      %v814 = vrot.slane %v810, %v813
      %816 = vrot.lane.b32.xlu0 %v814, 2
      %v817 = vpop.permute.xlu0 %816
      %v819 = vmul.f32 %v786, %v817
      %v820 = vmul.f32 %v788, %v817
      %v821 = vmul.f32 %v787, %v817
      %v822 = vmul.f32 %v789, %v817
      %v823 = vld [vmem:[%s15 + $0x3] sm:$0x1]
      %v824 = vlaneseq
      %v825 = vshrl.u32 %v824, 7
      %v826 = vsub.s32 0, %v825
      %v827 = vrot.slane %v823, %v826
      %829 = vrot.lane.b32.xlu0 %v827, 16
      %v830 = vpop.permute.xlu0 %829
      %v832 = vmul.f32 %v786, %v830
      %v833 = vmul.f32 %v788, %v830
      %v834 = vmul.f32 %v787, %v830
      %v835 = vmul.f32 %v789, %v830
      %v836 = vld [vmem:[%s15 + $0x5] sm:$0x1]
      %v837 = vlaneseq
      %v838 = vshrl.u32 %v837, 7
      %v839 = vsub.s32 0, %v838
      %v840 = vrot.slane %v836, %v839
      %842 = vrot.lane.b32.xlu0 %v840, 18
      %v843 = vpop.permute.xlu0 %842
      %v845 = vmul.f32 %v786, %v843
      %v846 = vmul.f32 %v788, %v843
      %v847 = vmul.f32 %v787, %v843
      %v848 = vmul.f32 %v789, %v843
      %v849 = vld [vmem:[%s15 + $0x6] sm:$0x1]
      %v850 = vlaneseq
      %v851 = vshrl.u32 %v850, 7
      %v852 = vsub.s32 0, %v851
      %v853 = vrot.slane %v849, %v852
      %855 = vrot.lane.b32.xlu0 %v853, 32
      %v856 = vpop.permute.xlu0 %855
      %v858 = vmul.f32 %v786, %v856
      %v859 = vmul.f32 %v788, %v856
      %v860 = vmul.f32 %v787, %v856
      %v861 = vmul.f32 %v789, %v856
      %v862 = vld [vmem:[%s15 + $0x7] sm:$0x1]
      %v863 = vlaneseq
      %v864 = vshrl.u32 %v863, 7
      %v865 = vsub.s32 0, %v864
      %v866 = vrot.slane %v862, %v865
      %868 = vrot.lane.b32.xlu0 %v866, 33
      %v869 = vpop.permute.xlu0 %868
      %v871 = vmul.f32 %v786, %v869
      %v872 = vmul.f32 %v788, %v869
      %v873 = vmul.f32 %v787, %v869
      %v874 = vmul.f32 %v789, %v869
      %v875 = vld [vmem:[%s15 + $0x8] sm:$0x1]
      %v876 = vlaneseq
      %v877 = vshrl.u32 %v876, 7
      %v878 = vsub.s32 0, %v877
      %v879 = vrot.slane %v875, %v878
      %881 = vrot.lane.b32.xlu0 %v879, 34
      %v882 = vpop.permute.xlu0 %881
      %v884 = vmul.f32 %v786, %v882
      %v885 = vmul.f32 %v788, %v882
      %v886 = vmul.f32 %v787, %v882
      %v887 = vmul.f32 %v789, %v882
      %v892 = vrot.slane %v806, 4
      %v893 = vrot.slane %v807, 4
      %v894 = vrot.slane %v808, 4
      %v895 = vsel %vm725, %v892, %v894
      %v896 = vrot.slane %v809, 4
      %v897 = vsel %vm725, %v893, %v896
      %898 = vrot.lane.b32.xlu0 %v892, 127
      %v899 = vpop.permute.xlu0 %898
      %900 = vrot.lane.b32.xlu0 %v893, 127
      %v901 = vpop.permute.xlu0 %900
      %902 = vrot.lane.b32.xlu0 %v895, 127
      %v903 = vpop.permute.xlu0 %902
      %904 = vrot.lane.b32.xlu0 %v897, 127
      %v905 = vpop.permute.xlu0 %904
      %vm906 = vcmask 1039360
      %v907 = vsel %vm906, %v899, %v901
      %v908 = vsel %vm906, %v903, %v905
      %915 = vrot.lane.b32.xlu0 %v819, 126
      %v916 = vpop.permute.xlu0 %915
      %917 = vrot.lane.b32.xlu0 %v820, 126
      %v918 = vpop.permute.xlu0 %917
      %919 = vrot.lane.b32.xlu0 %v821, 126
      %v920 = vpop.permute.xlu0 %919
      %921 = vrot.lane.b32.xlu0 %v822, 126
      %v922 = vpop.permute.xlu0 %921
      %vm923 = vcmask 1031168
      %v924 = vsel %vm923, %v916, %v918
      %v925 = vsel %vm923, %v920, %v922
      %v932 = vrot.slane %v832, 4
      %v933 = vrot.slane %v833, 4
      %v934 = vrot.slane %v834, 4
      %v935 = vsel %vm725, %v932, %v934
      %v936 = vrot.slane %v835, 4
      %v937 = vsel %vm725, %v933, %v936
      %938 = vrot.lane.b32.xlu0 %v932, 112
      %v939 = vpop.permute.xlu0 %938
      %940 = vrot.lane.b32.xlu0 %v933, 112
      %v941 = vpop.permute.xlu0 %940
      %942 = vrot.lane.b32.xlu0 %v935, 112
      %v943 = vpop.permute.xlu0 %942
      %944 = vrot.lane.b32.xlu0 %v937, 112
      %v945 = vpop.permute.xlu0 %944
      %vm946 = vcmask 916480
      %v947 = vsel %vm946, %v939, %v941
      %v948 = vsel %vm946, %v943, %v945
      %955 = vrot.lane.b32.xlu0 %v786, 111
      %v956 = vpop.permute.xlu0 %955
      %957 = vrot.lane.b32.xlu0 %v788, 111
      %v958 = vpop.permute.xlu0 %957
      %959 = vrot.lane.b32.xlu0 %v787, 111
      %v960 = vpop.permute.xlu0 %959
      %961 = vrot.lane.b32.xlu0 %v789, 111
      %v962 = vpop.permute.xlu0 %961
      %vm963 = vcmask 908288
      %v964 = vsel %vm963, %v956, %v958
      %v965 = vsel %vm963, %v960, %v962
      %v972 = vrot.slane %v845, 4
      %v973 = vrot.slane %v846, 4
      %v974 = vrot.slane %v847, 4
      %v975 = vsel %vm725, %v972, %v974
      %v976 = vrot.slane %v848, 4
      %v977 = vsel %vm725, %v973, %v976
      %978 = vrot.lane.b32.xlu0 %v972, 110
      %v979 = vpop.permute.xlu0 %978
      %980 = vrot.lane.b32.xlu0 %v973, 110
      %v981 = vpop.permute.xlu0 %980
      %982 = vrot.lane.b32.xlu0 %v975, 110
      %v983 = vpop.permute.xlu0 %982
      %984 = vrot.lane.b32.xlu0 %v977, 110
      %v985 = vpop.permute.xlu0 %984
      %vm986 = vcmask 900096
      %v987 = vsel %vm986, %v979, %v981
      %v988 = vsel %vm986, %v983, %v985
      %995 = vrot.lane.b32.xlu0 %v858, 96
      %v996 = vpop.permute.xlu0 %995
      %997 = vrot.lane.b32.xlu0 %v859, 96
      %v998 = vpop.permute.xlu0 %997
      %999 = vrot.lane.b32.xlu0 %v860, 96
      %v1000 = vpop.permute.xlu0 %999
      %1001 = vrot.lane.b32.xlu0 %v861, 96
      %v1002 = vpop.permute.xlu0 %1001
      %vm1003 = vcmask 785408
      %v1004 = vsel %vm1003, %v996, %v998
      %v1005 = vsel %vm1003, %v1000, %v1002
      %v1012 = vrot.slane %v871, 4
      %v1013 = vrot.slane %v872, 4
      %v1014 = vrot.slane %v873, 4
      %v1015 = vsel %vm725, %v1012, %v1014
      %v1016 = vrot.slane %v874, 4
      %v1017 = vsel %vm725, %v1013, %v1016
      %1018 = vrot.lane.b32.xlu0 %v1012, 95
      %v1019 = vpop.permute.xlu0 %1018
      %1020 = vrot.lane.b32.xlu0 %v1013, 95
      %v1021 = vpop.permute.xlu0 %1020
      %1022 = vrot.lane.b32.xlu0 %v1015, 95
      %v1023 = vpop.permute.xlu0 %1022
      %1024 = vrot.lane.b32.xlu0 %v1017, 95
      %v1025 = vpop.permute.xlu0 %1024
      %vm1026 = vcmask 777216
      %v1027 = vsel %vm1026, %v1019, %v1021
      %v1028 = vsel %vm1026, %v1023, %v1025
      %1035 = vrot.lane.b32.xlu0 %v884, 94
      %v1036 = vpop.permute.xlu0 %1035
      %1037 = vrot.lane.b32.xlu0 %v885, 94
      %v1038 = vpop.permute.xlu0 %1037
      %1039 = vrot.lane.b32.xlu0 %v886, 94
      %v1040 = vpop.permute.xlu0 %1039
      %1041 = vrot.lane.b32.xlu0 %v887, 94
      %v1042 = vpop.permute.xlu0 %1041
      %vm1043 = vcmask 769024
      %v1044 = vsel %vm1043, %v1036, %v1038
      %v1045 = vsel %vm1043, %v1040, %v1042
      %v1048 = vsel %vm725, %v796, %v907
      %v1049 = vsel %vm725, %v925, %v947
      %v1050 = vsel %vm725, %v965, %v987
      %v1051 = vsel %vm725, %v1005, %v1027
      %v1052 = vpack.c.bf16 %v1048, %v795
      %v1053 = vpack.c.bf16 %v924, %v908
      %v1054 = vpack.c.bf16 %v948, %v1049
      %v1055 = vpack.c.bf16 %v1050, %v964
      %v1056 = vpack.c.bf16 %v1004, %v988
      %v1057 = vpack.c.bf16 %v1028, %v1051
      %v1058 = vpack.c.bf16 %v1045, %v1044
      %v1061 = vunpack.c.l.b16 %v775
      %v1062 = vunpack.c.l.b16 %v776
      %v1063 = vpack.c.b16 %v1062, %v1061
      %vm1064 = vcmask 883712
      %v1066 = vsel %vm1064, %v1063, 0
      %v1069 = vsel %vm674, %v1058, 0
      %1071 = vmatprep.subr.bf16.mxu0 0
      %1072 = vmatpush1.bf16.msra.mxu0 %v1052
      %1073 = vmatprep.subr.bf16.mxu0 0
      %1074 = vmatpush1.bf16.msra.mxu0 %v1053
      %1075 = vmatprep.subr.bf16.mxu0 0
      %1076 = vmatpush1.bf16.msra.mxu0 %v1054
      %1077 = vmatprep.subr.bf16.mxu0 0
      %1078 = vmatpush1.bf16.msra.mxu0 %v1055
      %1079 = vmatprep.subr.bf16.mxu0 0
      %1080 = vmatpush1.bf16.msra.mxu0 %v1056
      %1081 = vmatprep.subr.bf16.mxu0 0
      %1082 = vmatpush1.bf16.msra.mxu0 %v1057
      %1083 = vmatprep.subr.bf16.mxu0 0
      %1084 = vmatpush1.bf16.msra.mxu0 %v1069
      %1085 = vmatprep.subr.bf16.mxu0 0
      %1086 = vmatpush1.bf16.msra.mxu0 0
      %1087 = vmatprep.subr.bf16.mxu0 0
      %1088 = vmatpush1.bf16.msra.mxu0 0
      %1089 = vmatprep.subr.bf16.mxu0 0
      %1090 = vmatpush1.bf16.msra.mxu0 0
      %1091 = vmatprep.subr.bf16.mxu0 0
      %1092 = vmatpush1.bf16.msra.mxu0 0
      %1093 = vmatprep.subr.bf16.mxu0 0
      %1094 = vmatpush1.bf16.msra.mxu0 0
      %1095 = vmatprep.subr.bf16.mxu0 0
      %1096 = vmatpush1.bf16.msra.mxu0 0
      %1097 = vmatprep.subr.bf16.mxu0 0
      %1098 = vmatpush1.bf16.msra.mxu0 0
      %1099 = vmatprep.subr.bf16.mxu0 0
      %1100 = vmatpush1.bf16.msra.mxu0 0
      %1101 = vmatprep.subr.bf16.mxu0 0
      %1102 = vmatpush1.bf16.msra.mxu0 0
      %1103 = vmatprep.mubr.bf16.mxu0 0
      %1104 = vmatmul.mubr.bf16.gmra.mrb[0].mxu0 %v1066
      %v1105 = vpop.f32.mrb[0].mxu0
      %v1106 = vadd.f32 0.0, %v1105
      %v1107 = vpop.f32.mrb[0].mxu0
      %v1108 = vpop.f32.mrb[0].mxu0
      %v1109 = vadd.f32 0.0, %v1108
      %v1110 = vpop.f32.mrb[0].mxu0
      %1111 = vdwg.mxu0
      %v1112 = vld [vmem:[%s6] sm:$0xff]
      %v1113 = vld [vmem:[%s6 + $0x8] sm:$0xf]
      %v1114 = vld [vmem:[%s7] sm:$0xff]
      %v1115 = vld [vmem:[%s7 + $0x8] sm:$0xf]
      %1116 = vadd.xlane.f32.xlu0 %v1106
      %v1117 = vpop.xlane.xlu0 %1116
      %v1118 = vsel %vm725, %v1109, 0.0
      %1119 = vadd.xlane.f32.xlu0 %v1118
      %v1120 = vpop.xlane.xlu0 %1119
      %v1121 = vmul.f32 %v1117, %v729
      %v1122 = vmul.f32 %v1120, %v729
      %v1123 = vsub.f32 %v1106, %v1121
      %v1124 = vsub.f32 %v1109, %v1122
      %v1125 = vmul.f32 %v1123, %v1123
      %v1126 = vmul.f32 %v1124, %v1124
      %1127 = vadd.xlane.f32.xlu0 %v1125
      %v1128 = vpop.xlane.xlu0 %1127
      %v1129 = vsel %vm725, %v1126, 0.0
      %1130 = vadd.xlane.f32.xlu0 %v1129
      %v1131 = vpop.xlane.xlu0 %1130
      %v1132 = vmul.f32 %v1128, %v729
      %v1133 = vmul.f32 %v1131, %v729
      %v1134 = vadd.f32 %v1132, 1e-05
      %v1135 = vadd.f32 %v1133, 1e-05
      %v1136 = vrsqrt.pop %v1134
      %v1137 = vrsqrt.pop %v1135
      %v1138 = vmul.f32 %v1123, %v1136
      %v1139 = vmul.f32 %v1124, %v1137
      %1141 = vset.pattern.permute.xlu0 0
      %1142 = vperm.xlu0 %1141, %v1112
      %v1143 = vpop.permute.xlu0 %1142
      %1146 = vset.pattern.permute.xlu0 0
      %1147 = vperm.xlu0 %1146, %v1113
      %v1148 = vpop.permute.xlu0 %1147
      %v1150 = vmul.f32 %v1138, %v1143
      %v1151 = vmul.f32 %v1139, %v1148
      %1153 = vset.pattern.permute.xlu0 0
      %1154 = vperm.xlu0 %1153, %v1114
      %v1155 = vpop.permute.xlu0 %1154
      %1158 = vset.pattern.permute.xlu0 0
      %1159 = vperm.xlu0 %1158, %v1115
      %v1160 = vpop.permute.xlu0 %1159
      %v1162 = vadd.f32 %v1150, %v1155
      %v1163 = vadd.f32 %v1151, %v1160
      %v1164 = vmax.f32 %v1162, 0.0
      %v1165 = vmax.f32 %v1163, 0.0
      %v1166 = vld [vmem:[%s8] sm:$0xf]
      %v1167 = vld [vmem:[%s8 + $0x4] sm:$0xf]
      %v1168 = vld [vmem:[%s8 + $0x8] sm:$0xf]
      %v1169 = vld [vmem:[%s8 + $0xc] sm:$0xf]
      %v1170 = vld [vmem:[%s8 + $0x10] sm:$0xf]
      %v1171 = vld [vmem:[%s8 + $0x14] sm:$0xf]
      %v1172 = vld [vmem:[%s8 + $0x18] sm:$0xf]
      %v1173 = vld [vmem:[%s8 + $0x1c] sm:$0xf]
      %v1174 = vld [vmem:[%s8 + $0x20] sm:$0xf]
      %v1175 = vld [vmem:[%s8 + $0x24] sm:$0xf]
      %v1176 = vld [vmem:[%s8 + $0x28] sm:$0xf]
      %v1177 = vld [vmem:[%s8 + $0x2c] sm:$0xf]
      %v1178 = vld [vmem:[%s8 + $0x30] sm:$0xf]
      %v1179 = vld [vmem:[%s8 + $0x34] sm:$0xf]
      %v1180 = vld [vmem:[%s8 + $0x38] sm:$0xf]
      %v1181 = vld [vmem:[%s8 + $0x3c] sm:$0xf]
      %v1182 = vpack.c.bf16 %v1165, %v1164
      %v1199 = vunpack.c.l.b16 %v1166
      %v1200 = vunpack.c.l.b16 %v1167
      %v1201 = vunpack.c.l.b16 %v1168
      %v1202 = vunpack.c.l.b16 %v1169
      %v1203 = vunpack.c.l.b16 %v1170
      %v1204 = vunpack.c.l.b16 %v1171
      %v1205 = vunpack.c.l.b16 %v1172
      %v1206 = vunpack.c.l.b16 %v1173
      %v1207 = vunpack.c.l.b16 %v1174
      %v1208 = vunpack.c.l.b16 %v1175
      %v1209 = vunpack.c.l.b16 %v1176
      %v1210 = vunpack.c.l.b16 %v1177
      %v1211 = vunpack.c.l.b16 %v1178
      %v1212 = vunpack.c.l.b16 %v1179
      %v1213 = vunpack.c.l.b16 %v1180
      %v1214 = vunpack.c.l.b16 %v1181
      %v1215 = vpack.c.b16 %v1200, %v1199
      %v1216 = vpack.c.b16 %v1202, %v1201
      %v1217 = vpack.c.b16 %v1204, %v1203
      %v1218 = vpack.c.b16 %v1206, %v1205
      %v1219 = vpack.c.b16 %v1208, %v1207
      %v1220 = vpack.c.b16 %v1210, %v1209
      %v1221 = vpack.c.b16 %v1212, %v1211
      %v1222 = vpack.c.b16 %v1214, %v1213
      %1231 = vmatprep.subr.bf16.mxu0 0
      %1232 = vmatpush1.bf16.msra.mxu0 %v1215
      %1233 = vmatprep.subr.bf16.mxu0 0
      %1234 = vmatpush1.bf16.msra.mxu0 %v1216
      %1235 = vmatprep.subr.bf16.mxu0 0
      %1236 = vmatpush1.bf16.msra.mxu0 %v1217
      %1237 = vmatprep.subr.bf16.mxu0 0
      %1238 = vmatpush1.bf16.msra.mxu0 %v1218
      %1239 = vmatprep.subr.bf16.mxu0 0
      %1240 = vmatpush1.bf16.msra.mxu0 %v1219
      %1241 = vmatprep.subr.bf16.mxu0 0
      %1242 = vmatpush1.bf16.msra.mxu0 %v1220
      %1243 = vmatprep.subr.bf16.mxu0 0
      %1244 = vmatpush1.bf16.msra.mxu0 %v1221
      %1245 = vmatprep.subr.bf16.mxu0 0
      %1246 = vmatpush1.bf16.msra.mxu0 %v1222
      %1247 = vmatprep.subr.bf16.mxu0 0
      %1248 = vmatpush1.bf16.msra.mxu0 0
      %1249 = vmatprep.subr.bf16.mxu0 0
      %1250 = vmatpush1.bf16.msra.mxu0 0
      %1251 = vmatprep.subr.bf16.mxu0 0
      %1252 = vmatpush1.bf16.msra.mxu0 0
      %1253 = vmatprep.subr.bf16.mxu0 0
      %1254 = vmatpush1.bf16.msra.mxu0 0
      %1255 = vmatprep.subr.bf16.mxu0 0
      %1256 = vmatpush1.bf16.msra.mxu0 0
      %1257 = vmatprep.subr.bf16.mxu0 0
      %1258 = vmatpush1.bf16.msra.mxu0 0
      %1259 = vmatprep.subr.bf16.mxu0 0
      %1260 = vmatpush1.bf16.msra.mxu0 0
      %1261 = vmatprep.subr.bf16.mxu0 0
      %1262 = vmatpush1.bf16.msra.mxu0 0
      %1263 = vmatprep.mubr.bf16.mxu0 0
      %1264 = vmatmul.mubr.bf16.gmra.mrb[0].mxu0 %v1182
      %v1265 = vpop.f32.mrb[0].mxu0
      %v1266 = vadd.f32 0.0, %v1265
      %v1267 = vpop.f32.mrb[0].mxu0
      %v1268 = vpop.f32.mrb[0].mxu0
      %v1269 = vadd.f32 0.0, %v1268
      %v1270 = vpop.f32.mrb[0].mxu0
      %1271 = vdwg.mxu0
      %v1272 = vld [vmem:[%s9] sm:$0xff]
      %v1273 = vld [vmem:[%s9 + $0x8] sm:$0xf]
      %v1274 = vld [vmem:[%s10] sm:$0xff]
      %v1275 = vld [vmem:[%s10 + $0x8] sm:$0xf]
      %v1276 = vsel %vm617, %v1266, 0.0
      %1277 = vadd.xlane.f32.xlu0 %v1276
      %v1278 = vpop.xlane.xlu0 %1277
      %vm1279 = vcmask 257024
      %v1280 = vsel %vm1279, %v1269, 0.0
      %1281 = vadd.xlane.f32.xlu0 %v1280
      %v1282 = vpop.xlane.xlu0 %1281
      %v1283 = vrcp.pop 32.0
      %v1284 = vmul.f32 %v1278, %v1283
      %v1285 = vmul.f32 %v1282, %v1283
      %v1286 = vsub.f32 %v1266, %v1284
      %v1287 = vsub.f32 %v1269, %v1285
      %v1288 = vmul.f32 %v1286, %v1286
      %v1289 = vmul.f32 %v1287, %v1287
      %v1290 = vsel %vm617, %v1288, 0.0
      %1291 = vadd.xlane.f32.xlu0 %v1290
      %v1292 = vpop.xlane.xlu0 %1291
      %v1293 = vsel %vm1279, %v1289, 0.0
      %1294 = vadd.xlane.f32.xlu0 %v1293
      %v1295 = vpop.xlane.xlu0 %1294
      %v1296 = vmul.f32 %v1292, %v1283
      %v1297 = vmul.f32 %v1295, %v1283
      %v1298 = vadd.f32 %v1296, 1e-05
      %v1299 = vadd.f32 %v1297, 1e-05
      %v1300 = vrsqrt.pop %v1298
      %v1301 = vrsqrt.pop %v1299
      %v1302 = vmul.f32 %v1286, %v1300
      %v1303 = vmul.f32 %v1287, %v1301
      %1305 = vset.pattern.permute.xlu0 0
      %1306 = vperm.xlu0 %1305, %v1272
      %v1307 = vpop.permute.xlu0 %1306
      %1310 = vset.pattern.permute.xlu0 0
      %1311 = vperm.xlu0 %1310, %v1273
      %v1312 = vpop.permute.xlu0 %1311
      %v1314 = vmul.f32 %v1302, %v1307
      %v1315 = vmul.f32 %v1303, %v1312
      %1317 = vset.pattern.permute.xlu0 0
      %1318 = vperm.xlu0 %1317, %v1274
      %v1319 = vpop.permute.xlu0 %1318
      %1322 = vset.pattern.permute.xlu0 0
      %1323 = vperm.xlu0 %1322, %v1275
      %v1324 = vpop.permute.xlu0 %1323
      %v1326 = vadd.f32 %v1314, %v1319
      %v1327 = vadd.f32 %v1315, %v1324
      %v1328 = vmax.f32 %v1326, 0.0
      %v1329 = vmax.f32 %v1327, 0.0
      %v1330 = vld [vmem:[%s11] sm:$0xf]
      %v1331 = vld [vmem:[%s11 + $0x4] sm:$0xf]
      %v1332 = vld [vmem:[%s11 + $0x8] sm:$0xf]
      %v1333 = vld [vmem:[%s11 + $0xc] sm:$0xf]
      %v1334 = vpack.c.bf16 %v1329, %v1328
      %v1339 = vunpack.c.l.b16 %v1330
      %v1340 = vunpack.c.l.b16 %v1331
      %v1341 = vunpack.c.l.b16 %v1332
      %v1342 = vunpack.c.l.b16 %v1333
      %v1343 = vpack.c.b16 %v1340, %v1339
      %v1344 = vpack.c.b16 %v1342, %v1341
      %v1348 = vsel %vm617, %v1334, 0
      %1350 = vmatprep.subr.bf16.mxu0 0
      %1351 = vmatpush1.bf16.msra.mxu0 %v1343
      %1352 = vmatprep.subr.bf16.mxu0 0
      %1353 = vmatpush1.bf16.msra.mxu0 %v1344
      %1354 = vmatprep.subr.bf16.mxu0 0
      %1355 = vmatpush1.bf16.msra.mxu0 0
      %1356 = vmatprep.subr.bf16.mxu0 0
      %1357 = vmatpush1.bf16.msra.mxu0 0
      %1358 = vmatprep.subr.bf16.mxu0 0
      %1359 = vmatpush1.bf16.msra.mxu0 0
      %1360 = vmatprep.subr.bf16.mxu0 0
      %1361 = vmatpush1.bf16.msra.mxu0 0
      %1362 = vmatprep.subr.bf16.mxu0 0
      %1363 = vmatpush1.bf16.msra.mxu0 0
      %1364 = vmatprep.subr.bf16.mxu0 0
      %1365 = vmatpush1.bf16.msra.mxu0 0
      %1366 = vmatprep.subr.bf16.mxu0 0
      %1367 = vmatpush1.bf16.msra.mxu0 0
      %1368 = vmatprep.subr.bf16.mxu0 0
      %1369 = vmatpush1.bf16.msra.mxu0 0
      %1370 = vmatprep.subr.bf16.mxu0 0
      %1371 = vmatpush1.bf16.msra.mxu0 0
      %1372 = vmatprep.subr.bf16.mxu0 0
      %1373 = vmatpush1.bf16.msra.mxu0 0
      %1374 = vmatprep.subr.bf16.mxu0 0
      %1375 = vmatpush1.bf16.msra.mxu0 0
      %1376 = vmatprep.subr.bf16.mxu0 0
      %1377 = vmatpush1.bf16.msra.mxu0 0
      %1378 = vmatprep.subr.bf16.mxu0 0
      %1379 = vmatpush1.bf16.msra.mxu0 0
      %1380 = vmatprep.subr.bf16.mxu0 0
      %1381 = vmatpush1.bf16.msra.mxu0 0
      %1382 = vmatprep.mubr.bf16.mxu0 0
      %1383 = vmatmul.mubr.bf16.gmra.mrb[0].mxu0 %v1348
      %v1384 = vpop.f32.mrb[0].mxu0
      %v1385 = vadd.f32 0.0, %v1384
      %v1386 = vpop.f32.mrb[0].mxu0
      %v1387 = vpop.f32.mrb[0].mxu0
      %v1388 = vadd.f32 0.0, %v1387
      %v1389 = vpop.f32.mrb[0].mxu0
      %1390 = vdwg.mxu0
      %v1391 = vadd.f32 %v1106, %v1385
      %v1392 = vadd.f32 %v1109, %v1388
      %v1393 = vld [vmem:[%s12] sm:$0xff]
      %v1394 = vld [vmem:[%s12 + $0x8] sm:$0xf]
      %v1395 = vld [vmem:[%s13] sm:$0xff]
      %v1396 = vld [vmem:[%s13 + $0x8] sm:$0xf]
      %1397 = vadd.xlane.f32.xlu0 %v1391
      %v1398 = vpop.xlane.xlu0 %1397
      %v1399 = vsel %vm725, %v1392, 0.0
      %1400 = vadd.xlane.f32.xlu0 %v1399
      %v1401 = vpop.xlane.xlu0 %1400
      %v1402 = vmul.f32 %v1398, %v729
      %v1403 = vmul.f32 %v1401, %v729
      %v1404 = vsub.f32 %v1391, %v1402
      %v1405 = vsub.f32 %v1392, %v1403
      %v1406 = vmul.f32 %v1404, %v1404
      %v1407 = vmul.f32 %v1405, %v1405
      %1408 = vadd.xlane.f32.xlu0 %v1406
      %v1409 = vpop.xlane.xlu0 %1408
      %v1410 = vsel %vm725, %v1407, 0.0
      %1411 = vadd.xlane.f32.xlu0 %v1410
      %v1412 = vpop.xlane.xlu0 %1411
      %v1413 = vmul.f32 %v1409, %v729
      %v1414 = vmul.f32 %v1412, %v729
      %v1415 = vadd.f32 %v1413, 1e-05
      %v1416 = vadd.f32 %v1414, 1e-05
      %v1417 = vrsqrt.pop %v1415
      %v1418 = vrsqrt.pop %v1416
      %v1419 = vmul.f32 %v1404, %v1417
      %v1420 = vmul.f32 %v1405, %v1418
      %1422 = vset.pattern.permute.xlu0 0
      %1423 = vperm.xlu0 %1422, %v1393
      %v1424 = vpop.permute.xlu0 %1423
      %1427 = vset.pattern.permute.xlu0 0
      %1428 = vperm.xlu0 %1427, %v1394
      %v1429 = vpop.permute.xlu0 %1428
      %v1431 = vmul.f32 %v1419, %v1424
      %v1432 = vmul.f32 %v1420, %v1429
      %1434 = vset.pattern.permute.xlu0 0
      %1435 = vperm.xlu0 %1434, %v1395
      %v1436 = vpop.permute.xlu0 %1435
      %1439 = vset.pattern.permute.xlu0 0
      %1440 = vperm.xlu0 %1439, %v1396
      %v1441 = vpop.permute.xlu0 %1440
      %v1443 = vadd.f32 %v1431, %v1436
      %v1444 = vadd.f32 %v1432, %v1441
      %v1445 = vmax.f32 %v1443, 0.0
      %v1446 = vmax.f32 %v1444, 0.0
      %v1447 = vld [vmem:[%s14] sm:$0xf]
      %v1448 = vld [vmem:[%s14 + $0x4] sm:$0x3]
      %1451 = vrot.lane.b32.xlu0 %v1445, 17
      %v1452 = vpop.permute.xlu0 %1451
      %1453 = vrot.lane.b32.xlu0 %v1446, 17
      %v1454 = vpop.permute.xlu0 %1453
      %v1457 = vsel %vm785, 0.0, %v1452
      %v1458 = vsel %vm785, 0.0, %v1454
      %v1459 = vsel %vm785, %v1452, 0.0
      %v1460 = vsel %vm785, %v1454, 0.0
      %v1461 = vmul.f32 %v1457, %v794
      %v1462 = vmul.f32 %v1458, %v794
      %v1463 = vmul.f32 %v1457, %v804
      %v1464 = vmul.f32 %v1459, %v804
      %v1465 = vmul.f32 %v1458, %v804
      %v1466 = vmul.f32 %v1460, %v804
      %v1467 = vmul.f32 %v1457, %v817
      %v1468 = vmul.f32 %v1459, %v817
      %v1469 = vmul.f32 %v1458, %v817
      %v1470 = vmul.f32 %v1460, %v817
      %v1471 = vmul.f32 %v1457, %v830
      %v1472 = vmul.f32 %v1459, %v830
      %v1473 = vmul.f32 %v1458, %v830
      %v1474 = vmul.f32 %v1460, %v830
      %v1475 = vmul.f32 %v1457, %v843
      %v1476 = vmul.f32 %v1459, %v843
      %v1477 = vmul.f32 %v1458, %v843
      %v1478 = vmul.f32 %v1460, %v843
      %v1479 = vmul.f32 %v1457, %v856
      %v1480 = vmul.f32 %v1459, %v856
      %v1481 = vmul.f32 %v1458, %v856
      %v1482 = vmul.f32 %v1460, %v856
      %v1483 = vmul.f32 %v1457, %v869
      %v1484 = vmul.f32 %v1459, %v869
      %v1485 = vmul.f32 %v1458, %v869
      %v1486 = vmul.f32 %v1460, %v869
      %v1487 = vmul.f32 %v1457, %v882
      %v1488 = vmul.f32 %v1459, %v882
      %v1489 = vmul.f32 %v1458, %v882
      %v1490 = vmul.f32 %v1460, %v882
      %v1495 = vrot.slane %v1463, 4
      %v1496 = vrot.slane %v1464, 4
      %v1497 = vrot.slane %v1465, 4
      %v1498 = vsel %vm725, %v1495, %v1497
      %v1499 = vrot.slane %v1466, 4
      %v1500 = vsel %vm725, %v1496, %v1499
      %1501 = vrot.lane.b32.xlu0 %v1495, 127
      %v1502 = vpop.permute.xlu0 %1501
      %1503 = vrot.lane.b32.xlu0 %v1496, 127
      %v1504 = vpop.permute.xlu0 %1503
      %1505 = vrot.lane.b32.xlu0 %v1498, 127
      %v1506 = vpop.permute.xlu0 %1505
      %1507 = vrot.lane.b32.xlu0 %v1500, 127
      %v1508 = vpop.permute.xlu0 %1507
      %v1509 = vsel %vm906, %v1502, %v1504
      %v1510 = vsel %vm906, %v1506, %v1508
      %1517 = vrot.lane.b32.xlu0 %v1467, 126
      %v1518 = vpop.permute.xlu0 %1517
      %1519 = vrot.lane.b32.xlu0 %v1468, 126
      %v1520 = vpop.permute.xlu0 %1519
      %1521 = vrot.lane.b32.xlu0 %v1469, 126
      %v1522 = vpop.permute.xlu0 %1521
      %1523 = vrot.lane.b32.xlu0 %v1470, 126
      %v1524 = vpop.permute.xlu0 %1523
      %v1525 = vsel %vm923, %v1518, %v1520
      %v1526 = vsel %vm923, %v1522, %v1524
      %v1533 = vrot.slane %v1471, 4
      %v1534 = vrot.slane %v1472, 4
      %v1535 = vrot.slane %v1473, 4
      %v1536 = vsel %vm725, %v1533, %v1535
      %v1537 = vrot.slane %v1474, 4
      %v1538 = vsel %vm725, %v1534, %v1537
      %1539 = vrot.lane.b32.xlu0 %v1533, 112
      %v1540 = vpop.permute.xlu0 %1539
      %1541 = vrot.lane.b32.xlu0 %v1534, 112
      %v1542 = vpop.permute.xlu0 %1541
      %1543 = vrot.lane.b32.xlu0 %v1536, 112
      %v1544 = vpop.permute.xlu0 %1543
      %1545 = vrot.lane.b32.xlu0 %v1538, 112
      %v1546 = vpop.permute.xlu0 %1545
      %v1547 = vsel %vm946, %v1540, %v1542
      %v1548 = vsel %vm946, %v1544, %v1546
      %1555 = vrot.lane.b32.xlu0 %v1457, 111
      %v1556 = vpop.permute.xlu0 %1555
      %1557 = vrot.lane.b32.xlu0 %v1459, 111
      %v1558 = vpop.permute.xlu0 %1557
      %1559 = vrot.lane.b32.xlu0 %v1458, 111
      %v1560 = vpop.permute.xlu0 %1559
      %1561 = vrot.lane.b32.xlu0 %v1460, 111
      %v1562 = vpop.permute.xlu0 %1561
      %v1563 = vsel %vm963, %v1556, %v1558
      %v1564 = vsel %vm963, %v1560, %v1562
      %v1571 = vrot.slane %v1475, 4
      %v1572 = vrot.slane %v1476, 4
      %v1573 = vrot.slane %v1477, 4
      %v1574 = vsel %vm725, %v1571, %v1573
      %v1575 = vrot.slane %v1478, 4
      %v1576 = vsel %vm725, %v1572, %v1575
      %1577 = vrot.lane.b32.xlu0 %v1571, 110
      %v1578 = vpop.permute.xlu0 %1577
      %1579 = vrot.lane.b32.xlu0 %v1572, 110
      %v1580 = vpop.permute.xlu0 %1579
      %1581 = vrot.lane.b32.xlu0 %v1574, 110
      %v1582 = vpop.permute.xlu0 %1581
      %1583 = vrot.lane.b32.xlu0 %v1576, 110
      %v1584 = vpop.permute.xlu0 %1583
      %v1585 = vsel %vm986, %v1578, %v1580
      %v1586 = vsel %vm986, %v1582, %v1584
      %1593 = vrot.lane.b32.xlu0 %v1479, 96
      %v1594 = vpop.permute.xlu0 %1593
      %1595 = vrot.lane.b32.xlu0 %v1480, 96
      %v1596 = vpop.permute.xlu0 %1595
      %1597 = vrot.lane.b32.xlu0 %v1481, 96
      %v1598 = vpop.permute.xlu0 %1597
      %1599 = vrot.lane.b32.xlu0 %v1482, 96
      %v1600 = vpop.permute.xlu0 %1599
      %v1601 = vsel %vm1003, %v1594, %v1596
      %v1602 = vsel %vm1003, %v1598, %v1600
      %v1609 = vrot.slane %v1483, 4
      %v1610 = vrot.slane %v1484, 4
      %v1611 = vrot.slane %v1485, 4
      %v1612 = vsel %vm725, %v1609, %v1611
      %v1613 = vrot.slane %v1486, 4
      %v1614 = vsel %vm725, %v1610, %v1613
      %1615 = vrot.lane.b32.xlu0 %v1609, 95
      %v1616 = vpop.permute.xlu0 %1615
      %1617 = vrot.lane.b32.xlu0 %v1610, 95
      %v1618 = vpop.permute.xlu0 %1617
      %1619 = vrot.lane.b32.xlu0 %v1612, 95
      %v1620 = vpop.permute.xlu0 %1619
      %1621 = vrot.lane.b32.xlu0 %v1614, 95
      %v1622 = vpop.permute.xlu0 %1621
      %v1623 = vsel %vm1026, %v1616, %v1618
      %v1624 = vsel %vm1026, %v1620, %v1622
      %1631 = vrot.lane.b32.xlu0 %v1487, 94
      %v1632 = vpop.permute.xlu0 %1631
      %1633 = vrot.lane.b32.xlu0 %v1488, 94
      %v1634 = vpop.permute.xlu0 %1633
      %1635 = vrot.lane.b32.xlu0 %v1489, 94
      %v1636 = vpop.permute.xlu0 %1635
      %1637 = vrot.lane.b32.xlu0 %v1490, 94
      %v1638 = vpop.permute.xlu0 %1637
      %v1639 = vsel %vm1043, %v1632, %v1634
      %v1640 = vsel %vm1043, %v1636, %v1638
      %v1643 = vsel %vm725, %v1462, %v1509
      %v1644 = vsel %vm725, %v1526, %v1547
      %v1645 = vsel %vm725, %v1564, %v1585
      %v1646 = vsel %vm725, %v1602, %v1623
      %v1647 = vpack.c.bf16 %v1643, %v1461
      %v1648 = vpack.c.bf16 %v1525, %v1510
      %v1649 = vpack.c.bf16 %v1548, %v1644
      %v1650 = vpack.c.bf16 %v1645, %v1563
      %v1651 = vpack.c.bf16 %v1601, %v1586
      %v1652 = vpack.c.bf16 %v1624, %v1646
      %v1653 = vpack.c.bf16 %v1640, %v1639
      %v1656 = vunpack.c.l.b16 %v1447
      %v1657 = vunpack.c.l.b16 %v1448
      %v1658 = vpack.c.b16 %v1657, %v1656
      %v1660 = vsel %vm1064, %v1658, 0
      %v1663 = vsel %vm674, %v1653, 0
      %1665 = vmatprep.subr.bf16.mxu0 0
      %1666 = vmatpush1.bf16.msra.mxu0 %v1647
      %1667 = vmatprep.subr.bf16.mxu0 0
      %1668 = vmatpush1.bf16.msra.mxu0 %v1648
      %1669 = vmatprep.subr.bf16.mxu0 0
      %1670 = vmatpush1.bf16.msra.mxu0 %v1649
      %1671 = vmatprep.subr.bf16.mxu0 0
      %1672 = vmatpush1.bf16.msra.mxu0 %v1650
      %1673 = vmatprep.subr.bf16.mxu0 0
      %1674 = vmatpush1.bf16.msra.mxu0 %v1651
      %1675 = vmatprep.subr.bf16.mxu0 0
      %1676 = vmatpush1.bf16.msra.mxu0 %v1652
      %1677 = vmatprep.subr.bf16.mxu0 0
      %1678 = vmatpush1.bf16.msra.mxu0 %v1663
      %1679 = vmatprep.subr.bf16.mxu0 0
      %1680 = vmatpush1.bf16.msra.mxu0 0
      %1681 = vmatprep.subr.bf16.mxu0 0
      %1682 = vmatpush1.bf16.msra.mxu0 0
      %1683 = vmatprep.subr.bf16.mxu0 0
      %1684 = vmatpush1.bf16.msra.mxu0 0
      %1685 = vmatprep.subr.bf16.mxu0 0
      %1686 = vmatpush1.bf16.msra.mxu0 0
      %1687 = vmatprep.subr.bf16.mxu0 0
      %1688 = vmatpush1.bf16.msra.mxu0 0
      %1689 = vmatprep.subr.bf16.mxu0 0
      %1690 = vmatpush1.bf16.msra.mxu0 0
      %1691 = vmatprep.subr.bf16.mxu0 0
      %1692 = vmatpush1.bf16.msra.mxu0 0
      %1693 = vmatprep.subr.bf16.mxu0 0
      %1694 = vmatpush1.bf16.msra.mxu0 0
      %1695 = vmatprep.subr.bf16.mxu0 0
      %1696 = vmatpush1.bf16.msra.mxu0 0
      %1697 = vmatprep.mubr.bf16.mxu0 0
      %1698 = vmatmul.mubr.bf16.gmra.mrb[0].mxu0 %v1660
      %v1699 = vpop.f32.mrb[0].mxu0
      %v1700 = vadd.f32 %v713, %v1699
      %v1701 = vpop.f32.mrb[0].mxu0
      %v1702 = vpop.f32.mrb[0].mxu0
      %v1703 = vadd.f32 %v716, %v1702
      %v1704 = vpop.f32.mrb[0].mxu0
      %1705 = vdwg.mxu0
      %v1706 = vld [vmem:[%s16] sm:$0xff]
      %v1707 = vld [vmem:[%s16 + $0x8] sm:$0xf]
      %v1708 = vld [vmem:[%s17] sm:$0xff]
      %v1709 = vld [vmem:[%s17 + $0x8] sm:$0xf]
      %1710 = vadd.xlane.f32.xlu0 %v1700
      %v1711 = vpop.xlane.xlu0 %1710
      %v1712 = vsel %vm725, %v1703, 0.0
      %1713 = vadd.xlane.f32.xlu0 %v1712
      %v1714 = vpop.xlane.xlu0 %1713
      %v1715 = vmul.f32 %v1711, %v729
      %v1716 = vmul.f32 %v1714, %v729
      %v1717 = vsub.f32 %v1700, %v1715
      %v1718 = vsub.f32 %v1703, %v1716
      %v1719 = vmul.f32 %v1717, %v1717
      %v1720 = vmul.f32 %v1718, %v1718
      %1721 = vadd.xlane.f32.xlu0 %v1719
      %v1722 = vpop.xlane.xlu0 %1721
      %v1723 = vsel %vm725, %v1720, 0.0
      %1724 = vadd.xlane.f32.xlu0 %v1723
      %v1725 = vpop.xlane.xlu0 %1724
      %v1726 = vmul.f32 %v1722, %v729
      %v1727 = vmul.f32 %v1725, %v729
      %v1728 = vadd.f32 %v1726, 1e-05
      %v1729 = vadd.f32 %v1727, 1e-05
      %v1730 = vrsqrt.pop %v1728
      %v1731 = vrsqrt.pop %v1729
      %v1732 = vmul.f32 %v1717, %v1730
      %v1733 = vmul.f32 %v1718, %v1731
      %1735 = vset.pattern.permute.xlu0 0
      %1736 = vperm.xlu0 %1735, %v1706
      %v1737 = vpop.permute.xlu0 %1736
      %1740 = vset.pattern.permute.xlu0 0
      %1741 = vperm.xlu0 %1740, %v1707
      %v1742 = vpop.permute.xlu0 %1741
      %v1744 = vmul.f32 %v1732, %v1737
      %v1745 = vmul.f32 %v1733, %v1742
      %1747 = vset.pattern.permute.xlu0 0
      %1748 = vperm.xlu0 %1747, %v1708
      %v1749 = vpop.permute.xlu0 %1748
      %1752 = vset.pattern.permute.xlu0 0
      %1753 = vperm.xlu0 %1752, %v1709
      %v1754 = vpop.permute.xlu0 %1753
      %v1756 = vadd.f32 %v1744, %v1749
      %v1757 = vadd.f32 %v1745, %v1754
      %v1758 = vmax.f32 %v1756, 0.0
      %v1759 = vmax.f32 %v1757, 0.0
      %v1760 = vld [vmem:[%s18] sm:$0xf]
      %v1761 = vld [vmem:[%s18 + $0x4] sm:$0xf]
      %v1762 = vld [vmem:[%s18 + $0x8] sm:$0xf]
      %v1763 = vld [vmem:[%s18 + $0xc] sm:$0xf]
      %v1764 = vpack.c.bf16 %v1759, %v1758
      %v1769 = vunpack.c.l.b16 %v1760
      %v1770 = vunpack.c.l.b16 %v1761
      %v1771 = vunpack.c.l.b16 %v1762
      %v1772 = vunpack.c.l.b16 %v1763
      %v1773 = vpack.c.b16 %v1770, %v1769
      %v1774 = vpack.c.b16 %v1772, %v1771
      %v1776 = vsel %vm670, %v1773, 0
      %v1779 = vsel %vm670, %v1774, 0
      %v1782 = vsel %vm674, %v1764, 0
      %1784 = vmatprep.subr.bf16.mxu0 0
      %1785 = vmatpush1.bf16.msra.mxu0 %v1782
      %1786 = vmatprep.subr.bf16.mxu0 0
      %1787 = vmatpush1.bf16.msra.mxu0 0
      %1788 = vmatprep.subr.bf16.mxu0 0
      %1789 = vmatpush1.bf16.msra.mxu0 0
      %1790 = vmatprep.subr.bf16.mxu0 0
      %1791 = vmatpush1.bf16.msra.mxu0 0
      %1792 = vmatprep.subr.bf16.mxu0 0
      %1793 = vmatpush1.bf16.msra.mxu0 0
      %1794 = vmatprep.subr.bf16.mxu0 0
      %1795 = vmatpush1.bf16.msra.mxu0 0
      %1796 = vmatprep.subr.bf16.mxu0 0
      %1797 = vmatpush1.bf16.msra.mxu0 0
      %1798 = vmatprep.subr.bf16.mxu0 0
      %1799 = vmatpush1.bf16.msra.mxu0 0
      %1800 = vmatprep.subr.bf16.mxu0 0
      %1801 = vmatpush1.bf16.msra.mxu0 0
      %1802 = vmatprep.subr.bf16.mxu0 0
      %1803 = vmatpush1.bf16.msra.mxu0 0
      %1804 = vmatprep.subr.bf16.mxu0 0
      %1805 = vmatpush1.bf16.msra.mxu0 0
      %1806 = vmatprep.subr.bf16.mxu0 0
      %1807 = vmatpush1.bf16.msra.mxu0 0
      %1808 = vmatprep.subr.bf16.mxu0 0
      %1809 = vmatpush1.bf16.msra.mxu0 0
      %1810 = vmatprep.subr.bf16.mxu0 0
      %1811 = vmatpush1.bf16.msra.mxu0 0
      %1812 = vmatprep.subr.bf16.mxu0 0
      %1813 = vmatpush1.bf16.msra.mxu0 0
      %1814 = vmatprep.subr.bf16.mxu0 0
      %1815 = vmatpush1.bf16.msra.mxu0 0
      %1816 = vmatprep.mubr.bf16.mxu0 0
      %1817 = vmatmul.mubr.bf16.gmra.mrb[0].mxu0 %v1776
      %v1818 = vpop.f32.mrb[0].mxu0
      %v1819 = vadd.f32 0.0, %v1818
      %v1820 = vpop.f32.mrb[0].mxu0
      %v1821 = vpop.f32.mrb[0].mxu0
      %v1822 = vadd.f32 0.0, %v1821
      %v1823 = vpop.f32.mrb[0].mxu0
      %1824 = vmatprep.mubr.bf16.mxu0 0
      %1825 = vmatmul.mubr.bf16.gmra.mrb[0].mxu0 %v1779
      %v1826 = vpop.f32.mrb[0].mxu0
      %v1827 = vadd.f32 0.0, %v1826
      %v1828 = vpop.f32.mrb[0].mxu0
      %v1829 = vpop.f32.mrb[0].mxu0
      %v1830 = vadd.f32 0.0, %v1829
      %v1831 = vpop.f32.mrb[0].mxu0
      %1832 = vdwg.mxu0
      %1833 = vst [vmem:[%s602] sm:$0xff] %v1819
      %1834 = vst [vmem:[%s602 + $0x8] sm:$0xff] %v1822
      %1835 = vst [vmem:[%s602 + $0x10] sm:$0xff] %v1827
      %1836 = vst [vmem:[%s602 + $0x18] sm:$0xff] %v1830
      %p1837 = scmp.lt.s32.totalorder %s30, 1
      %s1838 = scalar_select %p1837, %s30, 1
      %s1839 = smul.addr %s1838, 4
      %s1840 = smul.addr %s1839, 8
      %s1841 = scalar_lea.vmem %s19, %s1840
      // Predicated region
      $region97: #{tfc_tdf_net_forward.4} parent=95 // pred_check
        %p1842 = pneg %p452
      $region98: #{tfc_tdf_net_forward.4} parent=95 // pred_check_branch
        %1844 = sbr.rel (%p1842) target = $region100
      $region99: #{tfc_tdf_net_forward.4} parent=95 // pred_region
        _
      $region100: #{tfc_tdf_net_forward.4} parent=95 // pred_fallthru
        _
    $region96: #{tfc_tdf_net_forward.4} parent=5 // pred_fallthru
      _
    %p1845 = scmp.le.s32.totalorder 2, %s25
    // Predicated region
    $region101: #{tfc_tdf_net_forward.4} parent=5 // pred_check
      %p1846 = pneg %p1845
    $region102: #{tfc_tdf_net_forward.4} parent=5 // pred_check_branch
      %1848 = sbr.rel (%p1846) target = $region104
    $region103: #{tfc_tdf_net_forward.4} parent=5 // pred_region
      %s1849 = ssub.s32 %s25, 2
      // Predicated region
      $region105: #{tfc_tdf_net_forward.4} parent=103 // pred_check
        %p1850 = pneg %p458
      $region106: #{tfc_tdf_net_forward.4} parent=103 // pred_check_branch
        %1852 = sbr.rel (%p1850) target = $region108
      $region107: #{tfc_tdf_net_forward.4} parent=103 // pred_region
        %p1853 = scmp.lt.s32.totalorder %s31, 1
        %s1854 = scalar_select %p1853, %s31, 1
        %s1855 = smul.addr %s1854, 4
        %s1856 = smul.addr %s1855, 8
        %s1857 = scalar_lea.vmem %s19, %s1856
      $region108: #{tfc_tdf_net_forward.4} parent=103 // pred_fallthru
        _
    $region104: #{tfc_tdf_net_forward.4} parent=5 // pred_fallthru
      _
  $region6: #{tfc_tdf_net_forward.4} parent=0 // loop_footer
    %s29 = sadd.s32 1, %s25
  $region7: #{tfc_tdf_net_forward.4} parent=0 // loop_footer_branch
    %24 = sbr.rel target = $region3
  $region8: #{tfc_tdf_net_forward.4} parent=0 // loop_exit
    _

// kernel: reverse.0
$region0: #{reverse.0}
  %s0 = inlined_call_operand.vmem [shape: f32[4,16,127], index: 0, kind: input, shape index: {}]
  %s1 = inlined_call_operand.vmem [shape: f32[4,16,127], index: 1, kind: output, shape index: {}]
  %v2 = vlaneseq
  %v3 = vsub.s32 126, %v2
  %4 = vset.pattern.permute.xlu0 %v3
  $region1: #{reverse.0} parent=0
    #allocation0 [shape = 'u8[32768]{0}', space=vmem, size = 0x8000, scoped, tag = 'operand span for operand 0']
    #allocation1 [shape = 'u8[32768]{0}', space=vmem, size = 0x8000, scoped, tag = 'operand span for operand 1']
    // Predicated region
    $region2: #{reverse.0} parent=1 // pred_check
      _
    $region3: #{reverse.0} parent=1 // pred_check_branch
      %6 = sbr.rel (0) target = $region5
    $region4: #{reverse.0} parent=1 // pred_region
      // Predicated region
      $region6: #{reverse.0} parent=4 // pred_check
        _
      $region7: #{reverse.0} parent=4 // pred_check_branch
        %8 = sbr.rel (0) target = $region9
      $region8: #{reverse.0} parent=4 // pred_region
        // Predicated region
        $region21: #{reverse.0} parent=8 // pred_check
          _
        $region22: #{reverse.0} parent=8 // pred_check_branch
          %37 = sbr.rel (0) target = $region24
        $region23: #{reverse.0} parent=8 // pred_region
          loop: start=0, step=1, limit=1
          $region25: #{reverse.0} parent=23 // loop_pre_header
            _
          $region26: #{reverse.0} parent=23 // loop_header
            %s39 = sphi 0, %s43
            %p40 = scmp.ge.s32.totalorder %s39, 1
            %s44 = sphi %s0, %s0
            %s45 = sphi [#allocation0], [#allocation0]
          $region27: #{reverse.0} parent=23 // loop_header_branch
            %42 = sbr.rel (%p40) target = $region31
          $region28: #{reverse.0} parent=23 // loop_body
            %v46 = vld [vmem:[%s44] sm:$0xff]
            %47 = vst [vmem:[%s45] sm:$0xff] %v46
            %v48 = vld [vmem:[%s44 + $0x8] sm:$0xff]
            %49 = vst [vmem:[%s45 + $0x8] sm:$0xff] %v48
            %v50 = vld [vmem:[%s44 + $0x10] sm:$0xff]
            %51 = vst [vmem:[%s45 + $0x10] sm:$0xff] %v50
            %v52 = vld [vmem:[%s44 + $0x18] sm:$0xff]
            %53 = vst [vmem:[%s45 + $0x18] sm:$0xff] %v52
            %v54 = vld [vmem:[%s44 + $0x20] sm:$0xff]
            %55 = vst [vmem:[%s45 + $0x20] sm:$0xff] %v54
            %v56 = vld [vmem:[%s44 + $0x28] sm:$0xff]
            %57 = vst [vmem:[%s45 + $0x28] sm:$0xff] %v56
            %v58 = vld [vmem:[%s44 + $0x30] sm:$0xff]
            %59 = vst [vmem:[%s45 + $0x30] sm:$0xff] %v58
            %v60 = vld [vmem:[%s44 + $0x38] sm:$0xff]
            %61 = vst [vmem:[%s45 + $0x38] sm:$0xff] %v60
          $region29: #{reverse.0} parent=23 // loop_footer
            %s43 = sadd.s32 1, %s39
          $region30: #{reverse.0} parent=23 // loop_footer_branch
            %38 = sbr.rel target = $region26
          $region31: #{reverse.0} parent=23 // loop_exit
            _
        $region24: #{reverse.0} parent=8 // pred_fallthru
          _
        // Predicated region
        $region32: #{reverse.0} parent=8 // pred_check
          _
        $region33: #{reverse.0} parent=8 // pred_check_branch
          %63 = sbr.rel target = $region35
        $region34: #{reverse.0} parent=8 // pred_region
          _
        $region35: #{reverse.0} parent=8 // pred_fallthru
          _
      $region9: #{reverse.0} parent=4 // pred_fallthru
        _
      // Predicated region
      $region10: #{reverse.0} parent=4 // pred_check
        _
      $region11: #{reverse.0} parent=4 // pred_check_branch
        %10 = sbr.rel target = $region13
      $region12: #{reverse.0} parent=4 // pred_region
        loop: start=0, step=1, limit=1
        $region14: #{reverse.0} parent=12 // loop_pre_header
          _
        $region15: #{reverse.0} parent=12 // loop_header
          %s13 = sphi 0, %s17
          %p14 = scmp.ge.s32.totalorder %s13, 1
          %s18 = sphi %s0, %s0
          %s19 = sphi [#allocation0], [#allocation0]
        $region16: #{reverse.0} parent=12 // loop_header_branch
          %16 = sbr.rel (%p14) target = $region20
        $region17: #{reverse.0} parent=12 // loop_body
          %v20 = vld [vmem:[%s18] sm:$0xff]
          %21 = vst [vmem:[%s19] sm:$0xff] %v20
          %v22 = vld [vmem:[%s18 + $0x8] sm:$0xff]
          %23 = vst [vmem:[%s19 + $0x8] sm:$0xff] %v22
          %v24 = vld [vmem:[%s18 + $0x10] sm:$0xff]
          %25 = vst [vmem:[%s19 + $0x10] sm:$0xff] %v24
          %v26 = vld [vmem:[%s18 + $0x18] sm:$0xff]
          %27 = vst [vmem:[%s19 + $0x18] sm:$0xff] %v26
          %v28 = vld [vmem:[%s18 + $0x20] sm:$0xff]
          %29 = vst [vmem:[%s19 + $0x20] sm:$0xff] %v28
          %v30 = vld [vmem:[%s18 + $0x28] sm:$0xff]
          %31 = vst [vmem:[%s19 + $0x28] sm:$0xff] %v30
          %v32 = vld [vmem:[%s18 + $0x30] sm:$0xff]
          %33 = vst [vmem:[%s19 + $0x30] sm:$0xff] %v32
          %v34 = vld [vmem:[%s18 + $0x38] sm:$0xff]
          %35 = vst [vmem:[%s19 + $0x38] sm:$0xff] %v34
        $region18: #{reverse.0} parent=12 // loop_footer
          %s17 = sadd.s32 1, %s13
        $region19: #{reverse.0} parent=12 // loop_footer_branch
          %12 = sbr.rel target = $region15
        $region20: #{reverse.0} parent=12 // loop_exit
          _
      $region13: #{reverse.0} parent=4 // pred_fallthru
        _
    $region5: #{reverse.0} parent=1 // pred_fallthru
      _
    %64 = vnop
    %v65 = vld [vmem:[#allocation0] sm:$0xff]
    %66 = vperm.xlu0 %4, %v65
    %v67 = vpop.permute.xlu0 %66
    %68 = vst [vmem:[#allocation1] sm:$0xff] %v67
    %s69 = scalar_lea.vmem [#allocation1], 8
    %s70 = scalar_lea.vmem [#allocation0], 8
    %v71 = vld [vmem:[%s70] sm:$0xff]
    %72 = vperm.xlu0 %4, %v71
    %v73 = vpop.permute.xlu0 %72
    %74 = vst [vmem:[%s69] sm:$0xff] %v73
    %s75 = scalar_lea.vmem [#allocation1], 16
    %s76 = scalar_lea.vmem [#allocation0], 16
    %v77 = vld [vmem:[%s76] sm:$0xff]
    %78 = vperm.xlu0 %4, %v77
    %v79 = vpop.permute.xlu0 %78
    %80 = vst [vmem:[%s75] sm:$0xff] %v79
    %s81 = scalar_lea.vmem %s75, 8 [#allocation1]
    %s82 = scalar_lea.vmem %s76, 8 [#allocation0]
    %v83 = vld [vmem:[%s82] sm:$0xff]
    %84 = vperm.xlu0 %4, %v83
    %v85 = vpop.permute.xlu0 %84
    %86 = vst [vmem:[%s81] sm:$0xff] %v85
    %s87 = scalar_lea.vmem [#allocation1], 32
    %s88 = scalar_lea.vmem [#allocation0], 32
    %v89 = vld [vmem:[%s88] sm:$0xff]
    %90 = vperm.xlu0 %4, %v89
    %v91 = vpop.permute.xlu0 %90
    %92 = vst [vmem:[%s87] sm:$0xff] %v91
    %s93 = scalar_lea.vmem %s87, 8 [#allocation1]
    %s94 = scalar_lea.vmem %s88, 8 [#allocation0]
    %v95 = vld [vmem:[%s94] sm:$0xff]
    %96 = vperm.xlu0 %4, %v95
    %v97 = vpop.permute.xlu0 %96
    %98 = vst [vmem:[%s93] sm:$0xff] %v97
    %s99 = scalar_lea.vmem [#allocation1], 48
    %s100 = scalar_lea.vmem [#allocation0], 48
    %v101 = vld [vmem:[%s100] sm:$0xff]
    %102 = vperm.xlu0 %4, %v101
    %v103 = vpop.permute.xlu0 %102
    %104 = vst [vmem:[%s99] sm:$0xff] %v103
    %s105 = scalar_lea.vmem %s99, 8 [#allocation1]
    %s106 = scalar_lea.vmem %s100, 8 [#allocation0]
    %v107 = vld [vmem:[%s106] sm:$0xff]
    %108 = vperm.xlu0 %4, %v107
    %v109 = vpop.permute.xlu0 %108
    %110 = vst [vmem:[%s105] sm:$0xff] %v109
    // Predicated region
    $region36: #{reverse.0} parent=1 // pred_check
      _
    $region37: #{reverse.0} parent=1 // pred_check_branch
      %112 = sbr.rel (0) target = $region39
    $region38: #{reverse.0} parent=1 // pred_region
      // Predicated region
      $region40: #{reverse.0} parent=38 // pred_check
        _
      $region41: #{reverse.0} parent=38 // pred_check_branch
        %114 = sbr.rel (0) target = $region43
      $region42: #{reverse.0} parent=38 // pred_region
        // Predicated region
        $region55: #{reverse.0} parent=42 // pred_check
          _
        $region56: #{reverse.0} parent=42 // pred_check_branch
          %143 = sbr.rel (0) target = $region58
        $region57: #{reverse.0} parent=42 // pred_region
          loop: start=0, step=1, limit=1
          $region59: #{reverse.0} parent=57 // loop_pre_header
            _
          $region60: #{reverse.0} parent=57 // loop_header
            %s145 = sphi 0, %s149
            %p146 = scmp.ge.s32.totalorder %s145, 1
            %s150 = sphi [#allocation1], [#allocation1]
            %s151 = sphi %s1, %s1
          $region61: #{reverse.0} parent=57 // loop_header_branch
            %148 = sbr.rel (%p146) target = $region65
          $region62: #{reverse.0} parent=57 // loop_body
            %v152 = vld [vmem:[%s150] sm:$0xff]
            %153 = vst [vmem:[%s151] sm:$0xff] %v152
            %v154 = vld [vmem:[%s150 + $0x8] sm:$0xff]
            %155 = vst [vmem:[%s151 + $0x8] sm:$0xff] %v154
            %v156 = vld [vmem:[%s150 + $0x10] sm:$0xff]
            %157 = vst [vmem:[%s151 + $0x10] sm:$0xff] %v156
            %v158 = vld [vmem:[%s150 + $0x18] sm:$0xff]
            %159 = vst [vmem:[%s151 + $0x18] sm:$0xff] %v158
            %v160 = vld [vmem:[%s150 + $0x20] sm:$0xff]
            %161 = vst [vmem:[%s151 + $0x20] sm:$0xff] %v160
            %v162 = vld [vmem:[%s150 + $0x28] sm:$0xff]
            %163 = vst [vmem:[%s151 + $0x28] sm:$0xff] %v162
            %v164 = vld [vmem:[%s150 + $0x30] sm:$0xff]
            %165 = vst [vmem:[%s151 + $0x30] sm:$0xff] %v164
            %v166 = vld [vmem:[%s150 + $0x38] sm:$0xff]
            %167 = vst [vmem:[%s151 + $0x38] sm:$0xff] %v166
          $region63: #{reverse.0} parent=57 // loop_footer
            %s149 = sadd.s32 1, %s145
          $region64: #{reverse.0} parent=57 // loop_footer_branch
            %144 = sbr.rel target = $region60
          $region65: #{reverse.0} parent=57 // loop_exit
            _
        $region58: #{reverse.0} parent=42 // pred_fallthru
          _
        // Predicated region
        $region66: #{reverse.0} parent=42 // pred_check
          _
        $region67: #{reverse.0} parent=42 // pred_check_branch
          %169 = sbr.rel target = $region69
        $region68: #{reverse.0} parent=42 // pred_region
          _
        $region69: #{reverse.0} parent=42 // pred_fallthru
          _
      $region43: #{reverse.0} parent=38 // pred_fallthru
        _
      // Predicated region
      $region44: #{reverse.0} parent=38 // pred_check
        _
      $region45: #{reverse.0} parent=38 // pred_check_branch
        %116 = sbr.rel target = $region47
      $region46: #{reverse.0} parent=38 // pred_region
        loop: start=0, step=1, limit=1
        $region48: #{reverse.0} parent=46 // loop_pre_header
          _
        $region49: #{reverse.0} parent=46 // loop_header
          %s119 = sphi 0, %s123
          %p120 = scmp.ge.s32.totalorder %s119, 1
          %s124 = sphi [#allocation1], [#allocation1]
          %s125 = sphi %s1, %s1
        $region50: #{reverse.0} parent=46 // loop_header_branch
          %122 = sbr.rel (%p120) target = $region54
        $region51: #{reverse.0} parent=46 // loop_body
          %v126 = vld [vmem:[%s124] sm:$0xff]
          %127 = vst [vmem:[%s125] sm:$0xff] %v126
          %v128 = vld [vmem:[%s124 + $0x8] sm:$0xff]
          %129 = vst [vmem:[%s125 + $0x8] sm:$0xff] %v128
          %v130 = vld [vmem:[%s124 + $0x10] sm:$0xff]
          %131 = vst [vmem:[%s125 + $0x10] sm:$0xff] %v130
          %v132 = vld [vmem:[%s124 + $0x18] sm:$0xff]
          %133 = vst [vmem:[%s125 + $0x18] sm:$0xff] %v132
          %v134 = vld [vmem:[%s124 + $0x20] sm:$0xff]
          %135 = vst [vmem:[%s125 + $0x20] sm:$0xff] %v134
          %v136 = vld [vmem:[%s124 + $0x28] sm:$0xff]
          %137 = vst [vmem:[%s125 + $0x28] sm:$0xff] %v136
          %v138 = vld [vmem:[%s124 + $0x30] sm:$0xff]
          %139 = vst [vmem:[%s125 + $0x30] sm:$0xff] %v138
          %v140 = vld [vmem:[%s124 + $0x38] sm:$0xff]
          %141 = vst [vmem:[%s125 + $0x38] sm:$0xff] %v140
        $region52: #{reverse.0} parent=46 // loop_footer
          %s123 = sadd.s32 1, %s119
        $region53: #{reverse.0} parent=46 // loop_footer_branch
          %118 = sbr.rel target = $region49
        $region54: #{reverse.0} parent=46 // loop_exit
          _
      $region47: #{reverse.0} parent=38 // pred_fallthru
        _
    $region39: #{reverse.0} parent=1 // pred_fallthru
      _
    %170 = vnop

// kernel: tfc_tdf_net_forward.5
$region0: #{tfc_tdf_net_forward.5}
  #allocation0 [shape = 'u32[]', space=smem, size = 0x4, offset = 0x4, fixed_abs, tag = 'smem constant byte address 0x4 - core index']
  #allocation1 [shape = 'u32[144,128]{1,0:T(1,128)}', space=vmem, size = 0x12000, scoped, tag = 'internal scratch']
  %s0 = inlined_call_operand.vmem [shape: f32[2,8,512], index: 0, kind: input, shape index: {}]
  %s1 = inlined_call_operand.vmem [shape: f32[2,8,512], index: 1, kind: input, shape index: {}]
  %s2 = inlined_call_operand.vmem [shape: f32[2,16,512], index: 2, kind: input, shape index: {}]
  %s3 = inlined_call_operand.vmem [shape: bf16[8,16], index: 3, kind: input, shape index: {}]
  %s4 = inlined_call_operand.vmem [shape: bf16[8,16], index: 4, kind: input, shape index: {}]
  %s5 = inlined_call_operand.vmem [shape: f32[16,1], index: 5, kind: input, shape index: {}]
  %s6 = inlined_call_operand.vmem [shape: f32[16,1], index: 6, kind: input, shape index: {}]
  %s7 = inlined_call_operand.vmem [shape: bf16[8,144], index: 7, kind: input, shape index: {}]
  %s8 = inlined_call_operand.vmem [shape: f32[8,1], index: 8, kind: input, shape index: {}]
  %s9 = inlined_call_operand.vmem [shape: f32[8,1], index: 9, kind: input, shape index: {}]
  %s10 = inlined_call_operand.vmem [shape: bf16[512,128], index: 10, kind: input, shape index: {}]
  %s11 = inlined_call_operand.vmem [shape: f32[8,1], index: 11, kind: input, shape index: {}]
  %s12 = inlined_call_operand.vmem [shape: f32[8,1], index: 12, kind: input, shape index: {}]
  %s13 = inlined_call_operand.vmem [shape: bf16[128,512], index: 13, kind: input, shape index: {}]
  %s14 = inlined_call_operand.vmem [shape: f32[8,1], index: 14, kind: input, shape index: {}]
  %s15 = inlined_call_operand.vmem [shape: f32[8,1], index: 15, kind: input, shape index: {}]
  %s16 = inlined_call_operand.vmem [shape: bf16[8,72], index: 16, kind: input, shape index: {}]
  %s17 = inlined_call_operand.vmem [shape: f32[9,512], index: 17, kind: input, shape index: {}]
  %s18 = inlined_call_operand.vmem [shape: bf16[8,24], index: 18, kind: input, shape index: {}]
  %s19 = inlined_call_operand.vmem [shape: bf16[16,8], index: 19, kind: input, shape index: {}]
  %s20 = inlined_call_operand.vmem [shape: f32[2,16,512], index: 20, kind: output, shape index: {}]
  %s21 = sld [smem:[#allocation0]]
  $region113: #{tfc_tdf_net_forward.5} parent=0
    _
  %s23 = ssub.s32 1, %s21
  %s24 = scalar_select 0, %s23, %s21
  loop: start=0, step=1, limit=4
  $region2: #{tfc_tdf_net_forward.5} parent=0 // loop_pre_header
    _
  $region3: #{tfc_tdf_net_forward.5} parent=0 // loop_header
    %s26 = sphi 0, %s30
    %p27 = scmp.ge.s32.totalorder %s26, 4
    %s36 = sphi 0, %s38
    %s39 = sphi 0, %s36
    %s40 = sphi 0, %s39
    %s56 = sphi 0, %s40
    %s62 = sphi 0, %s64
    %s65 = sphi 0, %s62
    %s66 = sphi 0, %s65
    %s82 = sphi 0, %s66
    %s88 = sphi 0, %s90
    %s91 = sphi 0, %s88
    %s92 = sphi 0, %s91
    %s108 = sphi 0, %s92
    %s112 = sphi 0, %s112
    %s114 = sphi 0, %s112
    %s115 = sphi 0, %s114
    %s129 = sphi 0, %s115
    %s133 = sphi 0, %s133
    %s135 = sphi 0, %s133
    %s136 = sphi 0, %s135
    %s150 = sphi 0, %s136
    %s154 = sphi 0, %s154
    %s156 = sphi 0, %s154
    %s157 = sphi 0, %s156
    %s171 = sphi 0, %s157
    %s175 = sphi 0, %s175
    %s177 = sphi 0, %s175
    %s178 = sphi 0, %s177
    %s192 = sphi 0, %s178
    %s196 = sphi 0, %s196
    %s198 = sphi 0, %s196
    %s199 = sphi 0, %s198
    %s213 = sphi 0, %s199
    %s217 = sphi 0, %s217
    %s219 = sphi 0, %s217
    %s220 = sphi 0, %s219
    %s234 = sphi 0, %s220
    %s238 = sphi 0, %s238
    %s240 = sphi 0, %s238
    %s241 = sphi 0, %s240
    %s255 = sphi 0, %s241
    %s259 = sphi 0, %s259
    %s261 = sphi 0, %s259
    %s262 = sphi 0, %s261
    %s276 = sphi 0, %s262
    %s280 = sphi 0, %s280
    %s282 = sphi 0, %s280
    %s283 = sphi 0, %s282
    %s297 = sphi 0, %s283
    %s301 = sphi 0, %s301
    %s303 = sphi 0, %s301
    %s304 = sphi 0, %s303
    %s318 = sphi 0, %s304
    %s322 = sphi 0, %s322
    %s324 = sphi 0, %s322
    %s325 = sphi 0, %s324
    %s339 = sphi 0, %s325
    %s343 = sphi 0, %s343
    %s345 = sphi 0, %s343
    %s346 = sphi 0, %s345
    %s360 = sphi 0, %s346
    %s364 = sphi 0, %s364
    %s366 = sphi 0, %s364
    %s367 = sphi 0, %s366
    %s381 = sphi 0, %s367
    %s385 = sphi 0, %s385
    %s387 = sphi 0, %s385
    %s388 = sphi 0, %s387
    %s402 = sphi 0, %s388
    %s406 = sphi 0, %s406
    %s408 = sphi 0, %s406
    %s409 = sphi 0, %s408
    %s423 = sphi 0, %s409
    %s427 = sphi 0, %s427
    %s429 = sphi 0, %s427
    %s430 = sphi 0, %s429
    %s444 = sphi 0, %s430
    %s448 = sphi 0, %s448
    %s450 = sphi 0, %s448
    %s451 = sphi 0, %s450
    %s465 = sphi 0, %s451
    %s471 = sphi 0, %s473
    %s474 = sphi 0, %s471
    %s475 = sphi 0, %s474
    %s491 = sphi 0, %s475
  $region4: #{tfc_tdf_net_forward.5} parent=0 // loop_header_branch
    %29 = sbr.rel (%p27) target = $region8
  $region5: #{tfc_tdf_net_forward.5} parent=0 // loop_body
    %s31 = ssub.s32 %s26, 1
    %s32 = ssub.s32 %s26, 2
    %s33 = sadd.s32 %s26, 1
    %s34 = ssub.s32 %s26, %s33
    %p35 = scmp.eq.s32.totalorder %s34, 0
    %s37 = sadd.s32 %s36, 1
    %s38 = scalar_select %p35, %s36, %s37
    %p41 = pneg %p35
    %p42 = scmp.eq.s32.totalorder %s26, 1
    %p43 = por %p41, %p42
    %p44 = scmp.ne.s32.totalorder %s36, %s39
    %p45 = scmp.eq.s32.totalorder %s26, 0
    %p46 = por %p44, %p45
    %p47 = scmp.ne.s32.totalorder %s36, %s39
    %p48 = scmp.eq.s32.totalorder %s31, 1
    %p49 = por %p47, %p48
    %p50 = scmp.ne.s32.totalorder %s39, %s40
    %p51 = scmp.eq.s32.totalorder %s31, 0
    %p52 = por %p50, %p51
    %p53 = scmp.ne.s32.totalorder %s39, %s40
    %p54 = scmp.eq.s32.totalorder %s32, 1
    %p55 = por %p53, %p54
    %p57 = scmp.ne.s32.totalorder %s40, %s56
    %p58 = scmp.eq.s32.totalorder %s32, 0
    %p59 = por %p57, %p58
    %s60 = ssub.s32 %s26, %s33
    %p61 = scmp.eq.s32.totalorder %s60, 0
    %s63 = sadd.s32 %s62, 1
    %s64 = scalar_select %p61, %s62, %s63
    %p67 = pneg %p61
    %p68 = scmp.eq.s32.totalorder %s26, 1
    %p69 = por %p67, %p68
    %p70 = scmp.ne.s32.totalorder %s62, %s65
    %p71 = scmp.eq.s32.totalorder %s26, 0
    %p72 = por %p70, %p71
    %p73 = scmp.ne.s32.totalorder %s62, %s65
    %p74 = scmp.eq.s32.totalorder %s31, 1
    %p75 = por %p73, %p74
    %p76 = scmp.ne.s32.totalorder %s65, %s66
    %p77 = scmp.eq.s32.totalorder %s31, 0
    %p78 = por %p76, %p77
    %p79 = scmp.ne.s32.totalorder %s65, %s66
    %p80 = scmp.eq.s32.totalorder %s32, 1
    %p81 = por %p79, %p80
    %p83 = scmp.ne.s32.totalorder %s66, %s82
    %p84 = scmp.eq.s32.totalorder %s32, 0
    %p85 = por %p83, %p84
    %s86 = ssub.s32 %s26, %s33
    %p87 = scmp.eq.s32.totalorder %s86, 0
    %s89 = sadd.s32 %s88, 1
    %s90 = scalar_select %p87, %s88, %s89
    %p93 = pneg %p87
    %p94 = scmp.eq.s32.totalorder %s26, 1
    %p95 = por %p93, %p94
    %p96 = scmp.ne.s32.totalorder %s88, %s91
    %p97 = scmp.eq.s32.totalorder %s26, 0
    %p98 = por %p96, %p97
    %p99 = scmp.ne.s32.totalorder %s88, %s91
    %p100 = scmp.eq.s32.totalorder %s31, 1
    %p101 = por %p99, %p100
    %p102 = scmp.ne.s32.totalorder %s91, %s92
    %p103 = scmp.eq.s32.totalorder %s31, 0
    %p104 = por %p102, %p103
    %p105 = scmp.ne.s32.totalorder %s91, %s92
    %p106 = scmp.eq.s32.totalorder %s32, 1
    %p107 = por %p105, %p106
    %p109 = scmp.ne.s32.totalorder %s92, %s108
    %p110 = scmp.eq.s32.totalorder %s32, 0
    %p111 = por %p109, %p110
    %s113 = sadd.s32 %s112, 1
    %p116 = scmp.eq.s32.totalorder %s26, 1
    %p117 = scmp.ne.s32.totalorder %s112, %s114
    %p118 = scmp.eq.s32.totalorder %s26, 0
    %p119 = por %p117, %p118
    %p120 = scmp.ne.s32.totalorder %s112, %s114
    %p121 = scmp.eq.s32.totalorder %s31, 1
    %p122 = por %p120, %p121
    %p123 = scmp.ne.s32.totalorder %s114, %s115
    %p124 = scmp.eq.s32.totalorder %s31, 0
    %p125 = por %p123, %p124
    %p126 = scmp.ne.s32.totalorder %s114, %s115
    %p127 = scmp.eq.s32.totalorder %s32, 1
    %p128 = por %p126, %p127
    %p130 = scmp.ne.s32.totalorder %s115, %s129
    %p131 = scmp.eq.s32.totalorder %s32, 0
    %p132 = por %p130, %p131
    %s134 = sadd.s32 %s133, 1
    %p137 = scmp.eq.s32.totalorder %s26, 1
    %p138 = scmp.ne.s32.totalorder %s133, %s135
    %p139 = scmp.eq.s32.totalorder %s26, 0
    %p140 = por %p138, %p139
    %p141 = scmp.ne.s32.totalorder %s133, %s135
    %p142 = scmp.eq.s32.totalorder %s31, 1
    %p143 = por %p141, %p142
    %p144 = scmp.ne.s32.totalorder %s135, %s136
    %p145 = scmp.eq.s32.totalorder %s31, 0
    %p146 = por %p144, %p145
    %p147 = scmp.ne.s32.totalorder %s135, %s136
    %p148 = scmp.eq.s32.totalorder %s32, 1
    %p149 = por %p147, %p148
    %p151 = scmp.ne.s32.totalorder %s136, %s150
    %p152 = scmp.eq.s32.totalorder %s32, 0
    %p153 = por %p151, %p152
    %s155 = sadd.s32 %s154, 1
    %p158 = scmp.eq.s32.totalorder %s26, 1
    %p159 = scmp.ne.s32.totalorder %s154, %s156
    %p160 = scmp.eq.s32.totalorder %s26, 0
    %p161 = por %p159, %p160
    %p162 = scmp.ne.s32.totalorder %s154, %s156
    %p163 = scmp.eq.s32.totalorder %s31, 1
    %p164 = por %p162, %p163
    %p165 = scmp.ne.s32.totalorder %s156, %s157
    %p166 = scmp.eq.s32.totalorder %s31, 0
    %p167 = por %p165, %p166
    %p168 = scmp.ne.s32.totalorder %s156, %s157
    %p169 = scmp.eq.s32.totalorder %s32, 1
    %p170 = por %p168, %p169
    %p172 = scmp.ne.s32.totalorder %s157, %s171
    %p173 = scmp.eq.s32.totalorder %s32, 0
    %p174 = por %p172, %p173
    %s176 = sadd.s32 %s175, 1
    %p179 = scmp.eq.s32.totalorder %s26, 1
    %p180 = scmp.ne.s32.totalorder %s175, %s177
    %p181 = scmp.eq.s32.totalorder %s26, 0
    %p182 = por %p180, %p181
    %p183 = scmp.ne.s32.totalorder %s175, %s177
    %p184 = scmp.eq.s32.totalorder %s31, 1
    %p185 = por %p183, %p184
    %p186 = scmp.ne.s32.totalorder %s177, %s178
    %p187 = scmp.eq.s32.totalorder %s31, 0
    %p188 = por %p186, %p187
    %p189 = scmp.ne.s32.totalorder %s177, %s178
    %p190 = scmp.eq.s32.totalorder %s32, 1
    %p191 = por %p189, %p190
    %p193 = scmp.ne.s32.totalorder %s178, %s192
    %p194 = scmp.eq.s32.totalorder %s32, 0
    %p195 = por %p193, %p194
    %s197 = sadd.s32 %s196, 1
    %p200 = scmp.eq.s32.totalorder %s26, 1
    %p201 = scmp.ne.s32.totalorder %s196, %s198
    %p202 = scmp.eq.s32.totalorder %s26, 0
    %p203 = por %p201, %p202
    %p204 = scmp.ne.s32.totalorder %s196, %s198
    %p205 = scmp.eq.s32.totalorder %s31, 1
    %p206 = por %p204, %p205
    %p207 = scmp.ne.s32.totalorder %s198, %s199
    %p208 = scmp.eq.s32.totalorder %s31, 0
    %p209 = por %p207, %p208
    %p210 = scmp.ne.s32.totalorder %s198, %s199
    %p211 = scmp.eq.s32.totalorder %s32, 1
    %p212 = por %p210, %p211
    %p214 = scmp.ne.s32.totalorder %s199, %s213
    %p215 = scmp.eq.s32.totalorder %s32, 0
    %p216 = por %p214, %p215
    %s218 = sadd.s32 %s217, 1
    %p221 = scmp.eq.s32.totalorder %s26, 1
    %p222 = scmp.ne.s32.totalorder %s217, %s219
    %p223 = scmp.eq.s32.totalorder %s26, 0
    %p224 = por %p222, %p223
    %p225 = scmp.ne.s32.totalorder %s217, %s219
    %p226 = scmp.eq.s32.totalorder %s31, 1
    %p227 = por %p225, %p226
    %p228 = scmp.ne.s32.totalorder %s219, %s220
    %p229 = scmp.eq.s32.totalorder %s31, 0
    %p230 = por %p228, %p229
    %p231 = scmp.ne.s32.totalorder %s219, %s220
    %p232 = scmp.eq.s32.totalorder %s32, 1
    %p233 = por %p231, %p232
    %p235 = scmp.ne.s32.totalorder %s220, %s234
    %p236 = scmp.eq.s32.totalorder %s32, 0
    %p237 = por %p235, %p236
    %s239 = sadd.s32 %s238, 1
    %p242 = scmp.eq.s32.totalorder %s26, 1
    %p243 = scmp.ne.s32.totalorder %s238, %s240
    %p244 = scmp.eq.s32.totalorder %s26, 0
    %p245 = por %p243, %p244
    %p246 = scmp.ne.s32.totalorder %s238, %s240
    %p247 = scmp.eq.s32.totalorder %s31, 1
    %p248 = por %p246, %p247
    %p249 = scmp.ne.s32.totalorder %s240, %s241
    %p250 = scmp.eq.s32.totalorder %s31, 0
    %p251 = por %p249, %p250
    %p252 = scmp.ne.s32.totalorder %s240, %s241
    %p253 = scmp.eq.s32.totalorder %s32, 1
    %p254 = por %p252, %p253
    %p256 = scmp.ne.s32.totalorder %s241, %s255
    %p257 = scmp.eq.s32.totalorder %s32, 0
    %p258 = por %p256, %p257
    %s260 = sadd.s32 %s259, 1
    %p263 = scmp.eq.s32.totalorder %s26, 1
    %p264 = scmp.ne.s32.totalorder %s259, %s261
    %p265 = scmp.eq.s32.totalorder %s26, 0
    %p266 = por %p264, %p265
    %p267 = scmp.ne.s32.totalorder %s259, %s261
    %p268 = scmp.eq.s32.totalorder %s31, 1
    %p269 = por %p267, %p268
    %p270 = scmp.ne.s32.totalorder %s261, %s262
    %p271 = scmp.eq.s32.totalorder %s31, 0
    %p272 = por %p270, %p271
    %p273 = scmp.ne.s32.totalorder %s261, %s262
    %p274 = scmp.eq.s32.totalorder %s32, 1
    %p275 = por %p273, %p274
    %p277 = scmp.ne.s32.totalorder %s262, %s276
    %p278 = scmp.eq.s32.totalorder %s32, 0
    %p279 = por %p277, %p278
    %s281 = sadd.s32 %s280, 1
    %p284 = scmp.eq.s32.totalorder %s26, 1
    %p285 = scmp.ne.s32.totalorder %s280, %s282
    %p286 = scmp.eq.s32.totalorder %s26, 0
    %p287 = por %p285, %p286
    %p288 = scmp.ne.s32.totalorder %s280, %s282
    %p289 = scmp.eq.s32.totalorder %s31, 1
    %p290 = por %p288, %p289
    %p291 = scmp.ne.s32.totalorder %s282, %s283
    %p292 = scmp.eq.s32.totalorder %s31, 0
    %p293 = por %p291, %p292
    %p294 = scmp.ne.s32.totalorder %s282, %s283
    %p295 = scmp.eq.s32.totalorder %s32, 1
    %p296 = por %p294, %p295
    %p298 = scmp.ne.s32.totalorder %s283, %s297
    %p299 = scmp.eq.s32.totalorder %s32, 0
    %p300 = por %p298, %p299
    %s302 = sadd.s32 %s301, 1
    %p305 = scmp.eq.s32.totalorder %s26, 1
    %p306 = scmp.ne.s32.totalorder %s301, %s303
    %p307 = scmp.eq.s32.totalorder %s26, 0
    %p308 = por %p306, %p307
    %p309 = scmp.ne.s32.totalorder %s301, %s303
    %p310 = scmp.eq.s32.totalorder %s31, 1
    %p311 = por %p309, %p310
    %p312 = scmp.ne.s32.totalorder %s303, %s304
    %p313 = scmp.eq.s32.totalorder %s31, 0
    %p314 = por %p312, %p313
    %p315 = scmp.ne.s32.totalorder %s303, %s304
    %p316 = scmp.eq.s32.totalorder %s32, 1
    %p317 = por %p315, %p316
    %p319 = scmp.ne.s32.totalorder %s304, %s318
    %p320 = scmp.eq.s32.totalorder %s32, 0
    %p321 = por %p319, %p320
    %s323 = sadd.s32 %s322, 1
    %p326 = scmp.eq.s32.totalorder %s26, 1
    %p327 = scmp.ne.s32.totalorder %s322, %s324
    %p328 = scmp.eq.s32.totalorder %s26, 0
    %p329 = por %p327, %p328
    %p330 = scmp.ne.s32.totalorder %s322, %s324
    %p331 = scmp.eq.s32.totalorder %s31, 1
    %p332 = por %p330, %p331
    %p333 = scmp.ne.s32.totalorder %s324, %s325
    %p334 = scmp.eq.s32.totalorder %s31, 0
    %p335 = por %p333, %p334
    %p336 = scmp.ne.s32.totalorder %s324, %s325
    %p337 = scmp.eq.s32.totalorder %s32, 1
    %p338 = por %p336, %p337
    %p340 = scmp.ne.s32.totalorder %s325, %s339
    %p341 = scmp.eq.s32.totalorder %s32, 0
    %p342 = por %p340, %p341
    %s344 = sadd.s32 %s343, 1
    %p347 = scmp.eq.s32.totalorder %s26, 1
    %p348 = scmp.ne.s32.totalorder %s343, %s345
    %p349 = scmp.eq.s32.totalorder %s26, 0
    %p350 = por %p348, %p349
    %p351 = scmp.ne.s32.totalorder %s343, %s345
    %p352 = scmp.eq.s32.totalorder %s31, 1
    %p353 = por %p351, %p352
    %p354 = scmp.ne.s32.totalorder %s345, %s346
    %p355 = scmp.eq.s32.totalorder %s31, 0
    %p356 = por %p354, %p355
    %p357 = scmp.ne.s32.totalorder %s345, %s346
    %p358 = scmp.eq.s32.totalorder %s32, 1
    %p359 = por %p357, %p358
    %p361 = scmp.ne.s32.totalorder %s346, %s360
    %p362 = scmp.eq.s32.totalorder %s32, 0
    %p363 = por %p361, %p362
    %s365 = sadd.s32 %s364, 1
    %p368 = scmp.eq.s32.totalorder %s26, 1
    %p369 = scmp.ne.s32.totalorder %s364, %s366
    %p370 = scmp.eq.s32.totalorder %s26, 0
    %p371 = por %p369, %p370
    %p372 = scmp.ne.s32.totalorder %s364, %s366
    %p373 = scmp.eq.s32.totalorder %s31, 1
    %p374 = por %p372, %p373
    %p375 = scmp.ne.s32.totalorder %s366, %s367
    %p376 = scmp.eq.s32.totalorder %s31, 0
    %p377 = por %p375, %p376
    %p378 = scmp.ne.s32.totalorder %s366, %s367
    %p379 = scmp.eq.s32.totalorder %s32, 1
    %p380 = por %p378, %p379
    %p382 = scmp.ne.s32.totalorder %s367, %s381
    %p383 = scmp.eq.s32.totalorder %s32, 0
    %p384 = por %p382, %p383
    %s386 = sadd.s32 %s385, 1
    %p389 = scmp.eq.s32.totalorder %s26, 1
    %p390 = scmp.ne.s32.totalorder %s385, %s387
    %p391 = scmp.eq.s32.totalorder %s26, 0
    %p392 = por %p390, %p391
    %p393 = scmp.ne.s32.totalorder %s385, %s387
    %p394 = scmp.eq.s32.totalorder %s31, 1
    %p395 = por %p393, %p394
    %p396 = scmp.ne.s32.totalorder %s387, %s388
    %p397 = scmp.eq.s32.totalorder %s31, 0
    %p398 = por %p396, %p397
    %p399 = scmp.ne.s32.totalorder %s387, %s388
    %p400 = scmp.eq.s32.totalorder %s32, 1
    %p401 = por %p399, %p400
    %p403 = scmp.ne.s32.totalorder %s388, %s402
    %p404 = scmp.eq.s32.totalorder %s32, 0
    %p405 = por %p403, %p404
    %s407 = sadd.s32 %s406, 1
    %p410 = scmp.eq.s32.totalorder %s26, 1
    %p411 = scmp.ne.s32.totalorder %s406, %s408
    %p412 = scmp.eq.s32.totalorder %s26, 0
    %p413 = por %p411, %p412
    %p414 = scmp.ne.s32.totalorder %s406, %s408
    %p415 = scmp.eq.s32.totalorder %s31, 1
    %p416 = por %p414, %p415
    %p417 = scmp.ne.s32.totalorder %s408, %s409
    %p418 = scmp.eq.s32.totalorder %s31, 0
    %p419 = por %p417, %p418
    %p420 = scmp.ne.s32.totalorder %s408, %s409
    %p421 = scmp.eq.s32.totalorder %s32, 1
    %p422 = por %p420, %p421
    %p424 = scmp.ne.s32.totalorder %s409, %s423
    %p425 = scmp.eq.s32.totalorder %s32, 0
    %p426 = por %p424, %p425
    %s428 = sadd.s32 %s427, 1
    %p431 = scmp.eq.s32.totalorder %s26, 1
    %p432 = scmp.ne.s32.totalorder %s427, %s429
    %p433 = scmp.eq.s32.totalorder %s26, 0
    %p434 = por %p432, %p433
    %p435 = scmp.ne.s32.totalorder %s427, %s429
    %p436 = scmp.eq.s32.totalorder %s31, 1
    %p437 = por %p435, %p436
    %p438 = scmp.ne.s32.totalorder %s429, %s430
    %p439 = scmp.eq.s32.totalorder %s31, 0
    %p440 = por %p438, %p439
    %p441 = scmp.ne.s32.totalorder %s429, %s430
    %p442 = scmp.eq.s32.totalorder %s32, 1
    %p443 = por %p441, %p442
    %p445 = scmp.ne.s32.totalorder %s430, %s444
    %p446 = scmp.eq.s32.totalorder %s32, 0
    %p447 = por %p445, %p446
    %s449 = sadd.s32 %s448, 1
    %p452 = scmp.eq.s32.totalorder %s26, 1
    %p453 = scmp.ne.s32.totalorder %s448, %s450
    %p454 = scmp.eq.s32.totalorder %s26, 0
    %p455 = por %p453, %p454
    %p456 = scmp.ne.s32.totalorder %s448, %s450
    %p457 = scmp.eq.s32.totalorder %s31, 1
    %p458 = por %p456, %p457
    %p459 = scmp.ne.s32.totalorder %s450, %s451
    %p460 = scmp.eq.s32.totalorder %s31, 0
    %p461 = por %p459, %p460
    %p462 = scmp.ne.s32.totalorder %s450, %s451
    %p463 = scmp.eq.s32.totalorder %s32, 1
    %p464 = por %p462, %p463
    %p466 = scmp.ne.s32.totalorder %s451, %s465
    %p467 = scmp.eq.s32.totalorder %s32, 0
    %p468 = por %p466, %p467
    %s469 = ssub.s32 %s26, %s33
    %p470 = scmp.eq.s32.totalorder %s469, 0
    %s472 = sadd.s32 %s471, 1
    %s473 = scalar_select %p470, %s471, %s472
    %p476 = pneg %p470
    %p477 = scmp.eq.s32.totalorder %s26, 1
    %p478 = por %p476, %p477
    %p479 = scmp.ne.s32.totalorder %s471, %s474
    %p480 = scmp.eq.s32.totalorder %s26, 0
    %p481 = por %p479, %p480
    %p482 = scmp.ne.s32.totalorder %s471, %s474
    %p483 = scmp.eq.s32.totalorder %s31, 1
    %p484 = por %p482, %p483
    %p485 = scmp.ne.s32.totalorder %s474, %s475
    %p486 = scmp.eq.s32.totalorder %s31, 0
    %p487 = por %p485, %p486
    %p488 = scmp.ne.s32.totalorder %s474, %s475
    %p489 = scmp.eq.s32.totalorder %s32, 1
    %p490 = por %p488, %p489
    %p492 = scmp.ne.s32.totalorder %s475, %s491
    %p493 = scmp.eq.s32.totalorder %s32, 0
    %p494 = por %p492, %p493
    %p495 = scmp.le.s32.totalorder 1, %s26
    %p496 = scmp.lt.s32.totalorder %s26, 3
    %p497 = pnand %p495, %p496
    %p498 = pneg %p497
    // Predicated region
    $region9: #{tfc_tdf_net_forward.5} parent=5 // pred_check
      _
    $region10: #{tfc_tdf_net_forward.5} parent=5 // pred_check_branch
      %500 = sbr.rel (%p497) target = $region12
    $region11: #{tfc_tdf_net_forward.5} parent=5 // pred_region
      %s501 = ssub.s32 %s26, 1
      // Predicated region
      $region13: #{tfc_tdf_net_forward.5} parent=11 // pred_check
        %p502 = pneg %p125
      $region14: #{tfc_tdf_net_forward.5} parent=11 // pred_check_branch
        %504 = sbr.rel (%p502) target = $region16
      $region15: #{tfc_tdf_net_forward.5} parent=11 // pred_region
        _
      $region16: #{tfc_tdf_net_forward.5} parent=11 // pred_fallthru
        _
      // Predicated region
      $region17: #{tfc_tdf_net_forward.5} parent=11 // pred_check
        %p505 = pneg %p146
      $region18: #{tfc_tdf_net_forward.5} parent=11 // pred_check_branch
        %507 = sbr.rel (%p505) target = $region20
      $region19: #{tfc_tdf_net_forward.5} parent=11 // pred_region
        _
      $region20: #{tfc_tdf_net_forward.5} parent=11 // pred_fallthru
        _
      // Predicated region
      $region21: #{tfc_tdf_net_forward.5} parent=11 // pred_check
        %p508 = pneg %p167
      $region22: #{tfc_tdf_net_forward.5} parent=11 // pred_check_branch
        %510 = sbr.rel (%p508) target = $region24
      $region23: #{tfc_tdf_net_forward.5} parent=11 // pred_region
        _
      $region24: #{tfc_tdf_net_forward.5} parent=11 // pred_fallthru
        _
      // Predicated region
      $region25: #{tfc_tdf_net_forward.5} parent=11 // pred_check
        %p511 = pneg %p188
      $region26: #{tfc_tdf_net_forward.5} parent=11 // pred_check_branch
        %513 = sbr.rel (%p511) target = $region28
      $region27: #{tfc_tdf_net_forward.5} parent=11 // pred_region
        _
      $region28: #{tfc_tdf_net_forward.5} parent=11 // pred_fallthru
        _
      // Predicated region
      $region29: #{tfc_tdf_net_forward.5} parent=11 // pred_check
        %p514 = pneg %p209
      $region30: #{tfc_tdf_net_forward.5} parent=11 // pred_check_branch
        %516 = sbr.rel (%p514) target = $region32
      $region31: #{tfc_tdf_net_forward.5} parent=11 // pred_region
        _
      $region32: #{tfc_tdf_net_forward.5} parent=11 // pred_fallthru
        _
      // Predicated region
      $region33: #{tfc_tdf_net_forward.5} parent=11 // pred_check
        %p517 = pneg %p230
      $region34: #{tfc_tdf_net_forward.5} parent=11 // pred_check_branch
        %519 = sbr.rel (%p517) target = $region36
      $region35: #{tfc_tdf_net_forward.5} parent=11 // pred_region
        _
      $region36: #{tfc_tdf_net_forward.5} parent=11 // pred_fallthru
        _
      // Predicated region
      $region37: #{tfc_tdf_net_forward.5} parent=11 // pred_check
        %p520 = pneg %p251
      $region38: #{tfc_tdf_net_forward.5} parent=11 // pred_check_branch
        %522 = sbr.rel (%p520) target = $region40
      $region39: #{tfc_tdf_net_forward.5} parent=11 // pred_region
        _
      $region40: #{tfc_tdf_net_forward.5} parent=11 // pred_fallthru
        _
      // Predicated region
      $region41: #{tfc_tdf_net_forward.5} parent=11 // pred_check
        %p523 = pneg %p272
      $region42: #{tfc_tdf_net_forward.5} parent=11 // pred_check_branch
        %525 = sbr.rel (%p523) target = $region44
      $region43: #{tfc_tdf_net_forward.5} parent=11 // pred_region
        _
      $region44: #{tfc_tdf_net_forward.5} parent=11 // pred_fallthru
        _
      // Predicated region
      $region45: #{tfc_tdf_net_forward.5} parent=11 // pred_check
        %p526 = pneg %p293
      $region46: #{tfc_tdf_net_forward.5} parent=11 // pred_check_branch
        %528 = sbr.rel (%p526) target = $region48
      $region47: #{tfc_tdf_net_forward.5} parent=11 // pred_region
        _
      $region48: #{tfc_tdf_net_forward.5} parent=11 // pred_fallthru
        _
      // Predicated region
      $region49: #{tfc_tdf_net_forward.5} parent=11 // pred_check
        %p529 = pneg %p314
      $region50: #{tfc_tdf_net_forward.5} parent=11 // pred_check_branch
        %531 = sbr.rel (%p529) target = $region52
      $region51: #{tfc_tdf_net_forward.5} parent=11 // pred_region
        _
      $region52: #{tfc_tdf_net_forward.5} parent=11 // pred_fallthru
        _
      // Predicated region
      $region53: #{tfc_tdf_net_forward.5} parent=11 // pred_check
        %p532 = pneg %p335
      $region54: #{tfc_tdf_net_forward.5} parent=11 // pred_check_branch
        %534 = sbr.rel (%p532) target = $region56
      $region55: #{tfc_tdf_net_forward.5} parent=11 // pred_region
        _
      $region56: #{tfc_tdf_net_forward.5} parent=11 // pred_fallthru
        _
      // Predicated region
      $region57: #{tfc_tdf_net_forward.5} parent=11 // pred_check
        %p535 = pneg %p356
      $region58: #{tfc_tdf_net_forward.5} parent=11 // pred_check_branch
        %537 = sbr.rel (%p535) target = $region60
      $region59: #{tfc_tdf_net_forward.5} parent=11 // pred_region
        _
      $region60: #{tfc_tdf_net_forward.5} parent=11 // pred_fallthru
        _
      // Predicated region
      $region61: #{tfc_tdf_net_forward.5} parent=11 // pred_check
        %p538 = pneg %p377
      $region62: #{tfc_tdf_net_forward.5} parent=11 // pred_check_branch
        %540 = sbr.rel (%p538) target = $region64
      $region63: #{tfc_tdf_net_forward.5} parent=11 // pred_region
        _
      $region64: #{tfc_tdf_net_forward.5} parent=11 // pred_fallthru
        _
      // Predicated region
      $region65: #{tfc_tdf_net_forward.5} parent=11 // pred_check
        %p541 = pneg %p398
      $region66: #{tfc_tdf_net_forward.5} parent=11 // pred_check_branch
        %543 = sbr.rel (%p541) target = $region68
      $region67: #{tfc_tdf_net_forward.5} parent=11 // pred_region
        _
      $region68: #{tfc_tdf_net_forward.5} parent=11 // pred_fallthru
        _
      // Predicated region
      $region69: #{tfc_tdf_net_forward.5} parent=11 // pred_check
        %p544 = pneg %p419
      $region70: #{tfc_tdf_net_forward.5} parent=11 // pred_check_branch
        %546 = sbr.rel (%p544) target = $region72
      $region71: #{tfc_tdf_net_forward.5} parent=11 // pred_region
        _
      $region72: #{tfc_tdf_net_forward.5} parent=11 // pred_fallthru
        _
      // Predicated region
      $region73: #{tfc_tdf_net_forward.5} parent=11 // pred_check
        %p547 = pneg %p440
      $region74: #{tfc_tdf_net_forward.5} parent=11 // pred_check_branch
        %549 = sbr.rel (%p547) target = $region76
      $region75: #{tfc_tdf_net_forward.5} parent=11 // pred_region
        _
      $region76: #{tfc_tdf_net_forward.5} parent=11 // pred_fallthru
        _
      // Predicated region
      $region77: #{tfc_tdf_net_forward.5} parent=11 // pred_check
        %p550 = pneg %p461
      $region78: #{tfc_tdf_net_forward.5} parent=11 // pred_check_branch
        %552 = sbr.rel (%p550) target = $region80
      $region79: #{tfc_tdf_net_forward.5} parent=11 // pred_region
        _
      $region80: #{tfc_tdf_net_forward.5} parent=11 // pred_fallthru
        _
    $region12: #{tfc_tdf_net_forward.5} parent=5 // pred_fallthru
      _
    %p553 = scmp.lt.s32.totalorder %s26, 2
    // Predicated region
    $region81: #{tfc_tdf_net_forward.5} parent=5 // pred_check
      %p554 = pneg %p553
    $region82: #{tfc_tdf_net_forward.5} parent=5 // pred_check_branch
      %556 = sbr.rel (%p554) target = $region84
    $region83: #{tfc_tdf_net_forward.5} parent=5 // pred_region
      // Predicated region
      $region85: #{tfc_tdf_net_forward.5} parent=83 // pred_check
        %p557 = pneg %p46
      $region86: #{tfc_tdf_net_forward.5} parent=83 // pred_check_branch
        %559 = sbr.rel (%p557) target = $region88
      $region87: #{tfc_tdf_net_forward.5} parent=83 // pred_region
        %p560 = scmp.lt.s32.totalorder %s26, 1
        %s561 = scalar_select %p560, %s26, 1
        %s562 = smul.addr %s561, 4
        %s563 = smul.addr %s562, 8
        %s564 = scalar_lea.vmem %s0, %s563
      $region88: #{tfc_tdf_net_forward.5} parent=83 // pred_fallthru
        _
      // Predicated region
      $region89: #{tfc_tdf_net_forward.5} parent=83 // pred_check
        %p565 = pneg %p72
      $region90: #{tfc_tdf_net_forward.5} parent=83 // pred_check_branch
        %567 = sbr.rel (%p565) target = $region92
      $region91: #{tfc_tdf_net_forward.5} parent=83 // pred_region
        %p568 = scmp.lt.s32.totalorder %s26, 1
        %s569 = scalar_select %p568, %s26, 1
        %s570 = smul.addr %s569, 4
        %s571 = smul.addr %s570, 8
        %s572 = scalar_lea.vmem %s1, %s571
      $region92: #{tfc_tdf_net_forward.5} parent=83 // pred_fallthru
        _
      // Predicated region
      $region93: #{tfc_tdf_net_forward.5} parent=83 // pred_check
        %p573 = pneg %p98
      $region94: #{tfc_tdf_net_forward.5} parent=83 // pred_check_branch
        %575 = sbr.rel (%p573) target = $region96
      $region95: #{tfc_tdf_net_forward.5} parent=83 // pred_region
        %p576 = scmp.lt.s32.totalorder %s26, 1
        %s577 = scalar_select %p576, %s26, 1
        %s578 = smul.addr %s577, 8
        %s579 = smul.addr %s578, 8
        %s580 = scalar_lea.vmem %s2, %s579
      $region96: #{tfc_tdf_net_forward.5} parent=83 // pred_fallthru
        _
    $region84: #{tfc_tdf_net_forward.5} parent=5 // pred_fallthru
      _
    %p581 = scmp.le.s32.totalorder 1, %s26
    %p582 = scmp.lt.s32.totalorder %s26, 3
    %p583 = pnand %p581, %p582
    %p584 = pneg %p583
    // Predicated region
    $region97: #{tfc_tdf_net_forward.5} parent=5 // pred_check
      _
    $region98: #{tfc_tdf_net_forward.5} parent=5 // pred_check_branch
      %586 = sbr.rel (%p583) target = $region100
    $region99: #{tfc_tdf_net_forward.5} parent=5 // pred_region
      %s587 = ssub.s32 %s26, 1
      %p588 = scmp.lt.s32.totalorder %s31, 1
      %s589 = scalar_select %p588, %s31, 1
      %s590 = smul.addr %s589, 4
      %s591 = smul.addr %s590, 8
      %s592 = scalar_lea.vmem %s0, %s591
      %p593 = pneg %p52
      %p594 = pneg %p49
      %p595 = scmp.lt.s32.totalorder %s31, 1
      %s596 = scalar_select %p595, %s31, 1
      %s597 = smul.addr %s596, 4
      %s598 = smul.addr %s597, 8
      %s599 = scalar_lea.vmem %s1, %s598
      %p600 = pneg %p78
      %p601 = pneg %p75
      %p602 = scmp.lt.s32.totalorder %s31, 1
      %s603 = scalar_select %p602, %s31, 1
      %s604 = smul.addr %s603, 8
      %s605 = smul.addr %s604, 8
      %s606 = scalar_lea.vmem %s2, %s605
      %p607 = pneg %p104
      %p608 = pneg %p101
      %p609 = pneg %p125
      %p610 = pneg %p122
      %p611 = pneg %p146
      %p612 = pneg %p143
      %p613 = pneg %p167
      %p614 = pneg %p164
      %p615 = pneg %p188
      %p616 = pneg %p185
      %p617 = pneg %p209
      %p618 = pneg %p206
      %p619 = pneg %p230
      %p620 = pneg %p227
      %p621 = pneg %p251
      %p622 = pneg %p248
      %p623 = pneg %p272
      %p624 = pneg %p269
      %p625 = pneg %p293
      %p626 = pneg %p290
      %p627 = pneg %p314
      %p628 = pneg %p311
      %p629 = pneg %p335
      %p630 = pneg %p332
      %p631 = pneg %p356
      %p632 = pneg %p353
      %p633 = pneg %p377
      %p634 = pneg %p374
      %p635 = pneg %p398
      %p636 = pneg %p395
      %p637 = pneg %p419
      %p638 = pneg %p416
      %p639 = pneg %p440
      %p640 = pneg %p437
      %p641 = pneg %p461
      %p642 = pneg %p458
      %p643 = pneg %p487
      %p644 = pneg %p484
      %p645 = scmp.lt.s32.totalorder %s31, 1
      %s646 = scalar_select %p645, %s31, 1
      %s647 = smul.addr %s646, 8
      %s648 = smul.addr %s647, 8
      %s649 = scalar_lea.vmem %s20, %s648
      %p650 = scmp.lt.s32.totalorder %s31, 1
      %s651 = scalar_select %p650, %s31, 1
      %s652 = smul.addr %s651, 4
      %s653 = smul.addr %s652, 8
      %s654 = scalar_lea.vmem %s0, %s653
      %p655 = scmp.lt.s32.totalorder %s31, 1
      %s656 = scalar_select %p655, %s31, 1
      %s657 = smul.addr %s656, 4
      %s658 = smul.addr %s657, 8
      %s659 = scalar_lea.vmem %s1, %s658
      %p660 = scmp.lt.s32.totalorder %s31, 1
      %s661 = scalar_select %p660, %s31, 1
      %s662 = smul.addr %s661, 8
      %s663 = smul.addr %s662, 8
      %s664 = scalar_lea.vmem %s2, %s663
      %p665 = scmp.lt.s32.totalorder %s31, 1
      %s666 = scalar_select %p665, %s31, 1
      %s667 = smul.addr %s666, 8
      %s668 = smul.addr %s667, 8
      %s669 = scalar_lea.vmem %s20, %s668
      %v671 = vld [vmem:[%s664] sm:$0xff]
      %v672 = vld [vmem:[%s664 + $0x8] sm:$0xff]
      %v673 = vld [vmem:[%s664 + $0x10] sm:$0xff]
      %v674 = vld [vmem:[%s664 + $0x18] sm:$0xff]
      %v675 = vld [vmem:[%s664 + $0x20] sm:$0xff]
      %v676 = vld [vmem:[%s664 + $0x28] sm:$0xff]
      %v677 = vld [vmem:[%s664 + $0x30] sm:$0xff]
      %v678 = vld [vmem:[%s664 + $0x38] sm:$0xff]
      %v679 = vld [vmem:[%s654] sm:$0xff]
      %v680 = vld [vmem:[%s654 + $0x8] sm:$0xff]
      %v681 = vld [vmem:[%s654 + $0x10] sm:$0xff]
      %v682 = vld [vmem:[%s654 + $0x18] sm:$0xff]
      %v683 = vld [vmem:[%s659] sm:$0xff]
      %v684 = vld [vmem:[%s659 + $0x8] sm:$0xff]
      %v685 = vld [vmem:[%s659 + $0x10] sm:$0xff]
      %v686 = vld [vmem:[%s659 + $0x18] sm:$0xff]
      %v687 = vld [vmem:[%s4] sm:$0xf]
      %v688 = vpack.c.bf16 %v683, %v679
      %v689 = vpack.c.bf16 %v684, %v680
      %v690 = vpack.c.bf16 %v685, %v681
      %v691 = vpack.c.bf16 %v686, %v682
      %vm692 = vcmask 130048
      %v694 = vsel %vm692, %v687, 0
      %696 = vmatprep.subr.bf16.mxu0 %v689
      %697 = vmatpush1.bf16.msra.mxu0 %v688
      %698 = vmatprep.subr.bf16.mxu0 0
      %699 = vmatpush1.bf16.msra.mxu0 0
      %700 = vmatprep.subr.bf16.mxu0 0
      %701 = vmatpush1.bf16.msra.mxu0 0
      %702 = vmatprep.subr.bf16.mxu0 0
      %703 = vmatpush1.bf16.msra.mxu0 0
      %704 = vmatprep.subr.bf16.mxu0 0
      %705 = vmatpush1.bf16.msra.mxu0 0
      %706 = vmatprep.subr.bf16.mxu0 0
      %707 = vmatpush1.bf16.msra.mxu0 0
      %708 = vmatprep.subr.bf16.mxu0 0
      %709 = vmatpush1.bf16.msra.mxu0 0
      %710 = vmatprep.subr.bf16.mxu0 0
      %711 = vmatpush1.bf16.msra.mxu0 0
      %712 = vmatprep.subr.bf16.mxu0 0
      %713 = vmatpush1.bf16.msra.mxu0 0
      %714 = vmatprep.subr.bf16.mxu0 0
      %715 = vmatpush1.bf16.msra.mxu0 0
      %716 = vmatprep.subr.bf16.mxu0 0
      %717 = vmatpush1.bf16.msra.mxu0 0
      %718 = vmatprep.subr.bf16.mxu0 0
      %719 = vmatpush1.bf16.msra.mxu0 0
      %720 = vmatprep.subr.bf16.mxu0 0
      %721 = vmatpush1.bf16.msra.mxu0 0
      %722 = vmatprep.subr.bf16.mxu0 0
      %723 = vmatpush1.bf16.msra.mxu0 0
      %724 = vmatprep.subr.bf16.mxu0 0
      %725 = vmatpush1.bf16.msra.mxu0 0
      %726 = vmatprep.subr.bf16.mxu0 0
      %727 = vmatpush1.bf16.msra.mxu0 0
      %728 = vmatprep.mubr.bf16.mxu0 0
      %729 = vmatmul.mubr.bf16.gmra.mrb[0].mxu0 %v694
      %v730 = vpop.f32.mrb[0].mxu0
      %v731 = vadd.f32 0.0, %v730
      %v732 = vpop.f32.mrb[0].mxu0
      %v733 = vadd.f32 0.0, %v732
      %v734 = vpop.f32.mrb[0].mxu0
      %v735 = vpop.f32.mrb[0].mxu0
      %736 = vdwg.mxu0
      %737 = vmatprep.subr.bf16.mxu0 %v691
      %738 = vmatpush1.bf16.msra.mxu0 %v690
      %739 = vmatprep.subr.bf16.mxu0 0
      %740 = vmatpush1.bf16.msra.mxu0 0
      %741 = vmatprep.subr.bf16.mxu0 0
      %742 = vmatpush1.bf16.msra.mxu0 0
      %743 = vmatprep.subr.bf16.mxu0 0
      %744 = vmatpush1.bf16.msra.mxu0 0
      %745 = vmatprep.subr.bf16.mxu0 0
      %746 = vmatpush1.bf16.msra.mxu0 0
      %747 = vmatprep.subr.bf16.mxu0 0
      %748 = vmatpush1.bf16.msra.mxu0 0
      %749 = vmatprep.subr.bf16.mxu0 0
      %750 = vmatpush1.bf16.msra.mxu0 0
      %751 = vmatprep.subr.bf16.mxu0 0
      %752 = vmatpush1.bf16.msra.mxu0 0
      %753 = vmatprep.subr.bf16.mxu0 0
      %754 = vmatpush1.bf16.msra.mxu0 0
      %755 = vmatprep.subr.bf16.mxu0 0
      %756 = vmatpush1.bf16.msra.mxu0 0
      %757 = vmatprep.subr.bf16.mxu0 0
      %758 = vmatpush1.bf16.msra.mxu0 0
      %759 = vmatprep.subr.bf16.mxu0 0
      %760 = vmatpush1.bf16.msra.mxu0 0
      %761 = vmatprep.subr.bf16.mxu0 0
      %762 = vmatpush1.bf16.msra.mxu0 0
      %763 = vmatprep.subr.bf16.mxu0 0
      %764 = vmatpush1.bf16.msra.mxu0 0
      %765 = vmatprep.subr.bf16.mxu0 0
      %766 = vmatpush1.bf16.msra.mxu0 0
      %767 = vmatprep.subr.bf16.mxu0 0
      %768 = vmatpush1.bf16.msra.mxu0 0
      %769 = vmatprep.mubr.bf16.mxu0 0
      %770 = vmatmul.mubr.bf16.gmra.mrb[0].mxu0 %v694
      %v771 = vpop.f32.mrb[0].mxu0
      %v772 = vadd.f32 0.0, %v771
      %v773 = vpop.f32.mrb[0].mxu0
      %v774 = vadd.f32 0.0, %v773
      %v775 = vpop.f32.mrb[0].mxu0
      %v776 = vpop.f32.mrb[0].mxu0
      %777 = vdwg.mxu0
      %v778 = vld [vmem:[%s5] sm:$0xff]
      %v779 = vld [vmem:[%s5 + $0x8] sm:$0xff]
      %v780 = vld [vmem:[%s6] sm:$0xff]
      %v781 = vld [vmem:[%s6 + $0x8] sm:$0xff]
      %v782 = vadd.f32 %v679, %v680
      %v783 = vadd.f32 %v782, %v681
      %v784 = vadd.f32 %v783, %v682
      %785 = vadd.xlane.f32.xlu0 %v784
      %v786 = vpop.xlane.xlu0 %785
      %v787 = vadd.f32 %v683, %v684
      %v788 = vadd.f32 %v787, %v685
      %v789 = vadd.f32 %v788, %v686
      %790 = vadd.xlane.f32.xlu0 %v789
      %v791 = vpop.xlane.xlu0 %790
      %v792 = vrcp.pop 512.0
      %v793 = vmul.f32 %v786, %v792
      %v794 = vmul.f32 %v791, %v792
      %v795 = vsub.f32 %v679, %v793
      %v796 = vsub.f32 %v680, %v793
      %v797 = vsub.f32 %v681, %v793
      %v798 = vsub.f32 %v682, %v793
      %v799 = vsub.f32 %v683, %v794
      %v800 = vsub.f32 %v684, %v794
      %v801 = vsub.f32 %v685, %v794
      %v802 = vsub.f32 %v686, %v794
      %v803 = vmul.f32 %v795, %v795
      %v804 = vmul.f32 %v796, %v796
      %v805 = vmul.f32 %v797, %v797
      %v806 = vmul.f32 %v798, %v798
      %v807 = vmul.f32 %v799, %v799
      %v808 = vmul.f32 %v800, %v800
      %v809 = vmul.f32 %v801, %v801
      %v810 = vmul.f32 %v802, %v802
      %v811 = vadd.f32 %v803, %v804
      %v812 = vadd.f32 %v811, %v805
      %v813 = vadd.f32 %v812, %v806
      %814 = vadd.xlane.f32.xlu0 %v813
      %v815 = vpop.xlane.xlu0 %814
      %v816 = vadd.f32 %v807, %v808
      %v817 = vadd.f32 %v816, %v809
      %v818 = vadd.f32 %v817, %v810
      %819 = vadd.xlane.f32.xlu0 %v818
      %v820 = vpop.xlane.xlu0 %819
      %v821 = vmul.f32 %v815, %v792
      %v822 = vmul.f32 %v820, %v792
      %v823 = vadd.f32 %v821, 1e-05
      %v824 = vadd.f32 %v822, 1e-05
      %v825 = vrsqrt.pop %v823
      %v826 = vrsqrt.pop %v824
      %v827 = vmul.f32 %v795, %v825
      %v828 = vmul.f32 %v796, %v825
      %v829 = vmul.f32 %v797, %v825
      %v830 = vmul.f32 %v798, %v825
      %v831 = vmul.f32 %v799, %v826
      %v832 = vmul.f32 %v800, %v826
      %v833 = vmul.f32 %v801, %v826
      %v834 = vmul.f32 %v802, %v826
      %836 = vset.pattern.permute.xlu0 0
      %837 = vperm.xlu0 %836, %v778
      %v838 = vpop.permute.xlu0 %837
      %841 = vset.pattern.permute.xlu0 0
      %842 = vperm.xlu0 %841, %v779
      %v843 = vpop.permute.xlu0 %842
      %v845 = vmul.f32 %v827, %v838
      %v846 = vmul.f32 %v828, %v838
      %v847 = vmul.f32 %v829, %v838
      %v848 = vmul.f32 %v830, %v838
      %v849 = vmul.f32 %v831, %v843
      %v850 = vmul.f32 %v832, %v843
      %v851 = vmul.f32 %v833, %v843
      %v852 = vmul.f32 %v834, %v843
      %854 = vset.pattern.permute.xlu0 0
      %855 = vperm.xlu0 %854, %v780
      %v856 = vpop.permute.xlu0 %855
      %859 = vset.pattern.permute.xlu0 0
      %860 = vperm.xlu0 %859, %v781
      %v861 = vpop.permute.xlu0 %860
      %v863 = vadd.f32 %v845, %v856
      %v864 = vadd.f32 %v846, %v856
      %v865 = vadd.f32 %v847, %v856
      %v866 = vadd.f32 %v848, %v856
      %v867 = vadd.f32 %v849, %v861
      %v868 = vadd.f32 %v850, %v861
      %v869 = vadd.f32 %v851, %v861
      %v870 = vadd.f32 %v852, %v861
      %v871 = vmax.f32 %v863, 0.0
      %v872 = vmax.f32 %v864, 0.0
      %v873 = vmax.f32 %v865, 0.0
      %v874 = vmax.f32 %v866, 0.0
      %v875 = vmax.f32 %v867, 0.0
      %v876 = vmax.f32 %v868, 0.0
      %v877 = vmax.f32 %v869, 0.0
      %v878 = vmax.f32 %v870, 0.0
      %v879 = vld [vmem:[%s7] sm:$0xff]
      %888 = vrot.lane.b32.xlu0 %v871, 33
      %v889 = vpop.permute.xlu0 %888
      %890 = vrot.lane.b32.xlu0 %v872, 33
      %v891 = vpop.permute.xlu0 %890
      %892 = vrot.lane.b32.xlu0 %v873, 33
      %v893 = vpop.permute.xlu0 %892
      %894 = vrot.lane.b32.xlu0 %v874, 33
      %v895 = vpop.permute.xlu0 %894
      %896 = vrot.lane.b32.xlu0 %v875, 33
      %v897 = vpop.permute.xlu0 %896
      %898 = vrot.lane.b32.xlu0 %v876, 33
      %v899 = vpop.permute.xlu0 %898
      %900 = vrot.lane.b32.xlu0 %v877, 33
      %v901 = vpop.permute.xlu0 %900
      %902 = vrot.lane.b32.xlu0 %v878, 33
      %v903 = vpop.permute.xlu0 %902
      %vm904 = vcmask 269312
      %v905 = vsel %vm904, %v889, %v891
      %v906 = vsel %vm904, %v891, %v893
      %v907 = vsel %vm904, %v893, %v895
      %v908 = vsel %vm904, %v897, %v899
      %v909 = vsel %vm904, %v899, %v901
      %v910 = vsel %vm904, %v901, %v903
      %v921 = vsel %vm904, 0.0, %v889
      %v922 = vsel %vm904, 0.0, %v897
      %v923 = vsel %vm904, %v895, 0.0
      %v924 = vsel %vm904, %v903, 0.0
      %v925 = vld [vmem:[%s17] ss:$8 sm:$0xf]
      %v927 = vlaneseq
      %v928 = vshrl.u32 %v927, 7
      %v929 = vsub.s32 0, %v928
      %v930 = vrot.slane %v925, %v929
      %v931 = vlaneseq
      %v932 = vshrl.u32 %v931, 7
      %v933 = vsub.s32 1, %v932
      %v934 = vrot.slane %v925, %v933
      %v935 = vlaneseq
      %v936 = vshrl.u32 %v935, 7
      %v937 = vsub.s32 2, %v936
      %v938 = vrot.slane %v925, %v937
      %v939 = vlaneseq
      %v940 = vshrl.u32 %v939, 7
      %v941 = vsub.s32 3, %v940
      %v942 = vrot.slane %v925, %v941
      %v947 = vmul.f32 %v921, %v930
      %v948 = vmul.f32 %v905, %v934
      %v949 = vmul.f32 %v906, %v938
      %v950 = vmul.f32 %v907, %v942
      %v951 = vmul.f32 %v922, %v930
      %v952 = vmul.f32 %v908, %v934
      %v953 = vmul.f32 %v909, %v938
      %v954 = vmul.f32 %v910, %v942
      %s955 = scalar_lea.vmem %s17, 1
      %v956 = vld [vmem:[%s955] ss:$8 sm:$0xf]
      %v958 = vlaneseq
      %v959 = vshrl.u32 %v958, 7
      %v960 = vsub.s32 0, %v959
      %v961 = vrot.slane %v956, %v960
      %v962 = vlaneseq
      %v963 = vshrl.u32 %v962, 7
      %v964 = vsub.s32 1, %v963
      %v965 = vrot.slane %v956, %v964
      %v966 = vlaneseq
      %v967 = vshrl.u32 %v966, 7
      %v968 = vsub.s32 2, %v967
      %v969 = vrot.slane %v956, %v968
      %v970 = vlaneseq
      %v971 = vshrl.u32 %v970, 7
      %v972 = vsub.s32 3, %v971
      %v973 = vrot.slane %v956, %v972
      %974 = vrot.lane.b32.xlu0 %v961, 1
      %v975 = vpop.permute.xlu0 %974
      %976 = vrot.lane.b32.xlu0 %v965, 1
      %v977 = vpop.permute.xlu0 %976
      %978 = vrot.lane.b32.xlu0 %v969, 1
      %v979 = vpop.permute.xlu0 %978
      %980 = vrot.lane.b32.xlu0 %v973, 1
      %v981 = vpop.permute.xlu0 %980
      %vm982 = vcmask 7168
      %v983 = vsel %vm982, %v975, %v977
      %v984 = vsel %vm982, %v977, %v979
      %v985 = vsel %vm982, %v979, %v981
      %v991 = vmul.f32 %v921, %v975
      %v992 = vmul.f32 %v905, %v983
      %v993 = vmul.f32 %v906, %v984
      %v994 = vmul.f32 %v907, %v985
      %v995 = vmul.f32 %v923, %v981
      %v996 = vmul.f32 %v922, %v975
      %v997 = vmul.f32 %v908, %v983
      %v998 = vmul.f32 %v909, %v984
      %v999 = vmul.f32 %v910, %v985
      %v1000 = vmul.f32 %v924, %v981
      %s1001 = scalar_lea.vmem %s17, 2
      %v1002 = vld [vmem:[%s1001] ss:$8 sm:$0xf]
      %v1004 = vlaneseq
      %v1005 = vshrl.u32 %v1004, 7
      %v1006 = vsub.s32 0, %v1005
      %v1007 = vrot.slane %v1002, %v1006
      %v1008 = vlaneseq
      %v1009 = vshrl.u32 %v1008, 7
      %v1010 = vsub.s32 1, %v1009
      %v1011 = vrot.slane %v1002, %v1010
      %v1012 = vlaneseq
      %v1013 = vshrl.u32 %v1012, 7
      %v1014 = vsub.s32 2, %v1013
      %v1015 = vrot.slane %v1002, %v1014
      %v1016 = vlaneseq
      %v1017 = vshrl.u32 %v1016, 7
      %v1018 = vsub.s32 3, %v1017
      %v1019 = vrot.slane %v1002, %v1018
      %1020 = vrot.lane.b32.xlu0 %v1007, 2
      %v1021 = vpop.permute.xlu0 %1020
      %1022 = vrot.lane.b32.xlu0 %v1011, 2
      %v1023 = vpop.permute.xlu0 %1022
      %1024 = vrot.lane.b32.xlu0 %v1015, 2
      %v1025 = vpop.permute.xlu0 %1024
      %1026 = vrot.lane.b32.xlu0 %v1019, 2
      %v1027 = vpop.permute.xlu0 %1026
      %vm1028 = vcmask 15360
      %v1029 = vsel %vm1028, %v1021, %v1023
      %v1030 = vsel %vm1028, %v1023, %v1025
      %v1031 = vsel %vm1028, %v1025, %v1027
      %v1037 = vmul.f32 %v921, %v1021
      %v1038 = vmul.f32 %v905, %v1029
      %v1039 = vmul.f32 %v906, %v1030
      %v1040 = vmul.f32 %v907, %v1031
      %v1041 = vmul.f32 %v923, %v1027
      %v1042 = vmul.f32 %v922, %v1021
      %v1043 = vmul.f32 %v908, %v1029
      %v1044 = vmul.f32 %v909, %v1030
      %v1045 = vmul.f32 %v910, %v1031
      %v1046 = vmul.f32 %v924, %v1027
      %s1047 = scalar_lea.vmem %s17, 3
      %v1048 = vld [vmem:[%s1047] ss:$8 sm:$0xf]
      %v1050 = vlaneseq
      %v1051 = vshrl.u32 %v1050, 7
      %v1052 = vsub.s32 0, %v1051
      %v1053 = vrot.slane %v1048, %v1052
      %v1054 = vlaneseq
      %v1055 = vshrl.u32 %v1054, 7
      %v1056 = vsub.s32 1, %v1055
      %v1057 = vrot.slane %v1048, %v1056
      %v1058 = vlaneseq
      %v1059 = vshrl.u32 %v1058, 7
      %v1060 = vsub.s32 2, %v1059
      %v1061 = vrot.slane %v1048, %v1060
      %v1062 = vlaneseq
      %v1063 = vshrl.u32 %v1062, 7
      %v1064 = vsub.s32 3, %v1063
      %v1065 = vrot.slane %v1048, %v1064
      %1066 = vrot.lane.b32.xlu0 %v1053, 32
      %v1067 = vpop.permute.xlu0 %1066
      %1068 = vrot.lane.b32.xlu0 %v1057, 32
      %v1069 = vpop.permute.xlu0 %1068
      %1070 = vrot.lane.b32.xlu0 %v1061, 32
      %v1071 = vpop.permute.xlu0 %1070
      %1072 = vrot.lane.b32.xlu0 %v1065, 32
      %v1073 = vpop.permute.xlu0 %1072
      %vm1074 = vcmask 261120
      %v1075 = vsel %vm1074, %v1067, %v1069
      %v1076 = vsel %vm1074, %v1069, %v1071
      %v1077 = vsel %vm1074, %v1071, %v1073
      %v1083 = vmul.f32 %v921, %v1067
      %v1084 = vmul.f32 %v905, %v1075
      %v1085 = vmul.f32 %v906, %v1076
      %v1086 = vmul.f32 %v907, %v1077
      %v1087 = vmul.f32 %v923, %v1073
      %v1088 = vmul.f32 %v922, %v1067
      %v1089 = vmul.f32 %v908, %v1075
      %v1090 = vmul.f32 %v909, %v1076
      %v1091 = vmul.f32 %v910, %v1077
      %v1092 = vmul.f32 %v924, %v1073
      %s1093 = scalar_lea.vmem %s17, 5
      %v1094 = vld [vmem:[%s1093] ss:$8 sm:$0xf]
      %v1096 = vlaneseq
      %v1097 = vshrl.u32 %v1096, 7
      %v1098 = vsub.s32 0, %v1097
      %v1099 = vrot.slane %v1094, %v1098
      %v1100 = vlaneseq
      %v1101 = vshrl.u32 %v1100, 7
      %v1102 = vsub.s32 1, %v1101
      %v1103 = vrot.slane %v1094, %v1102
      %v1104 = vlaneseq
      %v1105 = vshrl.u32 %v1104, 7
      %v1106 = vsub.s32 2, %v1105
      %v1107 = vrot.slane %v1094, %v1106
      %v1108 = vlaneseq
      %v1109 = vshrl.u32 %v1108, 7
      %v1110 = vsub.s32 3, %v1109
      %v1111 = vrot.slane %v1094, %v1110
      %1112 = vrot.lane.b32.xlu0 %v1099, 34
      %v1113 = vpop.permute.xlu0 %1112
      %1114 = vrot.lane.b32.xlu0 %v1103, 34
      %v1115 = vpop.permute.xlu0 %1114
      %1116 = vrot.lane.b32.xlu0 %v1107, 34
      %v1117 = vpop.permute.xlu0 %1116
      %1118 = vrot.lane.b32.xlu0 %v1111, 34
      %v1119 = vpop.permute.xlu0 %1118
      %vm1120 = vcmask 277504
      %v1121 = vsel %vm1120, %v1113, %v1115
      %v1122 = vsel %vm1120, %v1115, %v1117
      %v1123 = vsel %vm1120, %v1117, %v1119
      %v1129 = vmul.f32 %v921, %v1113
      %v1130 = vmul.f32 %v905, %v1121
      %v1131 = vmul.f32 %v906, %v1122
      %v1132 = vmul.f32 %v907, %v1123
      %v1133 = vmul.f32 %v923, %v1119
      %v1134 = vmul.f32 %v922, %v1113
      %v1135 = vmul.f32 %v908, %v1121
      %v1136 = vmul.f32 %v909, %v1122
      %v1137 = vmul.f32 %v910, %v1123
      %v1138 = vmul.f32 %v924, %v1119
      %s1139 = scalar_lea.vmem %s17, 6
      %v1140 = vld [vmem:[%s1139] ss:$8 sm:$0xf]
      %v1142 = vlaneseq
      %v1143 = vshrl.u32 %v1142, 7
      %v1144 = vsub.s32 0, %v1143
      %v1145 = vrot.slane %v1140, %v1144
      %v1146 = vlaneseq
      %v1147 = vshrl.u32 %v1146, 7
      %v1148 = vsub.s32 1, %v1147
      %v1149 = vrot.slane %v1140, %v1148
      %v1150 = vlaneseq
      %v1151 = vshrl.u32 %v1150, 7
      %v1152 = vsub.s32 2, %v1151
      %v1153 = vrot.slane %v1140, %v1152
      %v1154 = vlaneseq
      %v1155 = vshrl.u32 %v1154, 7
      %v1156 = vsub.s32 3, %v1155
      %v1157 = vrot.slane %v1140, %v1156
      %1158 = vrot.lane.b32.xlu0 %v1145, 64
      %v1159 = vpop.permute.xlu0 %1158
      %1160 = vrot.lane.b32.xlu0 %v1149, 64
      %v1161 = vpop.permute.xlu0 %1160
      %1162 = vrot.lane.b32.xlu0 %v1153, 64
      %v1163 = vpop.permute.xlu0 %1162
      %1164 = vrot.lane.b32.xlu0 %v1157, 64
      %v1165 = vpop.permute.xlu0 %1164
      %vm1166 = vcmask 523264
      %v1167 = vsel %vm1166, %v1159, %v1161
      %v1168 = vsel %vm1166, %v1161, %v1163
      %v1169 = vsel %vm1166, %v1163, %v1165
      %v1175 = vmul.f32 %v921, %v1159
      %v1176 = vmul.f32 %v905, %v1167
      %v1177 = vmul.f32 %v906, %v1168
      %v1178 = vmul.f32 %v907, %v1169
      %v1179 = vmul.f32 %v923, %v1165
      %v1180 = vmul.f32 %v922, %v1159
      %v1181 = vmul.f32 %v908, %v1167
      %v1182 = vmul.f32 %v909, %v1168
      %v1183 = vmul.f32 %v910, %v1169
      %v1184 = vmul.f32 %v924, %v1165
      %s1185 = scalar_lea.vmem %s17, 7
      %v1186 = vld [vmem:[%s1185] ss:$8 sm:$0xf]
      %v1188 = vlaneseq
      %v1189 = vshrl.u32 %v1188, 7
      %v1190 = vsub.s32 0, %v1189
      %v1191 = vrot.slane %v1186, %v1190
      %v1192 = vlaneseq
      %v1193 = vshrl.u32 %v1192, 7
      %v1194 = vsub.s32 1, %v1193
      %v1195 = vrot.slane %v1186, %v1194
      %v1196 = vlaneseq
      %v1197 = vshrl.u32 %v1196, 7
      %v1198 = vsub.s32 2, %v1197
      %v1199 = vrot.slane %v1186, %v1198
      %v1200 = vlaneseq
      %v1201 = vshrl.u32 %v1200, 7
      %v1202 = vsub.s32 3, %v1201
      %v1203 = vrot.slane %v1186, %v1202
      %1204 = vrot.lane.b32.xlu0 %v1191, 65
      %v1205 = vpop.permute.xlu0 %1204
      %1206 = vrot.lane.b32.xlu0 %v1195, 65
      %v1207 = vpop.permute.xlu0 %1206
      %1208 = vrot.lane.b32.xlu0 %v1199, 65
      %v1209 = vpop.permute.xlu0 %1208
      %1210 = vrot.lane.b32.xlu0 %v1203, 65
      %v1211 = vpop.permute.xlu0 %1210
      %vm1212 = vcmask 531456
      %v1213 = vsel %vm1212, %v1205, %v1207
      %v1214 = vsel %vm1212, %v1207, %v1209
      %v1215 = vsel %vm1212, %v1209, %v1211
      %v1221 = vmul.f32 %v921, %v1205
      %v1222 = vmul.f32 %v905, %v1213
      %v1223 = vmul.f32 %v906, %v1214
      %v1224 = vmul.f32 %v907, %v1215
      %v1225 = vmul.f32 %v923, %v1211
      %v1226 = vmul.f32 %v922, %v1205
      %v1227 = vmul.f32 %v908, %v1213
      %v1228 = vmul.f32 %v909, %v1214
      %v1229 = vmul.f32 %v910, %v1215
      %v1230 = vmul.f32 %v924, %v1211
      %s1231 = scalar_lea.vmem %s17, 32
      %v1232 = vld [vmem:[%s1231] ss:$8 sm:$0xf]
      %v1234 = vlaneseq
      %v1235 = vshrl.u32 %v1234, 7
      %v1236 = vsub.s32 0, %v1235
      %v1237 = vrot.slane %v1232, %v1236
      %v1238 = vlaneseq
      %v1239 = vshrl.u32 %v1238, 7
      %v1240 = vsub.s32 1, %v1239
      %v1241 = vrot.slane %v1232, %v1240
      %v1242 = vlaneseq
      %v1243 = vshrl.u32 %v1242, 7
      %v1244 = vsub.s32 2, %v1243
      %v1245 = vrot.slane %v1232, %v1244
      %v1246 = vlaneseq
      %v1247 = vshrl.u32 %v1246, 7
      %v1248 = vsub.s32 3, %v1247
      %v1249 = vrot.slane %v1232, %v1248
      %1250 = vrot.lane.b32.xlu0 %v1237, 66
      %v1251 = vpop.permute.xlu0 %1250
      %1252 = vrot.lane.b32.xlu0 %v1241, 66
      %v1253 = vpop.permute.xlu0 %1252
      %1254 = vrot.lane.b32.xlu0 %v1245, 66
      %v1255 = vpop.permute.xlu0 %1254
      %1256 = vrot.lane.b32.xlu0 %v1249, 66
      %v1257 = vpop.permute.xlu0 %1256
      %vm1258 = vcmask 539648
      %v1259 = vsel %vm1258, %v1251, %v1253
      %v1260 = vsel %vm1258, %v1253, %v1255
      %v1261 = vsel %vm1258, %v1255, %v1257
      %v1267 = vmul.f32 %v921, %v1251
      %v1268 = vmul.f32 %v905, %v1259
      %v1269 = vmul.f32 %v906, %v1260
      %v1270 = vmul.f32 %v907, %v1261
      %v1271 = vmul.f32 %v923, %v1257
      %v1272 = vmul.f32 %v922, %v1251
      %v1273 = vmul.f32 %v908, %v1259
      %v1274 = vmul.f32 %v909, %v1260
      %v1275 = vmul.f32 %v910, %v1261
      %v1276 = vmul.f32 %v924, %v1257
      %1287 = vrot.lane.b32.xlu0 %v991, 127
      %v1288 = vpop.permute.xlu0 %1287
      %1289 = vrot.lane.b32.xlu0 %v992, 127
      %v1290 = vpop.permute.xlu0 %1289
      %1291 = vrot.lane.b32.xlu0 %v993, 127
      %v1292 = vpop.permute.xlu0 %1291
      %1293 = vrot.lane.b32.xlu0 %v994, 127
      %v1294 = vpop.permute.xlu0 %1293
      %1295 = vrot.lane.b32.xlu0 %v995, 127
      %v1296 = vpop.permute.xlu0 %1295
      %1297 = vrot.lane.b32.xlu0 %v996, 127
      %v1298 = vpop.permute.xlu0 %1297
      %1299 = vrot.lane.b32.xlu0 %v997, 127
      %v1300 = vpop.permute.xlu0 %1299
      %1301 = vrot.lane.b32.xlu0 %v998, 127
      %v1302 = vpop.permute.xlu0 %1301
      %1303 = vrot.lane.b32.xlu0 %v999, 127
      %v1304 = vpop.permute.xlu0 %1303
      %1305 = vrot.lane.b32.xlu0 %v1000, 127
      %v1306 = vpop.permute.xlu0 %1305
      %vm1307 = vcmask 1039360
      %v1308 = vsel %vm1307, %v1288, %v1290
      %v1309 = vsel %vm1307, %v1290, %v1292
      %v1310 = vsel %vm1307, %v1292, %v1294
      %v1311 = vsel %vm1307, %v1294, %v1296
      %v1312 = vsel %vm1307, %v1298, %v1300
      %v1313 = vsel %vm1307, %v1300, %v1302
      %v1314 = vsel %vm1307, %v1302, %v1304
      %v1315 = vsel %vm1307, %v1304, %v1306
      %1334 = vrot.lane.b32.xlu0 %v1037, 126
      %v1335 = vpop.permute.xlu0 %1334
      %1336 = vrot.lane.b32.xlu0 %v1038, 126
      %v1337 = vpop.permute.xlu0 %1336
      %1338 = vrot.lane.b32.xlu0 %v1039, 126
      %v1339 = vpop.permute.xlu0 %1338
      %1340 = vrot.lane.b32.xlu0 %v1040, 126
      %v1341 = vpop.permute.xlu0 %1340
      %1342 = vrot.lane.b32.xlu0 %v1041, 126
      %v1343 = vpop.permute.xlu0 %1342
      %1344 = vrot.lane.b32.xlu0 %v1042, 126
      %v1345 = vpop.permute.xlu0 %1344
      %1346 = vrot.lane.b32.xlu0 %v1043, 126
      %v1347 = vpop.permute.xlu0 %1346
      %1348 = vrot.lane.b32.xlu0 %v1044, 126
      %v1349 = vpop.permute.xlu0 %1348
      %1350 = vrot.lane.b32.xlu0 %v1045, 126
      %v1351 = vpop.permute.xlu0 %1350
      %1352 = vrot.lane.b32.xlu0 %v1046, 126
      %v1353 = vpop.permute.xlu0 %1352
      %vm1354 = vcmask 1031168
      %v1355 = vsel %vm1354, %v1335, %v1337
      %v1356 = vsel %vm1354, %v1337, %v1339
      %v1357 = vsel %vm1354, %v1339, %v1341
      %v1358 = vsel %vm1354, %v1341, %v1343
      %v1359 = vsel %vm1354, %v1345, %v1347
      %v1360 = vsel %vm1354, %v1347, %v1349
      %v1361 = vsel %vm1354, %v1349, %v1351
      %v1362 = vsel %vm1354, %v1351, %v1353
      %1381 = vrot.lane.b32.xlu0 %v1083, 96
      %v1382 = vpop.permute.xlu0 %1381
      %1383 = vrot.lane.b32.xlu0 %v1084, 96
      %v1384 = vpop.permute.xlu0 %1383
      %1385 = vrot.lane.b32.xlu0 %v1085, 96
      %v1386 = vpop.permute.xlu0 %1385
      %1387 = vrot.lane.b32.xlu0 %v1086, 96
      %v1388 = vpop.permute.xlu0 %1387
      %1389 = vrot.lane.b32.xlu0 %v1087, 96
      %v1390 = vpop.permute.xlu0 %1389
      %1391 = vrot.lane.b32.xlu0 %v1088, 96
      %v1392 = vpop.permute.xlu0 %1391
      %1393 = vrot.lane.b32.xlu0 %v1089, 96
      %v1394 = vpop.permute.xlu0 %1393
      %1395 = vrot.lane.b32.xlu0 %v1090, 96
      %v1396 = vpop.permute.xlu0 %1395
      %1397 = vrot.lane.b32.xlu0 %v1091, 96
      %v1398 = vpop.permute.xlu0 %1397
      %1399 = vrot.lane.b32.xlu0 %v1092, 96
      %v1400 = vpop.permute.xlu0 %1399
      %vm1401 = vcmask 785408
      %v1402 = vsel %vm1401, %v1382, %v1384
      %v1403 = vsel %vm1401, %v1384, %v1386
      %v1404 = vsel %vm1401, %v1386, %v1388
      %v1405 = vsel %vm1401, %v1388, %v1390
      %v1406 = vsel %vm1401, %v1392, %v1394
      %v1407 = vsel %vm1401, %v1394, %v1396
      %v1408 = vsel %vm1401, %v1396, %v1398
      %v1409 = vsel %vm1401, %v1398, %v1400
      %1422 = vrot.lane.b32.xlu0 %v921, 95
      %v1423 = vpop.permute.xlu0 %1422
      %1424 = vrot.lane.b32.xlu0 %v905, 95
      %v1425 = vpop.permute.xlu0 %1424
      %1426 = vrot.lane.b32.xlu0 %v906, 95
      %v1427 = vpop.permute.xlu0 %1426
      %1428 = vrot.lane.b32.xlu0 %v907, 95
      %v1429 = vpop.permute.xlu0 %1428
      %1430 = vrot.lane.b32.xlu0 %v923, 95
      %v1431 = vpop.permute.xlu0 %1430
      %1432 = vrot.lane.b32.xlu0 %v922, 95
      %v1433 = vpop.permute.xlu0 %1432
      %1434 = vrot.lane.b32.xlu0 %v908, 95
      %v1435 = vpop.permute.xlu0 %1434
      %1436 = vrot.lane.b32.xlu0 %v909, 95
      %v1437 = vpop.permute.xlu0 %1436
      %1438 = vrot.lane.b32.xlu0 %v910, 95
      %v1439 = vpop.permute.xlu0 %1438
      %1440 = vrot.lane.b32.xlu0 %v924, 95
      %v1441 = vpop.permute.xlu0 %1440
      %vm1442 = vcmask 777216
      %v1443 = vsel %vm1442, %v1423, %v1425
      %v1444 = vsel %vm1442, %v1425, %v1427
      %v1445 = vsel %vm1442, %v1427, %v1429
      %v1446 = vsel %vm1442, %v1429, %v1431
      %v1447 = vsel %vm1442, %v1433, %v1435
      %v1448 = vsel %vm1442, %v1435, %v1437
      %v1449 = vsel %vm1442, %v1437, %v1439
      %v1450 = vsel %vm1442, %v1439, %v1441
      %1469 = vrot.lane.b32.xlu0 %v1129, 94
      %v1470 = vpop.permute.xlu0 %1469
      %1471 = vrot.lane.b32.xlu0 %v1130, 94
      %v1472 = vpop.permute.xlu0 %1471
      %1473 = vrot.lane.b32.xlu0 %v1131, 94
      %v1474 = vpop.permute.xlu0 %1473
      %1475 = vrot.lane.b32.xlu0 %v1132, 94
      %v1476 = vpop.permute.xlu0 %1475
      %1477 = vrot.lane.b32.xlu0 %v1133, 94
      %v1478 = vpop.permute.xlu0 %1477
      %1479 = vrot.lane.b32.xlu0 %v1134, 94
      %v1480 = vpop.permute.xlu0 %1479
      %1481 = vrot.lane.b32.xlu0 %v1135, 94
      %v1482 = vpop.permute.xlu0 %1481
      %1483 = vrot.lane.b32.xlu0 %v1136, 94
      %v1484 = vpop.permute.xlu0 %1483
      %1485 = vrot.lane.b32.xlu0 %v1137, 94
      %v1486 = vpop.permute.xlu0 %1485
      %1487 = vrot.lane.b32.xlu0 %v1138, 94
      %v1488 = vpop.permute.xlu0 %1487
      %vm1489 = vcmask 769024
      %v1490 = vsel %vm1489, %v1470, %v1472
      %v1491 = vsel %vm1489, %v1472, %v1474
      %v1492 = vsel %vm1489, %v1474, %v1476
      %v1493 = vsel %vm1489, %v1476, %v1478
      %v1494 = vsel %vm1489, %v1480, %v1482
      %v1495 = vsel %vm1489, %v1482, %v1484
      %v1496 = vsel %vm1489, %v1484, %v1486
      %v1497 = vsel %vm1489, %v1486, %v1488
      %1516 = vrot.lane.b32.xlu0 %v1175, 64
      %v1517 = vpop.permute.xlu0 %1516
      %1518 = vrot.lane.b32.xlu0 %v1176, 64
      %v1519 = vpop.permute.xlu0 %1518
      %1520 = vrot.lane.b32.xlu0 %v1177, 64
      %v1521 = vpop.permute.xlu0 %1520
      %1522 = vrot.lane.b32.xlu0 %v1178, 64
      %v1523 = vpop.permute.xlu0 %1522
      %1524 = vrot.lane.b32.xlu0 %v1179, 64
      %v1525 = vpop.permute.xlu0 %1524
      %1526 = vrot.lane.b32.xlu0 %v1180, 64
      %v1527 = vpop.permute.xlu0 %1526
      %1528 = vrot.lane.b32.xlu0 %v1181, 64
      %v1529 = vpop.permute.xlu0 %1528
      %1530 = vrot.lane.b32.xlu0 %v1182, 64
      %v1531 = vpop.permute.xlu0 %1530
      %1532 = vrot.lane.b32.xlu0 %v1183, 64
      %v1533 = vpop.permute.xlu0 %1532
      %1534 = vrot.lane.b32.xlu0 %v1184, 64
      %v1535 = vpop.permute.xlu0 %1534
      %v1536 = vsel %vm1166, %v1517, %v1519
      %v1537 = vsel %vm1166, %v1519, %v1521
      %v1538 = vsel %vm1166, %v1521, %v1523
      %v1539 = vsel %vm1166, %v1523, %v1525
      %v1540 = vsel %vm1166, %v1527, %v1529
      %v1541 = vsel %vm1166, %v1529, %v1531
      %v1542 = vsel %vm1166, %v1531, %v1533
      %v1543 = vsel %vm1166, %v1533, %v1535
      %1562 = vrot.lane.b32.xlu0 %v1221, 63
      %v1563 = vpop.permute.xlu0 %1562
      %1564 = vrot.lane.b32.xlu0 %v1222, 63
      %v1565 = vpop.permute.xlu0 %1564
      %1566 = vrot.lane.b32.xlu0 %v1223, 63
      %v1567 = vpop.permute.xlu0 %1566
      %1568 = vrot.lane.b32.xlu0 %v1224, 63
      %v1569 = vpop.permute.xlu0 %1568
      %1570 = vrot.lane.b32.xlu0 %v1225, 63
      %v1571 = vpop.permute.xlu0 %1570
      %1572 = vrot.lane.b32.xlu0 %v1226, 63
      %v1573 = vpop.permute.xlu0 %1572
      %1574 = vrot.lane.b32.xlu0 %v1227, 63
      %v1575 = vpop.permute.xlu0 %1574
      %1576 = vrot.lane.b32.xlu0 %v1228, 63
      %v1577 = vpop.permute.xlu0 %1576
      %1578 = vrot.lane.b32.xlu0 %v1229, 63
      %v1579 = vpop.permute.xlu0 %1578
      %1580 = vrot.lane.b32.xlu0 %v1230, 63
      %v1581 = vpop.permute.xlu0 %1580
      %vm1582 = vcmask 515072
      %v1583 = vsel %vm1582, %v1563, %v1565
      %v1584 = vsel %vm1582, %v1565, %v1567
      %v1585 = vsel %vm1582, %v1567, %v1569
      %v1586 = vsel %vm1582, %v1569, %v1571
      %v1587 = vsel %vm1582, %v1573, %v1575
      %v1588 = vsel %vm1582, %v1575, %v1577
      %v1589 = vsel %vm1582, %v1577, %v1579
      %v1590 = vsel %vm1582, %v1579, %v1581
      %1609 = vrot.lane.b32.xlu0 %v1267, 62
      %v1610 = vpop.permute.xlu0 %1609
      %1611 = vrot.lane.b32.xlu0 %v1268, 62
      %v1612 = vpop.permute.xlu0 %1611
      %1613 = vrot.lane.b32.xlu0 %v1269, 62
      %v1614 = vpop.permute.xlu0 %1613
      %1615 = vrot.lane.b32.xlu0 %v1270, 62
      %v1616 = vpop.permute.xlu0 %1615
      %1617 = vrot.lane.b32.xlu0 %v1271, 62
      %v1618 = vpop.permute.xlu0 %1617
      %1619 = vrot.lane.b32.xlu0 %v1272, 62
      %v1620 = vpop.permute.xlu0 %1619
      %1621 = vrot.lane.b32.xlu0 %v1273, 62
      %v1622 = vpop.permute.xlu0 %1621
      %1623 = vrot.lane.b32.xlu0 %v1274, 62
      %v1624 = vpop.permute.xlu0 %1623
      %1625 = vrot.lane.b32.xlu0 %v1275, 62
      %v1626 = vpop.permute.xlu0 %1625
      %1627 = vrot.lane.b32.xlu0 %v1276, 62
      %v1628 = vpop.permute.xlu0 %1627
      %vm1629 = vcmask 506880
      %v1630 = vsel %vm1629, %v1610, %v1612
      %v1631 = vsel %vm1629, %v1612, %v1614
      %v1632 = vsel %vm1629, %v1614, %v1616
      %v1633 = vsel %vm1629, %v1616, %v1618
      %v1634 = vsel %vm1629, %v1620, %v1622
      %v1635 = vsel %vm1629, %v1622, %v1624
      %v1636 = vsel %vm1629, %v1624, %v1626
      %v1637 = vsel %vm1629, %v1626, %v1628
      %v1646 = vpack.c.bf16 %v951, %v947
      %v1647 = vpack.c.bf16 %v952, %v948
      %v1648 = vpack.c.bf16 %v953, %v949
      %v1649 = vpack.c.bf16 %v954, %v950
      %v1650 = vpack.c.bf16 %v1312, %v1308
      %v1651 = vpack.c.bf16 %v1313, %v1309
      %v1652 = vpack.c.bf16 %v1314, %v1310
      %v1653 = vpack.c.bf16 %v1315, %v1311
      %v1654 = vpack.c.bf16 %v1359, %v1355
      %v1655 = vpack.c.bf16 %v1360, %v1356
      %v1656 = vpack.c.bf16 %v1361, %v1357
      %v1657 = vpack.c.bf16 %v1362, %v1358
      %v1658 = vpack.c.bf16 %v1406, %v1402
      %v1659 = vpack.c.bf16 %v1407, %v1403
      %v1660 = vpack.c.bf16 %v1408, %v1404
      %v1661 = vpack.c.bf16 %v1409, %v1405
      %v1662 = vpack.c.bf16 %v1447, %v1443
      %v1663 = vpack.c.bf16 %v1448, %v1444
      %v1664 = vpack.c.bf16 %v1449, %v1445
      %v1665 = vpack.c.bf16 %v1450, %v1446
      %v1666 = vpack.c.bf16 %v1494, %v1490
      %v1667 = vpack.c.bf16 %v1495, %v1491
      %v1668 = vpack.c.bf16 %v1496, %v1492
      %v1669 = vpack.c.bf16 %v1497, %v1493
      %v1670 = vpack.c.bf16 %v1540, %v1536
      %v1671 = vpack.c.bf16 %v1541, %v1537
      %v1672 = vpack.c.bf16 %v1542, %v1538
      %v1673 = vpack.c.bf16 %v1543, %v1539
      %v1674 = vpack.c.bf16 %v1587, %v1583
      %v1675 = vpack.c.bf16 %v1588, %v1584
      %v1676 = vpack.c.bf16 %v1589, %v1585
      %v1677 = vpack.c.bf16 %v1590, %v1586
      %v1678 = vpack.c.bf16 %v1634, %v1630
      %v1679 = vpack.c.bf16 %v1635, %v1631
      %v1680 = vpack.c.bf16 %v1636, %v1632
      %v1681 = vpack.c.bf16 %v1637, %v1633
      %v1683 = vunpack.c.l.b16 %v879
      %v1684 = vunpack.c.h.b16 %v879
      %v1685 = vpack.c.b16 %v1683, %v1683
      %v1686 = vpack.c.b16 %v1684, %v1684
      %v1689 = vsel %vm692, %v1686, 0
      %1691 = vmatprep.subr.bf16.mxu0 %v1647
      %1692 = vmatpush1.bf16.msra.mxu0 %v1646
      %1693 = vmatprep.subr.bf16.mxu0 %v1651
      %1694 = vmatpush1.bf16.msra.mxu0 %v1650
      %1695 = vmatprep.subr.bf16.mxu0 %v1655
      %1696 = vmatpush1.bf16.msra.mxu0 %v1654
      %1697 = vmatprep.subr.bf16.mxu0 %v1659
      %1698 = vmatpush1.bf16.msra.mxu0 %v1658
      %1699 = vmatprep.subr.bf16.mxu0 %v1663
      %1700 = vmatpush1.bf16.msra.mxu0 %v1662
      %1701 = vmatprep.subr.bf16.mxu0 %v1667
      %1702 = vmatpush1.bf16.msra.mxu0 %v1666
      %1703 = vmatprep.subr.bf16.mxu0 %v1671
      %1704 = vmatpush1.bf16.msra.mxu0 %v1670
      %1705 = vmatprep.subr.bf16.mxu0 %v1675
      %1706 = vmatpush1.bf16.msra.mxu0 %v1674
      %1707 = vmatprep.subr.bf16.mxu0 %v1679
      %1708 = vmatpush1.bf16.msra.mxu0 %v1678
      %1709 = vmatprep.subr.bf16.mxu0 0
      %1710 = vmatpush1.bf16.msra.mxu0 0
      %1711 = vmatprep.subr.bf16.mxu0 0
      %1712 = vmatpush1.bf16.msra.mxu0 0
      %1713 = vmatprep.subr.bf16.mxu0 0
      %1714 = vmatpush1.bf16.msra.mxu0 0
      %1715 = vmatprep.subr.bf16.mxu0 0
      %1716 = vmatpush1.bf16.msra.mxu0 0
      %1717 = vmatprep.subr.bf16.mxu0 0
      %1718 = vmatpush1.bf16.msra.mxu0 0
      %1719 = vmatprep.subr.bf16.mxu0 0
      %1720 = vmatpush1.bf16.msra.mxu0 0
      %1721 = vmatprep.subr.bf16.mxu0 0
      %1722 = vmatpush1.bf16.msra.mxu0 0
      %1723 = vmatprep.mubr.bf16.mxu0 %v1689
      %1724 = vmatmul.mubr.bf16.gmra.mrb[0].mxu0 %v1685
      %v1725 = vpop.f32.mrb[0].mxu0
      %v1726 = vadd.f32 0.0, %v1725
      %v1727 = vpop.f32.mrb[0].mxu0
      %v1728 = vadd.f32 0.0, %v1727
      %v1729 = vpop.f32.mrb[0].mxu0
      %v1730 = vpop.f32.mrb[0].mxu0
      %1731 = vdwg.mxu0
      %1732 = vmatprep.subr.bf16.mxu0 %v1649
      %1733 = vmatpush1.bf16.msra.mxu0 %v1648
      %1734 = vmatprep.subr.bf16.mxu0 %v1653
      %1735 = vmatpush1.bf16.msra.mxu0 %v1652
      %1736 = vmatprep.subr.bf16.mxu0 %v1657
      %1737 = vmatpush1.bf16.msra.mxu0 %v1656
      %1738 = vmatprep.subr.bf16.mxu0 %v1661
      %1739 = vmatpush1.bf16.msra.mxu0 %v1660
      %1740 = vmatprep.subr.bf16.mxu0 %v1665
      %1741 = vmatpush1.bf16.msra.mxu0 %v1664
      %1742 = vmatprep.subr.bf16.mxu0 %v1669
      %1743 = vmatpush1.bf16.msra.mxu0 %v1668
      %1744 = vmatprep.subr.bf16.mxu0 %v1673
      %1745 = vmatpush1.bf16.msra.mxu0 %v1672
      %1746 = vmatprep.subr.bf16.mxu0 %v1677
      %1747 = vmatpush1.bf16.msra.mxu0 %v1676
      %1748 = vmatprep.subr.bf16.mxu0 %v1681
      %1749 = vmatpush1.bf16.msra.mxu0 %v1680
      %1750 = vmatprep.subr.bf16.mxu0 0
      %1751 = vmatpush1.bf16.msra.mxu0 0
      %1752 = vmatprep.subr.bf16.mxu0 0
      %1753 = vmatpush1.bf16.msra.mxu0 0
      %1754 = vmatprep.subr.bf16.mxu0 0
      %1755 = vmatpush1.bf16.msra.mxu0 0
      %1756 = vmatprep.subr.bf16.mxu0 0
      %1757 = vmatpush1.bf16.msra.mxu0 0
      %1758 = vmatprep.subr.bf16.mxu0 0
      %1759 = vmatpush1.bf16.msra.mxu0 0
      %1760 = vmatprep.subr.bf16.mxu0 0
      %1761 = vmatpush1.bf16.msra.mxu0 0
      %1762 = vmatprep.subr.bf16.mxu0 0
      %1763 = vmatpush1.bf16.msra.mxu0 0
      %1764 = vmatprep.mubr.bf16.mxu0 %v1689
      %1765 = vmatmul.mubr.bf16.gmra.mrb[0].mxu0 %v1685
      %v1766 = vpop.f32.mrb[0].mxu0
      %v1767 = vadd.f32 0.0, %v1766
      %v1768 = vpop.f32.mrb[0].mxu0
      %v1769 = vadd.f32 0.0, %v1768
      %v1770 = vpop.f32.mrb[0].mxu0
      %v1771 = vpop.f32.mrb[0].mxu0
      %1772 = vdwg.mxu0
      %v1773 = vld [vmem:[%s8] sm:$0xff]
      %v1774 = vld [vmem:[%s9] sm:$0xff]
      %v1775 = vadd.f32 %v1726, %v1728
      %v1776 = vadd.f32 %v1775, %v1767
      %v1777 = vadd.f32 %v1776, %v1769
      %1778 = vadd.xlane.f32.xlu0 %v1777
      %v1779 = vpop.xlane.xlu0 %1778
      %v1780 = vmul.f32 %v1779, %v792
      %v1781 = vsub.f32 %v1726, %v1780
      %v1782 = vsub.f32 %v1728, %v1780
      %v1783 = vsub.f32 %v1767, %v1780
      %v1784 = vsub.f32 %v1769, %v1780
      %v1785 = vmul.f32 %v1781, %v1781
      %v1786 = vmul.f32 %v1782, %v1782
      %v1787 = vmul.f32 %v1783, %v1783
      %v1788 = vmul.f32 %v1784, %v1784
      %v1789 = vadd.f32 %v1785, %v1786
      %v1790 = vadd.f32 %v1789, %v1787
      %v1791 = vadd.f32 %v1790, %v1788
      %1792 = vadd.xlane.f32.xlu0 %v1791
      %v1793 = vpop.xlane.xlu0 %1792
      %v1794 = vmul.f32 %v1793, %v792
      %v1795 = vadd.f32 %v1794, 1e-05
      %v1796 = vrsqrt.pop %v1795
      %v1797 = vmul.f32 %v1781, %v1796
      %v1798 = vmul.f32 %v1782, %v1796
      %v1799 = vmul.f32 %v1783, %v1796
      %v1800 = vmul.f32 %v1784, %v1796
      %1802 = vset.pattern.permute.xlu0 0
      %1803 = vperm.xlu0 %1802, %v1773
      %v1804 = vpop.permute.xlu0 %1803
      %v1806 = vmul.f32 %v1797, %v1804
      %v1807 = vmul.f32 %v1798, %v1804
      %v1808 = vmul.f32 %v1799, %v1804
      %v1809 = vmul.f32 %v1800, %v1804
      %1811 = vset.pattern.permute.xlu0 0
      %1812 = vperm.xlu0 %1811, %v1774
      %v1813 = vpop.permute.xlu0 %1812
      %v1815 = vadd.f32 %v1806, %v1813
      %v1816 = vadd.f32 %v1807, %v1813
      %v1817 = vadd.f32 %v1808, %v1813
      %v1818 = vadd.f32 %v1809, %v1813
      %v1819 = vmax.f32 %v1815, 0.0
      %v1820 = vmax.f32 %v1816, 0.0
      %v1821 = vmax.f32 %v1817, 0.0
      %v1822 = vmax.f32 %v1818, 0.0
      %v1823 = vld [vmem:[%s10] sm:$0xf]
      %v1824 = vld [vmem:[%s10 + $0x4] sm:$0xf]
      %v1825 = vld [vmem:[%s10 + $0x8] sm:$0xf]
      %v1826 = vld [vmem:[%s10 + $0xc] sm:$0xf]
      %v1827 = vld [vmem:[%s10 + $0x10] sm:$0xf]
      %v1828 = vld [vmem:[%s10 + $0x14] sm:$0xf]
      %v1829 = vld [vmem:[%s10 + $0x18] sm:$0xf]
      %v1830 = vld [vmem:[%s10 + $0x1c] sm:$0xf]
      %v1831 = vld [vmem:[%s10 + $0x20] sm:$0xf]
      %v1832 = vld [vmem:[%s10 + $0x24] sm:$0xf]
      %v1833 = vld [vmem:[%s10 + $0x28] sm:$0xf]
      %v1834 = vld [vmem:[%s10 + $0x2c] sm:$0xf]
      %v1835 = vld [vmem:[%s10 + $0x30] sm:$0xf]
      %v1836 = vld [vmem:[%s10 + $0x34] sm:$0xf]
      %v1837 = vld [vmem:[%s10 + $0x38] sm:$0xf]
      %v1838 = vld [vmem:[%s10 + $0x3c] sm:$0xf]
      %v1839 = vld [vmem:[%s10 + $0x40] sm:$0xf]
      %v1840 = vld [vmem:[%s10 + $0x44] sm:$0xf]
      %v1841 = vld [vmem:[%s10 + $0x48] sm:$0xf]
      %v1842 = vld [vmem:[%s10 + $0x4c] sm:$0xf]
      %v1843 = vld [vmem:[%s10 + $0x50] sm:$0xf]
      %v1844 = vld [vmem:[%s10 + $0x54] sm:$0xf]
      %v1845 = vld [vmem:[%s10 + $0x58] sm:$0xf]
      %v1846 = vld [vmem:[%s10 + $0x5c] sm:$0xf]
      %v1847 = vld [vmem:[%s10 + $0x60] sm:$0xf]
      %v1848 = vld [vmem:[%s10 + $0x64] sm:$0xf]
      %v1849 = vld [vmem:[%s10 + $0x68] sm:$0xf]
      %v1850 = vld [vmem:[%s10 + $0x6c] sm:$0xf]
      %v1851 = vld [vmem:[%s10 + $0x70] sm:$0xf]
      %v1852 = vld [vmem:[%s10 + $0x74] sm:$0xf]
      %v1853 = vld [vmem:[%s10 + $0x78] sm:$0xf]
      %v1854 = vld [vmem:[%s10 + $0x7c] sm:$0xf]
      %v1855 = vld [vmem:[%s10 + $0x80] sm:$0xf]
      %v1856 = vld [vmem:[%s10 + $0x84] sm:$0xf]
      %v1857 = vld [vmem:[%s10 + $0x88] sm:$0xf]
      %v1858 = vld [vmem:[%s10 + $0x8c] sm:$0xf]
      %v1859 = vld [vmem:[%s10 + $0x90] sm:$0xf]
      %v1860 = vld [vmem:[%s10 + $0x94] sm:$0xf]
      %v1861 = vld [vmem:[%s10 + $0x98] sm:$0xf]
      %v1862 = vld [vmem:[%s10 + $0x9c] sm:$0xf]
      %v1863 = vld [vmem:[%s10 + $0xa0] sm:$0xf]
      %v1864 = vld [vmem:[%s10 + $0xa4] sm:$0xf]
      %v1865 = vld [vmem:[%s10 + $0xa8] sm:$0xf]
      %v1866 = vld [vmem:[%s10 + $0xac] sm:$0xf]
      %v1867 = vld [vmem:[%s10 + $0xb0] sm:$0xf]
      %v1868 = vld [vmem:[%s10 + $0xb4] sm:$0xf]
      %v1869 = vld [vmem:[%s10 + $0xb8] sm:$0xf]
      %v1870 = vld [vmem:[%s10 + $0xbc] sm:$0xf]
      %v1871 = vld [vmem:[%s10 + $0xc0] sm:$0xf]
      %v1872 = vld [vmem:[%s10 + $0xc4] sm:$0xf]
      %v1873 = vld [vmem:[%s10 + $0xc8] sm:$0xf]
      %v1874 = vld [vmem:[%s10 + $0xcc] sm:$0xf]
      %v1875 = vld [vmem:[%s10 + $0xd0] sm:$0xf]
      %v1876 = vld [vmem:[%s10 + $0xd4] sm:$0xf]
      %v1877 = vld [vmem:[%s10 + $0xd8] sm:$0xf]
      %v1878 = vld [vmem:[%s10 + $0xdc] sm:$0xf]
      %v1879 = vld [vmem:[%s10 + $0xe0] sm:$0xf]
      %v1880 = vld [vmem:[%s10 + $0xe4] sm:$0xf]
      %v1881 = vld [vmem:[%s10 + $0xe8] sm:$0xf]
      %v1882 = vld [vmem:[%s10 + $0xec] sm:$0xf]
      %v1883 = vld [vmem:[%s10 + $0xf0] sm:$0xf]
      %v1884 = vld [vmem:[%s10 + $0xf4] sm:$0xf]
      %v1885 = vld [vmem:[%s10 + $0xf8] sm:$0xf]
      %v1886 = vld [vmem:[%s10 + $0xfc] sm:$0xf]
      %v1887 = vpack.c.bf16 %v1819, %v1819
      %v1888 = vpack.c.bf16 %v1820, %v1820
      %v1889 = vpack.c.bf16 %v1821, %v1821
      %v1890 = vpack.c.bf16 %v1822, %v1822
      %v1955 = vunpack.c.l.b16 %v1823
      %v1956 = vunpack.c.l.b16 %v1824
      %v1957 = vunpack.c.l.b16 %v1825
      %v1958 = vunpack.c.l.b16 %v1826
      %v1959 = vunpack.c.l.b16 %v1827
      %v1960 = vunpack.c.l.b16 %v1828
      %v1961 = vunpack.c.l.b16 %v1829
      %v1962 = vunpack.c.l.b16 %v1830
      %v1963 = vunpack.c.l.b16 %v1831
      %v1964 = vunpack.c.l.b16 %v1832
      %v1965 = vunpack.c.l.b16 %v1833
      %v1966 = vunpack.c.l.b16 %v1834
      %v1967 = vunpack.c.l.b16 %v1835
      %v1968 = vunpack.c.l.b16 %v1836
      %v1969 = vunpack.c.l.b16 %v1837
      %v1970 = vunpack.c.l.b16 %v1838
      %v1971 = vunpack.c.l.b16 %v1839
      %v1972 = vunpack.c.l.b16 %v1840
      %v1973 = vunpack.c.l.b16 %v1841
      %v1974 = vunpack.c.l.b16 %v1842
      %v1975 = vunpack.c.l.b16 %v1843
      %v1976 = vunpack.c.l.b16 %v1844
      %v1977 = vunpack.c.l.b16 %v1845
      %v1978 = vunpack.c.l.b16 %v1846
      %v1979 = vunpack.c.l.b16 %v1847
      %v1980 = vunpack.c.l.b16 %v1848
      %v1981 = vunpack.c.l.b16 %v1849
      %v1982 = vunpack.c.l.b16 %v1850
      %v1983 = vunpack.c.l.b16 %v1851
      %v1984 = vunpack.c.l.b16 %v1852
      %v1985 = vunpack.c.l.b16 %v1853
      %v1986 = vunpack.c.l.b16 %v1854
      %v1987 = vunpack.c.l.b16 %v1855
      %v1988 = vunpack.c.l.b16 %v1856
      %v1989 = vunpack.c.l.b16 %v1857
      %v1990 = vunpack.c.l.b16 %v1858
      %v1991 = vunpack.c.l.b16 %v1859
      %v1992 = vunpack.c.l.b16 %v1860
      %v1993 = vunpack.c.l.b16 %v1861
      %v1994 = vunpack.c.l.b16 %v1862
      %v1995 = vunpack.c.l.b16 %v1863
      %v1996 = vunpack.c.l.b16 %v1864
      %v1997 = vunpack.c.l.b16 %v1865
      %v1998 = vunpack.c.l.b16 %v1866
      %v1999 = vunpack.c.l.b16 %v1867
      %v2000 = vunpack.c.l.b16 %v1868
      %v2001 = vunpack.c.l.b16 %v1869
      %v2002 = vunpack.c.l.b16 %v1870
      %v2003 = vunpack.c.l.b16 %v1871
      %v2004 = vunpack.c.l.b16 %v1872
      %v2005 = vunpack.c.l.b16 %v1873
      %v2006 = vunpack.c.l.b16 %v1874
      %v2007 = vunpack.c.l.b16 %v1875
      %v2008 = vunpack.c.l.b16 %v1876
      %v2009 = vunpack.c.l.b16 %v1877
      %v2010 = vunpack.c.l.b16 %v1878
      %v2011 = vunpack.c.l.b16 %v1879
      %v2012 = vunpack.c.l.b16 %v1880
      %v2013 = vunpack.c.l.b16 %v1881
      %v2014 = vunpack.c.l.b16 %v1882
      %v2015 = vunpack.c.l.b16 %v1883
      %v2016 = vunpack.c.l.b16 %v1884
      %v2017 = vunpack.c.l.b16 %v1885
      %v2018 = vunpack.c.l.b16 %v1886
      %v2019 = vpack.c.b16 %v1956, %v1955
      %v2020 = vpack.c.b16 %v1958, %v1957
      %v2021 = vpack.c.b16 %v1960, %v1959
      %v2022 = vpack.c.b16 %v1962, %v1961
      %v2023 = vpack.c.b16 %v1964, %v1963
      %v2024 = vpack.c.b16 %v1966, %v1965
      %v2025 = vpack.c.b16 %v1968, %v1967
      %v2026 = vpack.c.b16 %v1970, %v1969
      %v2027 = vpack.c.b16 %v1972, %v1971
      %v2028 = vpack.c.b16 %v1974, %v1973
      %v2029 = vpack.c.b16 %v1976, %v1975
      %v2030 = vpack.c.b16 %v1978, %v1977
      %v2031 = vpack.c.b16 %v1980, %v1979
      %v2032 = vpack.c.b16 %v1982, %v1981
      %v2033 = vpack.c.b16 %v1984, %v1983
      %v2034 = vpack.c.b16 %v1986, %v1985
      %v2035 = vpack.c.b16 %v1988, %v1987
      %v2036 = vpack.c.b16 %v1990, %v1989
      %v2037 = vpack.c.b16 %v1992, %v1991
      %v2038 = vpack.c.b16 %v1994, %v1993
      %v2039 = vpack.c.b16 %v1996, %v1995
      %v2040 = vpack.c.b16 %v1998, %v1997
      %v2041 = vpack.c.b16 %v2000, %v1999
      %v2042 = vpack.c.b16 %v2002, %v2001
      %v2043 = vpack.c.b16 %v2004, %v2003
      %v2044 = vpack.c.b16 %v2006, %v2005
      %v2045 = vpack.c.b16 %v2008, %v2007
      %v2046 = vpack.c.b16 %v2010, %v2009
      %v2047 = vpack.c.b16 %v2012, %v2011
      %v2048 = vpack.c.b16 %v2014, %v2013
      %v2049 = vpack.c.b16 %v2016, %v2015
      %v2050 = vpack.c.b16 %v2018, %v2017
      %2083 = vmatprep.subr.bf16.mxu0 0
      %2084 = vmatpush1.bf16.msra.mxu0 %v2019
      %2085 = vmatprep.subr.bf16.mxu0 0
      %2086 = vmatpush1.bf16.msra.mxu0 %v2020
      %2087 = vmatprep.subr.bf16.mxu0 0
      %2088 = vmatpush1.bf16.msra.mxu0 %v2021
      %2089 = vmatprep.subr.bf16.mxu0 0
      %2090 = vmatpush1.bf16.msra.mxu0 %v2022
      %2091 = vmatprep.subr.bf16.mxu0 0
      %2092 = vmatpush1.bf16.msra.mxu0 %v2023
      %2093 = vmatprep.subr.bf16.mxu0 0
      %2094 = vmatpush1.bf16.msra.mxu0 %v2024
      %2095 = vmatprep.subr.bf16.mxu0 0
      %2096 = vmatpush1.bf16.msra.mxu0 %v2025
      %2097 = vmatprep.subr.bf16.mxu0 0
      %2098 = vmatpush1.bf16.msra.mxu0 %v2026
      %2099 = vmatprep.subr.bf16.mxu0 0
      %2100 = vmatpush1.bf16.msra.mxu0 %v2027
      %2101 = vmatprep.subr.bf16.mxu0 0
      %2102 = vmatpush1.bf16.msra.mxu0 %v2028
      %2103 = vmatprep.subr.bf16.mxu0 0
      %2104 = vmatpush1.bf16.msra.mxu0 %v2029
      %2105 = vmatprep.subr.bf16.mxu0 0
      %2106 = vmatpush1.bf16.msra.mxu0 %v2030
      %2107 = vmatprep.subr.bf16.mxu0 0
      %2108 = vmatpush1.bf16.msra.mxu0 %v2031
      %2109 = vmatprep.subr.bf16.mxu0 0
      %2110 = vmatpush1.bf16.msra.mxu0 %v2032
      %2111 = vmatprep.subr.bf16.mxu0 0
      %2112 = vmatpush1.bf16.msra.mxu0 %v2033
      %2113 = vmatprep.subr.bf16.mxu0 0
      %2114 = vmatpush1.bf16.msra.mxu0 %v2034
      %2115 = vmatprep.mubr.bf16.mxu0 %v1888
      %2116 = vmatmul.mubr.bf16.gmra.mrb[0].mxu0 %v1887
      %v2117 = vpop.f32.mrb[0].mxu0
      %v2118 = vadd.f32 0.0, %v2117
      %v2119 = vpop.f32.mrb[0].mxu0
      %v2120 = vpop.f32.mrb[0].mxu0
      %v2121 = vpop.f32.mrb[0].mxu0
      %2122 = vdwg.mxu0
      %2123 = vmatprep.subr.bf16.mxu0 0
      %2124 = vmatpush1.bf16.msra.mxu0 %v2035
      %2125 = vmatprep.subr.bf16.mxu0 0
      %2126 = vmatpush1.bf16.msra.mxu0 %v2036
      %2127 = vmatprep.subr.bf16.mxu0 0
      %2128 = vmatpush1.bf16.msra.mxu0 %v2037
      %2129 = vmatprep.subr.bf16.mxu0 0
      %2130 = vmatpush1.bf16.msra.mxu0 %v2038
      %2131 = vmatprep.subr.bf16.mxu0 0
      %2132 = vmatpush1.bf16.msra.mxu0 %v2039
      %2133 = vmatprep.subr.bf16.mxu0 0
      %2134 = vmatpush1.bf16.msra.mxu0 %v2040
      %2135 = vmatprep.subr.bf16.mxu0 0
      %2136 = vmatpush1.bf16.msra.mxu0 %v2041
      %2137 = vmatprep.subr.bf16.mxu0 0
      %2138 = vmatpush1.bf16.msra.mxu0 %v2042
      %2139 = vmatprep.subr.bf16.mxu0 0
      %2140 = vmatpush1.bf16.msra.mxu0 %v2043
      %2141 = vmatprep.subr.bf16.mxu0 0
      %2142 = vmatpush1.bf16.msra.mxu0 %v2044
      %2143 = vmatprep.subr.bf16.mxu0 0
      %2144 = vmatpush1.bf16.msra.mxu0 %v2045
      %2145 = vmatprep.subr.bf16.mxu0 0
      %2146 = vmatpush1.bf16.msra.mxu0 %v2046
      %2147 = vmatprep.subr.bf16.mxu0 0
      %2148 = vmatpush1.bf16.msra.mxu0 %v2047
      %2149 = vmatprep.subr.bf16.mxu0 0
      %2150 = vmatpush1.bf16.msra.mxu0 %v2048
      %2151 = vmatprep.subr.bf16.mxu0 0
      %2152 = vmatpush1.bf16.msra.mxu0 %v2049
      %2153 = vmatprep.subr.bf16.mxu0 0
      %2154 = vmatpush1.bf16.msra.mxu0 %v2050
      %2155 = vmatprep.mubr.bf16.mxu0 %v1890
      %2156 = vmatmul.mubr.bf16.gmra.mrb[0].mxu0 %v1889
      %v2157 = vpop.f32.mrb[0].mxu0
      %v2158 = vadd.f32 %v2118, %v2157
      %v2159 = vpop.f32.mrb[0].mxu0
      %v2160 = vpop.f32.mrb[0].mxu0
      %v2161 = vpop.f32.mrb[0].mxu0
      %2162 = vdwg.mxu0
      %v2163 = vld [vmem:[%s11] sm:$0xff]
      %v2164 = vld [vmem:[%s12] sm:$0xff]
      %2165 = vadd.xlane.f32.xlu0 %v2158
      %v2166 = vpop.xlane.xlu0 %2165
      %v2167 = vrcp.pop 128.0
      %v2168 = vmul.f32 %v2166, %v2167
      %v2169 = vsub.f32 %v2158, %v2168
      %v2170 = vmul.f32 %v2169, %v2169
      %2171 = vadd.xlane.f32.xlu0 %v2170
      %v2172 = vpop.xlane.xlu0 %2171
      %v2173 = vmul.f32 %v2172, %v2167
      %v2174 = vadd.f32 %v2173, 1e-05
      %v2175 = vrsqrt.pop %v2174
      %v2176 = vmul.f32 %v2169, %v2175
      %2178 = vset.pattern.permute.xlu0 0
      %2179 = vperm.xlu0 %2178, %v2163
      %v2180 = vpop.permute.xlu0 %2179
      %v2182 = vmul.f32 %v2176, %v2180
      %2184 = vset.pattern.permute.xlu0 0
      %2185 = vperm.xlu0 %2184, %v2164
      %v2186 = vpop.permute.xlu0 %2185
      %v2188 = vadd.f32 %v2182, %v2186
      %v2189 = vmax.f32 %v2188, 0.0
      %v2190 = vld [vmem:[%s13] sm:$0xff]
      %v2191 = vld [vmem:[%s13 + $0x8] sm:$0xff]
      %v2192 = vld [vmem:[%s13 + $0x10] sm:$0xff]
      %v2193 = vld [vmem:[%s13 + $0x18] sm:$0xff]
      %v2194 = vld [vmem:[%s13 + $0x20] sm:$0xff]
      %v2195 = vld [vmem:[%s13 + $0x28] sm:$0xff]
      %v2196 = vld [vmem:[%s13 + $0x30] sm:$0xff]
      %v2197 = vld [vmem:[%s13 + $0x38] sm:$0xff]
      %v2198 = vld [vmem:[%s13 + $0x40] sm:$0xff]
      %v2199 = vld [vmem:[%s13 + $0x48] sm:$0xff]
      %v2200 = vld [vmem:[%s13 + $0x50] sm:$0xff]
      %v2201 = vld [vmem:[%s13 + $0x58] sm:$0xff]
      %v2202 = vld [vmem:[%s13 + $0x60] sm:$0xff]
      %v2203 = vld [vmem:[%s13 + $0x68] sm:$0xff]
      %v2204 = vld [vmem:[%s13 + $0x70] sm:$0xff]
      %v2205 = vld [vmem:[%s13 + $0x78] sm:$0xff]
      %v2206 = vld [vmem:[%s13 + $0x80] sm:$0xff]
      %v2207 = vld [vmem:[%s13 + $0x88] sm:$0xff]
      %v2208 = vld [vmem:[%s13 + $0x90] sm:$0xff]
      %v2209 = vld [vmem:[%s13 + $0x98] sm:$0xff]
      %v2210 = vld [vmem:[%s13 + $0xa0] sm:$0xff]
      %v2211 = vld [vmem:[%s13 + $0xa8] sm:$0xff]
      %v2212 = vld [vmem:[%s13 + $0xb0] sm:$0xff]
      %v2213 = vld [vmem:[%s13 + $0xb8] sm:$0xff]
      %v2214 = vld [vmem:[%s13 + $0xc0] sm:$0xff]
      %v2215 = vld [vmem:[%s13 + $0xc8] sm:$0xff]
      %v2216 = vld [vmem:[%s13 + $0xd0] sm:$0xff]
      %v2217 = vld [vmem:[%s13 + $0xd8] sm:$0xff]
      %v2218 = vld [vmem:[%s13 + $0xe0] sm:$0xff]
      %v2219 = vld [vmem:[%s13 + $0xe8] sm:$0xff]
      %v2220 = vld [vmem:[%s13 + $0xf0] sm:$0xff]
      %v2221 = vld [vmem:[%s13 + $0xf8] sm:$0xff]
      %v2222 = vpack.c.bf16 %v2189, %v2189
      %v2255 = vunpack.c.l.b16 %v2190
      %v2256 = vunpack.c.h.b16 %v2190
      %v2257 = vunpack.c.l.b16 %v2191
      %v2258 = vunpack.c.h.b16 %v2191
      %v2259 = vunpack.c.l.b16 %v2192
      %v2260 = vunpack.c.h.b16 %v2192
      %v2261 = vunpack.c.l.b16 %v2193
      %v2262 = vunpack.c.h.b16 %v2193
      %v2263 = vunpack.c.l.b16 %v2194
      %v2264 = vunpack.c.h.b16 %v2194
      %v2265 = vunpack.c.l.b16 %v2195
      %v2266 = vunpack.c.h.b16 %v2195
      %v2267 = vunpack.c.l.b16 %v2196
      %v2268 = vunpack.c.h.b16 %v2196
      %v2269 = vunpack.c.l.b16 %v2197
      %v2270 = vunpack.c.h.b16 %v2197
      %v2271 = vunpack.c.l.b16 %v2198
      %v2272 = vunpack.c.h.b16 %v2198
      %v2273 = vunpack.c.l.b16 %v2199
      %v2274 = vunpack.c.h.b16 %v2199
      %v2275 = vunpack.c.l.b16 %v2200
      %v2276 = vunpack.c.h.b16 %v2200
      %v2277 = vunpack.c.l.b16 %v2201
      %v2278 = vunpack.c.h.b16 %v2201
      %v2279 = vunpack.c.l.b16 %v2202
      %v2280 = vunpack.c.h.b16 %v2202
      %v2281 = vunpack.c.l.b16 %v2203
      %v2282 = vunpack.c.h.b16 %v2203
      %v2283 = vunpack.c.l.b16 %v2204
      %v2284 = vunpack.c.h.b16 %v2204
      %v2285 = vunpack.c.l.b16 %v2205
      %v2286 = vunpack.c.h.b16 %v2205
      %v2287 = vunpack.c.l.b16 %v2206
      %v2288 = vunpack.c.h.b16 %v2206
      %v2289 = vunpack.c.l.b16 %v2207
      %v2290 = vunpack.c.h.b16 %v2207
      %v2291 = vunpack.c.l.b16 %v2208
      %v2292 = vunpack.c.h.b16 %v2208
      %v2293 = vunpack.c.l.b16 %v2209
      %v2294 = vunpack.c.h.b16 %v2209
      %v2295 = vunpack.c.l.b16 %v2210
      %v2296 = vunpack.c.h.b16 %v2210
      %v2297 = vunpack.c.l.b16 %v2211
      %v2298 = vunpack.c.h.b16 %v2211
      %v2299 = vunpack.c.l.b16 %v2212
      %v2300 = vunpack.c.h.b16 %v2212
      %v2301 = vunpack.c.l.b16 %v2213
      %v2302 = vunpack.c.h.b16 %v2213
      %v2303 = vunpack.c.l.b16 %v2214
      %v2304 = vunpack.c.h.b16 %v2214
      %v2305 = vunpack.c.l.b16 %v2215
      %v2306 = vunpack.c.h.b16 %v2215
      %v2307 = vunpack.c.l.b16 %v2216
      %v2308 = vunpack.c.h.b16 %v2216
      %v2309 = vunpack.c.l.b16 %v2217
      %v2310 = vunpack.c.h.b16 %v2217
      %v2311 = vunpack.c.l.b16 %v2218
      %v2312 = vunpack.c.h.b16 %v2218
      %v2313 = vunpack.c.l.b16 %v2219
      %v2314 = vunpack.c.h.b16 %v2219
      %v2315 = vunpack.c.l.b16 %v2220
      %v2316 = vunpack.c.h.b16 %v2220
      %v2317 = vunpack.c.l.b16 %v2221
      %v2318 = vunpack.c.h.b16 %v2221
      %v2319 = vpack.c.b16 %v2259, %v2255
      %v2320 = vpack.c.b16 %v2260, %v2256
      %v2321 = vpack.c.b16 %v2261, %v2257
      %v2322 = vpack.c.b16 %v2262, %v2258
      %v2323 = vpack.c.b16 %v2267, %v2263
      %v2324 = vpack.c.b16 %v2268, %v2264
      %v2325 = vpack.c.b16 %v2269, %v2265
      %v2326 = vpack.c.b16 %v2270, %v2266
      %v2327 = vpack.c.b16 %v2275, %v2271
      %v2328 = vpack.c.b16 %v2276, %v2272
      %v2329 = vpack.c.b16 %v2277, %v2273
      %v2330 = vpack.c.b16 %v2278, %v2274
      %v2331 = vpack.c.b16 %v2283, %v2279
      %v2332 = vpack.c.b16 %v2284, %v2280
      %v2333 = vpack.c.b16 %v2285, %v2281
      %v2334 = vpack.c.b16 %v2286, %v2282
      %v2335 = vpack.c.b16 %v2291, %v2287
      %v2336 = vpack.c.b16 %v2292, %v2288
      %v2337 = vpack.c.b16 %v2293, %v2289
      %v2338 = vpack.c.b16 %v2294, %v2290
      %v2339 = vpack.c.b16 %v2299, %v2295
      %v2340 = vpack.c.b16 %v2300, %v2296
      %v2341 = vpack.c.b16 %v2301, %v2297
      %v2342 = vpack.c.b16 %v2302, %v2298
      %v2343 = vpack.c.b16 %v2307, %v2303
      %v2344 = vpack.c.b16 %v2308, %v2304
      %v2345 = vpack.c.b16 %v2309, %v2305
      %v2346 = vpack.c.b16 %v2310, %v2306
      %v2347 = vpack.c.b16 %v2315, %v2311
      %v2348 = vpack.c.b16 %v2316, %v2312
      %v2349 = vpack.c.b16 %v2317, %v2313
      %v2350 = vpack.c.b16 %v2318, %v2314
      %2383 = vmatprep.subr.bf16.mxu0 %v2320
      %2384 = vmatpush1.bf16.msra.mxu0 %v2319
      %2385 = vmatprep.subr.bf16.mxu0 %v2324
      %2386 = vmatpush1.bf16.msra.mxu0 %v2323
      %2387 = vmatprep.subr.bf16.mxu0 %v2328
      %2388 = vmatpush1.bf16.msra.mxu0 %v2327
      %2389 = vmatprep.subr.bf16.mxu0 %v2332
      %2390 = vmatpush1.bf16.msra.mxu0 %v2331
      %2391 = vmatprep.subr.bf16.mxu0 %v2336
      %2392 = vmatpush1.bf16.msra.mxu0 %v2335
      %2393 = vmatprep.subr.bf16.mxu0 %v2340
      %2394 = vmatpush1.bf16.msra.mxu0 %v2339
      %2395 = vmatprep.subr.bf16.mxu0 %v2344
      %2396 = vmatpush1.bf16.msra.mxu0 %v2343
      %2397 = vmatprep.subr.bf16.mxu0 %v2348
      %2398 = vmatpush1.bf16.msra.mxu0 %v2347
      %2399 = vmatprep.subr.bf16.mxu0 0
      %2400 = vmatpush1.bf16.msra.mxu0 0
      %2401 = vmatprep.subr.bf16.mxu0 0
      %2402 = vmatpush1.bf16.msra.mxu0 0
      %2403 = vmatprep.subr.bf16.mxu0 0
      %2404 = vmatpush1.bf16.msra.mxu0 0
      %2405 = vmatprep.subr.bf16.mxu0 0
      %2406 = vmatpush1.bf16.msra.mxu0 0
      %2407 = vmatprep.subr.bf16.mxu0 0
      %2408 = vmatpush1.bf16.msra.mxu0 0
      %2409 = vmatprep.subr.bf16.mxu0 0
      %2410 = vmatpush1.bf16.msra.mxu0 0
      %2411 = vmatprep.subr.bf16.mxu0 0
      %2412 = vmatpush1.bf16.msra.mxu0 0
      %2413 = vmatprep.subr.bf16.mxu0 0
      %2414 = vmatpush1.bf16.msra.mxu0 0
      %2415 = vmatprep.mubr.bf16.mxu0 0
      %2416 = vmatmul.mubr.bf16.gmra.mrb[0].mxu0 %v2222
      %v2417 = vpop.f32.mrb[0].mxu0
      %v2418 = vadd.f32 0.0, %v2417
      %v2419 = vpop.f32.mrb[0].mxu0
      %v2420 = vadd.f32 0.0, %v2419
      %v2421 = vpop.f32.mrb[0].mxu0
      %v2422 = vpop.f32.mrb[0].mxu0
      %2423 = vdwg.mxu0
      %2424 = vmatprep.subr.bf16.mxu0 %v2322
      %2425 = vmatpush1.bf16.msra.mxu0 %v2321
      %2426 = vmatprep.subr.bf16.mxu0 %v2326
      %2427 = vmatpush1.bf16.msra.mxu0 %v2325
      %2428 = vmatprep.subr.bf16.mxu0 %v2330
      %2429 = vmatpush1.bf16.msra.mxu0 %v2329
      %2430 = vmatprep.subr.bf16.mxu0 %v2334
      %2431 = vmatpush1.bf16.msra.mxu0 %v2333
      %2432 = vmatprep.subr.bf16.mxu0 %v2338
      %2433 = vmatpush1.bf16.msra.mxu0 %v2337
      %2434 = vmatprep.subr.bf16.mxu0 %v2342
      %2435 = vmatpush1.bf16.msra.mxu0 %v2341
      %2436 = vmatprep.subr.bf16.mxu0 %v2346
      %2437 = vmatpush1.bf16.msra.mxu0 %v2345
      %2438 = vmatprep.subr.bf16.mxu0 %v2350
      %2439 = vmatpush1.bf16.msra.mxu0 %v2349
      %2440 = vmatprep.subr.bf16.mxu0 0
      %2441 = vmatpush1.bf16.msra.mxu0 0
      %2442 = vmatprep.subr.bf16.mxu0 0
      %2443 = vmatpush1.bf16.msra.mxu0 0
      %2444 = vmatprep.subr.bf16.mxu0 0
      %2445 = vmatpush1.bf16.msra.mxu0 0
      %2446 = vmatprep.subr.bf16.mxu0 0
      %2447 = vmatpush1.bf16.msra.mxu0 0
      %2448 = vmatprep.subr.bf16.mxu0 0
      %2449 = vmatpush1.bf16.msra.mxu0 0
      %2450 = vmatprep.subr.bf16.mxu0 0
      %2451 = vmatpush1.bf16.msra.mxu0 0
      %2452 = vmatprep.subr.bf16.mxu0 0
      %2453 = vmatpush1.bf16.msra.mxu0 0
      %2454 = vmatprep.subr.bf16.mxu0 0
      %2455 = vmatpush1.bf16.msra.mxu0 0
      %2456 = vmatprep.mubr.bf16.mxu0 0
      %2457 = vmatmul.mubr.bf16.gmra.mrb[0].mxu0 %v2222
      %v2458 = vpop.f32.mrb[0].mxu0
      %v2459 = vadd.f32 0.0, %v2458
      %v2460 = vpop.f32.mrb[0].mxu0
      %v2461 = vadd.f32 0.0, %v2460
      %v2462 = vpop.f32.mrb[0].mxu0
      %v2463 = vpop.f32.mrb[0].mxu0
      %2464 = vdwg.mxu0
      %v2465 = vadd.f32 %v1726, %v2418
      %v2466 = vadd.f32 %v1728, %v2420
      %v2467 = vadd.f32 %v1767, %v2459
      %v2468 = vadd.f32 %v1769, %v2461
      %v2469 = vld [vmem:[%s14] sm:$0xff]
      %v2470 = vld [vmem:[%s15] sm:$0xff]
      %v2471 = vadd.f32 %v2465, %v2466
      %v2472 = vadd.f32 %v2471, %v2467
      %v2473 = vadd.f32 %v2472, %v2468
      %2474 = vadd.xlane.f32.xlu0 %v2473
      %v2475 = vpop.xlane.xlu0 %2474
      %v2476 = vmul.f32 %v2475, %v792
      %v2477 = vsub.f32 %v2465, %v2476
      %v2478 = vsub.f32 %v2466, %v2476
      %v2479 = vsub.f32 %v2467, %v2476
      %v2480 = vsub.f32 %v2468, %v2476
      %v2481 = vmul.f32 %v2477, %v2477
      %v2482 = vmul.f32 %v2478, %v2478
      %v2483 = vmul.f32 %v2479, %v2479
      %v2484 = vmul.f32 %v2480, %v2480
      %v2485 = vadd.f32 %v2481, %v2482
      %v2486 = vadd.f32 %v2485, %v2483
      %v2487 = vadd.f32 %v2486, %v2484
      %2488 = vadd.xlane.f32.xlu0 %v2487
      %v2489 = vpop.xlane.xlu0 %2488
      %v2490 = vmul.f32 %v2489, %v792
      %v2491 = vadd.f32 %v2490, 1e-05
      %v2492 = vrsqrt.pop %v2491
      %v2493 = vmul.f32 %v2477, %v2492
      %v2494 = vmul.f32 %v2478, %v2492
      %v2495 = vmul.f32 %v2479, %v2492
      %v2496 = vmul.f32 %v2480, %v2492
      %2498 = vset.pattern.permute.xlu0 0
      %2499 = vperm.xlu0 %2498, %v2469
      %v2500 = vpop.permute.xlu0 %2499
      %v2502 = vmul.f32 %v2493, %v2500
      %v2503 = vmul.f32 %v2494, %v2500
      %v2504 = vmul.f32 %v2495, %v2500
      %v2505 = vmul.f32 %v2496, %v2500
      %2507 = vset.pattern.permute.xlu0 0
      %2508 = vperm.xlu0 %2507, %v2470
      %v2509 = vpop.permute.xlu0 %2508
      %v2511 = vadd.f32 %v2502, %v2509
      %v2512 = vadd.f32 %v2503, %v2509
      %v2513 = vadd.f32 %v2504, %v2509
      %v2514 = vadd.f32 %v2505, %v2509
      %v2515 = vmax.f32 %v2511, 0.0
      %v2516 = vmax.f32 %v2512, 0.0
      %v2517 = vmax.f32 %v2513, 0.0
      %v2518 = vmax.f32 %v2514, 0.0
      %v2519 = vld [vmem:[%s16] sm:$0xf]
      %2524 = vrot.lane.b32.xlu0 %v2515, 33
      %v2525 = vpop.permute.xlu0 %2524
      %2526 = vrot.lane.b32.xlu0 %v2516, 33
      %v2527 = vpop.permute.xlu0 %2526
      %2528 = vrot.lane.b32.xlu0 %v2517, 33
      %v2529 = vpop.permute.xlu0 %2528
      %2530 = vrot.lane.b32.xlu0 %v2518, 33
      %v2531 = vpop.permute.xlu0 %2530
      %v2532 = vsel %vm904, %v2525, %v2527
      %v2533 = vsel %vm904, %v2527, %v2529
      %v2534 = vsel %vm904, %v2529, %v2531
      %v2540 = vsel %vm904, 0.0, %v2525
      %v2541 = vsel %vm904, %v2531, 0.0
      %v2542 = vmul.f32 %v2540, %v930
      %v2543 = vmul.f32 %v2532, %v934
      %v2544 = vmul.f32 %v2533, %v938
      %v2545 = vmul.f32 %v2534, %v942
      %v2546 = vmul.f32 %v2540, %v975
      %v2547 = vmul.f32 %v2532, %v983
      %v2548 = vmul.f32 %v2533, %v984
      %v2549 = vmul.f32 %v2534, %v985
      %v2550 = vmul.f32 %v2541, %v981
      %v2551 = vmul.f32 %v2540, %v1021
      %v2552 = vmul.f32 %v2532, %v1029
      %v2553 = vmul.f32 %v2533, %v1030
      %v2554 = vmul.f32 %v2534, %v1031
      %v2555 = vmul.f32 %v2541, %v1027
      %v2556 = vmul.f32 %v2540, %v1067
      %v2557 = vmul.f32 %v2532, %v1075
      %v2558 = vmul.f32 %v2533, %v1076
      %v2559 = vmul.f32 %v2534, %v1077
      %v2560 = vmul.f32 %v2541, %v1073
      %v2561 = vmul.f32 %v2540, %v1113
      %v2562 = vmul.f32 %v2532, %v1121
      %v2563 = vmul.f32 %v2533, %v1122
      %v2564 = vmul.f32 %v2534, %v1123
      %v2565 = vmul.f32 %v2541, %v1119
      %v2566 = vmul.f32 %v2540, %v1159
      %v2567 = vmul.f32 %v2532, %v1167
      %v2568 = vmul.f32 %v2533, %v1168
      %v2569 = vmul.f32 %v2534, %v1169
      %v2570 = vmul.f32 %v2541, %v1165
      %v2571 = vmul.f32 %v2540, %v1205
      %v2572 = vmul.f32 %v2532, %v1213
      %v2573 = vmul.f32 %v2533, %v1214
      %v2574 = vmul.f32 %v2534, %v1215
      %v2575 = vmul.f32 %v2541, %v1211
      %v2576 = vmul.f32 %v2540, %v1251
      %v2577 = vmul.f32 %v2532, %v1259
      %v2578 = vmul.f32 %v2533, %v1260
      %v2579 = vmul.f32 %v2534, %v1261
      %v2580 = vmul.f32 %v2541, %v1257
      %2586 = vrot.lane.b32.xlu0 %v2546, 127
      %v2587 = vpop.permute.xlu0 %2586
      %2588 = vrot.lane.b32.xlu0 %v2547, 127
      %v2589 = vpop.permute.xlu0 %2588
      %2590 = vrot.lane.b32.xlu0 %v2548, 127
      %v2591 = vpop.permute.xlu0 %2590
      %2592 = vrot.lane.b32.xlu0 %v2549, 127
      %v2593 = vpop.permute.xlu0 %2592
      %2594 = vrot.lane.b32.xlu0 %v2550, 127
      %v2595 = vpop.permute.xlu0 %2594
      %v2596 = vsel %vm1307, %v2587, %v2589
      %v2597 = vsel %vm1307, %v2589, %v2591
      %v2598 = vsel %vm1307, %v2591, %v2593
      %v2599 = vsel %vm1307, %v2593, %v2595
      %2609 = vrot.lane.b32.xlu0 %v2551, 126
      %v2610 = vpop.permute.xlu0 %2609
      %2611 = vrot.lane.b32.xlu0 %v2552, 126
      %v2612 = vpop.permute.xlu0 %2611
      %2613 = vrot.lane.b32.xlu0 %v2553, 126
      %v2614 = vpop.permute.xlu0 %2613
      %2615 = vrot.lane.b32.xlu0 %v2554, 126
      %v2616 = vpop.permute.xlu0 %2615
      %2617 = vrot.lane.b32.xlu0 %v2555, 126
      %v2618 = vpop.permute.xlu0 %2617
      %v2619 = vsel %vm1354, %v2610, %v2612
      %v2620 = vsel %vm1354, %v2612, %v2614
      %v2621 = vsel %vm1354, %v2614, %v2616
      %v2622 = vsel %vm1354, %v2616, %v2618
      %2632 = vrot.lane.b32.xlu0 %v2556, 96
      %v2633 = vpop.permute.xlu0 %2632
      %2634 = vrot.lane.b32.xlu0 %v2557, 96
      %v2635 = vpop.permute.xlu0 %2634
      %2636 = vrot.lane.b32.xlu0 %v2558, 96
      %v2637 = vpop.permute.xlu0 %2636
      %2638 = vrot.lane.b32.xlu0 %v2559, 96
      %v2639 = vpop.permute.xlu0 %2638
      %2640 = vrot.lane.b32.xlu0 %v2560, 96
      %v2641 = vpop.permute.xlu0 %2640
      %v2642 = vsel %vm1401, %v2633, %v2635
      %v2643 = vsel %vm1401, %v2635, %v2637
      %v2644 = vsel %vm1401, %v2637, %v2639
      %v2645 = vsel %vm1401, %v2639, %v2641
      %2652 = vrot.lane.b32.xlu0 %v2540, 95
      %v2653 = vpop.permute.xlu0 %2652
      %2654 = vrot.lane.b32.xlu0 %v2532, 95
      %v2655 = vpop.permute.xlu0 %2654
      %2656 = vrot.lane.b32.xlu0 %v2533, 95
      %v2657 = vpop.permute.xlu0 %2656
      %2658 = vrot.lane.b32.xlu0 %v2534, 95
      %v2659 = vpop.permute.xlu0 %2658
      %2660 = vrot.lane.b32.xlu0 %v2541, 95
      %v2661 = vpop.permute.xlu0 %2660
      %v2662 = vsel %vm1442, %v2653, %v2655
      %v2663 = vsel %vm1442, %v2655, %v2657
      %v2664 = vsel %vm1442, %v2657, %v2659
      %v2665 = vsel %vm1442, %v2659, %v2661
      %2675 = vrot.lane.b32.xlu0 %v2561, 94
      %v2676 = vpop.permute.xlu0 %2675
      %2677 = vrot.lane.b32.xlu0 %v2562, 94
      %v2678 = vpop.permute.xlu0 %2677
      %2679 = vrot.lane.b32.xlu0 %v2563, 94
      %v2680 = vpop.permute.xlu0 %2679
      %2681 = vrot.lane.b32.xlu0 %v2564, 94
      %v2682 = vpop.permute.xlu0 %2681
      %2683 = vrot.lane.b32.xlu0 %v2565, 94
      %v2684 = vpop.permute.xlu0 %2683
      %v2685 = vsel %vm1489, %v2676, %v2678
      %v2686 = vsel %vm1489, %v2678, %v2680
      %v2687 = vsel %vm1489, %v2680, %v2682
      %v2688 = vsel %vm1489, %v2682, %v2684
      %2698 = vrot.lane.b32.xlu0 %v2566, 64
      %v2699 = vpop.permute.xlu0 %2698
      %2700 = vrot.lane.b32.xlu0 %v2567, 64
      %v2701 = vpop.permute.xlu0 %2700
      %2702 = vrot.lane.b32.xlu0 %v2568, 64
      %v2703 = vpop.permute.xlu0 %2702
      %2704 = vrot.lane.b32.xlu0 %v2569, 64
      %v2705 = vpop.permute.xlu0 %2704
      %2706 = vrot.lane.b32.xlu0 %v2570, 64
      %v2707 = vpop.permute.xlu0 %2706
      %v2708 = vsel %vm1166, %v2699, %v2701
      %v2709 = vsel %vm1166, %v2701, %v2703
      %v2710 = vsel %vm1166, %v2703, %v2705
      %v2711 = vsel %vm1166, %v2705, %v2707
      %2721 = vrot.lane.b32.xlu0 %v2571, 63
      %v2722 = vpop.permute.xlu0 %2721
      %2723 = vrot.lane.b32.xlu0 %v2572, 63
      %v2724 = vpop.permute.xlu0 %2723
      %2725 = vrot.lane.b32.xlu0 %v2573, 63
      %v2726 = vpop.permute.xlu0 %2725
      %2727 = vrot.lane.b32.xlu0 %v2574, 63
      %v2728 = vpop.permute.xlu0 %2727
      %2729 = vrot.lane.b32.xlu0 %v2575, 63
      %v2730 = vpop.permute.xlu0 %2729
      %v2731 = vsel %vm1582, %v2722, %v2724
      %v2732 = vsel %vm1582, %v2724, %v2726
      %v2733 = vsel %vm1582, %v2726, %v2728
      %v2734 = vsel %vm1582, %v2728, %v2730
      %2744 = vrot.lane.b32.xlu0 %v2576, 62
      %v2745 = vpop.permute.xlu0 %2744
      %2746 = vrot.lane.b32.xlu0 %v2577, 62
      %v2747 = vpop.permute.xlu0 %2746
      %2748 = vrot.lane.b32.xlu0 %v2578, 62
      %v2749 = vpop.permute.xlu0 %2748
      %2750 = vrot.lane.b32.xlu0 %v2579, 62
      %v2751 = vpop.permute.xlu0 %2750
      %2752 = vrot.lane.b32.xlu0 %v2580, 62
      %v2753 = vpop.permute.xlu0 %2752
      %v2754 = vsel %vm1629, %v2745, %v2747
      %v2755 = vsel %vm1629, %v2747, %v2749
      %v2756 = vsel %vm1629, %v2749, %v2751
      %v2757 = vsel %vm1629, %v2751, %v2753
      %v2762 = vpack.c.bf16 %v2596, %v2542
      %v2763 = vpack.c.bf16 %v2597, %v2543
      %v2764 = vpack.c.bf16 %v2598, %v2544
      %v2765 = vpack.c.bf16 %v2599, %v2545
      %v2766 = vpack.c.bf16 %v2642, %v2619
      %v2767 = vpack.c.bf16 %v2643, %v2620
      %v2768 = vpack.c.bf16 %v2644, %v2621
      %v2769 = vpack.c.bf16 %v2645, %v2622
      %v2770 = vpack.c.bf16 %v2685, %v2662
      %v2771 = vpack.c.bf16 %v2686, %v2663
      %v2772 = vpack.c.bf16 %v2687, %v2664
      %v2773 = vpack.c.bf16 %v2688, %v2665
      %v2774 = vpack.c.bf16 %v2731, %v2708
      %v2775 = vpack.c.bf16 %v2732, %v2709
      %v2776 = vpack.c.bf16 %v2733, %v2710
      %v2777 = vpack.c.bf16 %v2734, %v2711
      %v2778 = vpack.c.bf16 %v2754, %v2754
      %v2779 = vpack.c.bf16 %v2755, %v2755
      %v2780 = vpack.c.bf16 %v2756, %v2756
      %v2781 = vpack.c.bf16 %v2757, %v2757
      %vm2782 = vcmask 588800
      %v2784 = vsel %vm2782, %v2519, 0
      %vm2786 = vcmask 1043456
      %v2788 = vsel %vm2786, %v2778, 0
      %v2791 = vsel %vm2786, %v2779, 0
      %v2794 = vsel %vm2786, %v2780, 0
      %v2797 = vsel %vm2786, %v2781, 0
      %2799 = vmatprep.subr.bf16.mxu0 %v2763
      %2800 = vmatpush1.bf16.msra.mxu0 %v2762
      %2801 = vmatprep.subr.bf16.mxu0 %v2767
      %2802 = vmatpush1.bf16.msra.mxu0 %v2766
      %2803 = vmatprep.subr.bf16.mxu0 %v2771
      %2804 = vmatpush1.bf16.msra.mxu0 %v2770
      %2805 = vmatprep.subr.bf16.mxu0 %v2775
      %2806 = vmatpush1.bf16.msra.mxu0 %v2774
      %2807 = vmatprep.subr.bf16.mxu0 %v2791
      %2808 = vmatpush1.bf16.msra.mxu0 %v2788
      %2809 = vmatprep.subr.bf16.mxu0 0
      %2810 = vmatpush1.bf16.msra.mxu0 0
      %2811 = vmatprep.subr.bf16.mxu0 0
      %2812 = vmatpush1.bf16.msra.mxu0 0
      %2813 = vmatprep.subr.bf16.mxu0 0
      %2814 = vmatpush1.bf16.msra.mxu0 0
      %2815 = vmatprep.subr.bf16.mxu0 0
      %2816 = vmatpush1.bf16.msra.mxu0 0
      %2817 = vmatprep.subr.bf16.mxu0 0
      %2818 = vmatpush1.bf16.msra.mxu0 0
      %2819 = vmatprep.subr.bf16.mxu0 0
      %2820 = vmatpush1.bf16.msra.mxu0 0
      %2821 = vmatprep.subr.bf16.mxu0 0
      %2822 = vmatpush1.bf16.msra.mxu0 0
      %2823 = vmatprep.subr.bf16.mxu0 0
      %2824 = vmatpush1.bf16.msra.mxu0 0
      %2825 = vmatprep.subr.bf16.mxu0 0
      %2826 = vmatpush1.bf16.msra.mxu0 0
      %2827 = vmatprep.subr.bf16.mxu0 0
      %2828 = vmatpush1.bf16.msra.mxu0 0
      %2829 = vmatprep.subr.bf16.mxu0 0
      %2830 = vmatpush1.bf16.msra.mxu0 0
      %2831 = vmatprep.mubr.bf16.mxu0 0
      %2832 = vmatmul.mubr.bf16.gmra.mrb[0].mxu0 %v2784
      %v2833 = vpop.f32.mrb[0].mxu0
      %v2834 = vadd.f32 %v731, %v2833
      %v2835 = vpop.f32.mrb[0].mxu0
      %v2836 = vadd.f32 %v733, %v2835
      %v2837 = vpop.f32.mrb[0].mxu0
      %v2838 = vpop.f32.mrb[0].mxu0
      %2839 = vdwg.mxu0
      %2840 = vmatprep.subr.bf16.mxu0 %v2765
      %2841 = vmatpush1.bf16.msra.mxu0 %v2764
      %2842 = vmatprep.subr.bf16.mxu0 %v2769
      %2843 = vmatpush1.bf16.msra.mxu0 %v2768
      %2844 = vmatprep.subr.bf16.mxu0 %v2773
      %2845 = vmatpush1.bf16.msra.mxu0 %v2772
      %2846 = vmatprep.subr.bf16.mxu0 %v2777
      %2847 = vmatpush1.bf16.msra.mxu0 %v2776
      %2848 = vmatprep.subr.bf16.mxu0 %v2797
      %2849 = vmatpush1.bf16.msra.mxu0 %v2794
      %2850 = vmatprep.subr.bf16.mxu0 0
      %2851 = vmatpush1.bf16.msra.mxu0 0
      %2852 = vmatprep.subr.bf16.mxu0 0
      %2853 = vmatpush1.bf16.msra.mxu0 0
      %2854 = vmatprep.subr.bf16.mxu0 0
      %2855 = vmatpush1.bf16.msra.mxu0 0
      %2856 = vmatprep.subr.bf16.mxu0 0
      %2857 = vmatpush1.bf16.msra.mxu0 0
      %2858 = vmatprep.subr.bf16.mxu0 0
      %2859 = vmatpush1.bf16.msra.mxu0 0
      %2860 = vmatprep.subr.bf16.mxu0 0
      %2861 = vmatpush1.bf16.msra.mxu0 0
      %2862 = vmatprep.subr.bf16.mxu0 0
      %2863 = vmatpush1.bf16.msra.mxu0 0
      %2864 = vmatprep.subr.bf16.mxu0 0
      %2865 = vmatpush1.bf16.msra.mxu0 0
      %2866 = vmatprep.subr.bf16.mxu0 0
      %2867 = vmatpush1.bf16.msra.mxu0 0
      %2868 = vmatprep.subr.bf16.mxu0 0
      %2869 = vmatpush1.bf16.msra.mxu0 0
      %2870 = vmatprep.subr.bf16.mxu0 0
      %2871 = vmatpush1.bf16.msra.mxu0 0
      %2872 = vmatprep.mubr.bf16.mxu0 0
      %2873 = vmatmul.mubr.bf16.gmra.mrb[0].mxu0 %v2784
      %v2874 = vpop.f32.mrb[0].mxu0
      %v2875 = vadd.f32 %v772, %v2874
      %v2876 = vpop.f32.mrb[0].mxu0
      %v2877 = vadd.f32 %v774, %v2876
      %v2878 = vpop.f32.mrb[0].mxu0
      %v2879 = vpop.f32.mrb[0].mxu0
      %2880 = vdwg.mxu0
      %v2881 = vld [vmem:[%s3] sm:$0xf]
      %v2882 = vpack.c.bf16 %v675, %v671
      %v2883 = vpack.c.bf16 %v676, %v672
      %v2884 = vpack.c.bf16 %v677, %v673
      %v2885 = vpack.c.bf16 %v678, %v674
      %v2887 = vsel %vm692, %v2881, 0
      %2889 = vmatprep.subr.bf16.mxu0 %v2883
      %2890 = vmatpush1.bf16.msra.mxu0 %v2882
      %2891 = vmatprep.subr.bf16.mxu0 0
      %2892 = vmatpush1.bf16.msra.mxu0 0
      %2893 = vmatprep.subr.bf16.mxu0 0
      %2894 = vmatpush1.bf16.msra.mxu0 0
      %2895 = vmatprep.subr.bf16.mxu0 0
      %2896 = vmatpush1.bf16.msra.mxu0 0
      %2897 = vmatprep.subr.bf16.mxu0 0
      %2898 = vmatpush1.bf16.msra.mxu0 0
      %2899 = vmatprep.subr.bf16.mxu0 0
      %2900 = vmatpush1.bf16.msra.mxu0 0
      %2901 = vmatprep.subr.bf16.mxu0 0
      %2902 = vmatpush1.bf16.msra.mxu0 0
      %2903 = vmatprep.subr.bf16.mxu0 0
      %2904 = vmatpush1.bf16.msra.mxu0 0
      %2905 = vmatprep.subr.bf16.mxu0 0
      %2906 = vmatpush1.bf16.msra.mxu0 0
      %2907 = vmatprep.subr.bf16.mxu0 0
      %2908 = vmatpush1.bf16.msra.mxu0 0
      %2909 = vmatprep.subr.bf16.mxu0 0
      %2910 = vmatpush1.bf16.msra.mxu0 0
      %2911 = vmatprep.subr.bf16.mxu0 0
      %2912 = vmatpush1.bf16.msra.mxu0 0
      %2913 = vmatprep.subr.bf16.mxu0 0
      %2914 = vmatpush1.bf16.msra.mxu0 0
      %2915 = vmatprep.subr.bf16.mxu0 0
      %2916 = vmatpush1.bf16.msra.mxu0 0
      %2917 = vmatprep.subr.bf16.mxu0 0
      %2918 = vmatpush1.bf16.msra.mxu0 0
      %2919 = vmatprep.subr.bf16.mxu0 0
      %2920 = vmatpush1.bf16.msra.mxu0 0
      %2921 = vmatprep.mubr.bf16.mxu0 0
      %2922 = vmatmul.mubr.bf16.gmra.mrb[0].mxu0 %v2887
      %v2923 = vpop.f32.mrb[0].mxu0
      %v2924 = vadd.f32 0.0, %v2923
      %v2925 = vpop.f32.mrb[0].mxu0
      %v2926 = vadd.f32 0.0, %v2925
      %v2927 = vpop.f32.mrb[0].mxu0
      %v2928 = vpop.f32.mrb[0].mxu0
      %2929 = vdwg.mxu0
      %2930 = vmatprep.subr.bf16.mxu0 %v2885
      %2931 = vmatpush1.bf16.msra.mxu0 %v2884
      %2932 = vmatprep.subr.bf16.mxu0 0
      %2933 = vmatpush1.bf16.msra.mxu0 0
      %2934 = vmatprep.subr.bf16.mxu0 0
      %2935 = vmatpush1.bf16.msra.mxu0 0
      %2936 = vmatprep.subr.bf16.mxu0 0
      %2937 = vmatpush1.bf16.msra.mxu0 0
      %2938 = vmatprep.subr.bf16.mxu0 0
      %2939 = vmatpush1.bf16.msra.mxu0 0
      %2940 = vmatprep.subr.bf16.mxu0 0
      %2941 = vmatpush1.bf16.msra.mxu0 0
      %2942 = vmatprep.subr.bf16.mxu0 0
      %2943 = vmatpush1.bf16.msra.mxu0 0
      %2944 = vmatprep.subr.bf16.mxu0 0
      %2945 = vmatpush1.bf16.msra.mxu0 0
      %2946 = vmatprep.subr.bf16.mxu0 0
      %2947 = vmatpush1.bf16.msra.mxu0 0
      %2948 = vmatprep.subr.bf16.mxu0 0
      %2949 = vmatpush1.bf16.msra.mxu0 0
      %2950 = vmatprep.subr.bf16.mxu0 0
      %2951 = vmatpush1.bf16.msra.mxu0 0
      %2952 = vmatprep.subr.bf16.mxu0 0
      %2953 = vmatpush1.bf16.msra.mxu0 0
      %2954 = vmatprep.subr.bf16.mxu0 0
      %2955 = vmatpush1.bf16.msra.mxu0 0
      %2956 = vmatprep.subr.bf16.mxu0 0
      %2957 = vmatpush1.bf16.msra.mxu0 0
      %2958 = vmatprep.subr.bf16.mxu0 0
      %2959 = vmatpush1.bf16.msra.mxu0 0
      %2960 = vmatprep.subr.bf16.mxu0 0
      %2961 = vmatpush1.bf16.msra.mxu0 0
      %2962 = vmatprep.mubr.bf16.mxu0 0
      %2963 = vmatmul.mubr.bf16.gmra.mrb[0].mxu0 %v2887
      %v2964 = vpop.f32.mrb[0].mxu0
      %v2965 = vadd.f32 0.0, %v2964
      %v2966 = vpop.f32.mrb[0].mxu0
      %v2967 = vadd.f32 0.0, %v2966
      %v2968 = vpop.f32.mrb[0].mxu0
      %v2969 = vpop.f32.mrb[0].mxu0
      %2970 = vdwg.mxu0
      %v2971 = vmul.f32 %v2834, %v2924
      %v2972 = vmul.f32 %v2836, %v2926
      %v2973 = vmul.f32 %v2875, %v2965
      %v2974 = vmul.f32 %v2877, %v2967
      %v2975 = vld [vmem:[%s18] sm:$0xf]
      %v2976 = vpack.c.bf16 %v2971, %v2971
      %v2977 = vpack.c.bf16 %v2972, %v2972
      %v2978 = vpack.c.bf16 %v2973, %v2973
      %v2979 = vpack.c.bf16 %v2974, %v2974
      %vm2980 = vcmask 195584
      %v2982 = vsel %vm2980, %v2975, 0
      %v2985 = vsel %vm2786, %v2976, 0
      %v2988 = vsel %vm2786, %v2977, 0
      %v2991 = vsel %vm2786, %v2978, 0
      %v2994 = vsel %vm2786, %v2979, 0
      %2996 = vmatprep.subr.bf16.mxu0 %v2883
      %2997 = vmatpush1.bf16.msra.mxu0 %v2882
      %2998 = vmatprep.subr.bf16.mxu0 %v2988
      %2999 = vmatpush1.bf16.msra.mxu0 %v2985
      %3000 = vmatprep.subr.bf16.mxu0 0
      %3001 = vmatpush1.bf16.msra.mxu0 0
      %3002 = vmatprep.subr.bf16.mxu0 0
      %3003 = vmatpush1.bf16.msra.mxu0 0
      %3004 = vmatprep.subr.bf16.mxu0 0
      %3005 = vmatpush1.bf16.msra.mxu0 0
      %3006 = vmatprep.subr.bf16.mxu0 0
      %3007 = vmatpush1.bf16.msra.mxu0 0
      %3008 = vmatprep.subr.bf16.mxu0 0
      %3009 = vmatpush1.bf16.msra.mxu0 0
      %3010 = vmatprep.subr.bf16.mxu0 0
      %3011 = vmatpush1.bf16.msra.mxu0 0
      %3012 = vmatprep.subr.bf16.mxu0 0
      %3013 = vmatpush1.bf16.msra.mxu0 0
      %3014 = vmatprep.subr.bf16.mxu0 0
      %3015 = vmatpush1.bf16.msra.mxu0 0
      %3016 = vmatprep.subr.bf16.mxu0 0
      %3017 = vmatpush1.bf16.msra.mxu0 0
      %3018 = vmatprep.subr.bf16.mxu0 0
      %3019 = vmatpush1.bf16.msra.mxu0 0
      %3020 = vmatprep.subr.bf16.mxu0 0
      %3021 = vmatpush1.bf16.msra.mxu0 0
      %3022 = vmatprep.subr.bf16.mxu0 0
      %3023 = vmatpush1.bf16.msra.mxu0 0
      %3024 = vmatprep.subr.bf16.mxu0 0
      %3025 = vmatpush1.bf16.msra.mxu0 0
      %3026 = vmatprep.subr.bf16.mxu0 0
      %3027 = vmatpush1.bf16.msra.mxu0 0
      %3028 = vmatprep.mubr.bf16.mxu0 0
      %3029 = vmatmul.mubr.bf16.gmra.mrb[0].mxu0 %v2982
      %v3030 = vpop.f32.mrb[0].mxu0
      %v3031 = vadd.f32 0.0, %v3030
      %v3032 = vpop.f32.mrb[0].mxu0
      %v3033 = vadd.f32 0.0, %v3032
      %v3034 = vpop.f32.mrb[0].mxu0
      %v3035 = vpop.f32.mrb[0].mxu0
      %3036 = vdwg.mxu0
      %3037 = vmatprep.subr.bf16.mxu0 %v2885
      %3038 = vmatpush1.bf16.msra.mxu0 %v2884
      %3039 = vmatprep.subr.bf16.mxu0 %v2994
      %3040 = vmatpush1.bf16.msra.mxu0 %v2991
      %3041 = vmatprep.subr.bf16.mxu0 0
      %3042 = vmatpush1.bf16.msra.mxu0 0
      %3043 = vmatprep.subr.bf16.mxu0 0
      %3044 = vmatpush1.bf16.msra.mxu0 0
      %3045 = vmatprep.subr.bf16.mxu0 0
      %3046 = vmatpush1.bf16.msra.mxu0 0
      %3047 = vmatprep.subr.bf16.mxu0 0
      %3048 = vmatpush1.bf16.msra.mxu0 0
      %3049 = vmatprep.subr.bf16.mxu0 0
      %3050 = vmatpush1.bf16.msra.mxu0 0
      %3051 = vmatprep.subr.bf16.mxu0 0
      %3052 = vmatpush1.bf16.msra.mxu0 0
      %3053 = vmatprep.subr.bf16.mxu0 0
      %3054 = vmatpush1.bf16.msra.mxu0 0
      %3055 = vmatprep.subr.bf16.mxu0 0
      %3056 = vmatpush1.bf16.msra.mxu0 0
      %3057 = vmatprep.subr.bf16.mxu0 0
      %3058 = vmatpush1.bf16.msra.mxu0 0
      %3059 = vmatprep.subr.bf16.mxu0 0
      %3060 = vmatpush1.bf16.msra.mxu0 0
      %3061 = vmatprep.subr.bf16.mxu0 0
      %3062 = vmatpush1.bf16.msra.mxu0 0
      %3063 = vmatprep.subr.bf16.mxu0 0
      %3064 = vmatpush1.bf16.msra.mxu0 0
      %3065 = vmatprep.subr.bf16.mxu0 0
      %3066 = vmatpush1.bf16.msra.mxu0 0
      %3067 = vmatprep.subr.bf16.mxu0 0
      %3068 = vmatpush1.bf16.msra.mxu0 0
      %3069 = vmatprep.mubr.bf16.mxu0 0
      %3070 = vmatmul.mubr.bf16.gmra.mrb[0].mxu0 %v2982
      %v3071 = vpop.f32.mrb[0].mxu0
      %v3072 = vadd.f32 0.0, %v3071
      %v3073 = vpop.f32.mrb[0].mxu0
      %v3074 = vadd.f32 0.0, %v3073
      %v3075 = vpop.f32.mrb[0].mxu0
      %v3076 = vpop.f32.mrb[0].mxu0
      %3077 = vdwg.mxu0
      %v3078 = vmax.f32 %v3031, 0.0
      %v3079 = vmax.f32 %v3033, 0.0
      %v3080 = vmax.f32 %v3072, 0.0
      %v3081 = vmax.f32 %v3074, 0.0
      %v3082 = vld [vmem:[%s19] sm:$0xf]
      %v3083 = vld [vmem:[%s19 + $0x4] sm:$0xf]
      %v3084 = vpack.c.bf16 %v3078, %v3078
      %v3085 = vpack.c.bf16 %v3079, %v3079
      %v3086 = vpack.c.bf16 %v3080, %v3080
      %v3087 = vpack.c.bf16 %v3081, %v3081
      %v3090 = vunpack.c.l.b16 %v3082
      %v3091 = vunpack.c.l.b16 %v3083
      %v3092 = vpack.c.b16 %v3091, %v3090
      %vm3093 = vcmask 64512
      %v3095 = vsel %vm3093, %v3092, 0
      %v3098 = vsel %vm2786, %v3084, 0
      %v3101 = vsel %vm2786, %v3085, 0
      %v3104 = vsel %vm2786, %v3086, 0
      %v3107 = vsel %vm2786, %v3087, 0
      %3109 = vmatprep.subr.bf16.mxu0 %v3101
      %3110 = vmatpush1.bf16.msra.mxu0 %v3098
      %3111 = vmatprep.subr.bf16.mxu0 0
      %3112 = vmatpush1.bf16.msra.mxu0 0
      %3113 = vmatprep.subr.bf16.mxu0 0
      %3114 = vmatpush1.bf16.msra.mxu0 0
      %3115 = vmatprep.subr.bf16.mxu0 0
      %3116 = vmatpush1.bf16.msra.mxu0 0
      %3117 = vmatprep.subr.bf16.mxu0 0
      %3118 = vmatpush1.bf16.msra.mxu0 0
      %3119 = vmatprep.subr.bf16.mxu0 0
      %3120 = vmatpush1.bf16.msra.mxu0 0
      %3121 = vmatprep.subr.bf16.mxu0 0
      %3122 = vmatpush1.bf16.msra.mxu0 0
      %3123 = vmatprep.subr.bf16.mxu0 0
      %3124 = vmatpush1.bf16.msra.mxu0 0
      %3125 = vmatprep.subr.bf16.mxu0 0
      %3126 = vmatpush1.bf16.msra.mxu0 0
      %3127 = vmatprep.subr.bf16.mxu0 0
      %3128 = vmatpush1.bf16.msra.mxu0 0
      %3129 = vmatprep.subr.bf16.mxu0 0
      %3130 = vmatpush1.bf16.msra.mxu0 0
      %3131 = vmatprep.subr.bf16.mxu0 0
      %3132 = vmatpush1.bf16.msra.mxu0 0
      %3133 = vmatprep.subr.bf16.mxu0 0
      %3134 = vmatpush1.bf16.msra.mxu0 0
      %3135 = vmatprep.subr.bf16.mxu0 0
      %3136 = vmatpush1.bf16.msra.mxu0 0
      %3137 = vmatprep.subr.bf16.mxu0 0
      %3138 = vmatpush1.bf16.msra.mxu0 0
      %3139 = vmatprep.subr.bf16.mxu0 0
      %3140 = vmatpush1.bf16.msra.mxu0 0
      %3141 = vmatprep.mubr.bf16.mxu0 0
      %3142 = vmatmul.mubr.bf16.gmra.mrb[0].mxu0 %v3095
      %v3143 = vpop.f32.mrb[0].mxu0
      %v3144 = vadd.f32 0.0, %v3143
      %v3145 = vpop.f32.mrb[0].mxu0
      %v3146 = vadd.f32 0.0, %v3145
      %v3147 = vpop.f32.mrb[0].mxu0
      %v3148 = vadd.f32 0.0, %v3147
      %v3149 = vpop.f32.mrb[0].mxu0
      %v3150 = vadd.f32 0.0, %v3149
      %3151 = vdwg.mxu0
      %3152 = vmatprep.subr.bf16.mxu0 %v3107
      %3153 = vmatpush1.bf16.msra.mxu0 %v3104
      %3154 = vmatprep.subr.bf16.mxu0 0
      %3155 = vmatpush1.bf16.msra.mxu0 0
      %3156 = vmatprep.subr.bf16.mxu0 0
      %3157 = vmatpush1.bf16.msra.mxu0 0
      %3158 = vmatprep.subr.bf16.mxu0 0
      %3159 = vmatpush1.bf16.msra.mxu0 0
      %3160 = vmatprep.subr.bf16.mxu0 0
      %3161 = vmatpush1.bf16.msra.mxu0 0
      %3162 = vmatprep.subr.bf16.mxu0 0
      %3163 = vmatpush1.bf16.msra.mxu0 0
      %3164 = vmatprep.subr.bf16.mxu0 0
      %3165 = vmatpush1.bf16.msra.mxu0 0
      %3166 = vmatprep.subr.bf16.mxu0 0
      %3167 = vmatpush1.bf16.msra.mxu0 0
      %3168 = vmatprep.subr.bf16.mxu0 0
      %3169 = vmatpush1.bf16.msra.mxu0 0
      %3170 = vmatprep.subr.bf16.mxu0 0
      %3171 = vmatpush1.bf16.msra.mxu0 0
      %3172 = vmatprep.subr.bf16.mxu0 0
      %3173 = vmatpush1.bf16.msra.mxu0 0
      %3174 = vmatprep.subr.bf16.mxu0 0
      %3175 = vmatpush1.bf16.msra.mxu0 0
      %3176 = vmatprep.subr.bf16.mxu0 0
      %3177 = vmatpush1.bf16.msra.mxu0 0
      %3178 = vmatprep.subr.bf16.mxu0 0
      %3179 = vmatpush1.bf16.msra.mxu0 0
      %3180 = vmatprep.subr.bf16.mxu0 0
      %3181 = vmatpush1.bf16.msra.mxu0 0
      %3182 = vmatprep.subr.bf16.mxu0 0
      %3183 = vmatpush1.bf16.msra.mxu0 0
      %3184 = vmatprep.mubr.bf16.mxu0 0
      %3185 = vmatmul.mubr.bf16.gmra.mrb[0].mxu0 %v3095
      %v3186 = vpop.f32.mrb[0].mxu0
      %v3187 = vadd.f32 0.0, %v3186
      %v3188 = vpop.f32.mrb[0].mxu0
      %v3189 = vadd.f32 0.0, %v3188
      %v3190 = vpop.f32.mrb[0].mxu0
      %v3191 = vadd.f32 0.0, %v3190
      %v3192 = vpop.f32.mrb[0].mxu0
      %v3193 = vadd.f32 0.0, %v3192
      %3194 = vdwg.mxu0
      %3195 = vst [vmem:[%s669] sm:$0xff] %v3144
      %3196 = vst [vmem:[%s669 + $0x8] sm:$0xff] %v3146
      %3197 = vst [vmem:[%s669 + $0x10] sm:$0xff] %v3187
      %3198 = vst [vmem:[%s669 + $0x18] sm:$0xff] %v3189
      %3199 = vst [vmem:[%s669 + $0x20] sm:$0xff] %v3148
      %3200 = vst [vmem:[%s669 + $0x28] sm:$0xff] %v3150
      %3201 = vst [vmem:[%s669 + $0x30] sm:$0xff] %v3191
      %3202 = vst [vmem:[%s669 + $0x38] sm:$0xff] %v3193
      %p3203 = scmp.lt.s32.totalorder %s31, 1
      %s3204 = scalar_select %p3203, %s31, 1
      %s3205 = smul.addr %s3204, 8
      %s3206 = smul.addr %s3205, 8
      %s3207 = scalar_lea.vmem %s20, %s3206
      // Predicated region
      $region101: #{tfc_tdf_net_forward.5} parent=99 // pred_check
        %p3208 = pneg %p484
      $region102: #{tfc_tdf_net_forward.5} parent=99 // pred_check_branch
        %3210 = sbr.rel (%p3208) target = $region104
      $region103: #{tfc_tdf_net_forward.5} parent=99 // pred_region
        _
      $region104: #{tfc_tdf_net_forward.5} parent=99 // pred_fallthru
        _
    $region100: #{tfc_tdf_net_forward.5} parent=5 // pred_fallthru
      _
    %p3211 = scmp.le.s32.totalorder 2, %s26
    // Predicated region
    $region105: #{tfc_tdf_net_forward.5} parent=5 // pred_check
      %p3212 = pneg %p3211
    $region106: #{tfc_tdf_net_forward.5} parent=5 // pred_check_branch
      %3214 = sbr.rel (%p3212) target = $region108
    $region107: #{tfc_tdf_net_forward.5} parent=5 // pred_region
      %s3215 = ssub.s32 %s26, 2
      // Predicated region
      $region109: #{tfc_tdf_net_forward.5} parent=107 // pred_check
        %p3216 = pneg %p490
      $region110: #{tfc_tdf_net_forward.5} parent=107 // pred_check_branch
        %3218 = sbr.rel (%p3216) target = $region112
      $region111: #{tfc_tdf_net_forward.5} parent=107 // pred_region
        %p3219 = scmp.lt.s32.totalorder %s32, 1
        %s3220 = scalar_select %p3219, %s32, 1
        %s3221 = smul.addr %s3220, 8
        %s3222 = smul.addr %s3221, 8
        %s3223 = scalar_lea.vmem %s20, %s3222
      $region112: #{tfc_tdf_net_forward.5} parent=107 // pred_fallthru
        _
    $region108: #{tfc_tdf_net_forward.5} parent=5 // pred_fallthru
      _
  $region6: #{tfc_tdf_net_forward.5} parent=0 // loop_footer
    %s30 = sadd.s32 1, %s26
  $region7: #{tfc_tdf_net_forward.5} parent=0 // loop_footer_branch
    %25 = sbr.rel target = $region3
  $region8: #{tfc_tdf_net_forward.5} parent=0 // loop_exit
    _

</llo_original>
